<compile_context>
chip_gen: v7x
topology: tpu7x:2x2x1
jax: 0.10.0
libtpu: 0.0.40
codegen_flags: <defaults>
</compile_context>

<pallas_src>
import numpy as np
import jax
import jax.numpy as jnp
from jax.experimental import pallas as pl
from jax.experimental.pallas import tpu as pltpu

NUM_CLASSES = 10
KSIZE = 5
PAD = 2


# ---------------------------------------------------------------------------
# Pallas kernels
# ---------------------------------------------------------------------------

def _conv_bn_relu_pool_kernel(x_ref, w_ref, bias_ref, o_ref):
    """Fused conv5x5(pad 2, stride 1) + BN(eval, folded) + ReLU + maxpool2x2 for ONE image.

    x_ref:    (2, Hp//2, Wp*Cin)   zero-padded input rows, split by row parity
    w_ref:    (KH, Wp*Cin, W*Cout) banded conv weight (BN scale folded in); output columns
                                   ordered (w%2, w//2, cout) so column pooling is contiguous
    bias_ref: (1, (W//2)*Cout)     folded conv-bias + BN bias, tiled over w//2
    o_ref:    (H//2, (W//2)*Cout)  pooled NHWC output with W,C merged (lane-dense)
    """
    h2 = o_ref.shape[0]
    kh_total = w_ref.shape[0]

    def conv_rows(p):
        # Conv output rows of parity p (h = 2*h2 + p), before bias/ReLU. All slices static.
        acc = None
        for kh in range(kh_total):
            r = kh + p                                        # padded-input row offset
            lhs = x_ref[r % 2, (r // 2):(r // 2) + h2, :]     # (H//2, Wp*Cin)
            y = jnp.dot(lhs, w_ref[kh], preferred_element_type=jnp.float32)
            acc = y if acc is None else acc + y
        return acc                                            # (H//2, W*Cout)

    # Max-pool commutes with the positive per-channel affine and with ReLU, so pool the raw
    # conv output first, then apply bias + ReLU once on the 4x smaller tensor.
    z = jnp.maximum(conv_rows(0), conv_rows(1))               # pool over row pairs
    half = z.shape[1] // 2                                    # = (W//2)*Cout
    pooled = jnp.maximum(z[:, :half], z[:, half:])            # pool over column pairs
    o_ref[...] = jnp.maximum(pooled + bias_ref[...], 0.0)     # bias + ReLU


def _fc_kernel(x_ref, w_ref, b_ref, o_ref):
    # x: (TM, F), w: (F, 128 padded classes), b: (1, 128)
    o_ref[...] = jnp.dot(x_ref[...], w_ref[...],
                         preferred_element_type=jnp.float32) + b_ref[...]


# ---------------------------------------------------------------------------
# Wrappers
# ---------------------------------------------------------------------------

def conv_bn_relu_pool(x_par, band_w, bias_tile):
    n, _, hp2, wpc = x_par.shape
    kh, _, wcols = band_w.shape
    h2 = hp2 - (kh // 2)              # pad=(k-1)//2, stride-1 conv, pool 2 -> Hp//2 = H//2 + 2
    w2cols = bias_tile.shape[1]
    return pl.pallas_call(
        _conv_bn_relu_pool_kernel,
        out_shape=jax.ShapeDtypeStruct((n, h2, w2cols), jnp.float32),
        grid=(n,),
        in_specs=[
            pl.BlockSpec((None, 2, hp2, wpc), lambda i: (i, 0, 0, 0)),   # per-image block
            pl.BlockSpec((kh, wpc, wcols), lambda i: (0, 0, 0)),         # weights stay resident
            pl.BlockSpec((1, w2cols), lambda i: (0, 0)),                 # bias stays resident
        ],
        out_specs=pl.BlockSpec((None, h2, w2cols), lambda i: (i, 0, 0)),
        compiler_params=pltpu.CompilerParams(dimension_semantics=("parallel",)),
    )(x_par, band_w, bias_tile)


def linear(x, w_pad, b_pad):
    n, f = x.shape
    ncp = w_pad.shape[1]
    tm = n if n <= 256 else 256       # M-tile; weights/bias stay resident across tiles
    return pl.pallas_call(
        _fc_kernel,
        out_shape=jax.ShapeDtypeStruct((n, ncp), jnp.float32),
        grid=(pl.cdiv(n, tm),),
        in_specs=[
            pl.BlockSpec((tm, f), lambda i: (i, 0)),
            pl.BlockSpec((f, ncp), lambda i: (0, 0)),
            pl.BlockSpec((1, ncp), lambda i: (0, 0)),
        ],
        out_specs=pl.BlockSpec((tm, ncp), lambda i: (i, 0)),
        compiler_params=pltpu.CompilerParams(dimension_semantics=("parallel",)),
    )(x, w_pad, b_pad)


def _prep_conv_input(x, cin, pad):
    """(N, H, W*Cin) NHWC-merged activation -> zero-pad spatially -> split rows by parity.

    Returns (N, 2, Hp//2, Wp*Cin).  Cheap XLA glue on the tiny activation tensor; padding the
    merged last dim by pad*Cin is exact because (w, c) flattening is w-major / c-minor.
    """
    xp = jnp.pad(x, ((0, 0), (pad, pad), (pad * cin, pad * cin)))
    return jnp.stack([xp[:, 0::2, :], xp[:, 1::2, :]], axis=1)


# ---------------------------------------------------------------------------
# Parameters (deterministic synthetic init, shapes from ConvNet.__init__)
# ---------------------------------------------------------------------------

def _build_banded_conv(w_torch, conv_bias, cin, cout, spatial, pad=PAD, eps=1e-5):
    """Fold eval-mode BN into the conv and lay the weight out as KH banded matrices.

    band_w[kh][(w+kw)*cin + ci, col(w, c)] = W[c, ci, kh, kw] * bn_scale[c], with output column
    index col(w, c) = (w%2)*(W//2)*Cout + (w//2)*Cout + c (parity-major for contiguous pooling).
    """
    ksize = w_torch.shape[2]
    w_np = np.asarray(w_torch, np.float32)            # (Cout, Cin, KH, KW)
    b_np = np.asarray(conv_bias, np.float32)          # (Cout,)
    # BatchNorm2d defaults: gamma=1, beta=0, running_mean=0, running_var=1.
    gamma = np.ones(cout, np.float32)
    beta = np.zeros(cout, np.float32)
    rmean = np.zeros(cout, np.float32)
    rvar = np.ones(cout, np.float32)
    scale = gamma / np.sqrt(rvar + eps)                # > 0 (needed for pool-before-affine)
    bias = scale * (b_np - rmean) + beta

    wk = np.transpose(w_np, (2, 3, 1, 0)) * scale[None, None, None, :]   # (KH, KW, Cin, Cout)
    w_sp = spatial
    wp = w_sp + 2 * pad
    w2 = w_sp // 2
    band = np.zeros((ksize, wp * cin, w_sp * cout), np.float32)
    for kh in range(ksize):
        for kw in range(ksize):
            for w in range(w_sp):
                col0 = (w % 2) * (w2 * cout) + (w // 2) * cout
                row0 = (w + kw) * cin
                band[kh, row0:row0 + cin, col0:col0 + cout] = wk[kh, kw]
    bias_tile = np.tile(bias, w2).reshape(1, w2 * cout)
    return jnp.asarray(band), jnp.asarray(bias_tile)


def init_params(key, num_classes=NUM_CLASSES):
    k1, k2, k3, k4, k5, k6 = jax.random.split(key, 6)

    w1 = 0.1 * jax.random.normal(k1, (16, 1, KSIZE, KSIZE), jnp.float32)
    b1 = 0.1 * jax.random.normal(k2, (16,), jnp.float32)
    w2 = 0.1 * jax.random.normal(k3, (32, 16, KSIZE, KSIZE), jnp.float32)
    b2 = 0.1 * jax.random.normal(k4, (32,), jnp.float32)

    band1, bias1 = _build_banded_conv(w1, b1, cin=1, cout=16, spatial=28)
    band2, bias2 = _build_banded_conv(w2, b2, cin=16, cout=32, spatial=14)

    fc_in = 7 * 7 * 32
    fc_w = 0.05 * jax.random.normal(k5, (num_classes, fc_in), jnp.float32)
    fc_b = 0.05 * jax.random.normal(k6, (num_classes,), jnp.float32)
    # Permute FC weight columns from PyTorch's (C,H,W) flatten order to our NHWC (H,W,C)
    # flatten order (removes the runtime NHWC->NCHW transpose), transpose to (fc_in, classes),
    # and zero-pad the class dim to a full 128-lane output.
    fc_w_np = np.asarray(fc_w, np.float32).reshape(num_classes, 32, 7, 7)
    fc_w_hwc = np.transpose(fc_w_np, (0, 2, 3, 1)).reshape(num_classes, fc_in)
    nc_pad = 128
    fc_wt = np.zeros((fc_in, nc_pad), np.float32)
    fc_wt[:, :num_classes] = fc_w_hwc.T
    fc_bias = np.zeros((1, nc_pad), np.float32)
    fc_bias[0, :num_classes] = np.asarray(fc_b, np.float32)

    return dict(B1=band1, bias1=bias1, B2=band2, bias2=bias2,
                fc_wt=jnp.asarray(fc_wt), fc_b=jnp.asarray(fc_bias))


# ---------------------------------------------------------------------------
# Forward pass (mirrors ConvNet.forward)
# ---------------------------------------------------------------------------

@jax.jit
def convnet_forward(x_nchw, params):
    n = x_nchw.shape[0]
    # layer1: conv(1->16, 5x5, pad 2) + BN + ReLU + maxpool 2x2  (one fused kernel)
    x1 = _prep_conv_input(x_nchw[:, 0], cin=1, pad=PAD)           # (N, 2, 16, 32)
    y1 = conv_bn_relu_pool(x1, params['B1'], params['bias1'])     # (N, 14, 14*16)
    # layer2: conv(16->32, 5x5, pad 2) + BN + ReLU + maxpool 2x2  (one fused kernel)
    x2 = _prep_conv_input(y1, cin=16, pad=PAD)                    # (N, 2, 9, 288)
    y2 = conv_bn_relu_pool(x2, params['B2'], params['bias2'])     # (N, 7, 7*32)
    # flatten (NHWC order; FC weights were permuted to match at init) + FC
    flat = y2.reshape(n, -1)                                      # (N, 1568)
    logits = linear(flat, params['fc_wt'], params['fc_b'])        # (N, 128) padded
    return logits[:, :NUM_CLASSES]


if __name__ == "__main__":
    key = jax.random.PRNGKey(0)
    k_in, k_par = jax.random.split(key)

    # ConvNet's fc (7*7*32) implies 1x28x28 inputs; small batch of 2.
    x = jax.random.normal(k_in, (2, 1, 28, 28), jnp.float32)
    params = init_params(k_par, num_classes=NUM_CLASSES)

    logits = convnet_forward(x, params)
    jax.block_until_ready(logits)
    assert logits.shape == (2, NUM_CLASSES), logits.shape
    print("KERNEL_OK")
</pallas_src>

<mosaic_0001>
module attributes {stable_mosaic.version = 11 : i64} {
  func.func @_conv_bn_relu_pool_kernel(%arg0: i32, %arg1: memref<1x2x16x32xf32, #tpu.memory_space<vmem>>, %arg2: memref<5x32x448xf32, #tpu.memory_space<vmem>>, %arg3: memref<1x224xf32, #tpu.memory_space<vmem>>, %arg4: memref<1x14x224xf32, #tpu.memory_space<vmem>>) attributes {dimension_semantics = [#tpu.dimension_semantics<parallel>], iteration_bounds = array<i64: 2>, scalar_prefetch = 0 : i64, scratch_operands = 0 : i64, tpu.core_type = #tpu.core_type<tc>, window_params = [{transform_indices = @transform_0, window_bounds = array<i64: 1, 2, 16, 32>}, {pipeline_mode = #tpu.pipeline_mode<synchronous>, transform_indices = @transform_1, window_bounds = array<i64: 5, 32, 448>}, {pipeline_mode = #tpu.pipeline_mode<synchronous>, transform_indices = @transform_2, window_bounds = array<i64: 1, 224>}, {transform_indices = @transform_3, window_bounds = array<i64: 1, 14, 224>}]} {
    %c0 = arith.constant 0 : index
    %c0_0 = arith.constant 0 : index
    %c0_1 = arith.constant 0 : index
    %c0_2 = arith.constant 0 : index
    %0 = vector.load %arg1[%c0, %c0_0, %c0_1, %c0_2] : memref<1x2x16x32xf32, #tpu.memory_space<vmem>>, vector<1x1x14x32xf32>
    %1 = vector.shape_cast %0 : vector<1x1x14x32xf32> to vector<14x32xf32>
    %c0_3 = arith.constant 0 : index
    %c0_4 = arith.constant 0 : index
    %c0_5 = arith.constant 0 : index
    %2 = vector.load %arg2[%c0_3, %c0_4, %c0_5] : memref<5x32x448xf32, #tpu.memory_space<vmem>>, vector<1x32x448xf32>
    %3 = vector.shape_cast %2 : vector<1x32x448xf32> to vector<32x448xf32>
    %cst = arith.constant dense<0.000000e+00> : vector<14x448xf32>
    %4 = tpu.matmul %1, %3, %cst {dimension_numbers = #tpu.dot_dimension_numbers<[1], [0], [0], [1], [0, 0, 1, 1], [], []>} : vector<14x32xf32>, vector<32x448xf32>, vector<14x448xf32> -> vector<14x448xf32>
    %c0_6 = arith.constant 0 : index
    %c1 = arith.constant 1 : index
    %c0_7 = arith.constant 0 : index
    %c0_8 = arith.constant 0 : index
    %5 = vector.load %arg1[%c0_6, %c1, %c0_7, %c0_8] : memref<1x2x16x32xf32, #tpu.memory_space<vmem>>, vector<1x1x14x32xf32>
    %6 = vector.shape_cast %5 : vector<1x1x14x32xf32> to vector<14x32xf32>
    %c1_9 = arith.constant 1 : index
    %c0_10 = arith.constant 0 : index
    %c0_11 = arith.constant 0 : index
    %7 = vector.load %arg2[%c1_9, %c0_10, %c0_11] : memref<5x32x448xf32, #tpu.memory_space<vmem>>, vector<1x32x448xf32>
    %8 = vector.shape_cast %7 : vector<1x32x448xf32> to vector<32x448xf32>
    %cst_12 = arith.constant dense<0.000000e+00> : vector<14x448xf32>
    %9 = tpu.matmul %6, %8, %cst_12 {dimension_numbers = #tpu.dot_dimension_numbers<[1], [0], [0], [1], [0, 0, 1, 1], [], []>} : vector<14x32xf32>, vector<32x448xf32>, vector<14x448xf32> -> vector<14x448xf32>
    %10 = arith.addf %4, %9 : vector<14x448xf32>
    %c0_13 = arith.constant 0 : index
    %c0_14 = arith.constant 0 : index
    %c1_15 = arith.constant 1 : index
    %c0_16 = arith.constant 0 : index
    %11 = vector.load %arg1[%c0_13, %c0_14, %c1_15, %c0_16] : memref<1x2x16x32xf32, #tpu.memory_space<vmem>>, vector<1x1x14x32xf32>
    %12 = vector.shape_cast %11 : vector<1x1x14x32xf32> to vector<14x32xf32>
    %c2 = arith.constant 2 : index
    %c0_17 = arith.constant 0 : index
    %c0_18 = arith.constant 0 : index
    %13 = vector.load %arg2[%c2, %c0_17, %c0_18] : memref<5x32x448xf32, #tpu.memory_space<vmem>>, vector<1x32x448xf32>
    %14 = vector.shape_cast %13 : vector<1x32x448xf32> to vector<32x448xf32>
    %cst_19 = arith.constant dense<0.000000e+00> : vector<14x448xf32>
    %15 = tpu.matmul %12, %14, %cst_19 {dimension_numbers = #tpu.dot_dimension_numbers<[1], [0], [0], [1], [0, 0, 1, 1], [], []>} : vector<14x32xf32>, vector<32x448xf32>, vector<14x448xf32> -> vector<14x448xf32>
    %16 = arith.addf %10, %15 : vector<14x448xf32>
    %c0_20 = arith.constant 0 : index
    %c1_21 = arith.constant 1 : index
    %c1_22 = arith.constant 1 : index
    %c0_23 = arith.constant 0 : index
    %17 = vector.load %arg1[%c0_20, %c1_21, %c1_22, %c0_23] : memref<1x2x16x32xf32, #tpu.memory_space<vmem>>, vector<1x1x14x32xf32>
    %18 = vector.shape_cast %17 : vector<1x1x14x32xf32> to vector<14x32xf32>
    %c3 = arith.constant 3 : index
    %c0_24 = arith.constant 0 : index
    %c0_25 = arith.constant 0 : index
    %19 = vector.load %arg2[%c3, %c0_24, %c0_25] : memref<5x32x448xf32, #tpu.memory_space<vmem>>, vector<1x32x448xf32>
    %20 = vector.shape_cast %19 : vector<1x32x448xf32> to vector<32x448xf32>
    %cst_26 = arith.constant dense<0.000000e+00> : vector<14x448xf32>
    %21 = tpu.matmul %18, %20, %cst_26 {dimension_numbers = #tpu.dot_dimension_numbers<[1], [0], [0], [1], [0, 0, 1, 1], [], []>} : vector<14x32xf32>, vector<32x448xf32>, vector<14x448xf32> -> vector<14x448xf32>
    %22 = arith.addf %16, %21 : vector<14x448xf32>
    %c0_27 = arith.constant 0 : index
    %c0_28 = arith.constant 0 : index
    %c2_29 = arith.constant 2 : index
    %c0_30 = arith.constant 0 : index
    %23 = vector.load %arg1[%c0_27, %c0_28, %c2_29, %c0_30] : memref<1x2x16x32xf32, #tpu.memory_space<vmem>>, vector<1x1x14x32xf32>
    %24 = vector.shape_cast %23 : vector<1x1x14x32xf32> to vector<14x32xf32>
    %c4 = arith.constant 4 : index
    %c0_31 = arith.constant 0 : index
    %c0_32 = arith.constant 0 : index
    %25 = vector.load %arg2[%c4, %c0_31, %c0_32] : memref<5x32x448xf32, #tpu.memory_space<vmem>>, vector<1x32x448xf32>
    %26 = vector.shape_cast %25 : vector<1x32x448xf32> to vector<32x448xf32>
    %cst_33 = arith.constant dense<0.000000e+00> : vector<14x448xf32>
    %27 = tpu.matmul %24, %26, %cst_33 {dimension_numbers = #tpu.dot_dimension_numbers<[1], [0], [0], [1], [0, 0, 1, 1], [], []>} : vector<14x32xf32>, vector<32x448xf32>, vector<14x448xf32> -> vector<14x448xf32>
    %28 = arith.addf %22, %27 : vector<14x448xf32>
    %c0_34 = arith.constant 0 : index
    %c1_35 = arith.constant 1 : index
    %c0_36 = arith.constant 0 : index
    %c0_37 = arith.constant 0 : index
    %29 = vector.load %arg1[%c0_34, %c1_35, %c0_36, %c0_37] : memref<1x2x16x32xf32, #tpu.memory_space<vmem>>, vector<1x1x14x32xf32>
    %30 = vector.shape_cast %29 : vector<1x1x14x32xf32> to vector<14x32xf32>
    %c0_38 = arith.constant 0 : index
    %c0_39 = arith.constant 0 : index
    %c0_40 = arith.constant 0 : index
    %31 = vector.load %arg2[%c0_38, %c0_39, %c0_40] : memref<5x32x448xf32, #tpu.memory_space<vmem>>, vector<1x32x448xf32>
    %32 = vector.shape_cast %31 : vector<1x32x448xf32> to vector<32x448xf32>
    %cst_41 = arith.constant dense<0.000000e+00> : vector<14x448xf32>
    %33 = tpu.matmul %30, %32, %cst_41 {dimension_numbers = #tpu.dot_dimension_numbers<[1], [0], [0], [1], [0, 0, 1, 1], [], []>} : vector<14x32xf32>, vector<32x448xf32>, vector<14x448xf32> -> vector<14x448xf32>
    %c0_42 = arith.constant 0 : index
    %c0_43 = arith.constant 0 : index
    %c1_44 = arith.constant 1 : index
    %c0_45 = arith.constant 0 : index
    %34 = vector.load %arg1[%c0_42, %c0_43, %c1_44, %c0_45] : memref<1x2x16x32xf32, #tpu.memory_space<vmem>>, vector<1x1x14x32xf32>
    %35 = vector.shape_cast %34 : vector<1x1x14x32xf32> to vector<14x32xf32>
    %c1_46 = arith.constant 1 : index
    %c0_47 = arith.constant 0 : index
    %c0_48 = arith.constant 0 : index
    %36 = vector.load %arg2[%c1_46, %c0_47, %c0_48] : memref<5x32x448xf32, #tpu.memory_space<vmem>>, vector<1x32x448xf32>
    %37 = vector.shape_cast %36 : vector<1x32x448xf32> to vector<32x448xf32>
    %cst_49 = arith.constant dense<0.000000e+00> : vector<14x448xf32>
    %38 = tpu.matmul %35, %37, %cst_49 {dimension_numbers = #tpu.dot_dimension_numbers<[1], [0], [0], [1], [0, 0, 1, 1], [], []>} : vector<14x32xf32>, vector<32x448xf32>, vector<14x448xf32> -> vector<14x448xf32>
    %39 = arith.addf %33, %38 : vector<14x448xf32>
    %c0_50 = arith.constant 0 : index
    %c1_51 = arith.constant 1 : index
    %c1_52 = arith.constant 1 : index
    %c0_53 = arith.constant 0 : index
    %40 = vector.load %arg1[%c0_50, %c1_51, %c1_52, %c0_53] : memref<1x2x16x32xf32, #tpu.memory_space<vmem>>, vector<1x1x14x32xf32>
    %41 = vector.shape_cast %40 : vector<1x1x14x32xf32> to vector<14x32xf32>
    %c2_54 = arith.constant 2 : index
    %c0_55 = arith.constant 0 : index
    %c0_56 = arith.constant 0 : index
    %42 = vector.load %arg2[%c2_54, %c0_55, %c0_56] : memref<5x32x448xf32, #tpu.memory_space<vmem>>, vector<1x32x448xf32>
    %43 = vector.shape_cast %42 : vector<1x32x448xf32> to vector<32x448xf32>
    %cst_57 = arith.constant dense<0.000000e+00> : vector<14x448xf32>
    %44 = tpu.matmul %41, %43, %cst_57 {dimension_numbers = #tpu.dot_dimension_numbers<[1], [0], [0], [1], [0, 0, 1, 1], [], []>} : vector<14x32xf32>, vector<32x448xf32>, vector<14x448xf32> -> vector<14x448xf32>
    %45 = arith.addf %39, %44 : vector<14x448xf32>
    %c0_58 = arith.constant 0 : index
    %c0_59 = arith.constant 0 : index
    %c2_60 = arith.constant 2 : index
    %c0_61 = arith.constant 0 : index
    %46 = vector.load %arg1[%c0_58, %c0_59, %c2_60, %c0_61] : memref<1x2x16x32xf32, #tpu.memory_space<vmem>>, vector<1x1x14x32xf32>
    %47 = vector.shape_cast %46 : vector<1x1x14x32xf32> to vector<14x32xf32>
    %c3_62 = arith.constant 3 : index
    %c0_63 = arith.constant 0 : index
    %c0_64 = arith.constant 0 : index
    %48 = vector.load %arg2[%c3_62, %c0_63, %c0_64] : memref<5x32x448xf32, #tpu.memory_space<vmem>>, vector<1x32x448xf32>
    %49 = vector.shape_cast %48 : vector<1x32x448xf32> to vector<32x448xf32>
    %cst_65 = arith.constant dense<0.000000e+00> : vector<14x448xf32>
    %50 = tpu.matmul %47, %49, %cst_65 {dimension_numbers = #tpu.dot_dimension_numbers<[1], [0], [0], [1], [0, 0, 1, 1], [], []>} : vector<14x32xf32>, vector<32x448xf32>, vector<14x448xf32> -> vector<14x448xf32>
    %51 = arith.addf %45, %50 : vector<14x448xf32>
    %c0_66 = arith.constant 0 : index
    %c1_67 = arith.constant 1 : index
    %c2_68 = arith.constant 2 : index
    %c0_69 = arith.constant 0 : index
    %52 = vector.load %arg1[%c0_66, %c1_67, %c2_68, %c0_69] : memref<1x2x16x32xf32, #tpu.memory_space<vmem>>, vector<1x1x14x32xf32>
    %53 = vector.shape_cast %52 : vector<1x1x14x32xf32> to vector<14x32xf32>
    %c4_70 = arith.constant 4 : index
    %c0_71 = arith.constant 0 : index
    %c0_72 = arith.constant 0 : index
    %54 = vector.load %arg2[%c4_70, %c0_71, %c0_72] : memref<5x32x448xf32, #tpu.memory_space<vmem>>, vector<1x32x448xf32>
    %55 = vector.shape_cast %54 : vector<1x32x448xf32> to vector<32x448xf32>
    %cst_73 = arith.constant dense<0.000000e+00> : vector<14x448xf32>
    %56 = tpu.matmul %53, %55, %cst_73 {dimension_numbers = #tpu.dot_dimension_numbers<[1], [0], [0], [1], [0, 0, 1, 1], [], []>} : vector<14x32xf32>, vector<32x448xf32>, vector<14x448xf32> -> vector<14x448xf32>
    %57 = arith.addf %51, %56 : vector<14x448xf32>
    %58 = arith.maximumf %28, %57 : vector<14x448xf32>
    %59 = vector.extract_strided_slice %58 {offsets = [0, 0], sizes = [14, 224], strides = [1, 1]} : vector<14x448xf32> to vector<14x224xf32>
    %60 = vector.extract_strided_slice %58 {offsets = [0, 224], sizes = [14, 224], strides = [1, 1]} : vector<14x448xf32> to vector<14x224xf32>
    %61 = arith.maximumf %59, %60 : vector<14x224xf32>
    %c0_74 = arith.constant 0 : index
    %c0_75 = arith.constant 0 : index
    %62 = vector.load %arg3[%c0_74, %c0_75] : memref<1x224xf32, #tpu.memory_space<vmem>>, vector<1x224xf32>
    %63 = vector.broadcast %62 : vector<1x224xf32> to vector<14x224xf32>
    %64 = arith.addf %61, %63 : vector<14x224xf32>
    %cst_76 = arith.constant 0.000000e+00 : f32
    %65 = vector.broadcast %cst_76 : f32 to vector<14x224xf32>
    %66 = arith.maximumf %64, %65 : vector<14x224xf32>
    %c0_77 = arith.constant 0 : index
    %c0_78 = arith.constant 0 : index
    %c0_79 = arith.constant 0 : index
    %67 = vector.load %arg4[%c0_77, %c0_78, %c0_79] : memref<1x14x224xf32, #tpu.memory_space<vmem>>, vector<1x14x224xf32>
    %68 = vector.shape_cast %67 : vector<1x14x224xf32> to vector<14x224xf32>
    %69 = vector.shape_cast %66 : vector<14x224xf32> to vector<1x14x224xf32>
    tpu.vector_store %arg4[%c0_77, %c0_78, %c0_79], %69 {strides = array<i32>} : memref<1x14x224xf32, #tpu.memory_space<vmem>>, vector<1x14x224xf32>,
    return
  }
  func.func @transform_0(%arg0: i32) -> (i32, i32, i32, i32) {
    %c0_i32 = arith.constant 0 : i32
    %c0_i32_0 = arith.constant 0 : i32
    %c0_i32_1 = arith.constant 0 : i32
    %c0_i32_2 = arith.constant 0 : i32
    return %arg0, %c0_i32, %c0_i32_0, %c0_i32_1 : i32, i32, i32, i32
  }
  func.func @transform_1(%arg0: i32) -> (i32, i32, i32) {
    %c0_i32 = arith.constant 0 : i32
    %c0_i32_0 = arith.constant 0 : i32
    %c0_i32_1 = arith.constant 0 : i32
    %c0_i32_2 = arith.constant 0 : i32
    return %c0_i32, %c0_i32_0, %c0_i32_1 : i32, i32, i32
  }
  func.func @transform_2(%arg0: i32) -> (i32, i32) {
    %c0_i32 = arith.constant 0 : i32
    %c0_i32_0 = arith.constant 0 : i32
    %c0_i32_1 = arith.constant 0 : i32
    return %c0_i32, %c0_i32_0 : i32, i32
  }
  func.func @transform_3(%arg0: i32) -> (i32, i32, i32) {
    %c0_i32 = arith.constant 0 : i32
    %c0_i32_0 = arith.constant 0 : i32
    %c0_i32_1 = arith.constant 0 : i32
    return %arg0, %c0_i32, %c0_i32_0 : i32, i32, i32
  }
}

module attributes {stable_mosaic.version = 11 : i64} {
  func.func @_conv_bn_relu_pool_kernel(%arg0: i32, %arg1: memref<1x2x9x288xf32, #tpu.memory_space<vmem>>, %arg2: memref<5x288x448xf32, #tpu.memory_space<vmem>>, %arg3: memref<1x224xf32, #tpu.memory_space<vmem>>, %arg4: memref<1x7x224xf32, #tpu.memory_space<vmem>>) attributes {dimension_semantics = [#tpu.dimension_semantics<parallel>], iteration_bounds = array<i64: 2>, scalar_prefetch = 0 : i64, scratch_operands = 0 : i64, tpu.core_type = #tpu.core_type<tc>, window_params = [{transform_indices = @transform_0, window_bounds = array<i64: 1, 2, 9, 288>}, {pipeline_mode = #tpu.pipeline_mode<synchronous>, transform_indices = @transform_1, window_bounds = array<i64: 5, 288, 448>}, {pipeline_mode = #tpu.pipeline_mode<synchronous>, transform_indices = @transform_2, window_bounds = array<i64: 1, 224>}, {transform_indices = @transform_3, window_bounds = array<i64: 1, 7, 224>}]} {
    %c0 = arith.constant 0 : index
    %c0_0 = arith.constant 0 : index
    %c0_1 = arith.constant 0 : index
    %c0_2 = arith.constant 0 : index
    %0 = vector.load %arg1[%c0, %c0_0, %c0_1, %c0_2] : memref<1x2x9x288xf32, #tpu.memory_space<vmem>>, vector<1x1x7x288xf32>
    %1 = vector.shape_cast %0 : vector<1x1x7x288xf32> to vector<7x288xf32>
    %c0_3 = arith.constant 0 : index
    %c0_4 = arith.constant 0 : index
    %c0_5 = arith.constant 0 : index
    %2 = vector.load %arg2[%c0_3, %c0_4, %c0_5] : memref<5x288x448xf32, #tpu.memory_space<vmem>>, vector<1x288x448xf32>
    %3 = vector.shape_cast %2 : vector<1x288x448xf32> to vector<288x448xf32>
    %cst = arith.constant dense<0.000000e+00> : vector<7x448xf32>
    %4 = tpu.matmul %1, %3, %cst {dimension_numbers = #tpu.dot_dimension_numbers<[1], [0], [0], [1], [0, 0, 1, 1], [], []>} : vector<7x288xf32>, vector<288x448xf32>, vector<7x448xf32> -> vector<7x448xf32>
    %c0_6 = arith.constant 0 : index
    %c1 = arith.constant 1 : index
    %c0_7 = arith.constant 0 : index
    %c0_8 = arith.constant 0 : index
    %5 = vector.load %arg1[%c0_6, %c1, %c0_7, %c0_8] : memref<1x2x9x288xf32, #tpu.memory_space<vmem>>, vector<1x1x7x288xf32>
    %6 = vector.shape_cast %5 : vector<1x1x7x288xf32> to vector<7x288xf32>
    %c1_9 = arith.constant 1 : index
    %c0_10 = arith.constant 0 : index
    %c0_11 = arith.constant 0 : index
    %7 = vector.load %arg2[%c1_9, %c0_10, %c0_11] : memref<5x288x448xf32, #tpu.memory_space<vmem>>, vector<1x288x448xf32>
    %8 = vector.shape_cast %7 : vector<1x288x448xf32> to vector<288x448xf32>
    %cst_12 = arith.constant dense<0.000000e+00> : vector<7x448xf32>
    %9 = tpu.matmul %6, %8, %cst_12 {dimension_numbers = #tpu.dot_dimension_numbers<[1], [0], [0], [1], [0, 0, 1, 1], [], []>} : vector<7x288xf32>, vector<288x448xf32>, vector<7x448xf32> -> vector<7x448xf32>
    %10 = arith.addf %4, %9 : vector<7x448xf32>
    %c0_13 = arith.constant 0 : index
    %c0_14 = arith.constant 0 : index
    %c1_15 = arith.constant 1 : index
    %c0_16 = arith.constant 0 : index
    %11 = vector.load %arg1[%c0_13, %c0_14, %c1_15, %c0_16] : memref<1x2x9x288xf32, #tpu.memory_space<vmem>>, vector<1x1x7x288xf32>
    %12 = vector.shape_cast %11 : vector<1x1x7x288xf32> to vector<7x288xf32>
    %c2 = arith.constant 2 : index
    %c0_17 = arith.constant 0 : index
    %c0_18 = arith.constant 0 : index
    %13 = vector.load %arg2[%c2, %c0_17, %c0_18] : memref<5x288x448xf32, #tpu.memory_space<vmem>>, vector<1x288x448xf32>
    %14 = vector.shape_cast %13 : vector<1x288x448xf32> to vector<288x448xf32>
    %cst_19 = arith.constant dense<0.000000e+00> : vector<7x448xf32>
    %15 = tpu.matmul %12, %14, %cst_19 {dimension_numbers = #tpu.dot_dimension_numbers<[1], [0], [0], [1], [0, 0, 1, 1], [], []>} : vector<7x288xf32>, vector<288x448xf32>, vector<7x448xf32> -> vector<7x448xf32>
    %16 = arith.addf %10, %15 : vector<7x448xf32>
    %c0_20 = arith.constant 0 : index
    %c1_21 = arith.constant 1 : index
    %c1_22 = arith.constant 1 : index
    %c0_23 = arith.constant 0 : index
    %17 = vector.load %arg1[%c0_20, %c1_21, %c1_22, %c0_23] : memref<1x2x9x288xf32, #tpu.memory_space<vmem>>, vector<1x1x7x288xf32>
    %18 = vector.shape_cast %17 : vector<1x1x7x288xf32> to vector<7x288xf32>
    %c3 = arith.constant 3 : index
    %c0_24 = arith.constant 0 : index
    %c0_25 = arith.constant 0 : index
    %19 = vector.load %arg2[%c3, %c0_24, %c0_25] : memref<5x288x448xf32, #tpu.memory_space<vmem>>, vector<1x288x448xf32>
    %20 = vector.shape_cast %19 : vector<1x288x448xf32> to vector<288x448xf32>
    %cst_26 = arith.constant dense<0.000000e+00> : vector<7x448xf32>
    %21 = tpu.matmul %18, %20, %cst_26 {dimension_numbers = #tpu.dot_dimension_numbers<[1], [0], [0], [1], [0, 0, 1, 1], [], []>} : vector<7x288xf32>, vector<288x448xf32>, vector<7x448xf32> -> vector<7x448xf32>
    %22 = arith.addf %16, %21 : vector<7x448xf32>
    %c0_27 = arith.constant 0 : index
    %c0_28 = arith.constant 0 : index
    %c2_29 = arith.constant 2 : index
    %c0_30 = arith.constant 0 : index
    %23 = vector.load %arg1[%c0_27, %c0_28, %c2_29, %c0_30] : memref<1x2x9x288xf32, #tpu.memory_space<vmem>>, vector<1x1x7x288xf32>
    %24 = vector.shape_cast %23 : vector<1x1x7x288xf32> to vector<7x288xf32>
    %c4 = arith.constant 4 : index
    %c0_31 = arith.constant 0 : index
    %c0_32 = arith.constant 0 : index
    %25 = vector.load %arg2[%c4, %c0_31, %c0_32] : memref<5x288x448xf32, #tpu.memory_space<vmem>>, vector<1x288x448xf32>
    %26 = vector.shape_cast %25 : vector<1x288x448xf32> to vector<288x448xf32>
    %cst_33 = arith.constant dense<0.000000e+00> : vector<7x448xf32>
    %27 = tpu.matmul %24, %26, %cst_33 {dimension_numbers = #tpu.dot_dimension_numbers<[1], [0], [0], [1], [0, 0, 1, 1], [], []>} : vector<7x288xf32>, vector<288x448xf32>, vector<7x448xf32> -> vector<7x448xf32>
    %28 = arith.addf %22, %27 : vector<7x448xf32>
    %c0_34 = arith.constant 0 : index
    %c1_35 = arith.constant 1 : index
    %c0_36 = arith.constant 0 : index
    %c0_37 = arith.constant 0 : index
    %29 = vector.load %arg1[%c0_34, %c1_35, %c0_36, %c0_37] : memref<1x2x9x288xf32, #tpu.memory_space<vmem>>, vector<1x1x7x288xf32>
    %30 = vector.shape_cast %29 : vector<1x1x7x288xf32> to vector<7x288xf32>
    %c0_38 = arith.constant 0 : index
    %c0_39 = arith.constant 0 : index
    %c0_40 = arith.constant 0 : index
    %31 = vector.load %arg2[%c0_38, %c0_39, %c0_40] : memref<5x288x448xf32, #tpu.memory_space<vmem>>, vector<1x288x448xf32>
    %32 = vector.shape_cast %31 : vector<1x288x448xf32> to vector<288x448xf32>
    %cst_41 = arith.constant dense<0.000000e+00> : vector<7x448xf32>
    %33 = tpu.matmul %30, %32, %cst_41 {dimension_numbers = #tpu.dot_dimension_numbers<[1], [0], [0], [1], [0, 0, 1, 1], [], []>} : vector<7x288xf32>, vector<288x448xf32>, vector<7x448xf32> -> vector<7x448xf32>
    %c0_42 = arith.constant 0 : index
    %c0_43 = arith.constant 0 : index
    %c1_44 = arith.constant 1 : index
    %c0_45 = arith.constant 0 : index
    %34 = vector.load %arg1[%c0_42, %c0_43, %c1_44, %c0_45] : memref<1x2x9x288xf32, #tpu.memory_space<vmem>>, vector<1x1x7x288xf32>
    %35 = vector.shape_cast %34 : vector<1x1x7x288xf32> to vector<7x288xf32>
    %c1_46 = arith.constant 1 : index
    %c0_47 = arith.constant 0 : index
    %c0_48 = arith.constant 0 : index
    %36 = vector.load %arg2[%c1_46, %c0_47, %c0_48] : memref<5x288x448xf32, #tpu.memory_space<vmem>>, vector<1x288x448xf32>
    %37 = vector.shape_cast %36 : vector<1x288x448xf32> to vector<288x448xf32>
    %cst_49 = arith.constant dense<0.000000e+00> : vector<7x448xf32>
    %38 = tpu.matmul %35, %37, %cst_49 {dimension_numbers = #tpu.dot_dimension_numbers<[1], [0], [0], [1], [0, 0, 1, 1], [], []>} : vector<7x288xf32>, vector<288x448xf32>, vector<7x448xf32> -> vector<7x448xf32>
    %39 = arith.addf %33, %38 : vector<7x448xf32>
    %c0_50 = arith.constant 0 : index
    %c1_51 = arith.constant 1 : index
    %c1_52 = arith.constant 1 : index
    %c0_53 = arith.constant 0 : index
    %40 = vector.load %arg1[%c0_50, %c1_51, %c1_52, %c0_53] : memref<1x2x9x288xf32, #tpu.memory_space<vmem>>, vector<1x1x7x288xf32>
    %41 = vector.shape_cast %40 : vector<1x1x7x288xf32> to vector<7x288xf32>
    %c2_54 = arith.constant 2 : index
    %c0_55 = arith.constant 0 : index
    %c0_56 = arith.constant 0 : index
    %42 = vector.load %arg2[%c2_54, %c0_55, %c0_56] : memref<5x288x448xf32, #tpu.memory_space<vmem>>, vector<1x288x448xf32>
    %43 = vector.shape_cast %42 : vector<1x288x448xf32> to vector<288x448xf32>
    %cst_57 = arith.constant dense<0.000000e+00> : vector<7x448xf32>
    %44 = tpu.matmul %41, %43, %cst_57 {dimension_numbers = #tpu.dot_dimension_numbers<[1], [0], [0], [1], [0, 0, 1, 1], [], []>} : vector<7x288xf32>, vector<288x448xf32>, vector<7x448xf32> -> vector<7x448xf32>
    %45 = arith.addf %39, %44 : vector<7x448xf32>
    %c0_58 = arith.constant 0 : index
    %c0_59 = arith.constant 0 : index
    %c2_60 = arith.constant 2 : index
    %c0_61 = arith.constant 0 : index
    %46 = vector.load %arg1[%c0_58, %c0_59, %c2_60, %c0_61] : memref<1x2x9x288xf32, #tpu.memory_space<vmem>>, vector<1x1x7x288xf32>
    %47 = vector.shape_cast %46 : vector<1x1x7x288xf32> to vector<7x288xf32>
    %c3_62 = arith.constant 3 : index
    %c0_63 = arith.constant 0 : index
    %c0_64 = arith.constant 0 : index
    %48 = vector.load %arg2[%c3_62, %c0_63, %c0_64] : memref<5x288x448xf32, #tpu.memory_space<vmem>>, vector<1x288x448xf32>
    %49 = vector.shape_cast %48 : vector<1x288x448xf32> to vector<288x448xf32>
    %cst_65 = arith.constant dense<0.000000e+00> : vector<7x448xf32>
    %50 = tpu.matmul %47, %49, %cst_65 {dimension_numbers = #tpu.dot_dimension_numbers<[1], [0], [0], [1], [0, 0, 1, 1], [], []>} : vector<7x288xf32>, vector<288x448xf32>, vector<7x448xf32> -> vector<7x448xf32>
    %51 = arith.addf %45, %50 : vector<7x448xf32>
    %c0_66 = arith.constant 0 : index
    %c1_67 = arith.constant 1 : index
    %c2_68 = arith.constant 2 : index
    %c0_69 = arith.constant 0 : index
    %52 = vector.load %arg1[%c0_66, %c1_67, %c2_68, %c0_69] : memref<1x2x9x288xf32, #tpu.memory_space<vmem>>, vector<1x1x7x288xf32>
    %53 = vector.shape_cast %52 : vector<1x1x7x288xf32> to vector<7x288xf32>
    %c4_70 = arith.constant 4 : index
    %c0_71 = arith.constant 0 : index
    %c0_72 = arith.constant 0 : index
    %54 = vector.load %arg2[%c4_70, %c0_71, %c0_72] : memref<5x288x448xf32, #tpu.memory_space<vmem>>, vector<1x288x448xf32>
    %55 = vector.shape_cast %54 : vector<1x288x448xf32> to vector<288x448xf32>
    %cst_73 = arith.constant dense<0.000000e+00> : vector<7x448xf32>
    %56 = tpu.matmul %53, %55, %cst_73 {dimension_numbers = #tpu.dot_dimension_numbers<[1], [0], [0], [1], [0, 0, 1, 1], [], []>} : vector<7x288xf32>, vector<288x448xf32>, vector<7x448xf32> -> vector<7x448xf32>
    %57 = arith.addf %51, %56 : vector<7x448xf32>
    %58 = arith.maximumf %28, %57 : vector<7x448xf32>
    %59 = vector.extract_strided_slice %58 {offsets = [0, 0], sizes = [7, 224], strides = [1, 1]} : vector<7x448xf32> to vector<7x224xf32>
    %60 = vector.extract_strided_slice %58 {offsets = [0, 224], sizes = [7, 224], strides = [1, 1]} : vector<7x448xf32> to vector<7x224xf32>
    %61 = arith.maximumf %59, %60 : vector<7x224xf32>
    %c0_74 = arith.constant 0 : index
    %c0_75 = arith.constant 0 : index
    %62 = vector.load %arg3[%c0_74, %c0_75] : memref<1x224xf32, #tpu.memory_space<vmem>>, vector<1x224xf32>
    %63 = vector.broadcast %62 : vector<1x224xf32> to vector<7x224xf32>
    %64 = arith.addf %61, %63 : vector<7x224xf32>
    %cst_76 = arith.constant 0.000000e+00 : f32
    %65 = vector.broadcast %cst_76 : f32 to vector<7x224xf32>
    %66 = arith.maximumf %64, %65 : vector<7x224xf32>
    %c0_77 = arith.constant 0 : index
    %c0_78 = arith.constant 0 : index
    %c0_79 = arith.constant 0 : index
    %67 = vector.load %arg4[%c0_77, %c0_78, %c0_79] : memref<1x7x224xf32, #tpu.memory_space<vmem>>, vector<1x7x224xf32>
    %68 = vector.shape_cast %67 : vector<1x7x224xf32> to vector<7x224xf32>
    %69 = vector.shape_cast %66 : vector<7x224xf32> to vector<1x7x224xf32>
    tpu.vector_store %arg4[%c0_77, %c0_78, %c0_79], %69 {strides = array<i32>} : memref<1x7x224xf32, #tpu.memory_space<vmem>>, vector<1x7x224xf32>,
    return
  }
  func.func @transform_0(%arg0: i32) -> (i32, i32, i32, i32) {
    %c0_i32 = arith.constant 0 : i32
    %c0_i32_0 = arith.constant 0 : i32
    %c0_i32_1 = arith.constant 0 : i32
    %c0_i32_2 = arith.constant 0 : i32
    return %arg0, %c0_i32, %c0_i32_0, %c0_i32_1 : i32, i32, i32, i32
  }
  func.func @transform_1(%arg0: i32) -> (i32, i32, i32) {
    %c0_i32 = arith.constant 0 : i32
    %c0_i32_0 = arith.constant 0 : i32
    %c0_i32_1 = arith.constant 0 : i32
    %c0_i32_2 = arith.constant 0 : i32
    return %c0_i32, %c0_i32_0, %c0_i32_1 : i32, i32, i32
  }
  func.func @transform_2(%arg0: i32) -> (i32, i32) {
    %c0_i32 = arith.constant 0 : i32
    %c0_i32_0 = arith.constant 0 : i32
    %c0_i32_1 = arith.constant 0 : i32
    return %c0_i32, %c0_i32_0 : i32, i32
  }
  func.func @transform_3(%arg0: i32) -> (i32, i32, i32) {
    %c0_i32 = arith.constant 0 : i32
    %c0_i32_0 = arith.constant 0 : i32
    %c0_i32_1 = arith.constant 0 : i32
    return %arg0, %c0_i32, %c0_i32_0 : i32, i32, i32
  }
}

module attributes {stable_mosaic.version = 11 : i64} {
  func.func @_fc_kernel(%arg0: i32, %arg1: memref<2x1568xf32, #tpu.memory_space<vmem>>, %arg2: memref<1568x128xf32, #tpu.memory_space<vmem>>, %arg3: memref<1x128xf32, #tpu.memory_space<vmem>>, %arg4: memref<2x128xf32, #tpu.memory_space<vmem>>) attributes {dimension_semantics = [#tpu.dimension_semantics<parallel>], iteration_bounds = array<i64: 1>, scalar_prefetch = 0 : i64, scratch_operands = 0 : i64, tpu.core_type = #tpu.core_type<tc>, window_params = [{transform_indices = @transform_0, window_bounds = array<i64: 2, 1568>}, {pipeline_mode = #tpu.pipeline_mode<synchronous>, transform_indices = @transform_1, window_bounds = array<i64: 1568, 128>}, {pipeline_mode = #tpu.pipeline_mode<synchronous>, transform_indices = @transform_2, window_bounds = array<i64: 1, 128>}, {transform_indices = @transform_3, window_bounds = array<i64: 2, 128>}]} {
    %c0 = arith.constant 0 : index
    %c0_0 = arith.constant 0 : index
    %0 = vector.load %arg1[%c0, %c0_0] : memref<2x1568xf32, #tpu.memory_space<vmem>>, vector<2x1568xf32>
    %c0_1 = arith.constant 0 : index
    %c0_2 = arith.constant 0 : index
    %1 = vector.load %arg2[%c0_1, %c0_2] : memref<1568x128xf32, #tpu.memory_space<vmem>>, vector<1568x128xf32>
    %cst = arith.constant dense<0.000000e+00> : vector<2x128xf32>
    %2 = tpu.matmul %0, %1, %cst {dimension_numbers = #tpu.dot_dimension_numbers<[1], [0], [0], [1], [0, 0, 1, 1], [], []>} : vector<2x1568xf32>, vector<1568x128xf32>, vector<2x128xf32> -> vector<2x128xf32>
    %c0_3 = arith.constant 0 : index
    %c0_4 = arith.constant 0 : index
    %3 = vector.load %arg3[%c0_3, %c0_4] : memref<1x128xf32, #tpu.memory_space<vmem>>, vector<1x128xf32>
    %4 = vector.broadcast %3 : vector<1x128xf32> to vector<2x128xf32>
    %5 = arith.addf %2, %4 : vector<2x128xf32>
    %c0_5 = arith.constant 0 : index
    %c0_6 = arith.constant 0 : index
    %6 = vector.load %arg4[%c0_5, %c0_6] : memref<2x128xf32, #tpu.memory_space<vmem>>, vector<2x128xf32>
    tpu.vector_store %arg4[%c0_5, %c0_6], %5 {strides = array<i32>} : memref<2x128xf32, #tpu.memory_space<vmem>>, vector<2x128xf32>,
    return
  }
  func.func @transform_0(%arg0: i32) -> (i32, i32) {
    %c0_i32 = arith.constant 0 : i32
    %c0_i32_0 = arith.constant 0 : i32
    return %arg0, %c0_i32 : i32, i32
  }
  func.func @transform_1(%arg0: i32) -> (i32, i32) {
    %c0_i32 = arith.constant 0 : i32
    %c0_i32_0 = arith.constant 0 : i32
    %c0_i32_1 = arith.constant 0 : i32
    return %c0_i32, %c0_i32_0 : i32, i32
  }
  func.func @transform_2(%arg0: i32) -> (i32, i32) {
    %c0_i32 = arith.constant 0 : i32
    %c0_i32_0 = arith.constant 0 : i32
    %c0_i32_1 = arith.constant 0 : i32
    return %c0_i32, %c0_i32_0 : i32, i32
  }
  func.func @transform_3(%arg0: i32) -> (i32, i32) {
    %c0_i32 = arith.constant 0 : i32
    %c0_i32_0 = arith.constant 0 : i32
    return %arg0, %c0_i32 : i32, i32
  }
}

</mosaic_0001>

<llo_original>
// kernel: convnet_forward.5
$region0: #{convnet_forward.5}
  #allocation0 [shape = 'u32[]', space=smem, size = 0x4, offset = 0x4, fixed_abs, tag = 'smem constant byte address 0x4 - core index']
  #allocation1 [shape = 'u32[144,128]{1,0:T(1,128)}', space=vmem, size = 0x12000, scoped, tag = 'internal scratch']
  %s0 = inlined_call_operand.vmem [shape: f32[2,1568], index: 0, kind: input, shape index: {}]
  %s1 = inlined_call_operand.vmem [shape: f32[1568,128], index: 1, kind: input, shape index: {}]
  %s2 = inlined_call_operand.vmem [shape: f32[1,128], index: 2, kind: input, shape index: {}]
  %s3 = inlined_call_operand.hbm [shape: f32[2,128], index: 3, kind: output, shape index: {}]
  %s4 = sld [smem:[#allocation0]]
  $region22: #{convnet_forward.5} parent=0
    _
  %s6 = ssub.s32 1, %s4
  %s7 = scalar_select 0, %s6, %s4
  $region1: #{convnet_forward.5} parent=0
    #allocation2 [shape = 'u8[1024]{0}', space=vmem, size = 0x400, scoped, tag = 'output window, operand 0, single buffered']
    #allocation3 [shape = 's32[1]{0}', space=sflag, size = 0x4, scoped, tag = 'scoped memory for convnet_forward.5']
    %8 = vsyncpa [#allocation3], 0
    // Predicated region
    $region2: #{convnet_forward.5} parent=1 // pred_check
      _
    $region3: #{convnet_forward.5} parent=1 // pred_check_branch
      %10 = sbr.rel (0) target = $region5
    $region4: #{convnet_forward.5} parent=1 // pred_region
      _
    $region5: #{convnet_forward.5} parent=1 // pred_fallthru
      _
    // Predicated region
    $region6: #{convnet_forward.5} parent=1 // pred_check
      _
    $region7: #{convnet_forward.5} parent=1 // pred_check_branch
      %12 = sbr.rel (0) target = $region9
    $region8: #{convnet_forward.5} parent=1 // pred_region
      _
    $region9: #{convnet_forward.5} parent=1 // pred_fallthru
      _
    // Predicated region
    $region10: #{convnet_forward.5} parent=1 // pred_check
      _
    $region11: #{convnet_forward.5} parent=1 // pred_check_branch
      %14 = sbr.rel (0) target = $region13
    $region12: #{convnet_forward.5} parent=1 // pred_region
      _
    $region13: #{convnet_forward.5} parent=1 // pred_fallthru
      _
    %v15 = vld [vmem:[%s0] sm:$0xff]
    %v16 = vld [vmem:[%s0 + $0x8] sm:$0xff]
    %v17 = vld [vmem:[%s0 + $0x10] sm:$0xff]
    %v18 = vld [vmem:[%s0 + $0x18] sm:$0x3]
    %v19 = vld [vmem:[%s1] sm:$0xff]
    %v20 = vld [vmem:[%s1 + $0x8] sm:$0xff]
    %v21 = vld [vmem:[%s1 + $0x10] sm:$0xff]
    %v22 = vld [vmem:[%s1 + $0x18] sm:$0xff]
    %v23 = vld [vmem:[%s1 + $0x20] sm:$0xff]
    %v24 = vld [vmem:[%s1 + $0x28] sm:$0xff]
    %v25 = vld [vmem:[%s1 + $0x30] sm:$0xff]
    %v26 = vld [vmem:[%s1 + $0x38] sm:$0xff]
    %v27 = vld [vmem:[%s1 + $0x40] sm:$0xff]
    %v28 = vld [vmem:[%s1 + $0x48] sm:$0xff]
    %v29 = vld [vmem:[%s1 + $0x50] sm:$0xff]
    %v30 = vld [vmem:[%s1 + $0x58] sm:$0xff]
    %v31 = vld [vmem:[%s1 + $0x60] sm:$0xff]
    %v32 = vld [vmem:[%s1 + $0x68] sm:$0xff]
    %v33 = vld [vmem:[%s1 + $0x70] sm:$0xff]
    %v34 = vld [vmem:[%s1 + $0x78] sm:$0xff]
    %v35 = vld [vmem:[%s1 + $0x80] sm:$0xff]
    %v36 = vld [vmem:[%s1 + $0x88] sm:$0xff]
    %v37 = vld [vmem:[%s1 + $0x90] sm:$0xff]
    %v38 = vld [vmem:[%s1 + $0x98] sm:$0xff]
    %v39 = vld [vmem:[%s1 + $0xa0] sm:$0xff]
    %v40 = vld [vmem:[%s1 + $0xa8] sm:$0xff]
    %v41 = vld [vmem:[%s1 + $0xb0] sm:$0xff]
    %v42 = vld [vmem:[%s1 + $0xb8] sm:$0xff]
    %v43 = vld [vmem:[%s1 + $0xc0] sm:$0xff]
    %v44 = vld [vmem:[%s1 + $0xc8] sm:$0xff]
    %v45 = vld [vmem:[%s1 + $0xd0] sm:$0xff]
    %v46 = vld [vmem:[%s1 + $0xd8] sm:$0xff]
    %v47 = vld [vmem:[%s1 + $0xe0] sm:$0xff]
    %v48 = vld [vmem:[%s1 + $0xe8] sm:$0xff]
    %v49 = vld [vmem:[%s1 + $0xf0] sm:$0xff]
    %v50 = vld [vmem:[%s1 + $0xf8] sm:$0xff]
    %v51 = vld [vmem:[%s1 + $0x100] sm:$0xff]
    %v52 = vld [vmem:[%s1 + $0x108] sm:$0xff]
    %v53 = vld [vmem:[%s1 + $0x110] sm:$0xff]
    %v54 = vld [vmem:[%s1 + $0x118] sm:$0xff]
    %v55 = vld [vmem:[%s1 + $0x120] sm:$0xff]
    %v56 = vld [vmem:[%s1 + $0x128] sm:$0xff]
    %v57 = vld [vmem:[%s1 + $0x130] sm:$0xff]
    %v58 = vld [vmem:[%s1 + $0x138] sm:$0xff]
    %v59 = vld [vmem:[%s1 + $0x140] sm:$0xff]
    %v60 = vld [vmem:[%s1 + $0x148] sm:$0xff]
    %v61 = vld [vmem:[%s1 + $0x150] sm:$0xff]
    %v62 = vld [vmem:[%s1 + $0x158] sm:$0xff]
    %v63 = vld [vmem:[%s1 + $0x160] sm:$0xff]
    %v64 = vld [vmem:[%s1 + $0x168] sm:$0xff]
    %v65 = vld [vmem:[%s1 + $0x170] sm:$0xff]
    %v66 = vld [vmem:[%s1 + $0x178] sm:$0xff]
    %v67 = vld [vmem:[%s1 + $0x180] sm:$0xff]
    %v68 = vld [vmem:[%s1 + $0x188] sm:$0xff]
    %v69 = vld [vmem:[%s1 + $0x190] sm:$0xff]
    %v70 = vld [vmem:[%s1 + $0x198] sm:$0xff]
    %v71 = vld [vmem:[%s1 + $0x1a0] sm:$0xff]
    %v72 = vld [vmem:[%s1 + $0x1a8] sm:$0xff]
    %v73 = vld [vmem:[%s1 + $0x1b0] sm:$0xff]
    %v74 = vld [vmem:[%s1 + $0x1b8] sm:$0xff]
    %v75 = vld [vmem:[%s1 + $0x1c0] sm:$0xff]
    %v76 = vld [vmem:[%s1 + $0x1c8] sm:$0xff]
    %v77 = vld [vmem:[%s1 + $0x1d0] sm:$0xff]
    %v78 = vld [vmem:[%s1 + $0x1d8] sm:$0xff]
    %v79 = vld [vmem:[%s1 + $0x1e0] sm:$0xff]
    %v80 = vld [vmem:[%s1 + $0x1e8] sm:$0xff]
    %v81 = vld [vmem:[%s1 + $0x1f0] sm:$0xff]
    %v82 = vld [vmem:[%s1 + $0x1f8] sm:$0xff]
    %v83 = vld [vmem:[%s1 + $0x200] sm:$0xff]
    %v84 = vld [vmem:[%s1 + $0x208] sm:$0xff]
    %v85 = vld [vmem:[%s1 + $0x210] sm:$0xff]
    %v86 = vld [vmem:[%s1 + $0x218] sm:$0xff]
    %v87 = vld [vmem:[%s1 + $0x220] sm:$0xff]
    %v88 = vld [vmem:[%s1 + $0x228] sm:$0xff]
    %v89 = vld [vmem:[%s1 + $0x230] sm:$0xff]
    %v90 = vld [vmem:[%s1 + $0x238] sm:$0xff]
    %v91 = vld [vmem:[%s1 + $0x240] sm:$0xff]
    %v92 = vld [vmem:[%s1 + $0x248] sm:$0xff]
    %v93 = vld [vmem:[%s1 + $0x250] sm:$0xff]
    %v94 = vld [vmem:[%s1 + $0x258] sm:$0xff]
    %v95 = vld [vmem:[%s1 + $0x260] sm:$0xff]
    %v96 = vld [vmem:[%s1 + $0x268] sm:$0xff]
    %v97 = vld [vmem:[%s1 + $0x270] sm:$0xff]
    %v98 = vld [vmem:[%s1 + $0x278] sm:$0xff]
    %v99 = vld [vmem:[%s1 + $0x280] sm:$0xff]
    %v100 = vld [vmem:[%s1 + $0x288] sm:$0xff]
    %v101 = vld [vmem:[%s1 + $0x290] sm:$0xff]
    %v102 = vld [vmem:[%s1 + $0x298] sm:$0xff]
    %v103 = vld [vmem:[%s1 + $0x2a0] sm:$0xff]
    %v104 = vld [vmem:[%s1 + $0x2a8] sm:$0xff]
    %v105 = vld [vmem:[%s1 + $0x2b0] sm:$0xff]
    %v106 = vld [vmem:[%s1 + $0x2b8] sm:$0xff]
    %v107 = vld [vmem:[%s1 + $0x2c0] sm:$0xff]
    %v108 = vld [vmem:[%s1 + $0x2c8] sm:$0xff]
    %v109 = vld [vmem:[%s1 + $0x2d0] sm:$0xff]
    %v110 = vld [vmem:[%s1 + $0x2d8] sm:$0xff]
    %v111 = vld [vmem:[%s1 + $0x2e0] sm:$0xff]
    %v112 = vld [vmem:[%s1 + $0x2e8] sm:$0xff]
    %v113 = vld [vmem:[%s1 + $0x2f0] sm:$0xff]
    %v114 = vld [vmem:[%s1 + $0x2f8] sm:$0xff]
    %v115 = vld [vmem:[%s1 + $0x300] sm:$0xff]
    %v116 = vld [vmem:[%s1 + $0x308] sm:$0xff]
    %v117 = vld [vmem:[%s1 + $0x310] sm:$0xff]
    %v118 = vld [vmem:[%s1 + $0x318] sm:$0xff]
    %v119 = vld [vmem:[%s1 + $0x320] sm:$0xff]
    %v120 = vld [vmem:[%s1 + $0x328] sm:$0xff]
    %v121 = vld [vmem:[%s1 + $0x330] sm:$0xff]
    %v122 = vld [vmem:[%s1 + $0x338] sm:$0xff]
    %v123 = vld [vmem:[%s1 + $0x340] sm:$0xff]
    %v124 = vld [vmem:[%s1 + $0x348] sm:$0xff]
    %v125 = vld [vmem:[%s1 + $0x350] sm:$0xff]
    %v126 = vld [vmem:[%s1 + $0x358] sm:$0xff]
    %v127 = vld [vmem:[%s1 + $0x360] sm:$0xff]
    %v128 = vld [vmem:[%s1 + $0x368] sm:$0xff]
    %v129 = vld [vmem:[%s1 + $0x370] sm:$0xff]
    %v130 = vld [vmem:[%s1 + $0x378] sm:$0xff]
    %v131 = vld [vmem:[%s1 + $0x380] sm:$0xff]
    %v132 = vld [vmem:[%s1 + $0x388] sm:$0xff]
    %v133 = vld [vmem:[%s1 + $0x390] sm:$0xff]
    %v134 = vld [vmem:[%s1 + $0x398] sm:$0xff]
    %v135 = vld [vmem:[%s1 + $0x3a0] sm:$0xff]
    %v136 = vld [vmem:[%s1 + $0x3a8] sm:$0xff]
    %v137 = vld [vmem:[%s1 + $0x3b0] sm:$0xff]
    %v138 = vld [vmem:[%s1 + $0x3b8] sm:$0xff]
    %v139 = vld [vmem:[%s1 + $0x3c0] sm:$0xff]
    %v140 = vld [vmem:[%s1 + $0x3c8] sm:$0xff]
    %v141 = vld [vmem:[%s1 + $0x3d0] sm:$0xff]
    %v142 = vld [vmem:[%s1 + $0x3d8] sm:$0xff]
    %v143 = vld [vmem:[%s1 + $0x3e0] sm:$0xff]
    %v144 = vld [vmem:[%s1 + $0x3e8] sm:$0xff]
    %v145 = vld [vmem:[%s1 + $0x3f0] sm:$0xff]
    %v146 = vld [vmem:[%s1 + $0x3f8] sm:$0xff]
    %v147 = vld [vmem:[%s1 + $0x400] sm:$0xff]
    %v148 = vld [vmem:[%s1 + $0x408] sm:$0xff]
    %v149 = vld [vmem:[%s1 + $0x410] sm:$0xff]
    %v150 = vld [vmem:[%s1 + $0x418] sm:$0xff]
    %v151 = vld [vmem:[%s1 + $0x420] sm:$0xff]
    %v152 = vld [vmem:[%s1 + $0x428] sm:$0xff]
    %v153 = vld [vmem:[%s1 + $0x430] sm:$0xff]
    %v154 = vld [vmem:[%s1 + $0x438] sm:$0xff]
    %v155 = vld [vmem:[%s1 + $0x440] sm:$0xff]
    %v156 = vld [vmem:[%s1 + $0x448] sm:$0xff]
    %v157 = vld [vmem:[%s1 + $0x450] sm:$0xff]
    %v158 = vld [vmem:[%s1 + $0x458] sm:$0xff]
    %v159 = vld [vmem:[%s1 + $0x460] sm:$0xff]
    %v160 = vld [vmem:[%s1 + $0x468] sm:$0xff]
    %v161 = vld [vmem:[%s1 + $0x470] sm:$0xff]
    %v162 = vld [vmem:[%s1 + $0x478] sm:$0xff]
    %v163 = vld [vmem:[%s1 + $0x480] sm:$0xff]
    %v164 = vld [vmem:[%s1 + $0x488] sm:$0xff]
    %v165 = vld [vmem:[%s1 + $0x490] sm:$0xff]
    %v166 = vld [vmem:[%s1 + $0x498] sm:$0xff]
    %v167 = vld [vmem:[%s1 + $0x4a0] sm:$0xff]
    %v168 = vld [vmem:[%s1 + $0x4a8] sm:$0xff]
    %v169 = vld [vmem:[%s1 + $0x4b0] sm:$0xff]
    %v170 = vld [vmem:[%s1 + $0x4b8] sm:$0xff]
    %v171 = vld [vmem:[%s1 + $0x4c0] sm:$0xff]
    %v172 = vld [vmem:[%s1 + $0x4c8] sm:$0xff]
    %v173 = vld [vmem:[%s1 + $0x4d0] sm:$0xff]
    %v174 = vld [vmem:[%s1 + $0x4d8] sm:$0xff]
    %v175 = vld [vmem:[%s1 + $0x4e0] sm:$0xff]
    %v176 = vld [vmem:[%s1 + $0x4e8] sm:$0xff]
    %v177 = vld [vmem:[%s1 + $0x4f0] sm:$0xff]
    %v178 = vld [vmem:[%s1 + $0x4f8] sm:$0xff]
    %v179 = vld [vmem:[%s1 + $0x500] sm:$0xff]
    %v180 = vld [vmem:[%s1 + $0x508] sm:$0xff]
    %v181 = vld [vmem:[%s1 + $0x510] sm:$0xff]
    %v182 = vld [vmem:[%s1 + $0x518] sm:$0xff]
    %v183 = vld [vmem:[%s1 + $0x520] sm:$0xff]
    %v184 = vld [vmem:[%s1 + $0x528] sm:$0xff]
    %v185 = vld [vmem:[%s1 + $0x530] sm:$0xff]
    %v186 = vld [vmem:[%s1 + $0x538] sm:$0xff]
    %v187 = vld [vmem:[%s1 + $0x540] sm:$0xff]
    %v188 = vld [vmem:[%s1 + $0x548] sm:$0xff]
    %v189 = vld [vmem:[%s1 + $0x550] sm:$0xff]
    %v190 = vld [vmem:[%s1 + $0x558] sm:$0xff]
    %v191 = vld [vmem:[%s1 + $0x560] sm:$0xff]
    %v192 = vld [vmem:[%s1 + $0x568] sm:$0xff]
    %v193 = vld [vmem:[%s1 + $0x570] sm:$0xff]
    %v194 = vld [vmem:[%s1 + $0x578] sm:$0xff]
    %v195 = vld [vmem:[%s1 + $0x580] sm:$0xff]
    %v196 = vld [vmem:[%s1 + $0x588] sm:$0xff]
    %v197 = vld [vmem:[%s1 + $0x590] sm:$0xff]
    %v198 = vld [vmem:[%s1 + $0x598] sm:$0xff]
    %v199 = vld [vmem:[%s1 + $0x5a0] sm:$0xff]
    %v200 = vld [vmem:[%s1 + $0x5a8] sm:$0xff]
    %v201 = vld [vmem:[%s1 + $0x5b0] sm:$0xff]
    %v202 = vld [vmem:[%s1 + $0x5b8] sm:$0xff]
    %v203 = vld [vmem:[%s1 + $0x5c0] sm:$0xff]
    %v204 = vld [vmem:[%s1 + $0x5c8] sm:$0xff]
    %v205 = vld [vmem:[%s1 + $0x5d0] sm:$0xff]
    %v206 = vld [vmem:[%s1 + $0x5d8] sm:$0xff]
    %v207 = vld [vmem:[%s1 + $0x5e0] sm:$0xff]
    %v208 = vld [vmem:[%s1 + $0x5e8] sm:$0xff]
    %v209 = vld [vmem:[%s1 + $0x5f0] sm:$0xff]
    %v210 = vld [vmem:[%s1 + $0x5f8] sm:$0xff]
    %v211 = vld [vmem:[%s1 + $0x600] sm:$0xff]
    %v212 = vld [vmem:[%s1 + $0x608] sm:$0xff]
    %v213 = vld [vmem:[%s1 + $0x610] sm:$0xff]
    %v214 = vld [vmem:[%s1 + $0x618] sm:$0xff]
    %v215 = vld [vmem:[%s2] sm:$0x1]
    %v217 = vlaneseq
    %v218 = vshrl.u32 %v217, 7
    %v219 = vsub.s32 0, %v218
    %v220 = vrot.slane %v215, %v219
    %v226 = vcombine.high %v15, %v15
    %v228 = vunpack.c.l.s4 1983009808
    %v229 = vunpack.c.0.s8 %v228
    %v230 = vlaneseq
    %v231 = vshrl.u32 %v230, 7
    %v232 = vsub.s32 %v229, %v231
    %v233 = vrot.slane %v15, %v232
    %v235 = vunpack.c.l.s4 1983009808
    %v236 = vunpack.c.0.s8 %v235
    %v237 = vlaneseq
    %v238 = vshrl.u32 %v237, 7
    %v239 = vsub.s32 %v236, %v238
    %v240 = vrot.slane %v226, %v239
    %v241 = vcombine.high %v233, %v233
    %v242 = vcombine.high %v240, %v240
    %v243 = vcombine.high %v16, %v16
    %v245 = vunpack.c.l.s4 1983009808
    %v246 = vunpack.c.0.s8 %v245
    %v247 = vlaneseq
    %v248 = vshrl.u32 %v247, 7
    %v249 = vsub.s32 %v246, %v248
    %v250 = vrot.slane %v16, %v249
    %v252 = vunpack.c.l.s4 1983009808
    %v253 = vunpack.c.0.s8 %v252
    %v254 = vlaneseq
    %v255 = vshrl.u32 %v254, 7
    %v256 = vsub.s32 %v253, %v255
    %v257 = vrot.slane %v243, %v256
    %v258 = vcombine.high %v250, %v250
    %v259 = vcombine.high %v257, %v257
    %v260 = vcombine.high %v17, %v17
    %v262 = vunpack.c.l.s4 1983009808
    %v263 = vunpack.c.0.s8 %v262
    %v264 = vlaneseq
    %v265 = vshrl.u32 %v264, 7
    %v266 = vsub.s32 %v263, %v265
    %v267 = vrot.slane %v17, %v266
    %v269 = vunpack.c.l.s4 1983009808
    %v270 = vunpack.c.0.s8 %v269
    %v271 = vlaneseq
    %v272 = vshrl.u32 %v271, 7
    %v273 = vsub.s32 %v270, %v272
    %v274 = vrot.slane %v260, %v273
    %v275 = vcombine.high %v267, %v267
    %v276 = vcombine.high %v274, %v274
    %v278 = vunpack.c.l.s4 1983009808
    %v279 = vunpack.c.0.s8 %v278
    %v280 = vlaneseq
    %v281 = vshrl.u32 %v280, 7
    %v282 = vsub.s32 %v279, %v281
    %v283 = vrot.slane %v18, %v282
    %vm296 = vcmask 261120
    %v297 = vsel %vm296, %v283, 0
    %299 = vmatprep.subr.mxu0 0.0
    %300 = vmatpush1.msra.mxu0 %v19
    %301 = vmatprep.subr.mxu0 0.0
    %302 = vmatpush1.msra.mxu0 %v20
    %303 = vmatprep.subr.mxu0 0.0
    %304 = vmatpush1.msra.mxu0 %v21
    %305 = vmatprep.subr.mxu0 0.0
    %306 = vmatpush1.msra.mxu0 %v22
    %307 = vmatprep.subr.mxu0 0.0
    %308 = vmatpush1.msra.mxu0 %v23
    %309 = vmatprep.subr.mxu0 0.0
    %310 = vmatpush1.msra.mxu0 %v24
    %311 = vmatprep.subr.mxu0 0.0
    %312 = vmatpush1.msra.mxu0 %v25
    %313 = vmatprep.subr.mxu0 0.0
    %314 = vmatpush1.msra.mxu0 %v26
    %315 = vmatprep.subr.mxu0 0.0
    %316 = vmatpush1.msra.mxu0 %v27
    %317 = vmatprep.subr.mxu0 0.0
    %318 = vmatpush1.msra.mxu0 %v28
    %319 = vmatprep.subr.mxu0 0.0
    %320 = vmatpush1.msra.mxu0 %v29
    %321 = vmatprep.subr.mxu0 0.0
    %322 = vmatpush1.msra.mxu0 %v30
    %323 = vmatprep.subr.mxu0 0.0
    %324 = vmatpush1.msra.mxu0 %v31
    %325 = vmatprep.subr.mxu0 0.0
    %326 = vmatpush1.msra.mxu0 %v32
    %327 = vmatprep.subr.mxu0 0.0
    %328 = vmatpush1.msra.mxu0 %v33
    %329 = vmatprep.subr.mxu0 0.0
    %330 = vmatpush1.msra.mxu0 %v34
    %331 = vmatprep.subr.mxu0 0.0
    %332 = vmatpush1.msra.mxu0 %v35
    %333 = vmatprep.subr.mxu0 0.0
    %334 = vmatpush1.msra.mxu0 %v36
    %335 = vmatprep.subr.mxu0 0.0
    %336 = vmatpush1.msra.mxu0 %v37
    %337 = vmatprep.subr.mxu0 0.0
    %338 = vmatpush1.msra.mxu0 %v38
    %339 = vmatprep.subr.mxu0 0.0
    %340 = vmatpush1.msra.mxu0 %v39
    %341 = vmatprep.subr.mxu0 0.0
    %342 = vmatpush1.msra.mxu0 %v40
    %343 = vmatprep.subr.mxu0 0.0
    %344 = vmatpush1.msra.mxu0 %v41
    %345 = vmatprep.subr.mxu0 0.0
    %346 = vmatpush1.msra.mxu0 %v42
    %347 = vmatprep.subr.mxu0 0.0
    %348 = vmatpush1.msra.mxu0 %v43
    %349 = vmatprep.subr.mxu0 0.0
    %350 = vmatpush1.msra.mxu0 %v44
    %351 = vmatprep.subr.mxu0 0.0
    %352 = vmatpush1.msra.mxu0 %v45
    %353 = vmatprep.subr.mxu0 0.0
    %354 = vmatpush1.msra.mxu0 %v46
    %355 = vmatprep.subr.mxu0 0.0
    %356 = vmatpush1.msra.mxu0 %v47
    %357 = vmatprep.subr.mxu0 0.0
    %358 = vmatpush1.msra.mxu0 %v48
    %359 = vmatprep.subr.mxu0 0.0
    %360 = vmatpush1.msra.mxu0 %v49
    %361 = vmatprep.subr.mxu0 0.0
    %362 = vmatpush1.msra.mxu0 %v50
    %363 = vmatprep.mubr.f32.mxu0 %v241
    %364 = vmatmul.mubr.f32.gmra.mrb[0].mxu0 %v233
    %v365 = vpop.f32.mrb[0].mxu0
    %v366 = vadd.f32 %v220, %v365
    %v367 = vpop.f32.mrb[0].mxu0
    %368 = vdwg.mxu0
    %369 = vmatprep.subr.mxu0 0.0
    %370 = vmatpush1.msra.mxu0 %v51
    %371 = vmatprep.subr.mxu0 0.0
    %372 = vmatpush1.msra.mxu0 %v52
    %373 = vmatprep.subr.mxu0 0.0
    %374 = vmatpush1.msra.mxu0 %v53
    %375 = vmatprep.subr.mxu0 0.0
    %376 = vmatpush1.msra.mxu0 %v54
    %377 = vmatprep.subr.mxu0 0.0
    %378 = vmatpush1.msra.mxu0 %v55
    %379 = vmatprep.subr.mxu0 0.0
    %380 = vmatpush1.msra.mxu0 %v56
    %381 = vmatprep.subr.mxu0 0.0
    %382 = vmatpush1.msra.mxu0 %v57
    %383 = vmatprep.subr.mxu0 0.0
    %384 = vmatpush1.msra.mxu0 %v58
    %385 = vmatprep.subr.mxu0 0.0
    %386 = vmatpush1.msra.mxu0 %v59
    %387 = vmatprep.subr.mxu0 0.0
    %388 = vmatpush1.msra.mxu0 %v60
    %389 = vmatprep.subr.mxu0 0.0
    %390 = vmatpush1.msra.mxu0 %v61
    %391 = vmatprep.subr.mxu0 0.0
    %392 = vmatpush1.msra.mxu0 %v62
    %393 = vmatprep.subr.mxu0 0.0
    %394 = vmatpush1.msra.mxu0 %v63
    %395 = vmatprep.subr.mxu0 0.0
    %396 = vmatpush1.msra.mxu0 %v64
    %397 = vmatprep.subr.mxu0 0.0
    %398 = vmatpush1.msra.mxu0 %v65
    %399 = vmatprep.subr.mxu0 0.0
    %400 = vmatpush1.msra.mxu0 %v66
    %401 = vmatprep.subr.mxu0 0.0
    %402 = vmatpush1.msra.mxu0 %v67
    %403 = vmatprep.subr.mxu0 0.0
    %404 = vmatpush1.msra.mxu0 %v68
    %405 = vmatprep.subr.mxu0 0.0
    %406 = vmatpush1.msra.mxu0 %v69
    %407 = vmatprep.subr.mxu0 0.0
    %408 = vmatpush1.msra.mxu0 %v70
    %409 = vmatprep.subr.mxu0 0.0
    %410 = vmatpush1.msra.mxu0 %v71
    %411 = vmatprep.subr.mxu0 0.0
    %412 = vmatpush1.msra.mxu0 %v72
    %413 = vmatprep.subr.mxu0 0.0
    %414 = vmatpush1.msra.mxu0 %v73
    %415 = vmatprep.subr.mxu0 0.0
    %416 = vmatpush1.msra.mxu0 %v74
    %417 = vmatprep.subr.mxu0 0.0
    %418 = vmatpush1.msra.mxu0 %v75
    %419 = vmatprep.subr.mxu0 0.0
    %420 = vmatpush1.msra.mxu0 %v76
    %421 = vmatprep.subr.mxu0 0.0
    %422 = vmatpush1.msra.mxu0 %v77
    %423 = vmatprep.subr.mxu0 0.0
    %424 = vmatpush1.msra.mxu0 %v78
    %425 = vmatprep.subr.mxu0 0.0
    %426 = vmatpush1.msra.mxu0 %v79
    %427 = vmatprep.subr.mxu0 0.0
    %428 = vmatpush1.msra.mxu0 %v80
    %429 = vmatprep.subr.mxu0 0.0
    %430 = vmatpush1.msra.mxu0 %v81
    %431 = vmatprep.subr.mxu0 0.0
    %432 = vmatpush1.msra.mxu0 %v82
    %433 = vmatprep.mubr.f32.mxu0 %v242
    %434 = vmatmul.mubr.f32.gmra.mrb[0].mxu0 %v240
    %v435 = vpop.f32.mrb[0].mxu0
    %v436 = vadd.f32 %v366, %v435
    %v437 = vpop.f32.mrb[0].mxu0
    %438 = vdwg.mxu0
    %439 = vmatprep.subr.mxu0 0.0
    %440 = vmatpush1.msra.mxu0 %v83
    %441 = vmatprep.subr.mxu0 0.0
    %442 = vmatpush1.msra.mxu0 %v84
    %443 = vmatprep.subr.mxu0 0.0
    %444 = vmatpush1.msra.mxu0 %v85
    %445 = vmatprep.subr.mxu0 0.0
    %446 = vmatpush1.msra.mxu0 %v86
    %447 = vmatprep.subr.mxu0 0.0
    %448 = vmatpush1.msra.mxu0 %v87
    %449 = vmatprep.subr.mxu0 0.0
    %450 = vmatpush1.msra.mxu0 %v88
    %451 = vmatprep.subr.mxu0 0.0
    %452 = vmatpush1.msra.mxu0 %v89
    %453 = vmatprep.subr.mxu0 0.0
    %454 = vmatpush1.msra.mxu0 %v90
    %455 = vmatprep.subr.mxu0 0.0
    %456 = vmatpush1.msra.mxu0 %v91
    %457 = vmatprep.subr.mxu0 0.0
    %458 = vmatpush1.msra.mxu0 %v92
    %459 = vmatprep.subr.mxu0 0.0
    %460 = vmatpush1.msra.mxu0 %v93
    %461 = vmatprep.subr.mxu0 0.0
    %462 = vmatpush1.msra.mxu0 %v94
    %463 = vmatprep.subr.mxu0 0.0
    %464 = vmatpush1.msra.mxu0 %v95
    %465 = vmatprep.subr.mxu0 0.0
    %466 = vmatpush1.msra.mxu0 %v96
    %467 = vmatprep.subr.mxu0 0.0
    %468 = vmatpush1.msra.mxu0 %v97
    %469 = vmatprep.subr.mxu0 0.0
    %470 = vmatpush1.msra.mxu0 %v98
    %471 = vmatprep.subr.mxu0 0.0
    %472 = vmatpush1.msra.mxu0 %v99
    %473 = vmatprep.subr.mxu0 0.0
    %474 = vmatpush1.msra.mxu0 %v100
    %475 = vmatprep.subr.mxu0 0.0
    %476 = vmatpush1.msra.mxu0 %v101
    %477 = vmatprep.subr.mxu0 0.0
    %478 = vmatpush1.msra.mxu0 %v102
    %479 = vmatprep.subr.mxu0 0.0
    %480 = vmatpush1.msra.mxu0 %v103
    %481 = vmatprep.subr.mxu0 0.0
    %482 = vmatpush1.msra.mxu0 %v104
    %483 = vmatprep.subr.mxu0 0.0
    %484 = vmatpush1.msra.mxu0 %v105
    %485 = vmatprep.subr.mxu0 0.0
    %486 = vmatpush1.msra.mxu0 %v106
    %487 = vmatprep.subr.mxu0 0.0
    %488 = vmatpush1.msra.mxu0 %v107
    %489 = vmatprep.subr.mxu0 0.0
    %490 = vmatpush1.msra.mxu0 %v108
    %491 = vmatprep.subr.mxu0 0.0
    %492 = vmatpush1.msra.mxu0 %v109
    %493 = vmatprep.subr.mxu0 0.0
    %494 = vmatpush1.msra.mxu0 %v110
    %495 = vmatprep.subr.mxu0 0.0
    %496 = vmatpush1.msra.mxu0 %v111
    %497 = vmatprep.subr.mxu0 0.0
    %498 = vmatpush1.msra.mxu0 %v112
    %499 = vmatprep.subr.mxu0 0.0
    %500 = vmatpush1.msra.mxu0 %v113
    %501 = vmatprep.subr.mxu0 0.0
    %502 = vmatpush1.msra.mxu0 %v114
    %503 = vmatprep.mubr.f32.mxu0 %v258
    %504 = vmatmul.mubr.f32.gmra.mrb[0].mxu0 %v250
    %v505 = vpop.f32.mrb[0].mxu0
    %v506 = vadd.f32 %v436, %v505
    %v507 = vpop.f32.mrb[0].mxu0
    %508 = vdwg.mxu0
    %509 = vmatprep.subr.mxu0 0.0
    %510 = vmatpush1.msra.mxu0 %v115
    %511 = vmatprep.subr.mxu0 0.0
    %512 = vmatpush1.msra.mxu0 %v116
    %513 = vmatprep.subr.mxu0 0.0
    %514 = vmatpush1.msra.mxu0 %v117
    %515 = vmatprep.subr.mxu0 0.0
    %516 = vmatpush1.msra.mxu0 %v118
    %517 = vmatprep.subr.mxu0 0.0
    %518 = vmatpush1.msra.mxu0 %v119
    %519 = vmatprep.subr.mxu0 0.0
    %520 = vmatpush1.msra.mxu0 %v120
    %521 = vmatprep.subr.mxu0 0.0
    %522 = vmatpush1.msra.mxu0 %v121
    %523 = vmatprep.subr.mxu0 0.0
    %524 = vmatpush1.msra.mxu0 %v122
    %525 = vmatprep.subr.mxu0 0.0
    %526 = vmatpush1.msra.mxu0 %v123
    %527 = vmatprep.subr.mxu0 0.0
    %528 = vmatpush1.msra.mxu0 %v124
    %529 = vmatprep.subr.mxu0 0.0
    %530 = vmatpush1.msra.mxu0 %v125
    %531 = vmatprep.subr.mxu0 0.0
    %532 = vmatpush1.msra.mxu0 %v126
    %533 = vmatprep.subr.mxu0 0.0
    %534 = vmatpush1.msra.mxu0 %v127
    %535 = vmatprep.subr.mxu0 0.0
    %536 = vmatpush1.msra.mxu0 %v128
    %537 = vmatprep.subr.mxu0 0.0
    %538 = vmatpush1.msra.mxu0 %v129
    %539 = vmatprep.subr.mxu0 0.0
    %540 = vmatpush1.msra.mxu0 %v130
    %541 = vmatprep.subr.mxu0 0.0
    %542 = vmatpush1.msra.mxu0 %v131
    %543 = vmatprep.subr.mxu0 0.0
    %544 = vmatpush1.msra.mxu0 %v132
    %545 = vmatprep.subr.mxu0 0.0
    %546 = vmatpush1.msra.mxu0 %v133
    %547 = vmatprep.subr.mxu0 0.0
    %548 = vmatpush1.msra.mxu0 %v134
    %549 = vmatprep.subr.mxu0 0.0
    %550 = vmatpush1.msra.mxu0 %v135
    %551 = vmatprep.subr.mxu0 0.0
    %552 = vmatpush1.msra.mxu0 %v136
    %553 = vmatprep.subr.mxu0 0.0
    %554 = vmatpush1.msra.mxu0 %v137
    %555 = vmatprep.subr.mxu0 0.0
    %556 = vmatpush1.msra.mxu0 %v138
    %557 = vmatprep.subr.mxu0 0.0
    %558 = vmatpush1.msra.mxu0 %v139
    %559 = vmatprep.subr.mxu0 0.0
    %560 = vmatpush1.msra.mxu0 %v140
    %561 = vmatprep.subr.mxu0 0.0
    %562 = vmatpush1.msra.mxu0 %v141
    %563 = vmatprep.subr.mxu0 0.0
    %564 = vmatpush1.msra.mxu0 %v142
    %565 = vmatprep.subr.mxu0 0.0
    %566 = vmatpush1.msra.mxu0 %v143
    %567 = vmatprep.subr.mxu0 0.0
    %568 = vmatpush1.msra.mxu0 %v144
    %569 = vmatprep.subr.mxu0 0.0
    %570 = vmatpush1.msra.mxu0 %v145
    %571 = vmatprep.subr.mxu0 0.0
    %572 = vmatpush1.msra.mxu0 %v146
    %573 = vmatprep.mubr.f32.mxu0 %v259
    %574 = vmatmul.mubr.f32.gmra.mrb[0].mxu0 %v257
    %v575 = vpop.f32.mrb[0].mxu0
    %v576 = vadd.f32 %v506, %v575
    %v577 = vpop.f32.mrb[0].mxu0
    %578 = vdwg.mxu0
    %579 = vmatprep.subr.mxu0 0.0
    %580 = vmatpush1.msra.mxu0 %v147
    %581 = vmatprep.subr.mxu0 0.0
    %582 = vmatpush1.msra.mxu0 %v148
    %583 = vmatprep.subr.mxu0 0.0
    %584 = vmatpush1.msra.mxu0 %v149
    %585 = vmatprep.subr.mxu0 0.0
    %586 = vmatpush1.msra.mxu0 %v150
    %587 = vmatprep.subr.mxu0 0.0
    %588 = vmatpush1.msra.mxu0 %v151
    %589 = vmatprep.subr.mxu0 0.0
    %590 = vmatpush1.msra.mxu0 %v152
    %591 = vmatprep.subr.mxu0 0.0
    %592 = vmatpush1.msra.mxu0 %v153
    %593 = vmatprep.subr.mxu0 0.0
    %594 = vmatpush1.msra.mxu0 %v154
    %595 = vmatprep.subr.mxu0 0.0
    %596 = vmatpush1.msra.mxu0 %v155
    %597 = vmatprep.subr.mxu0 0.0
    %598 = vmatpush1.msra.mxu0 %v156
    %599 = vmatprep.subr.mxu0 0.0
    %600 = vmatpush1.msra.mxu0 %v157
    %601 = vmatprep.subr.mxu0 0.0
    %602 = vmatpush1.msra.mxu0 %v158
    %603 = vmatprep.subr.mxu0 0.0
    %604 = vmatpush1.msra.mxu0 %v159
    %605 = vmatprep.subr.mxu0 0.0
    %606 = vmatpush1.msra.mxu0 %v160
    %607 = vmatprep.subr.mxu0 0.0
    %608 = vmatpush1.msra.mxu0 %v161
    %609 = vmatprep.subr.mxu0 0.0
    %610 = vmatpush1.msra.mxu0 %v162
    %611 = vmatprep.subr.mxu0 0.0
    %612 = vmatpush1.msra.mxu0 %v163
    %613 = vmatprep.subr.mxu0 0.0
    %614 = vmatpush1.msra.mxu0 %v164
    %615 = vmatprep.subr.mxu0 0.0
    %616 = vmatpush1.msra.mxu0 %v165
    %617 = vmatprep.subr.mxu0 0.0
    %618 = vmatpush1.msra.mxu0 %v166
    %619 = vmatprep.subr.mxu0 0.0
    %620 = vmatpush1.msra.mxu0 %v167
    %621 = vmatprep.subr.mxu0 0.0
    %622 = vmatpush1.msra.mxu0 %v168
    %623 = vmatprep.subr.mxu0 0.0
    %624 = vmatpush1.msra.mxu0 %v169
    %625 = vmatprep.subr.mxu0 0.0
    %626 = vmatpush1.msra.mxu0 %v170
    %627 = vmatprep.subr.mxu0 0.0
    %628 = vmatpush1.msra.mxu0 %v171
    %629 = vmatprep.subr.mxu0 0.0
    %630 = vmatpush1.msra.mxu0 %v172
    %631 = vmatprep.subr.mxu0 0.0
    %632 = vmatpush1.msra.mxu0 %v173
    %633 = vmatprep.subr.mxu0 0.0
    %634 = vmatpush1.msra.mxu0 %v174
    %635 = vmatprep.subr.mxu0 0.0
    %636 = vmatpush1.msra.mxu0 %v175
    %637 = vmatprep.subr.mxu0 0.0
    %638 = vmatpush1.msra.mxu0 %v176
    %639 = vmatprep.subr.mxu0 0.0
    %640 = vmatpush1.msra.mxu0 %v177
    %641 = vmatprep.subr.mxu0 0.0
    %642 = vmatpush1.msra.mxu0 %v178
    %643 = vmatprep.mubr.f32.mxu0 %v275
    %644 = vmatmul.mubr.f32.gmra.mrb[0].mxu0 %v267
    %v645 = vpop.f32.mrb[0].mxu0
    %v646 = vadd.f32 %v576, %v645
    %v647 = vpop.f32.mrb[0].mxu0
    %648 = vdwg.mxu0
    %649 = vmatprep.subr.mxu0 0.0
    %650 = vmatpush1.msra.mxu0 %v179
    %651 = vmatprep.subr.mxu0 0.0
    %652 = vmatpush1.msra.mxu0 %v180
    %653 = vmatprep.subr.mxu0 0.0
    %654 = vmatpush1.msra.mxu0 %v181
    %655 = vmatprep.subr.mxu0 0.0
    %656 = vmatpush1.msra.mxu0 %v182
    %657 = vmatprep.subr.mxu0 0.0
    %658 = vmatpush1.msra.mxu0 %v183
    %659 = vmatprep.subr.mxu0 0.0
    %660 = vmatpush1.msra.mxu0 %v184
    %661 = vmatprep.subr.mxu0 0.0
    %662 = vmatpush1.msra.mxu0 %v185
    %663 = vmatprep.subr.mxu0 0.0
    %664 = vmatpush1.msra.mxu0 %v186
    %665 = vmatprep.subr.mxu0 0.0
    %666 = vmatpush1.msra.mxu0 %v187
    %667 = vmatprep.subr.mxu0 0.0
    %668 = vmatpush1.msra.mxu0 %v188
    %669 = vmatprep.subr.mxu0 0.0
    %670 = vmatpush1.msra.mxu0 %v189
    %671 = vmatprep.subr.mxu0 0.0
    %672 = vmatpush1.msra.mxu0 %v190
    %673 = vmatprep.subr.mxu0 0.0
    %674 = vmatpush1.msra.mxu0 %v191
    %675 = vmatprep.subr.mxu0 0.0
    %676 = vmatpush1.msra.mxu0 %v192
    %677 = vmatprep.subr.mxu0 0.0
    %678 = vmatpush1.msra.mxu0 %v193
    %679 = vmatprep.subr.mxu0 0.0
    %680 = vmatpush1.msra.mxu0 %v194
    %681 = vmatprep.subr.mxu0 0.0
    %682 = vmatpush1.msra.mxu0 %v195
    %683 = vmatprep.subr.mxu0 0.0
    %684 = vmatpush1.msra.mxu0 %v196
    %685 = vmatprep.subr.mxu0 0.0
    %686 = vmatpush1.msra.mxu0 %v197
    %687 = vmatprep.subr.mxu0 0.0
    %688 = vmatpush1.msra.mxu0 %v198
    %689 = vmatprep.subr.mxu0 0.0
    %690 = vmatpush1.msra.mxu0 %v199
    %691 = vmatprep.subr.mxu0 0.0
    %692 = vmatpush1.msra.mxu0 %v200
    %693 = vmatprep.subr.mxu0 0.0
    %694 = vmatpush1.msra.mxu0 %v201
    %695 = vmatprep.subr.mxu0 0.0
    %696 = vmatpush1.msra.mxu0 %v202
    %697 = vmatprep.subr.mxu0 0.0
    %698 = vmatpush1.msra.mxu0 %v203
    %699 = vmatprep.subr.mxu0 0.0
    %700 = vmatpush1.msra.mxu0 %v204
    %701 = vmatprep.subr.mxu0 0.0
    %702 = vmatpush1.msra.mxu0 %v205
    %703 = vmatprep.subr.mxu0 0.0
    %704 = vmatpush1.msra.mxu0 %v206
    %705 = vmatprep.subr.mxu0 0.0
    %706 = vmatpush1.msra.mxu0 %v207
    %707 = vmatprep.subr.mxu0 0.0
    %708 = vmatpush1.msra.mxu0 %v208
    %709 = vmatprep.subr.mxu0 0.0
    %710 = vmatpush1.msra.mxu0 %v209
    %711 = vmatprep.subr.mxu0 0.0
    %712 = vmatpush1.msra.mxu0 %v210
    %713 = vmatprep.mubr.f32.mxu0 %v276
    %714 = vmatmul.mubr.f32.gmra.mrb[0].mxu0 %v274
    %v715 = vpop.f32.mrb[0].mxu0
    %v716 = vadd.f32 %v646, %v715
    %v717 = vpop.f32.mrb[0].mxu0
    %718 = vdwg.mxu0
    %719 = vmatprep.subr.mxu0 0.0
    %720 = vmatpush1.msra.mxu0 %v211
    %721 = vmatprep.subr.mxu0 0.0
    %722 = vmatpush1.msra.mxu0 %v212
    %723 = vmatprep.subr.mxu0 0.0
    %724 = vmatpush1.msra.mxu0 %v213
    %725 = vmatprep.subr.mxu0 0.0
    %726 = vmatpush1.msra.mxu0 %v214
    %727 = vmatprep.subr.mxu0 0.0
    %728 = vmatpush1.msra.mxu0 0.0
    %729 = vmatprep.subr.mxu0 0.0
    %730 = vmatpush1.msra.mxu0 0.0
    %731 = vmatprep.subr.mxu0 0.0
    %732 = vmatpush1.msra.mxu0 0.0
    %733 = vmatprep.subr.mxu0 0.0
    %734 = vmatpush1.msra.mxu0 0.0
    %735 = vmatprep.subr.mxu0 0.0
    %736 = vmatpush1.msra.mxu0 0.0
    %737 = vmatprep.subr.mxu0 0.0
    %738 = vmatpush1.msra.mxu0 0.0
    %739 = vmatprep.subr.mxu0 0.0
    %740 = vmatpush1.msra.mxu0 0.0
    %741 = vmatprep.subr.mxu0 0.0
    %742 = vmatpush1.msra.mxu0 0.0
    %743 = vmatprep.subr.mxu0 0.0
    %744 = vmatpush1.msra.mxu0 0.0
    %745 = vmatprep.subr.mxu0 0.0
    %746 = vmatpush1.msra.mxu0 0.0
    %747 = vmatprep.subr.mxu0 0.0
    %748 = vmatpush1.msra.mxu0 0.0
    %749 = vmatprep.subr.mxu0 0.0
    %750 = vmatpush1.msra.mxu0 0.0
    %751 = vmatprep.subr.mxu0 0.0
    %752 = vmatpush1.msra.mxu0 0.0
    %753 = vmatprep.subr.mxu0 0.0
    %754 = vmatpush1.msra.mxu0 0.0
    %755 = vmatprep.subr.mxu0 0.0
    %756 = vmatpush1.msra.mxu0 0.0
    %757 = vmatprep.subr.mxu0 0.0
    %758 = vmatpush1.msra.mxu0 0.0
    %759 = vmatprep.subr.mxu0 0.0
    %760 = vmatpush1.msra.mxu0 0.0
    %761 = vmatprep.subr.mxu0 0.0
    %762 = vmatpush1.msra.mxu0 0.0
    %763 = vmatprep.subr.mxu0 0.0
    %764 = vmatpush1.msra.mxu0 0.0
    %765 = vmatprep.subr.mxu0 0.0
    %766 = vmatpush1.msra.mxu0 0.0
    %767 = vmatprep.subr.mxu0 0.0
    %768 = vmatpush1.msra.mxu0 0.0
    %769 = vmatprep.subr.mxu0 0.0
    %770 = vmatpush1.msra.mxu0 0.0
    %771 = vmatprep.subr.mxu0 0.0
    %772 = vmatpush1.msra.mxu0 0.0
    %773 = vmatprep.subr.mxu0 0.0
    %774 = vmatpush1.msra.mxu0 0.0
    %775 = vmatprep.subr.mxu0 0.0
    %776 = vmatpush1.msra.mxu0 0.0
    %777 = vmatprep.subr.mxu0 0.0
    %778 = vmatpush1.msra.mxu0 0.0
    %779 = vmatprep.subr.mxu0 0.0
    %780 = vmatpush1.msra.mxu0 0.0
    %781 = vmatprep.subr.mxu0 0.0
    %782 = vmatpush1.msra.mxu0 0.0
    %783 = vmatprep.mubr.f32.mxu0 0.0
    %784 = vmatmul.mubr.f32.gmra.mrb[0].mxu0 %v297
    %v785 = vpop.f32.mrb[0].mxu0
    %v786 = vadd.f32 %v716, %v785
    %v787 = vpop.f32.mrb[0].mxu0
    %788 = vdwg.mxu0
    %789 = vst [vmem:[#allocation2] sm:$0x3] %v786
    // Predicated region
    $region14: #{convnet_forward.5} parent=1 // pred_check
      _
    $region15: #{convnet_forward.5} parent=1 // pred_check_branch
      %791 = sbr.rel (0) target = $region17
    $region16: #{convnet_forward.5} parent=1 // pred_region
      %s793 = ssub.s32 32, 32
      %794 = vsyncadd [#allocation3], %s793
      %s796 = sshll.u32 [#allocation2], 4
      %s797 = int_to_ptr.vmem [resolvable:$true] %s796
      %799 = dma.vmem_to_hbm [thread:$0]  %s797, 32, %s3, [#allocation3]
    $region17: #{convnet_forward.5} parent=1 // pred_fallthru
      _
    // Predicated region
    $region18: #{convnet_forward.5} parent=1 // pred_check
      _
    $region19: #{convnet_forward.5} parent=1 // pred_check_branch
      %801 = sbr.rel (0) target = $region21
    $region20: #{convnet_forward.5} parent=1 // pred_region
      %802 = dma.done [#allocation3], 32
    $region21: #{convnet_forward.5} parent=1 // pred_fallthru
      _
    %803 = vsyncpa [#allocation3], 1

// kernel: convnet_forward.3
$region0: #{convnet_forward.3}
  #allocation0 [shape = 'u32[]', space=smem, size = 0x4, offset = 0x4, fixed_abs, tag = 'smem constant byte address 0x4 - core index']
  #allocation1 [shape = 'u32[144,128]{1,0:T(1,128)}', space=vmem, size = 0x12000, scoped, tag = 'internal scratch']
  %s0 = inlined_call_operand.vmem [shape: f32[2,2,16,32], index: 0, kind: input, shape index: {}]
  %s1 = inlined_call_operand.hbm [shape: f32[5,32,448], index: 1, kind: input, shape index: {}]
  %s2 = inlined_call_operand.hbm [shape: f32[1,224], index: 2, kind: input, shape index: {}]
  %s3 = inlined_call_operand.vmem [shape: f32[2,14,224], index: 3, kind: output, shape index: {}]
  %s4 = sld [smem:[#allocation0]]
  $region53: #{convnet_forward.3} parent=0
    _
  %s6 = ssub.s32 1, %s4
  %s7 = scalar_select 0, %s6, %s4
  $region1: #{convnet_forward.3} parent=0
    #allocation2 [shape = 'u8[327680]{0}', space=vmem, size = 0x50000, scoped, tag = 'input window, operand 1, single buffered']
    #allocation3 [shape = 's32[2]{0}', space=sflag, size = 0x8, scoped, tag = 'scoped memory for convnet_forward.3']
    #allocation4 [shape = 'u8[1024]{0}', space=vmem, size = 0x400, scoped, tag = 'input window, operand 2, single buffered']
    #allocation5 [shape = 's32[1]{0}', space=sflag, size = 0x4, scoped, tag = 'scoped memory for convnet_forward.3']
    %8 = vsyncpa [#allocation3], 0
    %9 = vsyncpa [#allocation5], 0
    loop: start=0, step=1, limit=4
    $region2: #{convnet_forward.3} parent=1 // loop_pre_header
      _
    $region3: #{convnet_forward.3} parent=1 // loop_header
      %s11 = sphi 0, %s15
      %p12 = scmp.ge.s32.totalorder %s11, 4
      %s21 = sphi 0, %s23
      %s24 = sphi 0, %s21
      %s25 = sphi 0, %s24
      %s41 = sphi 0, %s25
      %s45 = sphi 0, %s45
      %s47 = sphi 0, %s45
      %s48 = sphi 0, %s47
      %s62 = sphi 0, %s48
      %s66 = sphi 0, %s66
      %s68 = sphi 0, %s66
      %s69 = sphi 0, %s68
      %s83 = sphi 0, %s69
      %s89 = sphi 0, %s91
      %s92 = sphi 0, %s89
      %s93 = sphi 0, %s92
      %s109 = sphi 0, %s93
    $region4: #{convnet_forward.3} parent=1 // loop_header_branch
      %14 = sbr.rel (%p12) target = $region8
    $region5: #{convnet_forward.3} parent=1 // loop_body
      %s16 = ssub.s32 %s11, 1
      %s17 = ssub.s32 %s11, 2
      %s18 = sadd.s32 %s11, 1
      %s19 = ssub.s32 %s11, %s18
      %p20 = scmp.eq.s32.totalorder %s19, 0
      %s22 = sadd.s32 %s21, 1
      %s23 = scalar_select %p20, %s21, %s22
      %p26 = pneg %p20
      %p27 = scmp.eq.s32.totalorder %s11, 1
      %p28 = por %p26, %p27
      %p29 = scmp.ne.s32.totalorder %s21, %s24
      %p30 = scmp.eq.s32.totalorder %s11, 0
      %p31 = por %p29, %p30
      %p32 = scmp.ne.s32.totalorder %s21, %s24
      %p33 = scmp.eq.s32.totalorder %s16, 1
      %p34 = por %p32, %p33
      %p35 = scmp.ne.s32.totalorder %s24, %s25
      %p36 = scmp.eq.s32.totalorder %s16, 0
      %p37 = por %p35, %p36
      %p38 = scmp.ne.s32.totalorder %s24, %s25
      %p39 = scmp.eq.s32.totalorder %s17, 1
      %p40 = por %p38, %p39
      %p42 = scmp.ne.s32.totalorder %s25, %s41
      %p43 = scmp.eq.s32.totalorder %s17, 0
      %p44 = por %p42, %p43
      %s46 = sadd.s32 %s45, 1
      %p49 = scmp.eq.s32.totalorder %s11, 1
      %p50 = scmp.ne.s32.totalorder %s45, %s47
      %p51 = scmp.eq.s32.totalorder %s11, 0
      %p52 = por %p50, %p51
      %p53 = scmp.ne.s32.totalorder %s45, %s47
      %p54 = scmp.eq.s32.totalorder %s16, 1
      %p55 = por %p53, %p54
      %p56 = scmp.ne.s32.totalorder %s47, %s48
      %p57 = scmp.eq.s32.totalorder %s16, 0
      %p58 = por %p56, %p57
      %p59 = scmp.ne.s32.totalorder %s47, %s48
      %p60 = scmp.eq.s32.totalorder %s17, 1
      %p61 = por %p59, %p60
      %p63 = scmp.ne.s32.totalorder %s48, %s62
      %p64 = scmp.eq.s32.totalorder %s17, 0
      %p65 = por %p63, %p64
      %s67 = sadd.s32 %s66, 1
      %p70 = scmp.eq.s32.totalorder %s11, 1
      %p71 = scmp.ne.s32.totalorder %s66, %s68
      %p72 = scmp.eq.s32.totalorder %s11, 0
      %p73 = por %p71, %p72
      %p74 = scmp.ne.s32.totalorder %s66, %s68
      %p75 = scmp.eq.s32.totalorder %s16, 1
      %p76 = por %p74, %p75
      %p77 = scmp.ne.s32.totalorder %s68, %s69
      %p78 = scmp.eq.s32.totalorder %s16, 0
      %p79 = por %p77, %p78
      %p80 = scmp.ne.s32.totalorder %s68, %s69
      %p81 = scmp.eq.s32.totalorder %s17, 1
      %p82 = por %p80, %p81
      %p84 = scmp.ne.s32.totalorder %s69, %s83
      %p85 = scmp.eq.s32.totalorder %s17, 0
      %p86 = por %p84, %p85
      %s87 = ssub.s32 %s11, %s18
      %p88 = scmp.eq.s32.totalorder %s87, 0
      %s90 = sadd.s32 %s89, 1
      %s91 = scalar_select %p88, %s89, %s90
      %p94 = pneg %p88
      %p95 = scmp.eq.s32.totalorder %s11, 1
      %p96 = por %p94, %p95
      %p97 = scmp.ne.s32.totalorder %s89, %s92
      %p98 = scmp.eq.s32.totalorder %s11, 0
      %p99 = por %p97, %p98
      %p100 = scmp.ne.s32.totalorder %s89, %s92
      %p101 = scmp.eq.s32.totalorder %s16, 1
      %p102 = por %p100, %p101
      %p103 = scmp.ne.s32.totalorder %s92, %s93
      %p104 = scmp.eq.s32.totalorder %s16, 0
      %p105 = por %p103, %p104
      %p106 = scmp.ne.s32.totalorder %s92, %s93
      %p107 = scmp.eq.s32.totalorder %s17, 1
      %p108 = por %p106, %p107
      %p110 = scmp.ne.s32.totalorder %s93, %s109
      %p111 = scmp.eq.s32.totalorder %s17, 0
      %p112 = por %p110, %p111
      %p113 = scmp.le.s32.totalorder 1, %s11
      %p114 = scmp.lt.s32.totalorder %s11, 3
      %p115 = pnand %p113, %p114
      %p116 = pneg %p115
      // Predicated region
      $region9: #{convnet_forward.3} parent=5 // pred_check
        _
      $region10: #{convnet_forward.3} parent=5 // pred_check_branch
        %118 = sbr.rel (%p115) target = $region12
      $region11: #{convnet_forward.3} parent=5 // pred_region
        %s119 = ssub.s32 %s11, 1
        // Predicated region
        $region13: #{convnet_forward.3} parent=11 // pred_check
          %p120 = pneg %p58
        $region14: #{convnet_forward.3} parent=11 // pred_check_branch
          %122 = sbr.rel (%p120) target = $region16
        $region15: #{convnet_forward.3} parent=11 // pred_region
          %s124 = ssub.s32 10240, 10240
          %125 = vsyncadd [#allocation3], %s124
          %s126 = sshll.u32 [#allocation2], 4
          %s127 = int_to_ptr.vmem [resolvable:$true] %s126
          %132 = dma.hbm_to_vmem [thread:$0]  %s1, 10240, %s127, [#allocation3], 512, 512, 32
        $region16: #{convnet_forward.3} parent=11 // pred_fallthru
          _
        // Predicated region
        $region17: #{convnet_forward.3} parent=11 // pred_check
          %p133 = pneg %p79
        $region18: #{convnet_forward.3} parent=11 // pred_check_branch
          %135 = sbr.rel (%p133) target = $region20
        $region19: #{convnet_forward.3} parent=11 // pred_region
          %s137 = ssub.s32 32, 32
          %138 = vsyncadd [#allocation5], %s137
          %s140 = sshll.u32 [#allocation4], 4
          %s141 = int_to_ptr.vmem [resolvable:$true] %s140
          %143 = dma.hbm_to_vmem [thread:$0]  %s2, 32, %s141, [#allocation5]
        $region20: #{convnet_forward.3} parent=11 // pred_fallthru
          _
      $region12: #{convnet_forward.3} parent=5 // pred_fallthru
        _
      %p144 = scmp.lt.s32.totalorder %s11, 2
      // Predicated region
      $region21: #{convnet_forward.3} parent=5 // pred_check
        %p145 = pneg %p144
      $region22: #{convnet_forward.3} parent=5 // pred_check_branch
        %147 = sbr.rel (%p145) target = $region24
      $region23: #{convnet_forward.3} parent=5 // pred_region
        // Predicated region
        $region25: #{convnet_forward.3} parent=23 // pred_check
          %p148 = pneg %p31
        $region26: #{convnet_forward.3} parent=23 // pred_check_branch
          %150 = sbr.rel (%p148) target = $region28
        $region27: #{convnet_forward.3} parent=23 // pred_region
          %p151 = scmp.lt.s32.totalorder %s11, 1
          %s152 = scalar_select %p151, %s11, 1
          %s153 = smul.addr %s152, 4
          %s154 = smul.addr %s153, 8
          %s155 = scalar_lea.vmem %s0, %s154
        $region28: #{convnet_forward.3} parent=23 // pred_fallthru
          _
      $region24: #{convnet_forward.3} parent=5 // pred_fallthru
        _
      %p156 = scmp.le.s32.totalorder 1, %s11
      %p157 = scmp.lt.s32.totalorder %s11, 3
      %p158 = pnand %p156, %p157
      %p159 = pneg %p158
      // Predicated region
      $region29: #{convnet_forward.3} parent=5 // pred_check
        _
      $region30: #{convnet_forward.3} parent=5 // pred_check_branch
        %161 = sbr.rel (%p158) target = $region32
      $region31: #{convnet_forward.3} parent=5 // pred_region
        %s162 = ssub.s32 %s11, 1
        // Predicated region
        $region33: #{convnet_forward.3} parent=31 // pred_check
          %p163 = pneg %p58
        $region34: #{convnet_forward.3} parent=31 // pred_check_branch
          %165 = sbr.rel (%p163) target = $region36
        $region35: #{convnet_forward.3} parent=31 // pred_region
          %166 = dma.done [#allocation3], 10240
        $region36: #{convnet_forward.3} parent=31 // pred_fallthru
          _
        // Predicated region
        $region37: #{convnet_forward.3} parent=31 // pred_check
          %p167 = pneg %p79
        $region38: #{convnet_forward.3} parent=31 // pred_check_branch
          %169 = sbr.rel (%p167) target = $region40
        $region39: #{convnet_forward.3} parent=31 // pred_region
          %170 = dma.done [#allocation5], 32
        $region40: #{convnet_forward.3} parent=31 // pred_fallthru
          _
        %p171 = scmp.lt.s32.totalorder %s16, 1
        %s172 = scalar_select %p171, %s16, 1
        %s173 = smul.addr %s172, 4
        %s174 = smul.addr %s173, 8
        %s175 = scalar_lea.vmem %s0, %s174
        %p176 = pneg %p37
        %p177 = pneg %p34
        %p178 = pneg %p58
        %p179 = pneg %p55
        %p180 = pneg %p79
        %p181 = pneg %p76
        %p182 = pneg %p105
        %p183 = pneg %p102
        %p184 = scmp.lt.s32.totalorder %s16, 1
        %s185 = scalar_select %p184, %s16, 1
        %s186 = smul.addr %s185, 4
        %s187 = smul.addr %s186, 8
        %s188 = scalar_lea.vmem %s3, %s187
        %p189 = scmp.lt.s32.totalorder %s16, 1
        %s190 = scalar_select %p189, %s16, 1
        %s191 = smul.addr %s190, 4
        %s192 = smul.addr %s191, 8
        %s193 = scalar_lea.vmem %s0, %s192
        %p194 = scmp.lt.s32.totalorder %s16, 1
        %s195 = scalar_select %p194, %s16, 1
        %s196 = smul.addr %s195, 4
        %s197 = smul.addr %s196, 8
        %s198 = scalar_lea.vmem %s3, %s197
        %v199 = vld [vmem:[%s193] sm:$0xff]
        %v200 = vld [vmem:[%s193 + $0x8] sm:$0x3f]
        %v201 = vld [vmem:[#allocation2] sm:$0xff]
        %v202 = vld [vmem:[#allocation2 + $0x8] sm:$0xff]
        %v203 = vld [vmem:[#allocation2 + $0x10] sm:$0xff]
        %v204 = vld [vmem:[#allocation2 + $0x18] sm:$0xff]
        %v205 = vld [vmem:[#allocation2 + $0x20] sm:$0xff]
        %v206 = vld [vmem:[#allocation2 + $0x28] sm:$0xff]
        %v207 = vld [vmem:[#allocation2 + $0x30] sm:$0xff]
        %v208 = vld [vmem:[#allocation2 + $0x38] sm:$0xff]
        %v209 = vld [vmem:[#allocation2 + $0x40] sm:$0xff]
        %v210 = vld [vmem:[#allocation2 + $0x48] sm:$0xff]
        %v211 = vld [vmem:[#allocation2 + $0x50] sm:$0xff]
        %v212 = vld [vmem:[#allocation2 + $0x58] sm:$0xff]
        %v213 = vld [vmem:[#allocation2 + $0x60] sm:$0xff]
        %v214 = vld [vmem:[#allocation2 + $0x68] sm:$0xff]
        %v215 = vld [vmem:[#allocation2 + $0x70] sm:$0xff]
        %v216 = vld [vmem:[#allocation2 + $0x78] sm:$0xff]
        %s217 = scalar_lea.vmem %s193, 16
        %v218 = vld [vmem:[%s217] sm:$0xff]
        %v219 = vld [vmem:[%s217 + $0x8] sm:$0x3f]
        %s220 = scalar_lea.vmem [#allocation2], 128
        %v221 = vld [vmem:[%s220] sm:$0xff]
        %v222 = vld [vmem:[%s220 + $0x8] sm:$0xff]
        %v223 = vld [vmem:[%s220 + $0x10] sm:$0xff]
        %v224 = vld [vmem:[%s220 + $0x18] sm:$0xff]
        %v225 = vld [vmem:[%s220 + $0x20] sm:$0xff]
        %v226 = vld [vmem:[%s220 + $0x28] sm:$0xff]
        %v227 = vld [vmem:[%s220 + $0x30] sm:$0xff]
        %v228 = vld [vmem:[%s220 + $0x38] sm:$0xff]
        %v229 = vld [vmem:[%s220 + $0x40] sm:$0xff]
        %v230 = vld [vmem:[%s220 + $0x48] sm:$0xff]
        %v231 = vld [vmem:[%s220 + $0x50] sm:$0xff]
        %v232 = vld [vmem:[%s220 + $0x58] sm:$0xff]
        %v233 = vld [vmem:[%s220 + $0x60] sm:$0xff]
        %v234 = vld [vmem:[%s220 + $0x68] sm:$0xff]
        %v235 = vld [vmem:[%s220 + $0x70] sm:$0xff]
        %v236 = vld [vmem:[%s220 + $0x78] sm:$0xff]
        %vm237 = vcmask 261120
        %v239 = vsel %vm237, %v218, 0
        %v242 = vsel %vm237, %v219, 0
        %244 = vmatprep.subr.mxu0 %v222
        %245 = vmatpush1.msra.mxu0 %v221
        %246 = vmatprep.subr.mxu0 %v226
        %247 = vmatpush1.msra.mxu0 %v225
        %248 = vmatprep.subr.mxu0 %v230
        %249 = vmatpush1.msra.mxu0 %v229
        %250 = vmatprep.subr.mxu0 %v234
        %251 = vmatpush1.msra.mxu0 %v233
        %252 = vmatprep.subr.mxu0 0.0
        %253 = vmatpush1.msra.mxu0 0.0
        %254 = vmatprep.subr.mxu0 0.0
        %255 = vmatpush1.msra.mxu0 0.0
        %256 = vmatprep.subr.mxu0 0.0
        %257 = vmatpush1.msra.mxu0 0.0
        %258 = vmatprep.subr.mxu0 0.0
        %259 = vmatpush1.msra.mxu0 0.0
        %260 = vmatprep.subr.mxu0 0.0
        %261 = vmatpush1.msra.mxu0 0.0
        %262 = vmatprep.subr.mxu0 0.0
        %263 = vmatpush1.msra.mxu0 0.0
        %264 = vmatprep.subr.mxu0 0.0
        %265 = vmatpush1.msra.mxu0 0.0
        %266 = vmatprep.subr.mxu0 0.0
        %267 = vmatpush1.msra.mxu0 0.0
        %268 = vmatprep.subr.mxu0 0.0
        %269 = vmatpush1.msra.mxu0 0.0
        %270 = vmatprep.subr.mxu0 0.0
        %271 = vmatpush1.msra.mxu0 0.0
        %272 = vmatprep.subr.mxu0 0.0
        %273 = vmatpush1.msra.mxu0 0.0
        %274 = vmatprep.subr.mxu0 0.0
        %275 = vmatpush1.msra.mxu0 0.0
        %276 = vmatprep.subr.mxu0 0.0
        %277 = vmatpush1.msra.mxu0 0.0
        %278 = vmatprep.subr.mxu0 0.0
        %279 = vmatpush1.msra.mxu0 0.0
        %280 = vmatprep.subr.mxu0 0.0
        %281 = vmatpush1.msra.mxu0 0.0
        %282 = vmatprep.subr.mxu0 0.0
        %283 = vmatpush1.msra.mxu0 0.0
        %284 = vmatprep.subr.mxu0 0.0
        %285 = vmatpush1.msra.mxu0 0.0
        %286 = vmatprep.subr.mxu0 0.0
        %287 = vmatpush1.msra.mxu0 0.0
        %288 = vmatprep.subr.mxu0 0.0
        %289 = vmatpush1.msra.mxu0 0.0
        %290 = vmatprep.subr.mxu0 0.0
        %291 = vmatpush1.msra.mxu0 0.0
        %292 = vmatprep.subr.mxu0 0.0
        %293 = vmatpush1.msra.mxu0 0.0
        %294 = vmatprep.subr.mxu0 0.0
        %295 = vmatpush1.msra.mxu0 0.0
        %296 = vmatprep.subr.mxu0 0.0
        %297 = vmatpush1.msra.mxu0 0.0
        %298 = vmatprep.subr.mxu0 0.0
        %299 = vmatpush1.msra.mxu0 0.0
        %300 = vmatprep.subr.mxu0 0.0
        %301 = vmatpush1.msra.mxu0 0.0
        %302 = vmatprep.subr.mxu0 0.0
        %303 = vmatpush1.msra.mxu0 0.0
        %304 = vmatprep.subr.mxu0 0.0
        %305 = vmatpush1.msra.mxu0 0.0
        %306 = vmatprep.subr.mxu0 0.0
        %307 = vmatpush1.msra.mxu0 0.0
        %308 = vmatprep.mubr.f32.mxu0 0.0
        %309 = vmatmul.mubr.f32.gmra.mrb[0].mxu0 %v239
        %v310 = vpop.f32.mrb[0].mxu0
        %v311 = vadd.f32 0.0, %v310
        %v312 = vpop.f32.mrb[0].mxu0
        %v313 = vadd.f32 0.0, %v312
        %314 = vmatprep.mubr.f32.mxu0 0.0
        %315 = vmatmul.mubr.f32.gmra.mrb[0].mxu0 %v242
        %v316 = vpop.f32.mrb[0].mxu0
        %v317 = vadd.f32 0.0, %v316
        %v318 = vpop.f32.mrb[0].mxu0
        %v319 = vadd.f32 0.0, %v318
        %320 = vdwg.mxu0
        %321 = vmatprep.subr.mxu0 %v224
        %322 = vmatpush1.msra.mxu0 %v223
        %323 = vmatprep.subr.mxu0 %v228
        %324 = vmatpush1.msra.mxu0 %v227
        %325 = vmatprep.subr.mxu0 %v232
        %326 = vmatpush1.msra.mxu0 %v231
        %327 = vmatprep.subr.mxu0 %v236
        %328 = vmatpush1.msra.mxu0 %v235
        %329 = vmatprep.subr.mxu0 0.0
        %330 = vmatpush1.msra.mxu0 0.0
        %331 = vmatprep.subr.mxu0 0.0
        %332 = vmatpush1.msra.mxu0 0.0
        %333 = vmatprep.subr.mxu0 0.0
        %334 = vmatpush1.msra.mxu0 0.0
        %335 = vmatprep.subr.mxu0 0.0
        %336 = vmatpush1.msra.mxu0 0.0
        %337 = vmatprep.subr.mxu0 0.0
        %338 = vmatpush1.msra.mxu0 0.0
        %339 = vmatprep.subr.mxu0 0.0
        %340 = vmatpush1.msra.mxu0 0.0
        %341 = vmatprep.subr.mxu0 0.0
        %342 = vmatpush1.msra.mxu0 0.0
        %343 = vmatprep.subr.mxu0 0.0
        %344 = vmatpush1.msra.mxu0 0.0
        %345 = vmatprep.subr.mxu0 0.0
        %346 = vmatpush1.msra.mxu0 0.0
        %347 = vmatprep.subr.mxu0 0.0
        %348 = vmatpush1.msra.mxu0 0.0
        %349 = vmatprep.subr.mxu0 0.0
        %350 = vmatpush1.msra.mxu0 0.0
        %351 = vmatprep.subr.mxu0 0.0
        %352 = vmatpush1.msra.mxu0 0.0
        %353 = vmatprep.subr.mxu0 0.0
        %354 = vmatpush1.msra.mxu0 0.0
        %355 = vmatprep.subr.mxu0 0.0
        %356 = vmatpush1.msra.mxu0 0.0
        %357 = vmatprep.subr.mxu0 0.0
        %358 = vmatpush1.msra.mxu0 0.0
        %359 = vmatprep.subr.mxu0 0.0
        %360 = vmatpush1.msra.mxu0 0.0
        %361 = vmatprep.subr.mxu0 0.0
        %362 = vmatpush1.msra.mxu0 0.0
        %363 = vmatprep.subr.mxu0 0.0
        %364 = vmatpush1.msra.mxu0 0.0
        %365 = vmatprep.subr.mxu0 0.0
        %366 = vmatpush1.msra.mxu0 0.0
        %367 = vmatprep.subr.mxu0 0.0
        %368 = vmatpush1.msra.mxu0 0.0
        %369 = vmatprep.subr.mxu0 0.0
        %370 = vmatpush1.msra.mxu0 0.0
        %371 = vmatprep.subr.mxu0 0.0
        %372 = vmatpush1.msra.mxu0 0.0
        %373 = vmatprep.subr.mxu0 0.0
        %374 = vmatpush1.msra.mxu0 0.0
        %375 = vmatprep.subr.mxu0 0.0
        %376 = vmatpush1.msra.mxu0 0.0
        %377 = vmatprep.subr.mxu0 0.0
        %378 = vmatpush1.msra.mxu0 0.0
        %379 = vmatprep.subr.mxu0 0.0
        %380 = vmatpush1.msra.mxu0 0.0
        %381 = vmatprep.subr.mxu0 0.0
        %382 = vmatpush1.msra.mxu0 0.0
        %383 = vmatprep.subr.mxu0 0.0
        %384 = vmatpush1.msra.mxu0 0.0
        %385 = vmatprep.mubr.f32.mxu0 0.0
        %386 = vmatmul.mubr.f32.gmra.mrb[0].mxu0 %v239
        %v387 = vpop.f32.mrb[0].mxu0
        %v388 = vadd.f32 0.0, %v387
        %v389 = vpop.f32.mrb[0].mxu0
        %v390 = vadd.f32 0.0, %v389
        %391 = vmatprep.mubr.f32.mxu0 0.0
        %392 = vmatmul.mubr.f32.gmra.mrb[0].mxu0 %v242
        %v393 = vpop.f32.mrb[0].mxu0
        %v394 = vadd.f32 0.0, %v393
        %v395 = vpop.f32.mrb[0].mxu0
        %v396 = vadd.f32 0.0, %v395
        %397 = vdwg.mxu0
        %v399 = vsel %vm237, %v199, 0
        %v402 = vsel %vm237, %v200, 0
        %404 = vmatprep.subr.mxu0 %v202
        %405 = vmatpush1.msra.mxu0 %v201
        %406 = vmatprep.subr.mxu0 %v206
        %407 = vmatpush1.msra.mxu0 %v205
        %408 = vmatprep.subr.mxu0 %v210
        %409 = vmatpush1.msra.mxu0 %v209
        %410 = vmatprep.subr.mxu0 %v214
        %411 = vmatpush1.msra.mxu0 %v213
        %412 = vmatprep.subr.mxu0 0.0
        %413 = vmatpush1.msra.mxu0 0.0
        %414 = vmatprep.subr.mxu0 0.0
        %415 = vmatpush1.msra.mxu0 0.0
        %416 = vmatprep.subr.mxu0 0.0
        %417 = vmatpush1.msra.mxu0 0.0
        %418 = vmatprep.subr.mxu0 0.0
        %419 = vmatpush1.msra.mxu0 0.0
        %420 = vmatprep.subr.mxu0 0.0
        %421 = vmatpush1.msra.mxu0 0.0
        %422 = vmatprep.subr.mxu0 0.0
        %423 = vmatpush1.msra.mxu0 0.0
        %424 = vmatprep.subr.mxu0 0.0
        %425 = vmatpush1.msra.mxu0 0.0
        %426 = vmatprep.subr.mxu0 0.0
        %427 = vmatpush1.msra.mxu0 0.0
        %428 = vmatprep.subr.mxu0 0.0
        %429 = vmatpush1.msra.mxu0 0.0
        %430 = vmatprep.subr.mxu0 0.0
        %431 = vmatpush1.msra.mxu0 0.0
        %432 = vmatprep.subr.mxu0 0.0
        %433 = vmatpush1.msra.mxu0 0.0
        %434 = vmatprep.subr.mxu0 0.0
        %435 = vmatpush1.msra.mxu0 0.0
        %436 = vmatprep.subr.mxu0 0.0
        %437 = vmatpush1.msra.mxu0 0.0
        %438 = vmatprep.subr.mxu0 0.0
        %439 = vmatpush1.msra.mxu0 0.0
        %440 = vmatprep.subr.mxu0 0.0
        %441 = vmatpush1.msra.mxu0 0.0
        %442 = vmatprep.subr.mxu0 0.0
        %443 = vmatpush1.msra.mxu0 0.0
        %444 = vmatprep.subr.mxu0 0.0
        %445 = vmatpush1.msra.mxu0 0.0
        %446 = vmatprep.subr.mxu0 0.0
        %447 = vmatpush1.msra.mxu0 0.0
        %448 = vmatprep.subr.mxu0 0.0
        %449 = vmatpush1.msra.mxu0 0.0
        %450 = vmatprep.subr.mxu0 0.0
        %451 = vmatpush1.msra.mxu0 0.0
        %452 = vmatprep.subr.mxu0 0.0
        %453 = vmatpush1.msra.mxu0 0.0
        %454 = vmatprep.subr.mxu0 0.0
        %455 = vmatpush1.msra.mxu0 0.0
        %456 = vmatprep.subr.mxu0 0.0
        %457 = vmatpush1.msra.mxu0 0.0
        %458 = vmatprep.subr.mxu0 0.0
        %459 = vmatpush1.msra.mxu0 0.0
        %460 = vmatprep.subr.mxu0 0.0
        %461 = vmatpush1.msra.mxu0 0.0
        %462 = vmatprep.subr.mxu0 0.0
        %463 = vmatpush1.msra.mxu0 0.0
        %464 = vmatprep.subr.mxu0 0.0
        %465 = vmatpush1.msra.mxu0 0.0
        %466 = vmatprep.subr.mxu0 0.0
        %467 = vmatpush1.msra.mxu0 0.0
        %468 = vmatprep.mubr.f32.mxu0 0.0
        %469 = vmatmul.mubr.f32.gmra.mrb[0].mxu0 %v399
        %v470 = vpop.f32.mrb[0].mxu0
        %v471 = vadd.f32 %v311, %v470
        %v472 = vpop.f32.mrb[0].mxu0
        %v473 = vadd.f32 %v313, %v472
        %474 = vmatprep.mubr.f32.mxu0 0.0
        %475 = vmatmul.mubr.f32.gmra.mrb[0].mxu0 %v402
        %v476 = vpop.f32.mrb[0].mxu0
        %v477 = vadd.f32 %v317, %v476
        %v478 = vpop.f32.mrb[0].mxu0
        %v479 = vadd.f32 %v319, %v478
        %480 = vdwg.mxu0
        %481 = vmatprep.subr.mxu0 %v204
        %482 = vmatpush1.msra.mxu0 %v203
        %483 = vmatprep.subr.mxu0 %v208
        %484 = vmatpush1.msra.mxu0 %v207
        %485 = vmatprep.subr.mxu0 %v212
        %486 = vmatpush1.msra.mxu0 %v211
        %487 = vmatprep.subr.mxu0 %v216
        %488 = vmatpush1.msra.mxu0 %v215
        %489 = vmatprep.subr.mxu0 0.0
        %490 = vmatpush1.msra.mxu0 0.0
        %491 = vmatprep.subr.mxu0 0.0
        %492 = vmatpush1.msra.mxu0 0.0
        %493 = vmatprep.subr.mxu0 0.0
        %494 = vmatpush1.msra.mxu0 0.0
        %495 = vmatprep.subr.mxu0 0.0
        %496 = vmatpush1.msra.mxu0 0.0
        %497 = vmatprep.subr.mxu0 0.0
        %498 = vmatpush1.msra.mxu0 0.0
        %499 = vmatprep.subr.mxu0 0.0
        %500 = vmatpush1.msra.mxu0 0.0
        %501 = vmatprep.subr.mxu0 0.0
        %502 = vmatpush1.msra.mxu0 0.0
        %503 = vmatprep.subr.mxu0 0.0
        %504 = vmatpush1.msra.mxu0 0.0
        %505 = vmatprep.subr.mxu0 0.0
        %506 = vmatpush1.msra.mxu0 0.0
        %507 = vmatprep.subr.mxu0 0.0
        %508 = vmatpush1.msra.mxu0 0.0
        %509 = vmatprep.subr.mxu0 0.0
        %510 = vmatpush1.msra.mxu0 0.0
        %511 = vmatprep.subr.mxu0 0.0
        %512 = vmatpush1.msra.mxu0 0.0
        %513 = vmatprep.subr.mxu0 0.0
        %514 = vmatpush1.msra.mxu0 0.0
        %515 = vmatprep.subr.mxu0 0.0
        %516 = vmatpush1.msra.mxu0 0.0
        %517 = vmatprep.subr.mxu0 0.0
        %518 = vmatpush1.msra.mxu0 0.0
        %519 = vmatprep.subr.mxu0 0.0
        %520 = vmatpush1.msra.mxu0 0.0
        %521 = vmatprep.subr.mxu0 0.0
        %522 = vmatpush1.msra.mxu0 0.0
        %523 = vmatprep.subr.mxu0 0.0
        %524 = vmatpush1.msra.mxu0 0.0
        %525 = vmatprep.subr.mxu0 0.0
        %526 = vmatpush1.msra.mxu0 0.0
        %527 = vmatprep.subr.mxu0 0.0
        %528 = vmatpush1.msra.mxu0 0.0
        %529 = vmatprep.subr.mxu0 0.0
        %530 = vmatpush1.msra.mxu0 0.0
        %531 = vmatprep.subr.mxu0 0.0
        %532 = vmatpush1.msra.mxu0 0.0
        %533 = vmatprep.subr.mxu0 0.0
        %534 = vmatpush1.msra.mxu0 0.0
        %535 = vmatprep.subr.mxu0 0.0
        %536 = vmatpush1.msra.mxu0 0.0
        %537 = vmatprep.subr.mxu0 0.0
        %538 = vmatpush1.msra.mxu0 0.0
        %539 = vmatprep.subr.mxu0 0.0
        %540 = vmatpush1.msra.mxu0 0.0
        %541 = vmatprep.subr.mxu0 0.0
        %542 = vmatpush1.msra.mxu0 0.0
        %543 = vmatprep.subr.mxu0 0.0
        %544 = vmatpush1.msra.mxu0 0.0
        %545 = vmatprep.mubr.f32.mxu0 0.0
        %546 = vmatmul.mubr.f32.gmra.mrb[0].mxu0 %v399
        %v547 = vpop.f32.mrb[0].mxu0
        %v548 = vadd.f32 %v388, %v547
        %v549 = vpop.f32.mrb[0].mxu0
        %v550 = vadd.f32 %v390, %v549
        %551 = vmatprep.mubr.f32.mxu0 0.0
        %552 = vmatmul.mubr.f32.gmra.mrb[0].mxu0 %v402
        %v553 = vpop.f32.mrb[0].mxu0
        %v554 = vadd.f32 %v394, %v553
        %v555 = vpop.f32.mrb[0].mxu0
        %v556 = vadd.f32 %v396, %v555
        %557 = vdwg.mxu0
        %v558 = vld [vmem:[%s193 + $0x1] sm:$0xff]
        %v559 = vld [vmem:[%s193 + $0x9] sm:$0x3f]
        %s560 = scalar_lea.vmem [#allocation2], 256
        %v561 = vld [vmem:[%s560] sm:$0xff]
        %v562 = vld [vmem:[%s560 + $0x8] sm:$0xff]
        %v563 = vld [vmem:[%s560 + $0x10] sm:$0xff]
        %v564 = vld [vmem:[%s560 + $0x18] sm:$0xff]
        %v565 = vld [vmem:[%s560 + $0x20] sm:$0xff]
        %v566 = vld [vmem:[%s560 + $0x28] sm:$0xff]
        %v567 = vld [vmem:[%s560 + $0x30] sm:$0xff]
        %v568 = vld [vmem:[%s560 + $0x38] sm:$0xff]
        %v569 = vld [vmem:[%s560 + $0x40] sm:$0xff]
        %v570 = vld [vmem:[%s560 + $0x48] sm:$0xff]
        %v571 = vld [vmem:[%s560 + $0x50] sm:$0xff]
        %v572 = vld [vmem:[%s560 + $0x58] sm:$0xff]
        %v573 = vld [vmem:[%s560 + $0x60] sm:$0xff]
        %v574 = vld [vmem:[%s560 + $0x68] sm:$0xff]
        %v575 = vld [vmem:[%s560 + $0x70] sm:$0xff]
        %v576 = vld [vmem:[%s560 + $0x78] sm:$0xff]
        %v578 = vsel %vm237, %v558, 0
        %v581 = vsel %vm237, %v559, 0
        %583 = vmatprep.subr.mxu0 %v562
        %584 = vmatpush1.msra.mxu0 %v561
        %585 = vmatprep.subr.mxu0 %v566
        %586 = vmatpush1.msra.mxu0 %v565
        %587 = vmatprep.subr.mxu0 %v570
        %588 = vmatpush1.msra.mxu0 %v569
        %589 = vmatprep.subr.mxu0 %v574
        %590 = vmatpush1.msra.mxu0 %v573
        %591 = vmatprep.subr.mxu0 0.0
        %592 = vmatpush1.msra.mxu0 0.0
        %593 = vmatprep.subr.mxu0 0.0
        %594 = vmatpush1.msra.mxu0 0.0
        %595 = vmatprep.subr.mxu0 0.0
        %596 = vmatpush1.msra.mxu0 0.0
        %597 = vmatprep.subr.mxu0 0.0
        %598 = vmatpush1.msra.mxu0 0.0
        %599 = vmatprep.subr.mxu0 0.0
        %600 = vmatpush1.msra.mxu0 0.0
        %601 = vmatprep.subr.mxu0 0.0
        %602 = vmatpush1.msra.mxu0 0.0
        %603 = vmatprep.subr.mxu0 0.0
        %604 = vmatpush1.msra.mxu0 0.0
        %605 = vmatprep.subr.mxu0 0.0
        %606 = vmatpush1.msra.mxu0 0.0
        %607 = vmatprep.subr.mxu0 0.0
        %608 = vmatpush1.msra.mxu0 0.0
        %609 = vmatprep.subr.mxu0 0.0
        %610 = vmatpush1.msra.mxu0 0.0
        %611 = vmatprep.subr.mxu0 0.0
        %612 = vmatpush1.msra.mxu0 0.0
        %613 = vmatprep.subr.mxu0 0.0
        %614 = vmatpush1.msra.mxu0 0.0
        %615 = vmatprep.subr.mxu0 0.0
        %616 = vmatpush1.msra.mxu0 0.0
        %617 = vmatprep.subr.mxu0 0.0
        %618 = vmatpush1.msra.mxu0 0.0
        %619 = vmatprep.subr.mxu0 0.0
        %620 = vmatpush1.msra.mxu0 0.0
        %621 = vmatprep.subr.mxu0 0.0
        %622 = vmatpush1.msra.mxu0 0.0
        %623 = vmatprep.subr.mxu0 0.0
        %624 = vmatpush1.msra.mxu0 0.0
        %625 = vmatprep.subr.mxu0 0.0
        %626 = vmatpush1.msra.mxu0 0.0
        %627 = vmatprep.subr.mxu0 0.0
        %628 = vmatpush1.msra.mxu0 0.0
        %629 = vmatprep.subr.mxu0 0.0
        %630 = vmatpush1.msra.mxu0 0.0
        %631 = vmatprep.subr.mxu0 0.0
        %632 = vmatpush1.msra.mxu0 0.0
        %633 = vmatprep.subr.mxu0 0.0
        %634 = vmatpush1.msra.mxu0 0.0
        %635 = vmatprep.subr.mxu0 0.0
        %636 = vmatpush1.msra.mxu0 0.0
        %637 = vmatprep.subr.mxu0 0.0
        %638 = vmatpush1.msra.mxu0 0.0
        %639 = vmatprep.subr.mxu0 0.0
        %640 = vmatpush1.msra.mxu0 0.0
        %641 = vmatprep.subr.mxu0 0.0
        %642 = vmatpush1.msra.mxu0 0.0
        %643 = vmatprep.subr.mxu0 0.0
        %644 = vmatpush1.msra.mxu0 0.0
        %645 = vmatprep.subr.mxu0 0.0
        %646 = vmatpush1.msra.mxu0 0.0
        %647 = vmatprep.mubr.f32.mxu0 0.0
        %648 = vmatmul.mubr.f32.gmra.mrb[0].mxu0 %v578
        %v649 = vpop.f32.mrb[0].mxu0
        %v650 = vadd.f32 0.0, %v649
        %v651 = vpop.f32.mrb[0].mxu0
        %v652 = vadd.f32 0.0, %v651
        %653 = vmatprep.mubr.f32.mxu0 0.0
        %654 = vmatmul.mubr.f32.gmra.mrb[0].mxu0 %v581
        %v655 = vpop.f32.mrb[0].mxu0
        %v656 = vadd.f32 0.0, %v655
        %v657 = vpop.f32.mrb[0].mxu0
        %v658 = vadd.f32 0.0, %v657
        %659 = vdwg.mxu0
        %660 = vmatprep.subr.mxu0 %v564
        %661 = vmatpush1.msra.mxu0 %v563
        %662 = vmatprep.subr.mxu0 %v568
        %663 = vmatpush1.msra.mxu0 %v567
        %664 = vmatprep.subr.mxu0 %v572
        %665 = vmatpush1.msra.mxu0 %v571
        %666 = vmatprep.subr.mxu0 %v576
        %667 = vmatpush1.msra.mxu0 %v575
        %668 = vmatprep.subr.mxu0 0.0
        %669 = vmatpush1.msra.mxu0 0.0
        %670 = vmatprep.subr.mxu0 0.0
        %671 = vmatpush1.msra.mxu0 0.0
        %672 = vmatprep.subr.mxu0 0.0
        %673 = vmatpush1.msra.mxu0 0.0
        %674 = vmatprep.subr.mxu0 0.0
        %675 = vmatpush1.msra.mxu0 0.0
        %676 = vmatprep.subr.mxu0 0.0
        %677 = vmatpush1.msra.mxu0 0.0
        %678 = vmatprep.subr.mxu0 0.0
        %679 = vmatpush1.msra.mxu0 0.0
        %680 = vmatprep.subr.mxu0 0.0
        %681 = vmatpush1.msra.mxu0 0.0
        %682 = vmatprep.subr.mxu0 0.0
        %683 = vmatpush1.msra.mxu0 0.0
        %684 = vmatprep.subr.mxu0 0.0
        %685 = vmatpush1.msra.mxu0 0.0
        %686 = vmatprep.subr.mxu0 0.0
        %687 = vmatpush1.msra.mxu0 0.0
        %688 = vmatprep.subr.mxu0 0.0
        %689 = vmatpush1.msra.mxu0 0.0
        %690 = vmatprep.subr.mxu0 0.0
        %691 = vmatpush1.msra.mxu0 0.0
        %692 = vmatprep.subr.mxu0 0.0
        %693 = vmatpush1.msra.mxu0 0.0
        %694 = vmatprep.subr.mxu0 0.0
        %695 = vmatpush1.msra.mxu0 0.0
        %696 = vmatprep.subr.mxu0 0.0
        %697 = vmatpush1.msra.mxu0 0.0
        %698 = vmatprep.subr.mxu0 0.0
        %699 = vmatpush1.msra.mxu0 0.0
        %700 = vmatprep.subr.mxu0 0.0
        %701 = vmatpush1.msra.mxu0 0.0
        %702 = vmatprep.subr.mxu0 0.0
        %703 = vmatpush1.msra.mxu0 0.0
        %704 = vmatprep.subr.mxu0 0.0
        %705 = vmatpush1.msra.mxu0 0.0
        %706 = vmatprep.subr.mxu0 0.0
        %707 = vmatpush1.msra.mxu0 0.0
        %708 = vmatprep.subr.mxu0 0.0
        %709 = vmatpush1.msra.mxu0 0.0
        %710 = vmatprep.subr.mxu0 0.0
        %711 = vmatpush1.msra.mxu0 0.0
        %712 = vmatprep.subr.mxu0 0.0
        %713 = vmatpush1.msra.mxu0 0.0
        %714 = vmatprep.subr.mxu0 0.0
        %715 = vmatpush1.msra.mxu0 0.0
        %716 = vmatprep.subr.mxu0 0.0
        %717 = vmatpush1.msra.mxu0 0.0
        %718 = vmatprep.subr.mxu0 0.0
        %719 = vmatpush1.msra.mxu0 0.0
        %720 = vmatprep.subr.mxu0 0.0
        %721 = vmatpush1.msra.mxu0 0.0
        %722 = vmatprep.subr.mxu0 0.0
        %723 = vmatpush1.msra.mxu0 0.0
        %724 = vmatprep.mubr.f32.mxu0 0.0
        %725 = vmatmul.mubr.f32.gmra.mrb[0].mxu0 %v578
        %v726 = vpop.f32.mrb[0].mxu0
        %v727 = vadd.f32 0.0, %v726
        %v728 = vpop.f32.mrb[0].mxu0
        %v729 = vadd.f32 0.0, %v728
        %730 = vmatprep.mubr.f32.mxu0 0.0
        %731 = vmatmul.mubr.f32.gmra.mrb[0].mxu0 %v581
        %v732 = vpop.f32.mrb[0].mxu0
        %v733 = vadd.f32 0.0, %v732
        %v734 = vpop.f32.mrb[0].mxu0
        %v735 = vadd.f32 0.0, %v734
        %736 = vdwg.mxu0
        %v737 = vadd.f32 %v471, %v650
        %v738 = vadd.f32 %v473, %v652
        %v739 = vadd.f32 %v548, %v727
        %v740 = vadd.f32 %v550, %v729
        %v741 = vadd.f32 %v477, %v656
        %v742 = vadd.f32 %v479, %v658
        %v743 = vadd.f32 %v554, %v733
        %v744 = vadd.f32 %v556, %v735
        %v745 = vld [vmem:[%s217 + $0x1] sm:$0xff]
        %v746 = vld [vmem:[%s217 + $0x9] sm:$0x3f]
        %s747 = scalar_lea.vmem [#allocation2], 384
        %v748 = vld [vmem:[%s747] sm:$0xff]
        %v749 = vld [vmem:[%s747 + $0x8] sm:$0xff]
        %v750 = vld [vmem:[%s747 + $0x10] sm:$0xff]
        %v751 = vld [vmem:[%s747 + $0x18] sm:$0xff]
        %v752 = vld [vmem:[%s747 + $0x20] sm:$0xff]
        %v753 = vld [vmem:[%s747 + $0x28] sm:$0xff]
        %v754 = vld [vmem:[%s747 + $0x30] sm:$0xff]
        %v755 = vld [vmem:[%s747 + $0x38] sm:$0xff]
        %v756 = vld [vmem:[%s747 + $0x40] sm:$0xff]
        %v757 = vld [vmem:[%s747 + $0x48] sm:$0xff]
        %v758 = vld [vmem:[%s747 + $0x50] sm:$0xff]
        %v759 = vld [vmem:[%s747 + $0x58] sm:$0xff]
        %v760 = vld [vmem:[%s747 + $0x60] sm:$0xff]
        %v761 = vld [vmem:[%s747 + $0x68] sm:$0xff]
        %v762 = vld [vmem:[%s747 + $0x70] sm:$0xff]
        %v763 = vld [vmem:[%s747 + $0x78] sm:$0xff]
        %v765 = vsel %vm237, %v745, 0
        %v768 = vsel %vm237, %v746, 0
        %770 = vmatprep.subr.mxu0 %v749
        %771 = vmatpush1.msra.mxu0 %v748
        %772 = vmatprep.subr.mxu0 %v753
        %773 = vmatpush1.msra.mxu0 %v752
        %774 = vmatprep.subr.mxu0 %v757
        %775 = vmatpush1.msra.mxu0 %v756
        %776 = vmatprep.subr.mxu0 %v761
        %777 = vmatpush1.msra.mxu0 %v760
        %778 = vmatprep.subr.mxu0 0.0
        %779 = vmatpush1.msra.mxu0 0.0
        %780 = vmatprep.subr.mxu0 0.0
        %781 = vmatpush1.msra.mxu0 0.0
        %782 = vmatprep.subr.mxu0 0.0
        %783 = vmatpush1.msra.mxu0 0.0
        %784 = vmatprep.subr.mxu0 0.0
        %785 = vmatpush1.msra.mxu0 0.0
        %786 = vmatprep.subr.mxu0 0.0
        %787 = vmatpush1.msra.mxu0 0.0
        %788 = vmatprep.subr.mxu0 0.0
        %789 = vmatpush1.msra.mxu0 0.0
        %790 = vmatprep.subr.mxu0 0.0
        %791 = vmatpush1.msra.mxu0 0.0
        %792 = vmatprep.subr.mxu0 0.0
        %793 = vmatpush1.msra.mxu0 0.0
        %794 = vmatprep.subr.mxu0 0.0
        %795 = vmatpush1.msra.mxu0 0.0
        %796 = vmatprep.subr.mxu0 0.0
        %797 = vmatpush1.msra.mxu0 0.0
        %798 = vmatprep.subr.mxu0 0.0
        %799 = vmatpush1.msra.mxu0 0.0
        %800 = vmatprep.subr.mxu0 0.0
        %801 = vmatpush1.msra.mxu0 0.0
        %802 = vmatprep.subr.mxu0 0.0
        %803 = vmatpush1.msra.mxu0 0.0
        %804 = vmatprep.subr.mxu0 0.0
        %805 = vmatpush1.msra.mxu0 0.0
        %806 = vmatprep.subr.mxu0 0.0
        %807 = vmatpush1.msra.mxu0 0.0
        %808 = vmatprep.subr.mxu0 0.0
        %809 = vmatpush1.msra.mxu0 0.0
        %810 = vmatprep.subr.mxu0 0.0
        %811 = vmatpush1.msra.mxu0 0.0
        %812 = vmatprep.subr.mxu0 0.0
        %813 = vmatpush1.msra.mxu0 0.0
        %814 = vmatprep.subr.mxu0 0.0
        %815 = vmatpush1.msra.mxu0 0.0
        %816 = vmatprep.subr.mxu0 0.0
        %817 = vmatpush1.msra.mxu0 0.0
        %818 = vmatprep.subr.mxu0 0.0
        %819 = vmatpush1.msra.mxu0 0.0
        %820 = vmatprep.subr.mxu0 0.0
        %821 = vmatpush1.msra.mxu0 0.0
        %822 = vmatprep.subr.mxu0 0.0
        %823 = vmatpush1.msra.mxu0 0.0
        %824 = vmatprep.subr.mxu0 0.0
        %825 = vmatpush1.msra.mxu0 0.0
        %826 = vmatprep.subr.mxu0 0.0
        %827 = vmatpush1.msra.mxu0 0.0
        %828 = vmatprep.subr.mxu0 0.0
        %829 = vmatpush1.msra.mxu0 0.0
        %830 = vmatprep.subr.mxu0 0.0
        %831 = vmatpush1.msra.mxu0 0.0
        %832 = vmatprep.subr.mxu0 0.0
        %833 = vmatpush1.msra.mxu0 0.0
        %834 = vmatprep.mubr.f32.mxu0 0.0
        %835 = vmatmul.mubr.f32.gmra.mrb[0].mxu0 %v765
        %v836 = vpop.f32.mrb[0].mxu0
        %v837 = vadd.f32 0.0, %v836
        %v838 = vpop.f32.mrb[0].mxu0
        %v839 = vadd.f32 0.0, %v838
        %840 = vmatprep.mubr.f32.mxu0 0.0
        %841 = vmatmul.mubr.f32.gmra.mrb[0].mxu0 %v768
        %v842 = vpop.f32.mrb[0].mxu0
        %v843 = vadd.f32 0.0, %v842
        %v844 = vpop.f32.mrb[0].mxu0
        %v845 = vadd.f32 0.0, %v844
        %846 = vdwg.mxu0
        %847 = vmatprep.subr.mxu0 %v751
        %848 = vmatpush1.msra.mxu0 %v750
        %849 = vmatprep.subr.mxu0 %v755
        %850 = vmatpush1.msra.mxu0 %v754
        %851 = vmatprep.subr.mxu0 %v759
        %852 = vmatpush1.msra.mxu0 %v758
        %853 = vmatprep.subr.mxu0 %v763
        %854 = vmatpush1.msra.mxu0 %v762
        %855 = vmatprep.subr.mxu0 0.0
        %856 = vmatpush1.msra.mxu0 0.0
        %857 = vmatprep.subr.mxu0 0.0
        %858 = vmatpush1.msra.mxu0 0.0
        %859 = vmatprep.subr.mxu0 0.0
        %860 = vmatpush1.msra.mxu0 0.0
        %861 = vmatprep.subr.mxu0 0.0
        %862 = vmatpush1.msra.mxu0 0.0
        %863 = vmatprep.subr.mxu0 0.0
        %864 = vmatpush1.msra.mxu0 0.0
        %865 = vmatprep.subr.mxu0 0.0
        %866 = vmatpush1.msra.mxu0 0.0
        %867 = vmatprep.subr.mxu0 0.0
        %868 = vmatpush1.msra.mxu0 0.0
        %869 = vmatprep.subr.mxu0 0.0
        %870 = vmatpush1.msra.mxu0 0.0
        %871 = vmatprep.subr.mxu0 0.0
        %872 = vmatpush1.msra.mxu0 0.0
        %873 = vmatprep.subr.mxu0 0.0
        %874 = vmatpush1.msra.mxu0 0.0
        %875 = vmatprep.subr.mxu0 0.0
        %876 = vmatpush1.msra.mxu0 0.0
        %877 = vmatprep.subr.mxu0 0.0
        %878 = vmatpush1.msra.mxu0 0.0
        %879 = vmatprep.subr.mxu0 0.0
        %880 = vmatpush1.msra.mxu0 0.0
        %881 = vmatprep.subr.mxu0 0.0
        %882 = vmatpush1.msra.mxu0 0.0
        %883 = vmatprep.subr.mxu0 0.0
        %884 = vmatpush1.msra.mxu0 0.0
        %885 = vmatprep.subr.mxu0 0.0
        %886 = vmatpush1.msra.mxu0 0.0
        %887 = vmatprep.subr.mxu0 0.0
        %888 = vmatpush1.msra.mxu0 0.0
        %889 = vmatprep.subr.mxu0 0.0
        %890 = vmatpush1.msra.mxu0 0.0
        %891 = vmatprep.subr.mxu0 0.0
        %892 = vmatpush1.msra.mxu0 0.0
        %893 = vmatprep.subr.mxu0 0.0
        %894 = vmatpush1.msra.mxu0 0.0
        %895 = vmatprep.subr.mxu0 0.0
        %896 = vmatpush1.msra.mxu0 0.0
        %897 = vmatprep.subr.mxu0 0.0
        %898 = vmatpush1.msra.mxu0 0.0
        %899 = vmatprep.subr.mxu0 0.0
        %900 = vmatpush1.msra.mxu0 0.0
        %901 = vmatprep.subr.mxu0 0.0
        %902 = vmatpush1.msra.mxu0 0.0
        %903 = vmatprep.subr.mxu0 0.0
        %904 = vmatpush1.msra.mxu0 0.0
        %905 = vmatprep.subr.mxu0 0.0
        %906 = vmatpush1.msra.mxu0 0.0
        %907 = vmatprep.subr.mxu0 0.0
        %908 = vmatpush1.msra.mxu0 0.0
        %909 = vmatprep.subr.mxu0 0.0
        %910 = vmatpush1.msra.mxu0 0.0
        %911 = vmatprep.mubr.f32.mxu0 0.0
        %912 = vmatmul.mubr.f32.gmra.mrb[0].mxu0 %v765
        %v913 = vpop.f32.mrb[0].mxu0
        %v914 = vadd.f32 0.0, %v913
        %v915 = vpop.f32.mrb[0].mxu0
        %v916 = vadd.f32 0.0, %v915
        %917 = vmatprep.mubr.f32.mxu0 0.0
        %918 = vmatmul.mubr.f32.gmra.mrb[0].mxu0 %v768
        %v919 = vpop.f32.mrb[0].mxu0
        %v920 = vadd.f32 0.0, %v919
        %v921 = vpop.f32.mrb[0].mxu0
        %v922 = vadd.f32 0.0, %v921
        %923 = vdwg.mxu0
        %v924 = vadd.f32 %v737, %v837
        %v925 = vadd.f32 %v738, %v839
        %v926 = vadd.f32 %v739, %v914
        %v927 = vadd.f32 %v740, %v916
        %v928 = vadd.f32 %v741, %v843
        %v929 = vadd.f32 %v742, %v845
        %v930 = vadd.f32 %v743, %v920
        %v931 = vadd.f32 %v744, %v922
        %v932 = vld [vmem:[%s193 + $0x2] sm:$0xff]
        %v933 = vld [vmem:[%s193 + $0xa] sm:$0x3f]
        %s934 = scalar_lea.vmem [#allocation2], 512
        %v935 = vld [vmem:[%s934] sm:$0xff]
        %v936 = vld [vmem:[%s934 + $0x8] sm:$0xff]
        %v937 = vld [vmem:[%s934 + $0x10] sm:$0xff]
        %v938 = vld [vmem:[%s934 + $0x18] sm:$0xff]
        %v939 = vld [vmem:[%s934 + $0x20] sm:$0xff]
        %v940 = vld [vmem:[%s934 + $0x28] sm:$0xff]
        %v941 = vld [vmem:[%s934 + $0x30] sm:$0xff]
        %v942 = vld [vmem:[%s934 + $0x38] sm:$0xff]
        %v943 = vld [vmem:[%s934 + $0x40] sm:$0xff]
        %v944 = vld [vmem:[%s934 + $0x48] sm:$0xff]
        %v945 = vld [vmem:[%s934 + $0x50] sm:$0xff]
        %v946 = vld [vmem:[%s934 + $0x58] sm:$0xff]
        %v947 = vld [vmem:[%s934 + $0x60] sm:$0xff]
        %v948 = vld [vmem:[%s934 + $0x68] sm:$0xff]
        %v949 = vld [vmem:[%s934 + $0x70] sm:$0xff]
        %v950 = vld [vmem:[%s934 + $0x78] sm:$0xff]
        %v952 = vsel %vm237, %v932, 0
        %v955 = vsel %vm237, %v933, 0
        %957 = vmatprep.subr.mxu0 %v936
        %958 = vmatpush1.msra.mxu0 %v935
        %959 = vmatprep.subr.mxu0 %v940
        %960 = vmatpush1.msra.mxu0 %v939
        %961 = vmatprep.subr.mxu0 %v944
        %962 = vmatpush1.msra.mxu0 %v943
        %963 = vmatprep.subr.mxu0 %v948
        %964 = vmatpush1.msra.mxu0 %v947
        %965 = vmatprep.subr.mxu0 0.0
        %966 = vmatpush1.msra.mxu0 0.0
        %967 = vmatprep.subr.mxu0 0.0
        %968 = vmatpush1.msra.mxu0 0.0
        %969 = vmatprep.subr.mxu0 0.0
        %970 = vmatpush1.msra.mxu0 0.0
        %971 = vmatprep.subr.mxu0 0.0
        %972 = vmatpush1.msra.mxu0 0.0
        %973 = vmatprep.subr.mxu0 0.0
        %974 = vmatpush1.msra.mxu0 0.0
        %975 = vmatprep.subr.mxu0 0.0
        %976 = vmatpush1.msra.mxu0 0.0
        %977 = vmatprep.subr.mxu0 0.0
        %978 = vmatpush1.msra.mxu0 0.0
        %979 = vmatprep.subr.mxu0 0.0
        %980 = vmatpush1.msra.mxu0 0.0
        %981 = vmatprep.subr.mxu0 0.0
        %982 = vmatpush1.msra.mxu0 0.0
        %983 = vmatprep.subr.mxu0 0.0
        %984 = vmatpush1.msra.mxu0 0.0
        %985 = vmatprep.subr.mxu0 0.0
        %986 = vmatpush1.msra.mxu0 0.0
        %987 = vmatprep.subr.mxu0 0.0
        %988 = vmatpush1.msra.mxu0 0.0
        %989 = vmatprep.subr.mxu0 0.0
        %990 = vmatpush1.msra.mxu0 0.0
        %991 = vmatprep.subr.mxu0 0.0
        %992 = vmatpush1.msra.mxu0 0.0
        %993 = vmatprep.subr.mxu0 0.0
        %994 = vmatpush1.msra.mxu0 0.0
        %995 = vmatprep.subr.mxu0 0.0
        %996 = vmatpush1.msra.mxu0 0.0
        %997 = vmatprep.subr.mxu0 0.0
        %998 = vmatpush1.msra.mxu0 0.0
        %999 = vmatprep.subr.mxu0 0.0
        %1000 = vmatpush1.msra.mxu0 0.0
        %1001 = vmatprep.subr.mxu0 0.0
        %1002 = vmatpush1.msra.mxu0 0.0
        %1003 = vmatprep.subr.mxu0 0.0
        %1004 = vmatpush1.msra.mxu0 0.0
        %1005 = vmatprep.subr.mxu0 0.0
        %1006 = vmatpush1.msra.mxu0 0.0
        %1007 = vmatprep.subr.mxu0 0.0
        %1008 = vmatpush1.msra.mxu0 0.0
        %1009 = vmatprep.subr.mxu0 0.0
        %1010 = vmatpush1.msra.mxu0 0.0
        %1011 = vmatprep.subr.mxu0 0.0
        %1012 = vmatpush1.msra.mxu0 0.0
        %1013 = vmatprep.subr.mxu0 0.0
        %1014 = vmatpush1.msra.mxu0 0.0
        %1015 = vmatprep.subr.mxu0 0.0
        %1016 = vmatpush1.msra.mxu0 0.0
        %1017 = vmatprep.subr.mxu0 0.0
        %1018 = vmatpush1.msra.mxu0 0.0
        %1019 = vmatprep.subr.mxu0 0.0
        %1020 = vmatpush1.msra.mxu0 0.0
        %1021 = vmatprep.mubr.f32.mxu0 0.0
        %1022 = vmatmul.mubr.f32.gmra.mrb[0].mxu0 %v952
        %v1023 = vpop.f32.mrb[0].mxu0
        %v1024 = vadd.f32 0.0, %v1023
        %v1025 = vpop.f32.mrb[0].mxu0
        %v1026 = vadd.f32 0.0, %v1025
        %1027 = vmatprep.mubr.f32.mxu0 0.0
        %1028 = vmatmul.mubr.f32.gmra.mrb[0].mxu0 %v955
        %v1029 = vpop.f32.mrb[0].mxu0
        %v1030 = vadd.f32 0.0, %v1029
        %v1031 = vpop.f32.mrb[0].mxu0
        %v1032 = vadd.f32 0.0, %v1031
        %1033 = vdwg.mxu0
        %1034 = vmatprep.subr.mxu0 %v938
        %1035 = vmatpush1.msra.mxu0 %v937
        %1036 = vmatprep.subr.mxu0 %v942
        %1037 = vmatpush1.msra.mxu0 %v941
        %1038 = vmatprep.subr.mxu0 %v946
        %1039 = vmatpush1.msra.mxu0 %v945
        %1040 = vmatprep.subr.mxu0 %v950
        %1041 = vmatpush1.msra.mxu0 %v949
        %1042 = vmatprep.subr.mxu0 0.0
        %1043 = vmatpush1.msra.mxu0 0.0
        %1044 = vmatprep.subr.mxu0 0.0
        %1045 = vmatpush1.msra.mxu0 0.0
        %1046 = vmatprep.subr.mxu0 0.0
        %1047 = vmatpush1.msra.mxu0 0.0
        %1048 = vmatprep.subr.mxu0 0.0
        %1049 = vmatpush1.msra.mxu0 0.0
        %1050 = vmatprep.subr.mxu0 0.0
        %1051 = vmatpush1.msra.mxu0 0.0
        %1052 = vmatprep.subr.mxu0 0.0
        %1053 = vmatpush1.msra.mxu0 0.0
        %1054 = vmatprep.subr.mxu0 0.0
        %1055 = vmatpush1.msra.mxu0 0.0
        %1056 = vmatprep.subr.mxu0 0.0
        %1057 = vmatpush1.msra.mxu0 0.0
        %1058 = vmatprep.subr.mxu0 0.0
        %1059 = vmatpush1.msra.mxu0 0.0
        %1060 = vmatprep.subr.mxu0 0.0
        %1061 = vmatpush1.msra.mxu0 0.0
        %1062 = vmatprep.subr.mxu0 0.0
        %1063 = vmatpush1.msra.mxu0 0.0
        %1064 = vmatprep.subr.mxu0 0.0
        %1065 = vmatpush1.msra.mxu0 0.0
        %1066 = vmatprep.subr.mxu0 0.0
        %1067 = vmatpush1.msra.mxu0 0.0
        %1068 = vmatprep.subr.mxu0 0.0
        %1069 = vmatpush1.msra.mxu0 0.0
        %1070 = vmatprep.subr.mxu0 0.0
        %1071 = vmatpush1.msra.mxu0 0.0
        %1072 = vmatprep.subr.mxu0 0.0
        %1073 = vmatpush1.msra.mxu0 0.0
        %1074 = vmatprep.subr.mxu0 0.0
        %1075 = vmatpush1.msra.mxu0 0.0
        %1076 = vmatprep.subr.mxu0 0.0
        %1077 = vmatpush1.msra.mxu0 0.0
        %1078 = vmatprep.subr.mxu0 0.0
        %1079 = vmatpush1.msra.mxu0 0.0
        %1080 = vmatprep.subr.mxu0 0.0
        %1081 = vmatpush1.msra.mxu0 0.0
        %1082 = vmatprep.subr.mxu0 0.0
        %1083 = vmatpush1.msra.mxu0 0.0
        %1084 = vmatprep.subr.mxu0 0.0
        %1085 = vmatpush1.msra.mxu0 0.0
        %1086 = vmatprep.subr.mxu0 0.0
        %1087 = vmatpush1.msra.mxu0 0.0
        %1088 = vmatprep.subr.mxu0 0.0
        %1089 = vmatpush1.msra.mxu0 0.0
        %1090 = vmatprep.subr.mxu0 0.0
        %1091 = vmatpush1.msra.mxu0 0.0
        %1092 = vmatprep.subr.mxu0 0.0
        %1093 = vmatpush1.msra.mxu0 0.0
        %1094 = vmatprep.subr.mxu0 0.0
        %1095 = vmatpush1.msra.mxu0 0.0
        %1096 = vmatprep.subr.mxu0 0.0
        %1097 = vmatpush1.msra.mxu0 0.0
        %1098 = vmatprep.mubr.f32.mxu0 0.0
        %1099 = vmatmul.mubr.f32.gmra.mrb[0].mxu0 %v952
        %v1100 = vpop.f32.mrb[0].mxu0
        %v1101 = vadd.f32 0.0, %v1100
        %v1102 = vpop.f32.mrb[0].mxu0
        %v1103 = vadd.f32 0.0, %v1102
        %1104 = vmatprep.mubr.f32.mxu0 0.0
        %1105 = vmatmul.mubr.f32.gmra.mrb[0].mxu0 %v955
        %v1106 = vpop.f32.mrb[0].mxu0
        %v1107 = vadd.f32 0.0, %v1106
        %v1108 = vpop.f32.mrb[0].mxu0
        %v1109 = vadd.f32 0.0, %v1108
        %1110 = vdwg.mxu0
        %v1111 = vadd.f32 %v924, %v1024
        %v1112 = vadd.f32 %v925, %v1026
        %v1113 = vadd.f32 %v926, %v1101
        %v1114 = vadd.f32 %v927, %v1103
        %v1115 = vadd.f32 %v928, %v1030
        %v1116 = vadd.f32 %v929, %v1032
        %v1117 = vadd.f32 %v930, %v1107
        %v1118 = vadd.f32 %v931, %v1109
        %1119 = vmatprep.subr.mxu0 %v222
        %1120 = vmatpush1.msra.mxu0 %v221
        %1121 = vmatprep.subr.mxu0 %v226
        %1122 = vmatpush1.msra.mxu0 %v225
        %1123 = vmatprep.subr.mxu0 %v230
        %1124 = vmatpush1.msra.mxu0 %v229
        %1125 = vmatprep.subr.mxu0 %v234
        %1126 = vmatpush1.msra.mxu0 %v233
        %1127 = vmatprep.subr.mxu0 0.0
        %1128 = vmatpush1.msra.mxu0 0.0
        %1129 = vmatprep.subr.mxu0 0.0
        %1130 = vmatpush1.msra.mxu0 0.0
        %1131 = vmatprep.subr.mxu0 0.0
        %1132 = vmatpush1.msra.mxu0 0.0
        %1133 = vmatprep.subr.mxu0 0.0
        %1134 = vmatpush1.msra.mxu0 0.0
        %1135 = vmatprep.subr.mxu0 0.0
        %1136 = vmatpush1.msra.mxu0 0.0
        %1137 = vmatprep.subr.mxu0 0.0
        %1138 = vmatpush1.msra.mxu0 0.0
        %1139 = vmatprep.subr.mxu0 0.0
        %1140 = vmatpush1.msra.mxu0 0.0
        %1141 = vmatprep.subr.mxu0 0.0
        %1142 = vmatpush1.msra.mxu0 0.0
        %1143 = vmatprep.subr.mxu0 0.0
        %1144 = vmatpush1.msra.mxu0 0.0
        %1145 = vmatprep.subr.mxu0 0.0
        %1146 = vmatpush1.msra.mxu0 0.0
        %1147 = vmatprep.subr.mxu0 0.0
        %1148 = vmatpush1.msra.mxu0 0.0
        %1149 = vmatprep.subr.mxu0 0.0
        %1150 = vmatpush1.msra.mxu0 0.0
        %1151 = vmatprep.subr.mxu0 0.0
        %1152 = vmatpush1.msra.mxu0 0.0
        %1153 = vmatprep.subr.mxu0 0.0
        %1154 = vmatpush1.msra.mxu0 0.0
        %1155 = vmatprep.subr.mxu0 0.0
        %1156 = vmatpush1.msra.mxu0 0.0
        %1157 = vmatprep.subr.mxu0 0.0
        %1158 = vmatpush1.msra.mxu0 0.0
        %1159 = vmatprep.subr.mxu0 0.0
        %1160 = vmatpush1.msra.mxu0 0.0
        %1161 = vmatprep.subr.mxu0 0.0
        %1162 = vmatpush1.msra.mxu0 0.0
        %1163 = vmatprep.subr.mxu0 0.0
        %1164 = vmatpush1.msra.mxu0 0.0
        %1165 = vmatprep.subr.mxu0 0.0
        %1166 = vmatpush1.msra.mxu0 0.0
        %1167 = vmatprep.subr.mxu0 0.0
        %1168 = vmatpush1.msra.mxu0 0.0
        %1169 = vmatprep.subr.mxu0 0.0
        %1170 = vmatpush1.msra.mxu0 0.0
        %1171 = vmatprep.subr.mxu0 0.0
        %1172 = vmatpush1.msra.mxu0 0.0
        %1173 = vmatprep.subr.mxu0 0.0
        %1174 = vmatpush1.msra.mxu0 0.0
        %1175 = vmatprep.subr.mxu0 0.0
        %1176 = vmatpush1.msra.mxu0 0.0
        %1177 = vmatprep.subr.mxu0 0.0
        %1178 = vmatpush1.msra.mxu0 0.0
        %1179 = vmatprep.subr.mxu0 0.0
        %1180 = vmatpush1.msra.mxu0 0.0
        %1181 = vmatprep.subr.mxu0 0.0
        %1182 = vmatpush1.msra.mxu0 0.0
        %1183 = vmatprep.mubr.f32.mxu0 0.0
        %1184 = vmatmul.mubr.f32.gmra.mrb[0].mxu0 %v578
        %v1185 = vpop.f32.mrb[0].mxu0
        %v1186 = vadd.f32 0.0, %v1185
        %v1187 = vpop.f32.mrb[0].mxu0
        %v1188 = vadd.f32 0.0, %v1187
        %1189 = vmatprep.mubr.f32.mxu0 0.0
        %1190 = vmatmul.mubr.f32.gmra.mrb[0].mxu0 %v581
        %v1191 = vpop.f32.mrb[0].mxu0
        %v1192 = vadd.f32 0.0, %v1191
        %v1193 = vpop.f32.mrb[0].mxu0
        %v1194 = vadd.f32 0.0, %v1193
        %1195 = vdwg.mxu0
        %1196 = vmatprep.subr.mxu0 %v224
        %1197 = vmatpush1.msra.mxu0 %v223
        %1198 = vmatprep.subr.mxu0 %v228
        %1199 = vmatpush1.msra.mxu0 %v227
        %1200 = vmatprep.subr.mxu0 %v232
        %1201 = vmatpush1.msra.mxu0 %v231
        %1202 = vmatprep.subr.mxu0 %v236
        %1203 = vmatpush1.msra.mxu0 %v235
        %1204 = vmatprep.subr.mxu0 0.0
        %1205 = vmatpush1.msra.mxu0 0.0
        %1206 = vmatprep.subr.mxu0 0.0
        %1207 = vmatpush1.msra.mxu0 0.0
        %1208 = vmatprep.subr.mxu0 0.0
        %1209 = vmatpush1.msra.mxu0 0.0
        %1210 = vmatprep.subr.mxu0 0.0
        %1211 = vmatpush1.msra.mxu0 0.0
        %1212 = vmatprep.subr.mxu0 0.0
        %1213 = vmatpush1.msra.mxu0 0.0
        %1214 = vmatprep.subr.mxu0 0.0
        %1215 = vmatpush1.msra.mxu0 0.0
        %1216 = vmatprep.subr.mxu0 0.0
        %1217 = vmatpush1.msra.mxu0 0.0
        %1218 = vmatprep.subr.mxu0 0.0
        %1219 = vmatpush1.msra.mxu0 0.0
        %1220 = vmatprep.subr.mxu0 0.0
        %1221 = vmatpush1.msra.mxu0 0.0
        %1222 = vmatprep.subr.mxu0 0.0
        %1223 = vmatpush1.msra.mxu0 0.0
        %1224 = vmatprep.subr.mxu0 0.0
        %1225 = vmatpush1.msra.mxu0 0.0
        %1226 = vmatprep.subr.mxu0 0.0
        %1227 = vmatpush1.msra.mxu0 0.0
        %1228 = vmatprep.subr.mxu0 0.0
        %1229 = vmatpush1.msra.mxu0 0.0
        %1230 = vmatprep.subr.mxu0 0.0
        %1231 = vmatpush1.msra.mxu0 0.0
        %1232 = vmatprep.subr.mxu0 0.0
        %1233 = vmatpush1.msra.mxu0 0.0
        %1234 = vmatprep.subr.mxu0 0.0
        %1235 = vmatpush1.msra.mxu0 0.0
        %1236 = vmatprep.subr.mxu0 0.0
        %1237 = vmatpush1.msra.mxu0 0.0
        %1238 = vmatprep.subr.mxu0 0.0
        %1239 = vmatpush1.msra.mxu0 0.0
        %1240 = vmatprep.subr.mxu0 0.0
        %1241 = vmatpush1.msra.mxu0 0.0
        %1242 = vmatprep.subr.mxu0 0.0
        %1243 = vmatpush1.msra.mxu0 0.0
        %1244 = vmatprep.subr.mxu0 0.0
        %1245 = vmatpush1.msra.mxu0 0.0
        %1246 = vmatprep.subr.mxu0 0.0
        %1247 = vmatpush1.msra.mxu0 0.0
        %1248 = vmatprep.subr.mxu0 0.0
        %1249 = vmatpush1.msra.mxu0 0.0
        %1250 = vmatprep.subr.mxu0 0.0
        %1251 = vmatpush1.msra.mxu0 0.0
        %1252 = vmatprep.subr.mxu0 0.0
        %1253 = vmatpush1.msra.mxu0 0.0
        %1254 = vmatprep.subr.mxu0 0.0
        %1255 = vmatpush1.msra.mxu0 0.0
        %1256 = vmatprep.subr.mxu0 0.0
        %1257 = vmatpush1.msra.mxu0 0.0
        %1258 = vmatprep.subr.mxu0 0.0
        %1259 = vmatpush1.msra.mxu0 0.0
        %1260 = vmatprep.mubr.f32.mxu0 0.0
        %1261 = vmatmul.mubr.f32.gmra.mrb[0].mxu0 %v578
        %v1262 = vpop.f32.mrb[0].mxu0
        %v1263 = vadd.f32 0.0, %v1262
        %v1264 = vpop.f32.mrb[0].mxu0
        %v1265 = vadd.f32 0.0, %v1264
        %1266 = vmatprep.mubr.f32.mxu0 0.0
        %1267 = vmatmul.mubr.f32.gmra.mrb[0].mxu0 %v581
        %v1268 = vpop.f32.mrb[0].mxu0
        %v1269 = vadd.f32 0.0, %v1268
        %v1270 = vpop.f32.mrb[0].mxu0
        %v1271 = vadd.f32 0.0, %v1270
        %1272 = vdwg.mxu0
        %1273 = vmatprep.subr.mxu0 %v202
        %1274 = vmatpush1.msra.mxu0 %v201
        %1275 = vmatprep.subr.mxu0 %v206
        %1276 = vmatpush1.msra.mxu0 %v205
        %1277 = vmatprep.subr.mxu0 %v210
        %1278 = vmatpush1.msra.mxu0 %v209
        %1279 = vmatprep.subr.mxu0 %v214
        %1280 = vmatpush1.msra.mxu0 %v213
        %1281 = vmatprep.subr.mxu0 0.0
        %1282 = vmatpush1.msra.mxu0 0.0
        %1283 = vmatprep.subr.mxu0 0.0
        %1284 = vmatpush1.msra.mxu0 0.0
        %1285 = vmatprep.subr.mxu0 0.0
        %1286 = vmatpush1.msra.mxu0 0.0
        %1287 = vmatprep.subr.mxu0 0.0
        %1288 = vmatpush1.msra.mxu0 0.0
        %1289 = vmatprep.subr.mxu0 0.0
        %1290 = vmatpush1.msra.mxu0 0.0
        %1291 = vmatprep.subr.mxu0 0.0
        %1292 = vmatpush1.msra.mxu0 0.0
        %1293 = vmatprep.subr.mxu0 0.0
        %1294 = vmatpush1.msra.mxu0 0.0
        %1295 = vmatprep.subr.mxu0 0.0
        %1296 = vmatpush1.msra.mxu0 0.0
        %1297 = vmatprep.subr.mxu0 0.0
        %1298 = vmatpush1.msra.mxu0 0.0
        %1299 = vmatprep.subr.mxu0 0.0
        %1300 = vmatpush1.msra.mxu0 0.0
        %1301 = vmatprep.subr.mxu0 0.0
        %1302 = vmatpush1.msra.mxu0 0.0
        %1303 = vmatprep.subr.mxu0 0.0
        %1304 = vmatpush1.msra.mxu0 0.0
        %1305 = vmatprep.subr.mxu0 0.0
        %1306 = vmatpush1.msra.mxu0 0.0
        %1307 = vmatprep.subr.mxu0 0.0
        %1308 = vmatpush1.msra.mxu0 0.0
        %1309 = vmatprep.subr.mxu0 0.0
        %1310 = vmatpush1.msra.mxu0 0.0
        %1311 = vmatprep.subr.mxu0 0.0
        %1312 = vmatpush1.msra.mxu0 0.0
        %1313 = vmatprep.subr.mxu0 0.0
        %1314 = vmatpush1.msra.mxu0 0.0
        %1315 = vmatprep.subr.mxu0 0.0
        %1316 = vmatpush1.msra.mxu0 0.0
        %1317 = vmatprep.subr.mxu0 0.0
        %1318 = vmatpush1.msra.mxu0 0.0
        %1319 = vmatprep.subr.mxu0 0.0
        %1320 = vmatpush1.msra.mxu0 0.0
        %1321 = vmatprep.subr.mxu0 0.0
        %1322 = vmatpush1.msra.mxu0 0.0
        %1323 = vmatprep.subr.mxu0 0.0
        %1324 = vmatpush1.msra.mxu0 0.0
        %1325 = vmatprep.subr.mxu0 0.0
        %1326 = vmatpush1.msra.mxu0 0.0
        %1327 = vmatprep.subr.mxu0 0.0
        %1328 = vmatpush1.msra.mxu0 0.0
        %1329 = vmatprep.subr.mxu0 0.0
        %1330 = vmatpush1.msra.mxu0 0.0
        %1331 = vmatprep.subr.mxu0 0.0
        %1332 = vmatpush1.msra.mxu0 0.0
        %1333 = vmatprep.subr.mxu0 0.0
        %1334 = vmatpush1.msra.mxu0 0.0
        %1335 = vmatprep.subr.mxu0 0.0
        %1336 = vmatpush1.msra.mxu0 0.0
        %1337 = vmatprep.mubr.f32.mxu0 0.0
        %1338 = vmatmul.mubr.f32.gmra.mrb[0].mxu0 %v239
        %v1339 = vpop.f32.mrb[0].mxu0
        %v1340 = vadd.f32 %v1186, %v1339
        %v1341 = vpop.f32.mrb[0].mxu0
        %v1342 = vadd.f32 %v1188, %v1341
        %1343 = vmatprep.mubr.f32.mxu0 0.0
        %1344 = vmatmul.mubr.f32.gmra.mrb[0].mxu0 %v242
        %v1345 = vpop.f32.mrb[0].mxu0
        %v1346 = vadd.f32 %v1192, %v1345
        %v1347 = vpop.f32.mrb[0].mxu0
        %v1348 = vadd.f32 %v1194, %v1347
        %1349 = vdwg.mxu0
        %1350 = vmatprep.subr.mxu0 %v204
        %1351 = vmatpush1.msra.mxu0 %v203
        %1352 = vmatprep.subr.mxu0 %v208
        %1353 = vmatpush1.msra.mxu0 %v207
        %1354 = vmatprep.subr.mxu0 %v212
        %1355 = vmatpush1.msra.mxu0 %v211
        %1356 = vmatprep.subr.mxu0 %v216
        %1357 = vmatpush1.msra.mxu0 %v215
        %1358 = vmatprep.subr.mxu0 0.0
        %1359 = vmatpush1.msra.mxu0 0.0
        %1360 = vmatprep.subr.mxu0 0.0
        %1361 = vmatpush1.msra.mxu0 0.0
        %1362 = vmatprep.subr.mxu0 0.0
        %1363 = vmatpush1.msra.mxu0 0.0
        %1364 = vmatprep.subr.mxu0 0.0
        %1365 = vmatpush1.msra.mxu0 0.0
        %1366 = vmatprep.subr.mxu0 0.0
        %1367 = vmatpush1.msra.mxu0 0.0
        %1368 = vmatprep.subr.mxu0 0.0
        %1369 = vmatpush1.msra.mxu0 0.0
        %1370 = vmatprep.subr.mxu0 0.0
        %1371 = vmatpush1.msra.mxu0 0.0
        %1372 = vmatprep.subr.mxu0 0.0
        %1373 = vmatpush1.msra.mxu0 0.0
        %1374 = vmatprep.subr.mxu0 0.0
        %1375 = vmatpush1.msra.mxu0 0.0
        %1376 = vmatprep.subr.mxu0 0.0
        %1377 = vmatpush1.msra.mxu0 0.0
        %1378 = vmatprep.subr.mxu0 0.0
        %1379 = vmatpush1.msra.mxu0 0.0
        %1380 = vmatprep.subr.mxu0 0.0
        %1381 = vmatpush1.msra.mxu0 0.0
        %1382 = vmatprep.subr.mxu0 0.0
        %1383 = vmatpush1.msra.mxu0 0.0
        %1384 = vmatprep.subr.mxu0 0.0
        %1385 = vmatpush1.msra.mxu0 0.0
        %1386 = vmatprep.subr.mxu0 0.0
        %1387 = vmatpush1.msra.mxu0 0.0
        %1388 = vmatprep.subr.mxu0 0.0
        %1389 = vmatpush1.msra.mxu0 0.0
        %1390 = vmatprep.subr.mxu0 0.0
        %1391 = vmatpush1.msra.mxu0 0.0
        %1392 = vmatprep.subr.mxu0 0.0
        %1393 = vmatpush1.msra.mxu0 0.0
        %1394 = vmatprep.subr.mxu0 0.0
        %1395 = vmatpush1.msra.mxu0 0.0
        %1396 = vmatprep.subr.mxu0 0.0
        %1397 = vmatpush1.msra.mxu0 0.0
        %1398 = vmatprep.subr.mxu0 0.0
        %1399 = vmatpush1.msra.mxu0 0.0
        %1400 = vmatprep.subr.mxu0 0.0
        %1401 = vmatpush1.msra.mxu0 0.0
        %1402 = vmatprep.subr.mxu0 0.0
        %1403 = vmatpush1.msra.mxu0 0.0
        %1404 = vmatprep.subr.mxu0 0.0
        %1405 = vmatpush1.msra.mxu0 0.0
        %1406 = vmatprep.subr.mxu0 0.0
        %1407 = vmatpush1.msra.mxu0 0.0
        %1408 = vmatprep.subr.mxu0 0.0
        %1409 = vmatpush1.msra.mxu0 0.0
        %1410 = vmatprep.subr.mxu0 0.0
        %1411 = vmatpush1.msra.mxu0 0.0
        %1412 = vmatprep.subr.mxu0 0.0
        %1413 = vmatpush1.msra.mxu0 0.0
        %1414 = vmatprep.mubr.f32.mxu0 0.0
        %1415 = vmatmul.mubr.f32.gmra.mrb[0].mxu0 %v239
        %v1416 = vpop.f32.mrb[0].mxu0
        %v1417 = vadd.f32 %v1263, %v1416
        %v1418 = vpop.f32.mrb[0].mxu0
        %v1419 = vadd.f32 %v1265, %v1418
        %1420 = vmatprep.mubr.f32.mxu0 0.0
        %1421 = vmatmul.mubr.f32.gmra.mrb[0].mxu0 %v242
        %v1422 = vpop.f32.mrb[0].mxu0
        %v1423 = vadd.f32 %v1269, %v1422
        %v1424 = vpop.f32.mrb[0].mxu0
        %v1425 = vadd.f32 %v1271, %v1424
        %1426 = vdwg.mxu0
        %1427 = vmatprep.subr.mxu0 %v562
        %1428 = vmatpush1.msra.mxu0 %v561
        %1429 = vmatprep.subr.mxu0 %v566
        %1430 = vmatpush1.msra.mxu0 %v565
        %1431 = vmatprep.subr.mxu0 %v570
        %1432 = vmatpush1.msra.mxu0 %v569
        %1433 = vmatprep.subr.mxu0 %v574
        %1434 = vmatpush1.msra.mxu0 %v573
        %1435 = vmatprep.subr.mxu0 0.0
        %1436 = vmatpush1.msra.mxu0 0.0
        %1437 = vmatprep.subr.mxu0 0.0
        %1438 = vmatpush1.msra.mxu0 0.0
        %1439 = vmatprep.subr.mxu0 0.0
        %1440 = vmatpush1.msra.mxu0 0.0
        %1441 = vmatprep.subr.mxu0 0.0
        %1442 = vmatpush1.msra.mxu0 0.0
        %1443 = vmatprep.subr.mxu0 0.0
        %1444 = vmatpush1.msra.mxu0 0.0
        %1445 = vmatprep.subr.mxu0 0.0
        %1446 = vmatpush1.msra.mxu0 0.0
        %1447 = vmatprep.subr.mxu0 0.0
        %1448 = vmatpush1.msra.mxu0 0.0
        %1449 = vmatprep.subr.mxu0 0.0
        %1450 = vmatpush1.msra.mxu0 0.0
        %1451 = vmatprep.subr.mxu0 0.0
        %1452 = vmatpush1.msra.mxu0 0.0
        %1453 = vmatprep.subr.mxu0 0.0
        %1454 = vmatpush1.msra.mxu0 0.0
        %1455 = vmatprep.subr.mxu0 0.0
        %1456 = vmatpush1.msra.mxu0 0.0
        %1457 = vmatprep.subr.mxu0 0.0
        %1458 = vmatpush1.msra.mxu0 0.0
        %1459 = vmatprep.subr.mxu0 0.0
        %1460 = vmatpush1.msra.mxu0 0.0
        %1461 = vmatprep.subr.mxu0 0.0
        %1462 = vmatpush1.msra.mxu0 0.0
        %1463 = vmatprep.subr.mxu0 0.0
        %1464 = vmatpush1.msra.mxu0 0.0
        %1465 = vmatprep.subr.mxu0 0.0
        %1466 = vmatpush1.msra.mxu0 0.0
        %1467 = vmatprep.subr.mxu0 0.0
        %1468 = vmatpush1.msra.mxu0 0.0
        %1469 = vmatprep.subr.mxu0 0.0
        %1470 = vmatpush1.msra.mxu0 0.0
        %1471 = vmatprep.subr.mxu0 0.0
        %1472 = vmatpush1.msra.mxu0 0.0
        %1473 = vmatprep.subr.mxu0 0.0
        %1474 = vmatpush1.msra.mxu0 0.0
        %1475 = vmatprep.subr.mxu0 0.0
        %1476 = vmatpush1.msra.mxu0 0.0
        %1477 = vmatprep.subr.mxu0 0.0
        %1478 = vmatpush1.msra.mxu0 0.0
        %1479 = vmatprep.subr.mxu0 0.0
        %1480 = vmatpush1.msra.mxu0 0.0
        %1481 = vmatprep.subr.mxu0 0.0
        %1482 = vmatpush1.msra.mxu0 0.0
        %1483 = vmatprep.subr.mxu0 0.0
        %1484 = vmatpush1.msra.mxu0 0.0
        %1485 = vmatprep.subr.mxu0 0.0
        %1486 = vmatpush1.msra.mxu0 0.0
        %1487 = vmatprep.subr.mxu0 0.0
        %1488 = vmatpush1.msra.mxu0 0.0
        %1489 = vmatprep.subr.mxu0 0.0
        %1490 = vmatpush1.msra.mxu0 0.0
        %1491 = vmatprep.mubr.f32.mxu0 0.0
        %1492 = vmatmul.mubr.f32.gmra.mrb[0].mxu0 %v765
        %v1493 = vpop.f32.mrb[0].mxu0
        %v1494 = vadd.f32 0.0, %v1493
        %v1495 = vpop.f32.mrb[0].mxu0
        %v1496 = vadd.f32 0.0, %v1495
        %1497 = vmatprep.mubr.f32.mxu0 0.0
        %1498 = vmatmul.mubr.f32.gmra.mrb[0].mxu0 %v768
        %v1499 = vpop.f32.mrb[0].mxu0
        %v1500 = vadd.f32 0.0, %v1499
        %v1501 = vpop.f32.mrb[0].mxu0
        %v1502 = vadd.f32 0.0, %v1501
        %1503 = vdwg.mxu0
        %1504 = vmatprep.subr.mxu0 %v564
        %1505 = vmatpush1.msra.mxu0 %v563
        %1506 = vmatprep.subr.mxu0 %v568
        %1507 = vmatpush1.msra.mxu0 %v567
        %1508 = vmatprep.subr.mxu0 %v572
        %1509 = vmatpush1.msra.mxu0 %v571
        %1510 = vmatprep.subr.mxu0 %v576
        %1511 = vmatpush1.msra.mxu0 %v575
        %1512 = vmatprep.subr.mxu0 0.0
        %1513 = vmatpush1.msra.mxu0 0.0
        %1514 = vmatprep.subr.mxu0 0.0
        %1515 = vmatpush1.msra.mxu0 0.0
        %1516 = vmatprep.subr.mxu0 0.0
        %1517 = vmatpush1.msra.mxu0 0.0
        %1518 = vmatprep.subr.mxu0 0.0
        %1519 = vmatpush1.msra.mxu0 0.0
        %1520 = vmatprep.subr.mxu0 0.0
        %1521 = vmatpush1.msra.mxu0 0.0
        %1522 = vmatprep.subr.mxu0 0.0
        %1523 = vmatpush1.msra.mxu0 0.0
        %1524 = vmatprep.subr.mxu0 0.0
        %1525 = vmatpush1.msra.mxu0 0.0
        %1526 = vmatprep.subr.mxu0 0.0
        %1527 = vmatpush1.msra.mxu0 0.0
        %1528 = vmatprep.subr.mxu0 0.0
        %1529 = vmatpush1.msra.mxu0 0.0
        %1530 = vmatprep.subr.mxu0 0.0
        %1531 = vmatpush1.msra.mxu0 0.0
        %1532 = vmatprep.subr.mxu0 0.0
        %1533 = vmatpush1.msra.mxu0 0.0
        %1534 = vmatprep.subr.mxu0 0.0
        %1535 = vmatpush1.msra.mxu0 0.0
        %1536 = vmatprep.subr.mxu0 0.0
        %1537 = vmatpush1.msra.mxu0 0.0
        %1538 = vmatprep.subr.mxu0 0.0
        %1539 = vmatpush1.msra.mxu0 0.0
        %1540 = vmatprep.subr.mxu0 0.0
        %1541 = vmatpush1.msra.mxu0 0.0
        %1542 = vmatprep.subr.mxu0 0.0
        %1543 = vmatpush1.msra.mxu0 0.0
        %1544 = vmatprep.subr.mxu0 0.0
        %1545 = vmatpush1.msra.mxu0 0.0
        %1546 = vmatprep.subr.mxu0 0.0
        %1547 = vmatpush1.msra.mxu0 0.0
        %1548 = vmatprep.subr.mxu0 0.0
        %1549 = vmatpush1.msra.mxu0 0.0
        %1550 = vmatprep.subr.mxu0 0.0
        %1551 = vmatpush1.msra.mxu0 0.0
        %1552 = vmatprep.subr.mxu0 0.0
        %1553 = vmatpush1.msra.mxu0 0.0
        %1554 = vmatprep.subr.mxu0 0.0
        %1555 = vmatpush1.msra.mxu0 0.0
        %1556 = vmatprep.subr.mxu0 0.0
        %1557 = vmatpush1.msra.mxu0 0.0
        %1558 = vmatprep.subr.mxu0 0.0
        %1559 = vmatpush1.msra.mxu0 0.0
        %1560 = vmatprep.subr.mxu0 0.0
        %1561 = vmatpush1.msra.mxu0 0.0
        %1562 = vmatprep.subr.mxu0 0.0
        %1563 = vmatpush1.msra.mxu0 0.0
        %1564 = vmatprep.subr.mxu0 0.0
        %1565 = vmatpush1.msra.mxu0 0.0
        %1566 = vmatprep.subr.mxu0 0.0
        %1567 = vmatpush1.msra.mxu0 0.0
        %1568 = vmatprep.mubr.f32.mxu0 0.0
        %1569 = vmatmul.mubr.f32.gmra.mrb[0].mxu0 %v765
        %v1570 = vpop.f32.mrb[0].mxu0
        %v1571 = vadd.f32 0.0, %v1570
        %v1572 = vpop.f32.mrb[0].mxu0
        %v1573 = vadd.f32 0.0, %v1572
        %1574 = vmatprep.mubr.f32.mxu0 0.0
        %1575 = vmatmul.mubr.f32.gmra.mrb[0].mxu0 %v768
        %v1576 = vpop.f32.mrb[0].mxu0
        %v1577 = vadd.f32 0.0, %v1576
        %v1578 = vpop.f32.mrb[0].mxu0
        %v1579 = vadd.f32 0.0, %v1578
        %1580 = vdwg.mxu0
        %v1581 = vadd.f32 %v1340, %v1494
        %v1582 = vadd.f32 %v1342, %v1496
        %v1583 = vadd.f32 %v1417, %v1571
        %v1584 = vadd.f32 %v1419, %v1573
        %v1585 = vadd.f32 %v1346, %v1500
        %v1586 = vadd.f32 %v1348, %v1502
        %v1587 = vadd.f32 %v1423, %v1577
        %v1588 = vadd.f32 %v1425, %v1579
        %1589 = vmatprep.subr.mxu0 %v749
        %1590 = vmatpush1.msra.mxu0 %v748
        %1591 = vmatprep.subr.mxu0 %v753
        %1592 = vmatpush1.msra.mxu0 %v752
        %1593 = vmatprep.subr.mxu0 %v757
        %1594 = vmatpush1.msra.mxu0 %v756
        %1595 = vmatprep.subr.mxu0 %v761
        %1596 = vmatpush1.msra.mxu0 %v760
        %1597 = vmatprep.subr.mxu0 0.0
        %1598 = vmatpush1.msra.mxu0 0.0
        %1599 = vmatprep.subr.mxu0 0.0
        %1600 = vmatpush1.msra.mxu0 0.0
        %1601 = vmatprep.subr.mxu0 0.0
        %1602 = vmatpush1.msra.mxu0 0.0
        %1603 = vmatprep.subr.mxu0 0.0
        %1604 = vmatpush1.msra.mxu0 0.0
        %1605 = vmatprep.subr.mxu0 0.0
        %1606 = vmatpush1.msra.mxu0 0.0
        %1607 = vmatprep.subr.mxu0 0.0
        %1608 = vmatpush1.msra.mxu0 0.0
        %1609 = vmatprep.subr.mxu0 0.0
        %1610 = vmatpush1.msra.mxu0 0.0
        %1611 = vmatprep.subr.mxu0 0.0
        %1612 = vmatpush1.msra.mxu0 0.0
        %1613 = vmatprep.subr.mxu0 0.0
        %1614 = vmatpush1.msra.mxu0 0.0
        %1615 = vmatprep.subr.mxu0 0.0
        %1616 = vmatpush1.msra.mxu0 0.0
        %1617 = vmatprep.subr.mxu0 0.0
        %1618 = vmatpush1.msra.mxu0 0.0
        %1619 = vmatprep.subr.mxu0 0.0
        %1620 = vmatpush1.msra.mxu0 0.0
        %1621 = vmatprep.subr.mxu0 0.0
        %1622 = vmatpush1.msra.mxu0 0.0
        %1623 = vmatprep.subr.mxu0 0.0
        %1624 = vmatpush1.msra.mxu0 0.0
        %1625 = vmatprep.subr.mxu0 0.0
        %1626 = vmatpush1.msra.mxu0 0.0
        %1627 = vmatprep.subr.mxu0 0.0
        %1628 = vmatpush1.msra.mxu0 0.0
        %1629 = vmatprep.subr.mxu0 0.0
        %1630 = vmatpush1.msra.mxu0 0.0
        %1631 = vmatprep.subr.mxu0 0.0
        %1632 = vmatpush1.msra.mxu0 0.0
        %1633 = vmatprep.subr.mxu0 0.0
        %1634 = vmatpush1.msra.mxu0 0.0
        %1635 = vmatprep.subr.mxu0 0.0
        %1636 = vmatpush1.msra.mxu0 0.0
        %1637 = vmatprep.subr.mxu0 0.0
        %1638 = vmatpush1.msra.mxu0 0.0
        %1639 = vmatprep.subr.mxu0 0.0
        %1640 = vmatpush1.msra.mxu0 0.0
        %1641 = vmatprep.subr.mxu0 0.0
        %1642 = vmatpush1.msra.mxu0 0.0
        %1643 = vmatprep.subr.mxu0 0.0
        %1644 = vmatpush1.msra.mxu0 0.0
        %1645 = vmatprep.subr.mxu0 0.0
        %1646 = vmatpush1.msra.mxu0 0.0
        %1647 = vmatprep.subr.mxu0 0.0
        %1648 = vmatpush1.msra.mxu0 0.0
        %1649 = vmatprep.subr.mxu0 0.0
        %1650 = vmatpush1.msra.mxu0 0.0
        %1651 = vmatprep.subr.mxu0 0.0
        %1652 = vmatpush1.msra.mxu0 0.0
        %1653 = vmatprep.mubr.f32.mxu0 0.0
        %1654 = vmatmul.mubr.f32.gmra.mrb[0].mxu0 %v952
        %v1655 = vpop.f32.mrb[0].mxu0
        %v1656 = vadd.f32 0.0, %v1655
        %v1657 = vpop.f32.mrb[0].mxu0
        %v1658 = vadd.f32 0.0, %v1657
        %1659 = vmatprep.mubr.f32.mxu0 0.0
        %1660 = vmatmul.mubr.f32.gmra.mrb[0].mxu0 %v955
        %v1661 = vpop.f32.mrb[0].mxu0
        %v1662 = vadd.f32 0.0, %v1661
        %v1663 = vpop.f32.mrb[0].mxu0
        %v1664 = vadd.f32 0.0, %v1663
        %1665 = vdwg.mxu0
        %1666 = vmatprep.subr.mxu0 %v751
        %1667 = vmatpush1.msra.mxu0 %v750
        %1668 = vmatprep.subr.mxu0 %v755
        %1669 = vmatpush1.msra.mxu0 %v754
        %1670 = vmatprep.subr.mxu0 %v759
        %1671 = vmatpush1.msra.mxu0 %v758
        %1672 = vmatprep.subr.mxu0 %v763
        %1673 = vmatpush1.msra.mxu0 %v762
        %1674 = vmatprep.subr.mxu0 0.0
        %1675 = vmatpush1.msra.mxu0 0.0
        %1676 = vmatprep.subr.mxu0 0.0
        %1677 = vmatpush1.msra.mxu0 0.0
        %1678 = vmatprep.subr.mxu0 0.0
        %1679 = vmatpush1.msra.mxu0 0.0
        %1680 = vmatprep.subr.mxu0 0.0
        %1681 = vmatpush1.msra.mxu0 0.0
        %1682 = vmatprep.subr.mxu0 0.0
        %1683 = vmatpush1.msra.mxu0 0.0
        %1684 = vmatprep.subr.mxu0 0.0
        %1685 = vmatpush1.msra.mxu0 0.0
        %1686 = vmatprep.subr.mxu0 0.0
        %1687 = vmatpush1.msra.mxu0 0.0
        %1688 = vmatprep.subr.mxu0 0.0
        %1689 = vmatpush1.msra.mxu0 0.0
        %1690 = vmatprep.subr.mxu0 0.0
        %1691 = vmatpush1.msra.mxu0 0.0
        %1692 = vmatprep.subr.mxu0 0.0
        %1693 = vmatpush1.msra.mxu0 0.0
        %1694 = vmatprep.subr.mxu0 0.0
        %1695 = vmatpush1.msra.mxu0 0.0
        %1696 = vmatprep.subr.mxu0 0.0
        %1697 = vmatpush1.msra.mxu0 0.0
        %1698 = vmatprep.subr.mxu0 0.0
        %1699 = vmatpush1.msra.mxu0 0.0
        %1700 = vmatprep.subr.mxu0 0.0
        %1701 = vmatpush1.msra.mxu0 0.0
        %1702 = vmatprep.subr.mxu0 0.0
        %1703 = vmatpush1.msra.mxu0 0.0
        %1704 = vmatprep.subr.mxu0 0.0
        %1705 = vmatpush1.msra.mxu0 0.0
        %1706 = vmatprep.subr.mxu0 0.0
        %1707 = vmatpush1.msra.mxu0 0.0
        %1708 = vmatprep.subr.mxu0 0.0
        %1709 = vmatpush1.msra.mxu0 0.0
        %1710 = vmatprep.subr.mxu0 0.0
        %1711 = vmatpush1.msra.mxu0 0.0
        %1712 = vmatprep.subr.mxu0 0.0
        %1713 = vmatpush1.msra.mxu0 0.0
        %1714 = vmatprep.subr.mxu0 0.0
        %1715 = vmatpush1.msra.mxu0 0.0
        %1716 = vmatprep.subr.mxu0 0.0
        %1717 = vmatpush1.msra.mxu0 0.0
        %1718 = vmatprep.subr.mxu0 0.0
        %1719 = vmatpush1.msra.mxu0 0.0
        %1720 = vmatprep.subr.mxu0 0.0
        %1721 = vmatpush1.msra.mxu0 0.0
        %1722 = vmatprep.subr.mxu0 0.0
        %1723 = vmatpush1.msra.mxu0 0.0
        %1724 = vmatprep.subr.mxu0 0.0
        %1725 = vmatpush1.msra.mxu0 0.0
        %1726 = vmatprep.subr.mxu0 0.0
        %1727 = vmatpush1.msra.mxu0 0.0
        %1728 = vmatprep.subr.mxu0 0.0
        %1729 = vmatpush1.msra.mxu0 0.0
        %1730 = vmatprep.mubr.f32.mxu0 0.0
        %1731 = vmatmul.mubr.f32.gmra.mrb[0].mxu0 %v952
        %v1732 = vpop.f32.mrb[0].mxu0
        %v1733 = vadd.f32 0.0, %v1732
        %v1734 = vpop.f32.mrb[0].mxu0
        %v1735 = vadd.f32 0.0, %v1734
        %1736 = vmatprep.mubr.f32.mxu0 0.0
        %1737 = vmatmul.mubr.f32.gmra.mrb[0].mxu0 %v955
        %v1738 = vpop.f32.mrb[0].mxu0
        %v1739 = vadd.f32 0.0, %v1738
        %v1740 = vpop.f32.mrb[0].mxu0
        %v1741 = vadd.f32 0.0, %v1740
        %1742 = vdwg.mxu0
        %v1743 = vadd.f32 %v1581, %v1656
        %v1744 = vadd.f32 %v1582, %v1658
        %v1745 = vadd.f32 %v1583, %v1733
        %v1746 = vadd.f32 %v1584, %v1735
        %v1747 = vadd.f32 %v1585, %v1662
        %v1748 = vadd.f32 %v1586, %v1664
        %v1749 = vadd.f32 %v1587, %v1739
        %v1750 = vadd.f32 %v1588, %v1741
        %v1751 = vld [vmem:[%s217 + $0x2] sm:$0xff]
        %v1752 = vld [vmem:[%s217 + $0xa] sm:$0x3f]
        %v1754 = vsel %vm237, %v1751, 0
        %v1757 = vsel %vm237, %v1752, 0
        %1759 = vmatprep.subr.mxu0 %v936
        %1760 = vmatpush1.msra.mxu0 %v935
        %1761 = vmatprep.subr.mxu0 %v940
        %1762 = vmatpush1.msra.mxu0 %v939
        %1763 = vmatprep.subr.mxu0 %v944
        %1764 = vmatpush1.msra.mxu0 %v943
        %1765 = vmatprep.subr.mxu0 %v948
        %1766 = vmatpush1.msra.mxu0 %v947
        %1767 = vmatprep.subr.mxu0 0.0
        %1768 = vmatpush1.msra.mxu0 0.0
        %1769 = vmatprep.subr.mxu0 0.0
        %1770 = vmatpush1.msra.mxu0 0.0
        %1771 = vmatprep.subr.mxu0 0.0
        %1772 = vmatpush1.msra.mxu0 0.0
        %1773 = vmatprep.subr.mxu0 0.0
        %1774 = vmatpush1.msra.mxu0 0.0
        %1775 = vmatprep.subr.mxu0 0.0
        %1776 = vmatpush1.msra.mxu0 0.0
        %1777 = vmatprep.subr.mxu0 0.0
        %1778 = vmatpush1.msra.mxu0 0.0
        %1779 = vmatprep.subr.mxu0 0.0
        %1780 = vmatpush1.msra.mxu0 0.0
        %1781 = vmatprep.subr.mxu0 0.0
        %1782 = vmatpush1.msra.mxu0 0.0
        %1783 = vmatprep.subr.mxu0 0.0
        %1784 = vmatpush1.msra.mxu0 0.0
        %1785 = vmatprep.subr.mxu0 0.0
        %1786 = vmatpush1.msra.mxu0 0.0
        %1787 = vmatprep.subr.mxu0 0.0
        %1788 = vmatpush1.msra.mxu0 0.0
        %1789 = vmatprep.subr.mxu0 0.0
        %1790 = vmatpush1.msra.mxu0 0.0
        %1791 = vmatprep.subr.mxu0 0.0
        %1792 = vmatpush1.msra.mxu0 0.0
        %1793 = vmatprep.subr.mxu0 0.0
        %1794 = vmatpush1.msra.mxu0 0.0
        %1795 = vmatprep.subr.mxu0 0.0
        %1796 = vmatpush1.msra.mxu0 0.0
        %1797 = vmatprep.subr.mxu0 0.0
        %1798 = vmatpush1.msra.mxu0 0.0
        %1799 = vmatprep.subr.mxu0 0.0
        %1800 = vmatpush1.msra.mxu0 0.0
        %1801 = vmatprep.subr.mxu0 0.0
        %1802 = vmatpush1.msra.mxu0 0.0
        %1803 = vmatprep.subr.mxu0 0.0
        %1804 = vmatpush1.msra.mxu0 0.0
        %1805 = vmatprep.subr.mxu0 0.0
        %1806 = vmatpush1.msra.mxu0 0.0
        %1807 = vmatprep.subr.mxu0 0.0
        %1808 = vmatpush1.msra.mxu0 0.0
        %1809 = vmatprep.subr.mxu0 0.0
        %1810 = vmatpush1.msra.mxu0 0.0
        %1811 = vmatprep.subr.mxu0 0.0
        %1812 = vmatpush1.msra.mxu0 0.0
        %1813 = vmatprep.subr.mxu0 0.0
        %1814 = vmatpush1.msra.mxu0 0.0
        %1815 = vmatprep.subr.mxu0 0.0
        %1816 = vmatpush1.msra.mxu0 0.0
        %1817 = vmatprep.subr.mxu0 0.0
        %1818 = vmatpush1.msra.mxu0 0.0
        %1819 = vmatprep.subr.mxu0 0.0
        %1820 = vmatpush1.msra.mxu0 0.0
        %1821 = vmatprep.subr.mxu0 0.0
        %1822 = vmatpush1.msra.mxu0 0.0
        %1823 = vmatprep.mubr.f32.mxu0 0.0
        %1824 = vmatmul.mubr.f32.gmra.mrb[0].mxu0 %v1754
        %v1825 = vpop.f32.mrb[0].mxu0
        %v1826 = vadd.f32 0.0, %v1825
        %v1827 = vpop.f32.mrb[0].mxu0
        %v1828 = vadd.f32 0.0, %v1827
        %1829 = vmatprep.mubr.f32.mxu0 0.0
        %1830 = vmatmul.mubr.f32.gmra.mrb[0].mxu0 %v1757
        %v1831 = vpop.f32.mrb[0].mxu0
        %v1832 = vadd.f32 0.0, %v1831
        %v1833 = vpop.f32.mrb[0].mxu0
        %v1834 = vadd.f32 0.0, %v1833
        %1835 = vdwg.mxu0
        %1836 = vmatprep.subr.mxu0 %v938
        %1837 = vmatpush1.msra.mxu0 %v937
        %1838 = vmatprep.subr.mxu0 %v942
        %1839 = vmatpush1.msra.mxu0 %v941
        %1840 = vmatprep.subr.mxu0 %v946
        %1841 = vmatpush1.msra.mxu0 %v945
        %1842 = vmatprep.subr.mxu0 %v950
        %1843 = vmatpush1.msra.mxu0 %v949
        %1844 = vmatprep.subr.mxu0 0.0
        %1845 = vmatpush1.msra.mxu0 0.0
        %1846 = vmatprep.subr.mxu0 0.0
        %1847 = vmatpush1.msra.mxu0 0.0
        %1848 = vmatprep.subr.mxu0 0.0
        %1849 = vmatpush1.msra.mxu0 0.0
        %1850 = vmatprep.subr.mxu0 0.0
        %1851 = vmatpush1.msra.mxu0 0.0
        %1852 = vmatprep.subr.mxu0 0.0
        %1853 = vmatpush1.msra.mxu0 0.0
        %1854 = vmatprep.subr.mxu0 0.0
        %1855 = vmatpush1.msra.mxu0 0.0
        %1856 = vmatprep.subr.mxu0 0.0
        %1857 = vmatpush1.msra.mxu0 0.0
        %1858 = vmatprep.subr.mxu0 0.0
        %1859 = vmatpush1.msra.mxu0 0.0
        %1860 = vmatprep.subr.mxu0 0.0
        %1861 = vmatpush1.msra.mxu0 0.0
        %1862 = vmatprep.subr.mxu0 0.0
        %1863 = vmatpush1.msra.mxu0 0.0
        %1864 = vmatprep.subr.mxu0 0.0
        %1865 = vmatpush1.msra.mxu0 0.0
        %1866 = vmatprep.subr.mxu0 0.0
        %1867 = vmatpush1.msra.mxu0 0.0
        %1868 = vmatprep.subr.mxu0 0.0
        %1869 = vmatpush1.msra.mxu0 0.0
        %1870 = vmatprep.subr.mxu0 0.0
        %1871 = vmatpush1.msra.mxu0 0.0
        %1872 = vmatprep.subr.mxu0 0.0
        %1873 = vmatpush1.msra.mxu0 0.0
        %1874 = vmatprep.subr.mxu0 0.0
        %1875 = vmatpush1.msra.mxu0 0.0
        %1876 = vmatprep.subr.mxu0 0.0
        %1877 = vmatpush1.msra.mxu0 0.0
        %1878 = vmatprep.subr.mxu0 0.0
        %1879 = vmatpush1.msra.mxu0 0.0
        %1880 = vmatprep.subr.mxu0 0.0
        %1881 = vmatpush1.msra.mxu0 0.0
        %1882 = vmatprep.subr.mxu0 0.0
        %1883 = vmatpush1.msra.mxu0 0.0
        %1884 = vmatprep.subr.mxu0 0.0
        %1885 = vmatpush1.msra.mxu0 0.0
        %1886 = vmatprep.subr.mxu0 0.0
        %1887 = vmatpush1.msra.mxu0 0.0
        %1888 = vmatprep.subr.mxu0 0.0
        %1889 = vmatpush1.msra.mxu0 0.0
        %1890 = vmatprep.subr.mxu0 0.0
        %1891 = vmatpush1.msra.mxu0 0.0
        %1892 = vmatprep.subr.mxu0 0.0
        %1893 = vmatpush1.msra.mxu0 0.0
        %1894 = vmatprep.subr.mxu0 0.0
        %1895 = vmatpush1.msra.mxu0 0.0
        %1896 = vmatprep.subr.mxu0 0.0
        %1897 = vmatpush1.msra.mxu0 0.0
        %1898 = vmatprep.subr.mxu0 0.0
        %1899 = vmatpush1.msra.mxu0 0.0
        %1900 = vmatprep.mubr.f32.mxu0 0.0
        %1901 = vmatmul.mubr.f32.gmra.mrb[0].mxu0 %v1754
        %v1902 = vpop.f32.mrb[0].mxu0
        %v1903 = vadd.f32 0.0, %v1902
        %v1904 = vpop.f32.mrb[0].mxu0
        %v1905 = vadd.f32 0.0, %v1904
        %1906 = vmatprep.mubr.f32.mxu0 0.0
        %1907 = vmatmul.mubr.f32.gmra.mrb[0].mxu0 %v1757
        %v1908 = vpop.f32.mrb[0].mxu0
        %v1909 = vadd.f32 0.0, %v1908
        %v1910 = vpop.f32.mrb[0].mxu0
        %v1911 = vadd.f32 0.0, %v1910
        %1912 = vdwg.mxu0
        %v1913 = vadd.f32 %v1743, %v1826
        %v1914 = vadd.f32 %v1744, %v1828
        %v1915 = vadd.f32 %v1745, %v1903
        %v1916 = vadd.f32 %v1746, %v1905
        %v1917 = vadd.f32 %v1747, %v1832
        %v1918 = vadd.f32 %v1748, %v1834
        %v1919 = vadd.f32 %v1749, %v1909
        %v1920 = vadd.f32 %v1750, %v1911
        %v1921 = vmax.f32 %v1111, %v1913
        %v1922 = vmax.f32 %v1112, %v1914
        %v1923 = vmax.f32 %v1113, %v1915
        %v1924 = vmax.f32 %v1114, %v1916
        %v1925 = vmax.f32 %v1115, %v1917
        %v1926 = vmax.f32 %v1116, %v1918
        %v1927 = vmax.f32 %v1117, %v1919
        %v1928 = vmax.f32 %v1118, %v1920
        %1935 = vrot.lane.b32.xlu0 %v1922, 32
        %v1936 = vpop.permute.xlu0 %1935
        %1937 = vrot.lane.b32.xlu0 %v1923, 32
        %v1938 = vpop.permute.xlu0 %1937
        %1939 = vrot.lane.b32.xlu0 %v1924, 32
        %v1940 = vpop.permute.xlu0 %1939
        %1941 = vrot.lane.b32.xlu0 %v1926, 32
        %v1942 = vpop.permute.xlu0 %1941
        %1943 = vrot.lane.b32.xlu0 %v1927, 32
        %v1944 = vpop.permute.xlu0 %1943
        %1945 = vrot.lane.b32.xlu0 %v1928, 32
        %v1946 = vpop.permute.xlu0 %1945
        %v1947 = vsel %vm237, %v1936, %v1938
        %v1948 = vsel %vm237, %v1938, %v1940
        %v1949 = vsel %vm237, %v1942, %v1944
        %v1950 = vsel %vm237, %v1944, %v1946
        %v1955 = vmax.f32 %v1921, %v1947
        %v1956 = vmax.f32 %v1922, %v1948
        %v1957 = vmax.f32 %v1925, %v1949
        %v1958 = vmax.f32 %v1926, %v1950
        %v1959 = vld [vmem:[#allocation4] sm:$0x3]
        %v1961 = vlaneseq
        %v1962 = vshrl.u32 %v1961, 7
        %v1963 = vsub.s32 0, %v1962
        %v1964 = vrot.slane %v1959, %v1963
        %v1965 = vlaneseq
        %v1966 = vshrl.u32 %v1965, 7
        %v1967 = vsub.s32 1, %v1966
        %v1968 = vrot.slane %v1959, %v1967
        %v1971 = vadd.f32 %v1955, %v1964
        %v1972 = vadd.f32 %v1956, %v1968
        %v1973 = vadd.f32 %v1957, %v1964
        %v1974 = vadd.f32 %v1958, %v1968
        %v1975 = vmax.f32 %v1971, 0.0
        %v1976 = vmax.f32 %v1972, 0.0
        %v1977 = vmax.f32 %v1973, 0.0
        %v1978 = vmax.f32 %v1974, 0.0
        %1979 = vst [vmem:[%s198] sm:$0xff] %v1975
        %vm1980 = vcmask 785408
        %1981 = vst.msk [vmem:[%s198 + $0x8] sm:$0xff] %vm1980, %v1976
        %1982 = vst [vmem:[%s198 + $0x10] sm:$0x3f] %v1977
        %vm1983 = vcmask 783360
        %1984 = vst.msk [vmem:[%s198 + $0x18] sm:$0x3f] %vm1983, %v1978
        %p1985 = scmp.lt.s32.totalorder %s16, 1
        %s1986 = scalar_select %p1985, %s16, 1
        %s1987 = smul.addr %s1986, 4
        %s1988 = smul.addr %s1987, 8
        %s1989 = scalar_lea.vmem %s3, %s1988
        // Predicated region
        $region41: #{convnet_forward.3} parent=31 // pred_check
          %p1990 = pneg %p102
        $region42: #{convnet_forward.3} parent=31 // pred_check_branch
          %1992 = sbr.rel (%p1990) target = $region44
        $region43: #{convnet_forward.3} parent=31 // pred_region
          _
        $region44: #{convnet_forward.3} parent=31 // pred_fallthru
          _
      $region32: #{convnet_forward.3} parent=5 // pred_fallthru
        _
      %p1993 = scmp.le.s32.totalorder 2, %s11
      // Predicated region
      $region45: #{convnet_forward.3} parent=5 // pred_check
        %p1994 = pneg %p1993
      $region46: #{convnet_forward.3} parent=5 // pred_check_branch
        %1996 = sbr.rel (%p1994) target = $region48
      $region47: #{convnet_forward.3} parent=5 // pred_region
        %s1997 = ssub.s32 %s11, 2
        // Predicated region
        $region49: #{convnet_forward.3} parent=47 // pred_check
          %p1998 = pneg %p108
        $region50: #{convnet_forward.3} parent=47 // pred_check_branch
          %2000 = sbr.rel (%p1998) target = $region52
        $region51: #{convnet_forward.3} parent=47 // pred_region
          %p2001 = scmp.lt.s32.totalorder %s17, 1
          %s2002 = scalar_select %p2001, %s17, 1
          %s2003 = smul.addr %s2002, 4
          %s2004 = smul.addr %s2003, 8
          %s2005 = scalar_lea.vmem %s3, %s2004
        $region52: #{convnet_forward.3} parent=47 // pred_fallthru
          _
      $region48: #{convnet_forward.3} parent=5 // pred_fallthru
        _
    $region6: #{convnet_forward.3} parent=1 // loop_footer
      %s15 = sadd.s32 1, %s11
    $region7: #{convnet_forward.3} parent=1 // loop_footer_branch
      %10 = sbr.rel target = $region3
    $region8: #{convnet_forward.3} parent=1 // loop_exit
      _
    %2006 = vsyncpa [#allocation3], 1
    %s2007 = scalar_lea.sflag [#allocation3], 1
    %2008 = vsyncpa %s2007, 1
    %2009 = vsyncpa [#allocation5], 1

// kernel: convnet_forward.4
$region0: #{convnet_forward.4}
  #allocation0 [shape = 'u32[]', space=smem, size = 0x4, offset = 0x4, fixed_abs, tag = 'smem constant byte address 0x4 - core index']
  #allocation1 [shape = 'u32[144,128]{1,0:T(1,128)}', space=vmem, size = 0x12000, scoped, tag = 'internal scratch']
  %s0 = inlined_call_operand.vmem [shape: f32[2,2,9,288], index: 0, kind: input, shape index: {}]
  %s1 = inlined_call_operand.hbm [shape: f32[5,288,448], index: 1, kind: input, shape index: {}]
  %s2 = inlined_call_operand.hbm [shape: f32[1,224], index: 2, kind: input, shape index: {}]
  %s3 = inlined_call_operand.vmem [shape: f32[2,7,224], index: 3, kind: output, shape index: {}]
  %s4 = sld [smem:[#allocation0]]
  $region53: #{convnet_forward.4} parent=0
    _
  %s6 = ssub.s32 1, %s4
  %s7 = scalar_select 0, %s6, %s4
  $region1: #{convnet_forward.4} parent=0
    #allocation2 [shape = 'u8[2949120]{0}', space=vmem, size = 0x2d0000, scoped, tag = 'input window, operand 1, single buffered']
    #allocation3 [shape = 's32[2]{0}', space=sflag, size = 0x8, scoped, tag = 'scoped memory for convnet_forward.4']
    #allocation4 [shape = 'u8[1024]{0}', space=vmem, size = 0x400, scoped, tag = 'input window, operand 2, single buffered']
    #allocation5 [shape = 's32[1]{0}', space=sflag, size = 0x4, scoped, tag = 'scoped memory for convnet_forward.4']
    %8 = vsyncpa [#allocation3], 0
    %9 = vsyncpa [#allocation5], 0
    loop: start=0, step=1, limit=4
    $region2: #{convnet_forward.4} parent=1 // loop_pre_header
      _
    $region3: #{convnet_forward.4} parent=1 // loop_header
      %s11 = sphi 0, %s15
      %p12 = scmp.ge.s32.totalorder %s11, 4
      %s21 = sphi 0, %s23
      %s24 = sphi 0, %s21
      %s25 = sphi 0, %s24
      %s41 = sphi 0, %s25
      %s45 = sphi 0, %s45
      %s47 = sphi 0, %s45
      %s48 = sphi 0, %s47
      %s62 = sphi 0, %s48
      %s66 = sphi 0, %s66
      %s68 = sphi 0, %s66
      %s69 = sphi 0, %s68
      %s83 = sphi 0, %s69
      %s89 = sphi 0, %s91
      %s92 = sphi 0, %s89
      %s93 = sphi 0, %s92
      %s109 = sphi 0, %s93
    $region4: #{convnet_forward.4} parent=1 // loop_header_branch
      %14 = sbr.rel (%p12) target = $region8
    $region5: #{convnet_forward.4} parent=1 // loop_body
      %s16 = ssub.s32 %s11, 1
      %s17 = ssub.s32 %s11, 2
      %s18 = sadd.s32 %s11, 1
      %s19 = ssub.s32 %s11, %s18
      %p20 = scmp.eq.s32.totalorder %s19, 0
      %s22 = sadd.s32 %s21, 1
      %s23 = scalar_select %p20, %s21, %s22
      %p26 = pneg %p20
      %p27 = scmp.eq.s32.totalorder %s11, 1
      %p28 = por %p26, %p27
      %p29 = scmp.ne.s32.totalorder %s21, %s24
      %p30 = scmp.eq.s32.totalorder %s11, 0
      %p31 = por %p29, %p30
      %p32 = scmp.ne.s32.totalorder %s21, %s24
      %p33 = scmp.eq.s32.totalorder %s16, 1
      %p34 = por %p32, %p33
      %p35 = scmp.ne.s32.totalorder %s24, %s25
      %p36 = scmp.eq.s32.totalorder %s16, 0
      %p37 = por %p35, %p36
      %p38 = scmp.ne.s32.totalorder %s24, %s25
      %p39 = scmp.eq.s32.totalorder %s17, 1
      %p40 = por %p38, %p39
      %p42 = scmp.ne.s32.totalorder %s25, %s41
      %p43 = scmp.eq.s32.totalorder %s17, 0
      %p44 = por %p42, %p43
      %s46 = sadd.s32 %s45, 1
      %p49 = scmp.eq.s32.totalorder %s11, 1
      %p50 = scmp.ne.s32.totalorder %s45, %s47
      %p51 = scmp.eq.s32.totalorder %s11, 0
      %p52 = por %p50, %p51
      %p53 = scmp.ne.s32.totalorder %s45, %s47
      %p54 = scmp.eq.s32.totalorder %s16, 1
      %p55 = por %p53, %p54
      %p56 = scmp.ne.s32.totalorder %s47, %s48
      %p57 = scmp.eq.s32.totalorder %s16, 0
      %p58 = por %p56, %p57
      %p59 = scmp.ne.s32.totalorder %s47, %s48
      %p60 = scmp.eq.s32.totalorder %s17, 1
      %p61 = por %p59, %p60
      %p63 = scmp.ne.s32.totalorder %s48, %s62
      %p64 = scmp.eq.s32.totalorder %s17, 0
      %p65 = por %p63, %p64
      %s67 = sadd.s32 %s66, 1
      %p70 = scmp.eq.s32.totalorder %s11, 1
      %p71 = scmp.ne.s32.totalorder %s66, %s68
      %p72 = scmp.eq.s32.totalorder %s11, 0
      %p73 = por %p71, %p72
      %p74 = scmp.ne.s32.totalorder %s66, %s68
      %p75 = scmp.eq.s32.totalorder %s16, 1
      %p76 = por %p74, %p75
      %p77 = scmp.ne.s32.totalorder %s68, %s69
      %p78 = scmp.eq.s32.totalorder %s16, 0
      %p79 = por %p77, %p78
      %p80 = scmp.ne.s32.totalorder %s68, %s69
      %p81 = scmp.eq.s32.totalorder %s17, 1
      %p82 = por %p80, %p81
      %p84 = scmp.ne.s32.totalorder %s69, %s83
      %p85 = scmp.eq.s32.totalorder %s17, 0
      %p86 = por %p84, %p85
      %s87 = ssub.s32 %s11, %s18
      %p88 = scmp.eq.s32.totalorder %s87, 0
      %s90 = sadd.s32 %s89, 1
      %s91 = scalar_select %p88, %s89, %s90
      %p94 = pneg %p88
      %p95 = scmp.eq.s32.totalorder %s11, 1
      %p96 = por %p94, %p95
      %p97 = scmp.ne.s32.totalorder %s89, %s92
      %p98 = scmp.eq.s32.totalorder %s11, 0
      %p99 = por %p97, %p98
      %p100 = scmp.ne.s32.totalorder %s89, %s92
      %p101 = scmp.eq.s32.totalorder %s16, 1
      %p102 = por %p100, %p101
      %p103 = scmp.ne.s32.totalorder %s92, %s93
      %p104 = scmp.eq.s32.totalorder %s16, 0
      %p105 = por %p103, %p104
      %p106 = scmp.ne.s32.totalorder %s92, %s93
      %p107 = scmp.eq.s32.totalorder %s17, 1
      %p108 = por %p106, %p107
      %p110 = scmp.ne.s32.totalorder %s93, %s109
      %p111 = scmp.eq.s32.totalorder %s17, 0
      %p112 = por %p110, %p111
      %p113 = scmp.le.s32.totalorder 1, %s11
      %p114 = scmp.lt.s32.totalorder %s11, 3
      %p115 = pnand %p113, %p114
      %p116 = pneg %p115
      // Predicated region
      $region9: #{convnet_forward.4} parent=5 // pred_check
        _
      $region10: #{convnet_forward.4} parent=5 // pred_check_branch
        %118 = sbr.rel (%p115) target = $region12
      $region11: #{convnet_forward.4} parent=5 // pred_region
        %s119 = ssub.s32 %s11, 1
        // Predicated region
        $region13: #{convnet_forward.4} parent=11 // pred_check
          %p120 = pneg %p58
        $region14: #{convnet_forward.4} parent=11 // pred_check_branch
          %122 = sbr.rel (%p120) target = $region16
        $region15: #{convnet_forward.4} parent=11 // pred_region
          %s124 = ssub.s32 92160, 92160
          %125 = vsyncadd [#allocation3], %s124
          %s126 = sshll.u32 [#allocation2], 4
          %s127 = int_to_ptr.vmem [resolvable:$true] %s126
          %132 = dma.hbm_to_vmem [thread:$0]  %s1, 92160, %s127, [#allocation3], 512, 512, 32
        $region16: #{convnet_forward.4} parent=11 // pred_fallthru
          _
        // Predicated region
        $region17: #{convnet_forward.4} parent=11 // pred_check
          %p133 = pneg %p79
        $region18: #{convnet_forward.4} parent=11 // pred_check_branch
          %135 = sbr.rel (%p133) target = $region20
        $region19: #{convnet_forward.4} parent=11 // pred_region
          %s137 = ssub.s32 32, 32
          %138 = vsyncadd [#allocation5], %s137
          %s140 = sshll.u32 [#allocation4], 4
          %s141 = int_to_ptr.vmem [resolvable:$true] %s140
          %143 = dma.hbm_to_vmem [thread:$0]  %s2, 32, %s141, [#allocation5]
        $region20: #{convnet_forward.4} parent=11 // pred_fallthru
          _
      $region12: #{convnet_forward.4} parent=5 // pred_fallthru
        _
      %p144 = scmp.lt.s32.totalorder %s11, 2
      // Predicated region
      $region21: #{convnet_forward.4} parent=5 // pred_check
        %p145 = pneg %p144
      $region22: #{convnet_forward.4} parent=5 // pred_check_branch
        %147 = sbr.rel (%p145) target = $region24
      $region23: #{convnet_forward.4} parent=5 // pred_region
        // Predicated region
        $region25: #{convnet_forward.4} parent=23 // pred_check
          %p148 = pneg %p31
        $region26: #{convnet_forward.4} parent=23 // pred_check_branch
          %150 = sbr.rel (%p148) target = $region28
        $region27: #{convnet_forward.4} parent=23 // pred_region
          %p151 = scmp.lt.s32.totalorder %s11, 1
          %s152 = scalar_select %p151, %s11, 1
          %s153 = smul.addr %s152, 12
          %s154 = smul.addr %s153, 8
          %s155 = scalar_lea.vmem %s0, %s154
        $region28: #{convnet_forward.4} parent=23 // pred_fallthru
          _
      $region24: #{convnet_forward.4} parent=5 // pred_fallthru
        _
      %p156 = scmp.le.s32.totalorder 1, %s11
      %p157 = scmp.lt.s32.totalorder %s11, 3
      %p158 = pnand %p156, %p157
      %p159 = pneg %p158
      // Predicated region
      $region29: #{convnet_forward.4} parent=5 // pred_check
        _
      $region30: #{convnet_forward.4} parent=5 // pred_check_branch
        %161 = sbr.rel (%p158) target = $region32
      $region31: #{convnet_forward.4} parent=5 // pred_region
        %s162 = ssub.s32 %s11, 1
        // Predicated region
        $region33: #{convnet_forward.4} parent=31 // pred_check
          %p163 = pneg %p58
        $region34: #{convnet_forward.4} parent=31 // pred_check_branch
          %165 = sbr.rel (%p163) target = $region36
        $region35: #{convnet_forward.4} parent=31 // pred_region
          %166 = dma.done [#allocation3], 92160
        $region36: #{convnet_forward.4} parent=31 // pred_fallthru
          _
        // Predicated region
        $region37: #{convnet_forward.4} parent=31 // pred_check
          %p167 = pneg %p79
        $region38: #{convnet_forward.4} parent=31 // pred_check_branch
          %169 = sbr.rel (%p167) target = $region40
        $region39: #{convnet_forward.4} parent=31 // pred_region
          %170 = dma.done [#allocation5], 32
        $region40: #{convnet_forward.4} parent=31 // pred_fallthru
          _
        %p171 = scmp.lt.s32.totalorder %s16, 1
        %s172 = scalar_select %p171, %s16, 1
        %s173 = smul.addr %s172, 12
        %s174 = smul.addr %s173, 8
        %s175 = scalar_lea.vmem %s0, %s174
        %p176 = pneg %p37
        %p177 = pneg %p34
        %p178 = pneg %p58
        %p179 = pneg %p55
        %p180 = pneg %p79
        %p181 = pneg %p76
        %p182 = pneg %p105
        %p183 = pneg %p102
        %p184 = scmp.lt.s32.totalorder %s16, 1
        %s185 = scalar_select %p184, %s16, 1
        %s186 = smul.addr %s185, 2
        %s187 = smul.addr %s186, 8
        %s188 = scalar_lea.vmem %s3, %s187
        %p189 = scmp.lt.s32.totalorder %s16, 1
        %s190 = scalar_select %p189, %s16, 1
        %s191 = smul.addr %s190, 12
        %s192 = smul.addr %s191, 8
        %s193 = scalar_lea.vmem %s0, %s192
        %p194 = scmp.lt.s32.totalorder %s16, 1
        %s195 = scalar_select %p194, %s16, 1
        %s196 = smul.addr %s195, 2
        %s197 = smul.addr %s196, 8
        %s198 = scalar_lea.vmem %s3, %s197
        %v199 = vld [vmem:[%s193] sm:$0x7f]
        %v200 = vld [vmem:[%s193 + $0x8] sm:$0x7f]
        %v201 = vld [vmem:[%s193 + $0x10] sm:$0x7f]
        %v202 = vld [vmem:[#allocation2] sm:$0xff]
        %v203 = vld [vmem:[#allocation2 + $0x8] sm:$0xff]
        %v204 = vld [vmem:[#allocation2 + $0x10] sm:$0xff]
        %v205 = vld [vmem:[#allocation2 + $0x18] sm:$0xff]
        %v206 = vld [vmem:[#allocation2 + $0x20] sm:$0xff]
        %v207 = vld [vmem:[#allocation2 + $0x28] sm:$0xff]
        %v208 = vld [vmem:[#allocation2 + $0x30] sm:$0xff]
        %v209 = vld [vmem:[#allocation2 + $0x38] sm:$0xff]
        %v210 = vld [vmem:[#allocation2 + $0x40] sm:$0xff]
        %v211 = vld [vmem:[#allocation2 + $0x48] sm:$0xff]
        %v212 = vld [vmem:[#allocation2 + $0x50] sm:$0xff]
        %v213 = vld [vmem:[#allocation2 + $0x58] sm:$0xff]
        %v214 = vld [vmem:[#allocation2 + $0x60] sm:$0xff]
        %v215 = vld [vmem:[#allocation2 + $0x68] sm:$0xff]
        %v216 = vld [vmem:[#allocation2 + $0x70] sm:$0xff]
        %v217 = vld [vmem:[#allocation2 + $0x78] sm:$0xff]
        %v218 = vld [vmem:[#allocation2 + $0x80] sm:$0xff]
        %v219 = vld [vmem:[#allocation2 + $0x88] sm:$0xff]
        %v220 = vld [vmem:[#allocation2 + $0x90] sm:$0xff]
        %v221 = vld [vmem:[#allocation2 + $0x98] sm:$0xff]
        %v222 = vld [vmem:[#allocation2 + $0xa0] sm:$0xff]
        %v223 = vld [vmem:[#allocation2 + $0xa8] sm:$0xff]
        %v224 = vld [vmem:[#allocation2 + $0xb0] sm:$0xff]
        %v225 = vld [vmem:[#allocation2 + $0xb8] sm:$0xff]
        %v226 = vld [vmem:[#allocation2 + $0xc0] sm:$0xff]
        %v227 = vld [vmem:[#allocation2 + $0xc8] sm:$0xff]
        %v228 = vld [vmem:[#allocation2 + $0xd0] sm:$0xff]
        %v229 = vld [vmem:[#allocation2 + $0xd8] sm:$0xff]
        %v230 = vld [vmem:[#allocation2 + $0xe0] sm:$0xff]
        %v231 = vld [vmem:[#allocation2 + $0xe8] sm:$0xff]
        %v232 = vld [vmem:[#allocation2 + $0xf0] sm:$0xff]
        %v233 = vld [vmem:[#allocation2 + $0xf8] sm:$0xff]
        %v234 = vld [vmem:[#allocation2 + $0x100] sm:$0xff]
        %v235 = vld [vmem:[#allocation2 + $0x108] sm:$0xff]
        %v236 = vld [vmem:[#allocation2 + $0x110] sm:$0xff]
        %v237 = vld [vmem:[#allocation2 + $0x118] sm:$0xff]
        %v238 = vld [vmem:[#allocation2 + $0x120] sm:$0xff]
        %v239 = vld [vmem:[#allocation2 + $0x128] sm:$0xff]
        %v240 = vld [vmem:[#allocation2 + $0x130] sm:$0xff]
        %v241 = vld [vmem:[#allocation2 + $0x138] sm:$0xff]
        %v242 = vld [vmem:[#allocation2 + $0x140] sm:$0xff]
        %v243 = vld [vmem:[#allocation2 + $0x148] sm:$0xff]
        %v244 = vld [vmem:[#allocation2 + $0x150] sm:$0xff]
        %v245 = vld [vmem:[#allocation2 + $0x158] sm:$0xff]
        %v246 = vld [vmem:[#allocation2 + $0x160] sm:$0xff]
        %v247 = vld [vmem:[#allocation2 + $0x168] sm:$0xff]
        %v248 = vld [vmem:[#allocation2 + $0x170] sm:$0xff]
        %v249 = vld [vmem:[#allocation2 + $0x178] sm:$0xff]
        %v250 = vld [vmem:[#allocation2 + $0x180] sm:$0xff]
        %v251 = vld [vmem:[#allocation2 + $0x188] sm:$0xff]
        %v252 = vld [vmem:[#allocation2 + $0x190] sm:$0xff]
        %v253 = vld [vmem:[#allocation2 + $0x198] sm:$0xff]
        %v254 = vld [vmem:[#allocation2 + $0x1a0] sm:$0xff]
        %v255 = vld [vmem:[#allocation2 + $0x1a8] sm:$0xff]
        %v256 = vld [vmem:[#allocation2 + $0x1b0] sm:$0xff]
        %v257 = vld [vmem:[#allocation2 + $0x1b8] sm:$0xff]
        %v258 = vld [vmem:[#allocation2 + $0x1c0] sm:$0xff]
        %v259 = vld [vmem:[#allocation2 + $0x1c8] sm:$0xff]
        %v260 = vld [vmem:[#allocation2 + $0x1d0] sm:$0xff]
        %v261 = vld [vmem:[#allocation2 + $0x1d8] sm:$0xff]
        %v262 = vld [vmem:[#allocation2 + $0x1e0] sm:$0xff]
        %v263 = vld [vmem:[#allocation2 + $0x1e8] sm:$0xff]
        %v264 = vld [vmem:[#allocation2 + $0x1f0] sm:$0xff]
        %v265 = vld [vmem:[#allocation2 + $0x1f8] sm:$0xff]
        %v266 = vld [vmem:[#allocation2 + $0x200] sm:$0xff]
        %v267 = vld [vmem:[#allocation2 + $0x208] sm:$0xff]
        %v268 = vld [vmem:[#allocation2 + $0x210] sm:$0xff]
        %v269 = vld [vmem:[#allocation2 + $0x218] sm:$0xff]
        %v270 = vld [vmem:[#allocation2 + $0x220] sm:$0xff]
        %v271 = vld [vmem:[#allocation2 + $0x228] sm:$0xff]
        %v272 = vld [vmem:[#allocation2 + $0x230] sm:$0xff]
        %v273 = vld [vmem:[#allocation2 + $0x238] sm:$0xff]
        %v274 = vld [vmem:[#allocation2 + $0x240] sm:$0xff]
        %v275 = vld [vmem:[#allocation2 + $0x248] sm:$0xff]
        %v276 = vld [vmem:[#allocation2 + $0x250] sm:$0xff]
        %v277 = vld [vmem:[#allocation2 + $0x258] sm:$0xff]
        %v278 = vld [vmem:[#allocation2 + $0x260] sm:$0xff]
        %v279 = vld [vmem:[#allocation2 + $0x268] sm:$0xff]
        %v280 = vld [vmem:[#allocation2 + $0x270] sm:$0xff]
        %v281 = vld [vmem:[#allocation2 + $0x278] sm:$0xff]
        %v282 = vld [vmem:[#allocation2 + $0x280] sm:$0xff]
        %v283 = vld [vmem:[#allocation2 + $0x288] sm:$0xff]
        %v284 = vld [vmem:[#allocation2 + $0x290] sm:$0xff]
        %v285 = vld [vmem:[#allocation2 + $0x298] sm:$0xff]
        %v286 = vld [vmem:[#allocation2 + $0x2a0] sm:$0xff]
        %v287 = vld [vmem:[#allocation2 + $0x2a8] sm:$0xff]
        %v288 = vld [vmem:[#allocation2 + $0x2b0] sm:$0xff]
        %v289 = vld [vmem:[#allocation2 + $0x2b8] sm:$0xff]
        %v290 = vld [vmem:[#allocation2 + $0x2c0] sm:$0xff]
        %v291 = vld [vmem:[#allocation2 + $0x2c8] sm:$0xff]
        %v292 = vld [vmem:[#allocation2 + $0x2d0] sm:$0xff]
        %v293 = vld [vmem:[#allocation2 + $0x2d8] sm:$0xff]
        %v294 = vld [vmem:[#allocation2 + $0x2e0] sm:$0xff]
        %v295 = vld [vmem:[#allocation2 + $0x2e8] sm:$0xff]
        %v296 = vld [vmem:[#allocation2 + $0x2f0] sm:$0xff]
        %v297 = vld [vmem:[#allocation2 + $0x2f8] sm:$0xff]
        %v298 = vld [vmem:[#allocation2 + $0x300] sm:$0xff]
        %v299 = vld [vmem:[#allocation2 + $0x308] sm:$0xff]
        %v300 = vld [vmem:[#allocation2 + $0x310] sm:$0xff]
        %v301 = vld [vmem:[#allocation2 + $0x318] sm:$0xff]
        %v302 = vld [vmem:[#allocation2 + $0x320] sm:$0xff]
        %v303 = vld [vmem:[#allocation2 + $0x328] sm:$0xff]
        %v304 = vld [vmem:[#allocation2 + $0x330] sm:$0xff]
        %v305 = vld [vmem:[#allocation2 + $0x338] sm:$0xff]
        %v306 = vld [vmem:[#allocation2 + $0x340] sm:$0xff]
        %v307 = vld [vmem:[#allocation2 + $0x348] sm:$0xff]
        %v308 = vld [vmem:[#allocation2 + $0x350] sm:$0xff]
        %v309 = vld [vmem:[#allocation2 + $0x358] sm:$0xff]
        %v310 = vld [vmem:[#allocation2 + $0x360] sm:$0xff]
        %v311 = vld [vmem:[#allocation2 + $0x368] sm:$0xff]
        %v312 = vld [vmem:[#allocation2 + $0x370] sm:$0xff]
        %v313 = vld [vmem:[#allocation2 + $0x378] sm:$0xff]
        %v314 = vld [vmem:[#allocation2 + $0x380] sm:$0xff]
        %v315 = vld [vmem:[#allocation2 + $0x388] sm:$0xff]
        %v316 = vld [vmem:[#allocation2 + $0x390] sm:$0xff]
        %v317 = vld [vmem:[#allocation2 + $0x398] sm:$0xff]
        %v318 = vld [vmem:[#allocation2 + $0x3a0] sm:$0xff]
        %v319 = vld [vmem:[#allocation2 + $0x3a8] sm:$0xff]
        %v320 = vld [vmem:[#allocation2 + $0x3b0] sm:$0xff]
        %v321 = vld [vmem:[#allocation2 + $0x3b8] sm:$0xff]
        %v322 = vld [vmem:[#allocation2 + $0x3c0] sm:$0xff]
        %v323 = vld [vmem:[#allocation2 + $0x3c8] sm:$0xff]
        %v324 = vld [vmem:[#allocation2 + $0x3d0] sm:$0xff]
        %v325 = vld [vmem:[#allocation2 + $0x3d8] sm:$0xff]
        %v326 = vld [vmem:[#allocation2 + $0x3e0] sm:$0xff]
        %v327 = vld [vmem:[#allocation2 + $0x3e8] sm:$0xff]
        %v328 = vld [vmem:[#allocation2 + $0x3f0] sm:$0xff]
        %v329 = vld [vmem:[#allocation2 + $0x3f8] sm:$0xff]
        %v330 = vld [vmem:[#allocation2 + $0x400] sm:$0xff]
        %v331 = vld [vmem:[#allocation2 + $0x408] sm:$0xff]
        %v332 = vld [vmem:[#allocation2 + $0x410] sm:$0xff]
        %v333 = vld [vmem:[#allocation2 + $0x418] sm:$0xff]
        %v334 = vld [vmem:[#allocation2 + $0x420] sm:$0xff]
        %v335 = vld [vmem:[#allocation2 + $0x428] sm:$0xff]
        %v336 = vld [vmem:[#allocation2 + $0x430] sm:$0xff]
        %v337 = vld [vmem:[#allocation2 + $0x438] sm:$0xff]
        %v338 = vld [vmem:[#allocation2 + $0x440] sm:$0xff]
        %v339 = vld [vmem:[#allocation2 + $0x448] sm:$0xff]
        %v340 = vld [vmem:[#allocation2 + $0x450] sm:$0xff]
        %v341 = vld [vmem:[#allocation2 + $0x458] sm:$0xff]
        %v342 = vld [vmem:[#allocation2 + $0x460] sm:$0xff]
        %v343 = vld [vmem:[#allocation2 + $0x468] sm:$0xff]
        %v344 = vld [vmem:[#allocation2 + $0x470] sm:$0xff]
        %v345 = vld [vmem:[#allocation2 + $0x478] sm:$0xff]
        %s346 = scalar_lea.vmem %s193, 48
        %v347 = vld [vmem:[%s346] sm:$0x7f]
        %v348 = vld [vmem:[%s346 + $0x8] sm:$0x7f]
        %v349 = vld [vmem:[%s346 + $0x10] sm:$0x7f]
        %s350 = scalar_lea.vmem [#allocation2], 1152
        %v351 = vld [vmem:[%s350] sm:$0xff]
        %v352 = vld [vmem:[%s350 + $0x8] sm:$0xff]
        %v353 = vld [vmem:[%s350 + $0x10] sm:$0xff]
        %v354 = vld [vmem:[%s350 + $0x18] sm:$0xff]
        %v355 = vld [vmem:[%s350 + $0x20] sm:$0xff]
        %v356 = vld [vmem:[%s350 + $0x28] sm:$0xff]
        %v357 = vld [vmem:[%s350 + $0x30] sm:$0xff]
        %v358 = vld [vmem:[%s350 + $0x38] sm:$0xff]
        %v359 = vld [vmem:[%s350 + $0x40] sm:$0xff]
        %v360 = vld [vmem:[%s350 + $0x48] sm:$0xff]
        %v361 = vld [vmem:[%s350 + $0x50] sm:$0xff]
        %v362 = vld [vmem:[%s350 + $0x58] sm:$0xff]
        %v363 = vld [vmem:[%s350 + $0x60] sm:$0xff]
        %v364 = vld [vmem:[%s350 + $0x68] sm:$0xff]
        %v365 = vld [vmem:[%s350 + $0x70] sm:$0xff]
        %v366 = vld [vmem:[%s350 + $0x78] sm:$0xff]
        %v367 = vld [vmem:[%s350 + $0x80] sm:$0xff]
        %v368 = vld [vmem:[%s350 + $0x88] sm:$0xff]
        %v369 = vld [vmem:[%s350 + $0x90] sm:$0xff]
        %v370 = vld [vmem:[%s350 + $0x98] sm:$0xff]
        %v371 = vld [vmem:[%s350 + $0xa0] sm:$0xff]
        %v372 = vld [vmem:[%s350 + $0xa8] sm:$0xff]
        %v373 = vld [vmem:[%s350 + $0xb0] sm:$0xff]
        %v374 = vld [vmem:[%s350 + $0xb8] sm:$0xff]
        %v375 = vld [vmem:[%s350 + $0xc0] sm:$0xff]
        %v376 = vld [vmem:[%s350 + $0xc8] sm:$0xff]
        %v377 = vld [vmem:[%s350 + $0xd0] sm:$0xff]
        %v378 = vld [vmem:[%s350 + $0xd8] sm:$0xff]
        %v379 = vld [vmem:[%s350 + $0xe0] sm:$0xff]
        %v380 = vld [vmem:[%s350 + $0xe8] sm:$0xff]
        %v381 = vld [vmem:[%s350 + $0xf0] sm:$0xff]
        %v382 = vld [vmem:[%s350 + $0xf8] sm:$0xff]
        %v383 = vld [vmem:[%s350 + $0x100] sm:$0xff]
        %v384 = vld [vmem:[%s350 + $0x108] sm:$0xff]
        %v385 = vld [vmem:[%s350 + $0x110] sm:$0xff]
        %v386 = vld [vmem:[%s350 + $0x118] sm:$0xff]
        %v387 = vld [vmem:[%s350 + $0x120] sm:$0xff]
        %v388 = vld [vmem:[%s350 + $0x128] sm:$0xff]
        %v389 = vld [vmem:[%s350 + $0x130] sm:$0xff]
        %v390 = vld [vmem:[%s350 + $0x138] sm:$0xff]
        %v391 = vld [vmem:[%s350 + $0x140] sm:$0xff]
        %v392 = vld [vmem:[%s350 + $0x148] sm:$0xff]
        %v393 = vld [vmem:[%s350 + $0x150] sm:$0xff]
        %v394 = vld [vmem:[%s350 + $0x158] sm:$0xff]
        %v395 = vld [vmem:[%s350 + $0x160] sm:$0xff]
        %v396 = vld [vmem:[%s350 + $0x168] sm:$0xff]
        %v397 = vld [vmem:[%s350 + $0x170] sm:$0xff]
        %v398 = vld [vmem:[%s350 + $0x178] sm:$0xff]
        %v399 = vld [vmem:[%s350 + $0x180] sm:$0xff]
        %v400 = vld [vmem:[%s350 + $0x188] sm:$0xff]
        %v401 = vld [vmem:[%s350 + $0x190] sm:$0xff]
        %v402 = vld [vmem:[%s350 + $0x198] sm:$0xff]
        %v403 = vld [vmem:[%s350 + $0x1a0] sm:$0xff]
        %v404 = vld [vmem:[%s350 + $0x1a8] sm:$0xff]
        %v405 = vld [vmem:[%s350 + $0x1b0] sm:$0xff]
        %v406 = vld [vmem:[%s350 + $0x1b8] sm:$0xff]
        %v407 = vld [vmem:[%s350 + $0x1c0] sm:$0xff]
        %v408 = vld [vmem:[%s350 + $0x1c8] sm:$0xff]
        %v409 = vld [vmem:[%s350 + $0x1d0] sm:$0xff]
        %v410 = vld [vmem:[%s350 + $0x1d8] sm:$0xff]
        %v411 = vld [vmem:[%s350 + $0x1e0] sm:$0xff]
        %v412 = vld [vmem:[%s350 + $0x1e8] sm:$0xff]
        %v413 = vld [vmem:[%s350 + $0x1f0] sm:$0xff]
        %v414 = vld [vmem:[%s350 + $0x1f8] sm:$0xff]
        %v415 = vld [vmem:[%s350 + $0x200] sm:$0xff]
        %v416 = vld [vmem:[%s350 + $0x208] sm:$0xff]
        %v417 = vld [vmem:[%s350 + $0x210] sm:$0xff]
        %v418 = vld [vmem:[%s350 + $0x218] sm:$0xff]
        %v419 = vld [vmem:[%s350 + $0x220] sm:$0xff]
        %v420 = vld [vmem:[%s350 + $0x228] sm:$0xff]
        %v421 = vld [vmem:[%s350 + $0x230] sm:$0xff]
        %v422 = vld [vmem:[%s350 + $0x238] sm:$0xff]
        %v423 = vld [vmem:[%s350 + $0x240] sm:$0xff]
        %v424 = vld [vmem:[%s350 + $0x248] sm:$0xff]
        %v425 = vld [vmem:[%s350 + $0x250] sm:$0xff]
        %v426 = vld [vmem:[%s350 + $0x258] sm:$0xff]
        %v427 = vld [vmem:[%s350 + $0x260] sm:$0xff]
        %v428 = vld [vmem:[%s350 + $0x268] sm:$0xff]
        %v429 = vld [vmem:[%s350 + $0x270] sm:$0xff]
        %v430 = vld [vmem:[%s350 + $0x278] sm:$0xff]
        %v431 = vld [vmem:[%s350 + $0x280] sm:$0xff]
        %v432 = vld [vmem:[%s350 + $0x288] sm:$0xff]
        %v433 = vld [vmem:[%s350 + $0x290] sm:$0xff]
        %v434 = vld [vmem:[%s350 + $0x298] sm:$0xff]
        %v435 = vld [vmem:[%s350 + $0x2a0] sm:$0xff]
        %v436 = vld [vmem:[%s350 + $0x2a8] sm:$0xff]
        %v437 = vld [vmem:[%s350 + $0x2b0] sm:$0xff]
        %v438 = vld [vmem:[%s350 + $0x2b8] sm:$0xff]
        %v439 = vld [vmem:[%s350 + $0x2c0] sm:$0xff]
        %v440 = vld [vmem:[%s350 + $0x2c8] sm:$0xff]
        %v441 = vld [vmem:[%s350 + $0x2d0] sm:$0xff]
        %v442 = vld [vmem:[%s350 + $0x2d8] sm:$0xff]
        %v443 = vld [vmem:[%s350 + $0x2e0] sm:$0xff]
        %v444 = vld [vmem:[%s350 + $0x2e8] sm:$0xff]
        %v445 = vld [vmem:[%s350 + $0x2f0] sm:$0xff]
        %v446 = vld [vmem:[%s350 + $0x2f8] sm:$0xff]
        %v447 = vld [vmem:[%s350 + $0x300] sm:$0xff]
        %v448 = vld [vmem:[%s350 + $0x308] sm:$0xff]
        %v449 = vld [vmem:[%s350 + $0x310] sm:$0xff]
        %v450 = vld [vmem:[%s350 + $0x318] sm:$0xff]
        %v451 = vld [vmem:[%s350 + $0x320] sm:$0xff]
        %v452 = vld [vmem:[%s350 + $0x328] sm:$0xff]
        %v453 = vld [vmem:[%s350 + $0x330] sm:$0xff]
        %v454 = vld [vmem:[%s350 + $0x338] sm:$0xff]
        %v455 = vld [vmem:[%s350 + $0x340] sm:$0xff]
        %v456 = vld [vmem:[%s350 + $0x348] sm:$0xff]
        %v457 = vld [vmem:[%s350 + $0x350] sm:$0xff]
        %v458 = vld [vmem:[%s350 + $0x358] sm:$0xff]
        %v459 = vld [vmem:[%s350 + $0x360] sm:$0xff]
        %v460 = vld [vmem:[%s350 + $0x368] sm:$0xff]
        %v461 = vld [vmem:[%s350 + $0x370] sm:$0xff]
        %v462 = vld [vmem:[%s350 + $0x378] sm:$0xff]
        %v463 = vld [vmem:[%s350 + $0x380] sm:$0xff]
        %v464 = vld [vmem:[%s350 + $0x388] sm:$0xff]
        %v465 = vld [vmem:[%s350 + $0x390] sm:$0xff]
        %v466 = vld [vmem:[%s350 + $0x398] sm:$0xff]
        %v467 = vld [vmem:[%s350 + $0x3a0] sm:$0xff]
        %v468 = vld [vmem:[%s350 + $0x3a8] sm:$0xff]
        %v469 = vld [vmem:[%s350 + $0x3b0] sm:$0xff]
        %v470 = vld [vmem:[%s350 + $0x3b8] sm:$0xff]
        %v471 = vld [vmem:[%s350 + $0x3c0] sm:$0xff]
        %v472 = vld [vmem:[%s350 + $0x3c8] sm:$0xff]
        %v473 = vld [vmem:[%s350 + $0x3d0] sm:$0xff]
        %v474 = vld [vmem:[%s350 + $0x3d8] sm:$0xff]
        %v475 = vld [vmem:[%s350 + $0x3e0] sm:$0xff]
        %v476 = vld [vmem:[%s350 + $0x3e8] sm:$0xff]
        %v477 = vld [vmem:[%s350 + $0x3f0] sm:$0xff]
        %v478 = vld [vmem:[%s350 + $0x3f8] sm:$0xff]
        %v479 = vld [vmem:[%s350 + $0x400] sm:$0xff]
        %v480 = vld [vmem:[%s350 + $0x408] sm:$0xff]
        %v481 = vld [vmem:[%s350 + $0x410] sm:$0xff]
        %v482 = vld [vmem:[%s350 + $0x418] sm:$0xff]
        %v483 = vld [vmem:[%s350 + $0x420] sm:$0xff]
        %v484 = vld [vmem:[%s350 + $0x428] sm:$0xff]
        %v485 = vld [vmem:[%s350 + $0x430] sm:$0xff]
        %v486 = vld [vmem:[%s350 + $0x438] sm:$0xff]
        %v487 = vld [vmem:[%s350 + $0x440] sm:$0xff]
        %v488 = vld [vmem:[%s350 + $0x448] sm:$0xff]
        %v489 = vld [vmem:[%s350 + $0x450] sm:$0xff]
        %v490 = vld [vmem:[%s350 + $0x458] sm:$0xff]
        %v491 = vld [vmem:[%s350 + $0x460] sm:$0xff]
        %v492 = vld [vmem:[%s350 + $0x468] sm:$0xff]
        %v493 = vld [vmem:[%s350 + $0x470] sm:$0xff]
        %v494 = vld [vmem:[%s350 + $0x478] sm:$0xff]
        %vm495 = vcmask 261120
        %v497 = vsel %vm495, %v349, 0
        %499 = vmatprep.subr.mxu0 %v352
        %500 = vmatpush1.msra.mxu0 %v351
        %501 = vmatprep.subr.mxu0 %v356
        %502 = vmatpush1.msra.mxu0 %v355
        %503 = vmatprep.subr.mxu0 %v360
        %504 = vmatpush1.msra.mxu0 %v359
        %505 = vmatprep.subr.mxu0 %v364
        %506 = vmatpush1.msra.mxu0 %v363
        %507 = vmatprep.subr.mxu0 %v368
        %508 = vmatpush1.msra.mxu0 %v367
        %509 = vmatprep.subr.mxu0 %v372
        %510 = vmatpush1.msra.mxu0 %v371
        %511 = vmatprep.subr.mxu0 %v376
        %512 = vmatpush1.msra.mxu0 %v375
        %513 = vmatprep.subr.mxu0 %v380
        %514 = vmatpush1.msra.mxu0 %v379
        %515 = vmatprep.subr.mxu0 %v384
        %516 = vmatpush1.msra.mxu0 %v383
        %517 = vmatprep.subr.mxu0 %v388
        %518 = vmatpush1.msra.mxu0 %v387
        %519 = vmatprep.subr.mxu0 %v392
        %520 = vmatpush1.msra.mxu0 %v391
        %521 = vmatprep.subr.mxu0 %v396
        %522 = vmatpush1.msra.mxu0 %v395
        %523 = vmatprep.subr.mxu0 %v400
        %524 = vmatpush1.msra.mxu0 %v399
        %525 = vmatprep.subr.mxu0 %v404
        %526 = vmatpush1.msra.mxu0 %v403
        %527 = vmatprep.subr.mxu0 %v408
        %528 = vmatpush1.msra.mxu0 %v407
        %529 = vmatprep.subr.mxu0 %v412
        %530 = vmatpush1.msra.mxu0 %v411
        %531 = vmatprep.subr.mxu0 %v416
        %532 = vmatpush1.msra.mxu0 %v415
        %533 = vmatprep.subr.mxu0 %v420
        %534 = vmatpush1.msra.mxu0 %v419
        %535 = vmatprep.subr.mxu0 %v424
        %536 = vmatpush1.msra.mxu0 %v423
        %537 = vmatprep.subr.mxu0 %v428
        %538 = vmatpush1.msra.mxu0 %v427
        %539 = vmatprep.subr.mxu0 %v432
        %540 = vmatpush1.msra.mxu0 %v431
        %541 = vmatprep.subr.mxu0 %v436
        %542 = vmatpush1.msra.mxu0 %v435
        %543 = vmatprep.subr.mxu0 %v440
        %544 = vmatpush1.msra.mxu0 %v439
        %545 = vmatprep.subr.mxu0 %v444
        %546 = vmatpush1.msra.mxu0 %v443
        %547 = vmatprep.subr.mxu0 %v448
        %548 = vmatpush1.msra.mxu0 %v447
        %549 = vmatprep.subr.mxu0 %v452
        %550 = vmatpush1.msra.mxu0 %v451
        %551 = vmatprep.subr.mxu0 %v456
        %552 = vmatpush1.msra.mxu0 %v455
        %553 = vmatprep.subr.mxu0 %v460
        %554 = vmatpush1.msra.mxu0 %v459
        %555 = vmatprep.subr.mxu0 %v464
        %556 = vmatpush1.msra.mxu0 %v463
        %557 = vmatprep.subr.mxu0 %v468
        %558 = vmatpush1.msra.mxu0 %v467
        %559 = vmatprep.subr.mxu0 %v472
        %560 = vmatpush1.msra.mxu0 %v471
        %561 = vmatprep.subr.mxu0 %v476
        %562 = vmatpush1.msra.mxu0 %v475
        %563 = vmatprep.mubr.f32.mxu0 %v348
        %564 = vmatmul.mubr.f32.gmra.mrb[0].mxu0 %v347
        %v565 = vpop.f32.mrb[0].mxu0
        %v566 = vadd.f32 0.0, %v565
        %v567 = vpop.f32.mrb[0].mxu0
        %v568 = vadd.f32 0.0, %v567
        %569 = vdwg.mxu0
        %570 = vmatprep.subr.mxu0 %v480
        %571 = vmatpush1.msra.mxu0 %v479
        %572 = vmatprep.subr.mxu0 %v484
        %573 = vmatpush1.msra.mxu0 %v483
        %574 = vmatprep.subr.mxu0 %v488
        %575 = vmatpush1.msra.mxu0 %v487
        %576 = vmatprep.subr.mxu0 %v492
        %577 = vmatpush1.msra.mxu0 %v491
        %578 = vmatprep.subr.mxu0 0.0
        %579 = vmatpush1.msra.mxu0 0.0
        %580 = vmatprep.subr.mxu0 0.0
        %581 = vmatpush1.msra.mxu0 0.0
        %582 = vmatprep.subr.mxu0 0.0
        %583 = vmatpush1.msra.mxu0 0.0
        %584 = vmatprep.subr.mxu0 0.0
        %585 = vmatpush1.msra.mxu0 0.0
        %586 = vmatprep.subr.mxu0 0.0
        %587 = vmatpush1.msra.mxu0 0.0
        %588 = vmatprep.subr.mxu0 0.0
        %589 = vmatpush1.msra.mxu0 0.0
        %590 = vmatprep.subr.mxu0 0.0
        %591 = vmatpush1.msra.mxu0 0.0
        %592 = vmatprep.subr.mxu0 0.0
        %593 = vmatpush1.msra.mxu0 0.0
        %594 = vmatprep.subr.mxu0 0.0
        %595 = vmatpush1.msra.mxu0 0.0
        %596 = vmatprep.subr.mxu0 0.0
        %597 = vmatpush1.msra.mxu0 0.0
        %598 = vmatprep.subr.mxu0 0.0
        %599 = vmatpush1.msra.mxu0 0.0
        %600 = vmatprep.subr.mxu0 0.0
        %601 = vmatpush1.msra.mxu0 0.0
        %602 = vmatprep.subr.mxu0 0.0
        %603 = vmatpush1.msra.mxu0 0.0
        %604 = vmatprep.subr.mxu0 0.0
        %605 = vmatpush1.msra.mxu0 0.0
        %606 = vmatprep.subr.mxu0 0.0
        %607 = vmatpush1.msra.mxu0 0.0
        %608 = vmatprep.subr.mxu0 0.0
        %609 = vmatpush1.msra.mxu0 0.0
        %610 = vmatprep.subr.mxu0 0.0
        %611 = vmatpush1.msra.mxu0 0.0
        %612 = vmatprep.subr.mxu0 0.0
        %613 = vmatpush1.msra.mxu0 0.0
        %614 = vmatprep.subr.mxu0 0.0
        %615 = vmatpush1.msra.mxu0 0.0
        %616 = vmatprep.subr.mxu0 0.0
        %617 = vmatpush1.msra.mxu0 0.0
        %618 = vmatprep.subr.mxu0 0.0
        %619 = vmatpush1.msra.mxu0 0.0
        %620 = vmatprep.subr.mxu0 0.0
        %621 = vmatpush1.msra.mxu0 0.0
        %622 = vmatprep.subr.mxu0 0.0
        %623 = vmatpush1.msra.mxu0 0.0
        %624 = vmatprep.subr.mxu0 0.0
        %625 = vmatpush1.msra.mxu0 0.0
        %626 = vmatprep.subr.mxu0 0.0
        %627 = vmatpush1.msra.mxu0 0.0
        %628 = vmatprep.subr.mxu0 0.0
        %629 = vmatpush1.msra.mxu0 0.0
        %630 = vmatprep.subr.mxu0 0.0
        %631 = vmatpush1.msra.mxu0 0.0
        %632 = vmatprep.subr.mxu0 0.0
        %633 = vmatpush1.msra.mxu0 0.0
        %634 = vmatprep.mubr.f32.mxu0 0.0
        %635 = vmatmul.mubr.f32.gmra.mrb[0].mxu0 %v497
        %v636 = vpop.f32.mrb[0].mxu0
        %v637 = vadd.f32 %v566, %v636
        %v638 = vpop.f32.mrb[0].mxu0
        %v639 = vadd.f32 %v568, %v638
        %640 = vdwg.mxu0
        %641 = vmatprep.subr.mxu0 %v354
        %642 = vmatpush1.msra.mxu0 %v353
        %643 = vmatprep.subr.mxu0 %v358
        %644 = vmatpush1.msra.mxu0 %v357
        %645 = vmatprep.subr.mxu0 %v362
        %646 = vmatpush1.msra.mxu0 %v361
        %647 = vmatprep.subr.mxu0 %v366
        %648 = vmatpush1.msra.mxu0 %v365
        %649 = vmatprep.subr.mxu0 %v370
        %650 = vmatpush1.msra.mxu0 %v369
        %651 = vmatprep.subr.mxu0 %v374
        %652 = vmatpush1.msra.mxu0 %v373
        %653 = vmatprep.subr.mxu0 %v378
        %654 = vmatpush1.msra.mxu0 %v377
        %655 = vmatprep.subr.mxu0 %v382
        %656 = vmatpush1.msra.mxu0 %v381
        %657 = vmatprep.subr.mxu0 %v386
        %658 = vmatpush1.msra.mxu0 %v385
        %659 = vmatprep.subr.mxu0 %v390
        %660 = vmatpush1.msra.mxu0 %v389
        %661 = vmatprep.subr.mxu0 %v394
        %662 = vmatpush1.msra.mxu0 %v393
        %663 = vmatprep.subr.mxu0 %v398
        %664 = vmatpush1.msra.mxu0 %v397
        %665 = vmatprep.subr.mxu0 %v402
        %666 = vmatpush1.msra.mxu0 %v401
        %667 = vmatprep.subr.mxu0 %v406
        %668 = vmatpush1.msra.mxu0 %v405
        %669 = vmatprep.subr.mxu0 %v410
        %670 = vmatpush1.msra.mxu0 %v409
        %671 = vmatprep.subr.mxu0 %v414
        %672 = vmatpush1.msra.mxu0 %v413
        %673 = vmatprep.subr.mxu0 %v418
        %674 = vmatpush1.msra.mxu0 %v417
        %675 = vmatprep.subr.mxu0 %v422
        %676 = vmatpush1.msra.mxu0 %v421
        %677 = vmatprep.subr.mxu0 %v426
        %678 = vmatpush1.msra.mxu0 %v425
        %679 = vmatprep.subr.mxu0 %v430
        %680 = vmatpush1.msra.mxu0 %v429
        %681 = vmatprep.subr.mxu0 %v434
        %682 = vmatpush1.msra.mxu0 %v433
        %683 = vmatprep.subr.mxu0 %v438
        %684 = vmatpush1.msra.mxu0 %v437
        %685 = vmatprep.subr.mxu0 %v442
        %686 = vmatpush1.msra.mxu0 %v441
        %687 = vmatprep.subr.mxu0 %v446
        %688 = vmatpush1.msra.mxu0 %v445
        %689 = vmatprep.subr.mxu0 %v450
        %690 = vmatpush1.msra.mxu0 %v449
        %691 = vmatprep.subr.mxu0 %v454
        %692 = vmatpush1.msra.mxu0 %v453
        %693 = vmatprep.subr.mxu0 %v458
        %694 = vmatpush1.msra.mxu0 %v457
        %695 = vmatprep.subr.mxu0 %v462
        %696 = vmatpush1.msra.mxu0 %v461
        %697 = vmatprep.subr.mxu0 %v466
        %698 = vmatpush1.msra.mxu0 %v465
        %699 = vmatprep.subr.mxu0 %v470
        %700 = vmatpush1.msra.mxu0 %v469
        %701 = vmatprep.subr.mxu0 %v474
        %702 = vmatpush1.msra.mxu0 %v473
        %703 = vmatprep.subr.mxu0 %v478
        %704 = vmatpush1.msra.mxu0 %v477
        %705 = vmatprep.mubr.f32.mxu0 %v348
        %706 = vmatmul.mubr.f32.gmra.mrb[0].mxu0 %v347
        %v707 = vpop.f32.mrb[0].mxu0
        %v708 = vadd.f32 0.0, %v707
        %v709 = vpop.f32.mrb[0].mxu0
        %v710 = vadd.f32 0.0, %v709
        %711 = vdwg.mxu0
        %712 = vmatprep.subr.mxu0 %v482
        %713 = vmatpush1.msra.mxu0 %v481
        %714 = vmatprep.subr.mxu0 %v486
        %715 = vmatpush1.msra.mxu0 %v485
        %716 = vmatprep.subr.mxu0 %v490
        %717 = vmatpush1.msra.mxu0 %v489
        %718 = vmatprep.subr.mxu0 %v494
        %719 = vmatpush1.msra.mxu0 %v493
        %720 = vmatprep.subr.mxu0 0.0
        %721 = vmatpush1.msra.mxu0 0.0
        %722 = vmatprep.subr.mxu0 0.0
        %723 = vmatpush1.msra.mxu0 0.0
        %724 = vmatprep.subr.mxu0 0.0
        %725 = vmatpush1.msra.mxu0 0.0
        %726 = vmatprep.subr.mxu0 0.0
        %727 = vmatpush1.msra.mxu0 0.0
        %728 = vmatprep.subr.mxu0 0.0
        %729 = vmatpush1.msra.mxu0 0.0
        %730 = vmatprep.subr.mxu0 0.0
        %731 = vmatpush1.msra.mxu0 0.0
        %732 = vmatprep.subr.mxu0 0.0
        %733 = vmatpush1.msra.mxu0 0.0
        %734 = vmatprep.subr.mxu0 0.0
        %735 = vmatpush1.msra.mxu0 0.0
        %736 = vmatprep.subr.mxu0 0.0
        %737 = vmatpush1.msra.mxu0 0.0
        %738 = vmatprep.subr.mxu0 0.0
        %739 = vmatpush1.msra.mxu0 0.0
        %740 = vmatprep.subr.mxu0 0.0
        %741 = vmatpush1.msra.mxu0 0.0
        %742 = vmatprep.subr.mxu0 0.0
        %743 = vmatpush1.msra.mxu0 0.0
        %744 = vmatprep.subr.mxu0 0.0
        %745 = vmatpush1.msra.mxu0 0.0
        %746 = vmatprep.subr.mxu0 0.0
        %747 = vmatpush1.msra.mxu0 0.0
        %748 = vmatprep.subr.mxu0 0.0
        %749 = vmatpush1.msra.mxu0 0.0
        %750 = vmatprep.subr.mxu0 0.0
        %751 = vmatpush1.msra.mxu0 0.0
        %752 = vmatprep.subr.mxu0 0.0
        %753 = vmatpush1.msra.mxu0 0.0
        %754 = vmatprep.subr.mxu0 0.0
        %755 = vmatpush1.msra.mxu0 0.0
        %756 = vmatprep.subr.mxu0 0.0
        %757 = vmatpush1.msra.mxu0 0.0
        %758 = vmatprep.subr.mxu0 0.0
        %759 = vmatpush1.msra.mxu0 0.0
        %760 = vmatprep.subr.mxu0 0.0
        %761 = vmatpush1.msra.mxu0 0.0
        %762 = vmatprep.subr.mxu0 0.0
        %763 = vmatpush1.msra.mxu0 0.0
        %764 = vmatprep.subr.mxu0 0.0
        %765 = vmatpush1.msra.mxu0 0.0
        %766 = vmatprep.subr.mxu0 0.0
        %767 = vmatpush1.msra.mxu0 0.0
        %768 = vmatprep.subr.mxu0 0.0
        %769 = vmatpush1.msra.mxu0 0.0
        %770 = vmatprep.subr.mxu0 0.0
        %771 = vmatpush1.msra.mxu0 0.0
        %772 = vmatprep.subr.mxu0 0.0
        %773 = vmatpush1.msra.mxu0 0.0
        %774 = vmatprep.subr.mxu0 0.0
        %775 = vmatpush1.msra.mxu0 0.0
        %776 = vmatprep.mubr.f32.mxu0 0.0
        %777 = vmatmul.mubr.f32.gmra.mrb[0].mxu0 %v497
        %v778 = vpop.f32.mrb[0].mxu0
        %v779 = vadd.f32 %v708, %v778
        %v780 = vpop.f32.mrb[0].mxu0
        %v781 = vadd.f32 %v710, %v780
        %782 = vdwg.mxu0
        %v784 = vsel %vm495, %v201, 0
        %786 = vmatprep.subr.mxu0 %v203
        %787 = vmatpush1.msra.mxu0 %v202
        %788 = vmatprep.subr.mxu0 %v207
        %789 = vmatpush1.msra.mxu0 %v206
        %790 = vmatprep.subr.mxu0 %v211
        %791 = vmatpush1.msra.mxu0 %v210
        %792 = vmatprep.subr.mxu0 %v215
        %793 = vmatpush1.msra.mxu0 %v214
        %794 = vmatprep.subr.mxu0 %v219
        %795 = vmatpush1.msra.mxu0 %v218
        %796 = vmatprep.subr.mxu0 %v223
        %797 = vmatpush1.msra.mxu0 %v222
        %798 = vmatprep.subr.mxu0 %v227
        %799 = vmatpush1.msra.mxu0 %v226
        %800 = vmatprep.subr.mxu0 %v231
        %801 = vmatpush1.msra.mxu0 %v230
        %802 = vmatprep.subr.mxu0 %v235
        %803 = vmatpush1.msra.mxu0 %v234
        %804 = vmatprep.subr.mxu0 %v239
        %805 = vmatpush1.msra.mxu0 %v238
        %806 = vmatprep.subr.mxu0 %v243
        %807 = vmatpush1.msra.mxu0 %v242
        %808 = vmatprep.subr.mxu0 %v247
        %809 = vmatpush1.msra.mxu0 %v246
        %810 = vmatprep.subr.mxu0 %v251
        %811 = vmatpush1.msra.mxu0 %v250
        %812 = vmatprep.subr.mxu0 %v255
        %813 = vmatpush1.msra.mxu0 %v254
        %814 = vmatprep.subr.mxu0 %v259
        %815 = vmatpush1.msra.mxu0 %v258
        %816 = vmatprep.subr.mxu0 %v263
        %817 = vmatpush1.msra.mxu0 %v262
        %818 = vmatprep.subr.mxu0 %v267
        %819 = vmatpush1.msra.mxu0 %v266
        %820 = vmatprep.subr.mxu0 %v271
        %821 = vmatpush1.msra.mxu0 %v270
        %822 = vmatprep.subr.mxu0 %v275
        %823 = vmatpush1.msra.mxu0 %v274
        %824 = vmatprep.subr.mxu0 %v279
        %825 = vmatpush1.msra.mxu0 %v278
        %826 = vmatprep.subr.mxu0 %v283
        %827 = vmatpush1.msra.mxu0 %v282
        %828 = vmatprep.subr.mxu0 %v287
        %829 = vmatpush1.msra.mxu0 %v286
        %830 = vmatprep.subr.mxu0 %v291
        %831 = vmatpush1.msra.mxu0 %v290
        %832 = vmatprep.subr.mxu0 %v295
        %833 = vmatpush1.msra.mxu0 %v294
        %834 = vmatprep.subr.mxu0 %v299
        %835 = vmatpush1.msra.mxu0 %v298
        %836 = vmatprep.subr.mxu0 %v303
        %837 = vmatpush1.msra.mxu0 %v302
        %838 = vmatprep.subr.mxu0 %v307
        %839 = vmatpush1.msra.mxu0 %v306
        %840 = vmatprep.subr.mxu0 %v311
        %841 = vmatpush1.msra.mxu0 %v310
        %842 = vmatprep.subr.mxu0 %v315
        %843 = vmatpush1.msra.mxu0 %v314
        %844 = vmatprep.subr.mxu0 %v319
        %845 = vmatpush1.msra.mxu0 %v318
        %846 = vmatprep.subr.mxu0 %v323
        %847 = vmatpush1.msra.mxu0 %v322
        %848 = vmatprep.subr.mxu0 %v327
        %849 = vmatpush1.msra.mxu0 %v326
        %850 = vmatprep.mubr.f32.mxu0 %v200
        %851 = vmatmul.mubr.f32.gmra.mrb[0].mxu0 %v199
        %v852 = vpop.f32.mrb[0].mxu0
        %v853 = vadd.f32 %v637, %v852
        %v854 = vpop.f32.mrb[0].mxu0
        %v855 = vadd.f32 %v639, %v854
        %856 = vdwg.mxu0
        %857 = vmatprep.subr.mxu0 %v331
        %858 = vmatpush1.msra.mxu0 %v330
        %859 = vmatprep.subr.mxu0 %v335
        %860 = vmatpush1.msra.mxu0 %v334
        %861 = vmatprep.subr.mxu0 %v339
        %862 = vmatpush1.msra.mxu0 %v338
        %863 = vmatprep.subr.mxu0 %v343
        %864 = vmatpush1.msra.mxu0 %v342
        %865 = vmatprep.subr.mxu0 0.0
        %866 = vmatpush1.msra.mxu0 0.0
        %867 = vmatprep.subr.mxu0 0.0
        %868 = vmatpush1.msra.mxu0 0.0
        %869 = vmatprep.subr.mxu0 0.0
        %870 = vmatpush1.msra.mxu0 0.0
        %871 = vmatprep.subr.mxu0 0.0
        %872 = vmatpush1.msra.mxu0 0.0
        %873 = vmatprep.subr.mxu0 0.0
        %874 = vmatpush1.msra.mxu0 0.0
        %875 = vmatprep.subr.mxu0 0.0
        %876 = vmatpush1.msra.mxu0 0.0
        %877 = vmatprep.subr.mxu0 0.0
        %878 = vmatpush1.msra.mxu0 0.0
        %879 = vmatprep.subr.mxu0 0.0
        %880 = vmatpush1.msra.mxu0 0.0
        %881 = vmatprep.subr.mxu0 0.0
        %882 = vmatpush1.msra.mxu0 0.0
        %883 = vmatprep.subr.mxu0 0.0
        %884 = vmatpush1.msra.mxu0 0.0
        %885 = vmatprep.subr.mxu0 0.0
        %886 = vmatpush1.msra.mxu0 0.0
        %887 = vmatprep.subr.mxu0 0.0
        %888 = vmatpush1.msra.mxu0 0.0
        %889 = vmatprep.subr.mxu0 0.0
        %890 = vmatpush1.msra.mxu0 0.0
        %891 = vmatprep.subr.mxu0 0.0
        %892 = vmatpush1.msra.mxu0 0.0
        %893 = vmatprep.subr.mxu0 0.0
        %894 = vmatpush1.msra.mxu0 0.0
        %895 = vmatprep.subr.mxu0 0.0
        %896 = vmatpush1.msra.mxu0 0.0
        %897 = vmatprep.subr.mxu0 0.0
        %898 = vmatpush1.msra.mxu0 0.0
        %899 = vmatprep.subr.mxu0 0.0
        %900 = vmatpush1.msra.mxu0 0.0
        %901 = vmatprep.subr.mxu0 0.0
        %902 = vmatpush1.msra.mxu0 0.0
        %903 = vmatprep.subr.mxu0 0.0
        %904 = vmatpush1.msra.mxu0 0.0
        %905 = vmatprep.subr.mxu0 0.0
        %906 = vmatpush1.msra.mxu0 0.0
        %907 = vmatprep.subr.mxu0 0.0
        %908 = vmatpush1.msra.mxu0 0.0
        %909 = vmatprep.subr.mxu0 0.0
        %910 = vmatpush1.msra.mxu0 0.0
        %911 = vmatprep.subr.mxu0 0.0
        %912 = vmatpush1.msra.mxu0 0.0
        %913 = vmatprep.subr.mxu0 0.0
        %914 = vmatpush1.msra.mxu0 0.0
        %915 = vmatprep.subr.mxu0 0.0
        %916 = vmatpush1.msra.mxu0 0.0
        %917 = vmatprep.subr.mxu0 0.0
        %918 = vmatpush1.msra.mxu0 0.0
        %919 = vmatprep.subr.mxu0 0.0
        %920 = vmatpush1.msra.mxu0 0.0
        %921 = vmatprep.mubr.f32.mxu0 0.0
        %922 = vmatmul.mubr.f32.gmra.mrb[0].mxu0 %v784
        %v923 = vpop.f32.mrb[0].mxu0
        %v924 = vadd.f32 %v853, %v923
        %v925 = vpop.f32.mrb[0].mxu0
        %v926 = vadd.f32 %v855, %v925
        %927 = vdwg.mxu0
        %928 = vmatprep.subr.mxu0 %v205
        %929 = vmatpush1.msra.mxu0 %v204
        %930 = vmatprep.subr.mxu0 %v209
        %931 = vmatpush1.msra.mxu0 %v208
        %932 = vmatprep.subr.mxu0 %v213
        %933 = vmatpush1.msra.mxu0 %v212
        %934 = vmatprep.subr.mxu0 %v217
        %935 = vmatpush1.msra.mxu0 %v216
        %936 = vmatprep.subr.mxu0 %v221
        %937 = vmatpush1.msra.mxu0 %v220
        %938 = vmatprep.subr.mxu0 %v225
        %939 = vmatpush1.msra.mxu0 %v224
        %940 = vmatprep.subr.mxu0 %v229
        %941 = vmatpush1.msra.mxu0 %v228
        %942 = vmatprep.subr.mxu0 %v233
        %943 = vmatpush1.msra.mxu0 %v232
        %944 = vmatprep.subr.mxu0 %v237
        %945 = vmatpush1.msra.mxu0 %v236
        %946 = vmatprep.subr.mxu0 %v241
        %947 = vmatpush1.msra.mxu0 %v240
        %948 = vmatprep.subr.mxu0 %v245
        %949 = vmatpush1.msra.mxu0 %v244
        %950 = vmatprep.subr.mxu0 %v249
        %951 = vmatpush1.msra.mxu0 %v248
        %952 = vmatprep.subr.mxu0 %v253
        %953 = vmatpush1.msra.mxu0 %v252
        %954 = vmatprep.subr.mxu0 %v257
        %955 = vmatpush1.msra.mxu0 %v256
        %956 = vmatprep.subr.mxu0 %v261
        %957 = vmatpush1.msra.mxu0 %v260
        %958 = vmatprep.subr.mxu0 %v265
        %959 = vmatpush1.msra.mxu0 %v264
        %960 = vmatprep.subr.mxu0 %v269
        %961 = vmatpush1.msra.mxu0 %v268
        %962 = vmatprep.subr.mxu0 %v273
        %963 = vmatpush1.msra.mxu0 %v272
        %964 = vmatprep.subr.mxu0 %v277
        %965 = vmatpush1.msra.mxu0 %v276
        %966 = vmatprep.subr.mxu0 %v281
        %967 = vmatpush1.msra.mxu0 %v280
        %968 = vmatprep.subr.mxu0 %v285
        %969 = vmatpush1.msra.mxu0 %v284
        %970 = vmatprep.subr.mxu0 %v289
        %971 = vmatpush1.msra.mxu0 %v288
        %972 = vmatprep.subr.mxu0 %v293
        %973 = vmatpush1.msra.mxu0 %v292
        %974 = vmatprep.subr.mxu0 %v297
        %975 = vmatpush1.msra.mxu0 %v296
        %976 = vmatprep.subr.mxu0 %v301
        %977 = vmatpush1.msra.mxu0 %v300
        %978 = vmatprep.subr.mxu0 %v305
        %979 = vmatpush1.msra.mxu0 %v304
        %980 = vmatprep.subr.mxu0 %v309
        %981 = vmatpush1.msra.mxu0 %v308
        %982 = vmatprep.subr.mxu0 %v313
        %983 = vmatpush1.msra.mxu0 %v312
        %984 = vmatprep.subr.mxu0 %v317
        %985 = vmatpush1.msra.mxu0 %v316
        %986 = vmatprep.subr.mxu0 %v321
        %987 = vmatpush1.msra.mxu0 %v320
        %988 = vmatprep.subr.mxu0 %v325
        %989 = vmatpush1.msra.mxu0 %v324
        %990 = vmatprep.subr.mxu0 %v329
        %991 = vmatpush1.msra.mxu0 %v328
        %992 = vmatprep.mubr.f32.mxu0 %v200
        %993 = vmatmul.mubr.f32.gmra.mrb[0].mxu0 %v199
        %v994 = vpop.f32.mrb[0].mxu0
        %v995 = vadd.f32 %v779, %v994
        %v996 = vpop.f32.mrb[0].mxu0
        %v997 = vadd.f32 %v781, %v996
        %998 = vdwg.mxu0
        %999 = vmatprep.subr.mxu0 %v333
        %1000 = vmatpush1.msra.mxu0 %v332
        %1001 = vmatprep.subr.mxu0 %v337
        %1002 = vmatpush1.msra.mxu0 %v336
        %1003 = vmatprep.subr.mxu0 %v341
        %1004 = vmatpush1.msra.mxu0 %v340
        %1005 = vmatprep.subr.mxu0 %v345
        %1006 = vmatpush1.msra.mxu0 %v344
        %1007 = vmatprep.subr.mxu0 0.0
        %1008 = vmatpush1.msra.mxu0 0.0
        %1009 = vmatprep.subr.mxu0 0.0
        %1010 = vmatpush1.msra.mxu0 0.0
        %1011 = vmatprep.subr.mxu0 0.0
        %1012 = vmatpush1.msra.mxu0 0.0
        %1013 = vmatprep.subr.mxu0 0.0
        %1014 = vmatpush1.msra.mxu0 0.0
        %1015 = vmatprep.subr.mxu0 0.0
        %1016 = vmatpush1.msra.mxu0 0.0
        %1017 = vmatprep.subr.mxu0 0.0
        %1018 = vmatpush1.msra.mxu0 0.0
        %1019 = vmatprep.subr.mxu0 0.0
        %1020 = vmatpush1.msra.mxu0 0.0
        %1021 = vmatprep.subr.mxu0 0.0
        %1022 = vmatpush1.msra.mxu0 0.0
        %1023 = vmatprep.subr.mxu0 0.0
        %1024 = vmatpush1.msra.mxu0 0.0
        %1025 = vmatprep.subr.mxu0 0.0
        %1026 = vmatpush1.msra.mxu0 0.0
        %1027 = vmatprep.subr.mxu0 0.0
        %1028 = vmatpush1.msra.mxu0 0.0
        %1029 = vmatprep.subr.mxu0 0.0
        %1030 = vmatpush1.msra.mxu0 0.0
        %1031 = vmatprep.subr.mxu0 0.0
        %1032 = vmatpush1.msra.mxu0 0.0
        %1033 = vmatprep.subr.mxu0 0.0
        %1034 = vmatpush1.msra.mxu0 0.0
        %1035 = vmatprep.subr.mxu0 0.0
        %1036 = vmatpush1.msra.mxu0 0.0
        %1037 = vmatprep.subr.mxu0 0.0
        %1038 = vmatpush1.msra.mxu0 0.0
        %1039 = vmatprep.subr.mxu0 0.0
        %1040 = vmatpush1.msra.mxu0 0.0
        %1041 = vmatprep.subr.mxu0 0.0
        %1042 = vmatpush1.msra.mxu0 0.0
        %1043 = vmatprep.subr.mxu0 0.0
        %1044 = vmatpush1.msra.mxu0 0.0
        %1045 = vmatprep.subr.mxu0 0.0
        %1046 = vmatpush1.msra.mxu0 0.0
        %1047 = vmatprep.subr.mxu0 0.0
        %1048 = vmatpush1.msra.mxu0 0.0
        %1049 = vmatprep.subr.mxu0 0.0
        %1050 = vmatpush1.msra.mxu0 0.0
        %1051 = vmatprep.subr.mxu0 0.0
        %1052 = vmatpush1.msra.mxu0 0.0
        %1053 = vmatprep.subr.mxu0 0.0
        %1054 = vmatpush1.msra.mxu0 0.0
        %1055 = vmatprep.subr.mxu0 0.0
        %1056 = vmatpush1.msra.mxu0 0.0
        %1057 = vmatprep.subr.mxu0 0.0
        %1058 = vmatpush1.msra.mxu0 0.0
        %1059 = vmatprep.subr.mxu0 0.0
        %1060 = vmatpush1.msra.mxu0 0.0
        %1061 = vmatprep.subr.mxu0 0.0
        %1062 = vmatpush1.msra.mxu0 0.0
        %1063 = vmatprep.mubr.f32.mxu0 0.0
        %1064 = vmatmul.mubr.f32.gmra.mrb[0].mxu0 %v784
        %v1065 = vpop.f32.mrb[0].mxu0
        %v1066 = vadd.f32 %v995, %v1065
        %v1067 = vpop.f32.mrb[0].mxu0
        %v1068 = vadd.f32 %v997, %v1067
        %1069 = vdwg.mxu0
        %v1070 = vld [vmem:[%s193] sm:$0xfe]
        %v1071 = vld [vmem:[%s193 + $0x8] sm:$0xfe]
        %v1072 = vld [vmem:[%s193 + $0x10] sm:$0xfe]
        %s1073 = scalar_lea.vmem [#allocation2], 2304
        %v1074 = vld [vmem:[%s1073] sm:$0xff]
        %v1075 = vld [vmem:[%s1073 + $0x8] sm:$0xff]
        %v1076 = vld [vmem:[%s1073 + $0x10] sm:$0xff]
        %v1077 = vld [vmem:[%s1073 + $0x18] sm:$0xff]
        %v1078 = vld [vmem:[%s1073 + $0x20] sm:$0xff]
        %v1079 = vld [vmem:[%s1073 + $0x28] sm:$0xff]
        %v1080 = vld [vmem:[%s1073 + $0x30] sm:$0xff]
        %v1081 = vld [vmem:[%s1073 + $0x38] sm:$0xff]
        %v1082 = vld [vmem:[%s1073 + $0x40] sm:$0xff]
        %v1083 = vld [vmem:[%s1073 + $0x48] sm:$0xff]
        %v1084 = vld [vmem:[%s1073 + $0x50] sm:$0xff]
        %v1085 = vld [vmem:[%s1073 + $0x58] sm:$0xff]
        %v1086 = vld [vmem:[%s1073 + $0x60] sm:$0xff]
        %v1087 = vld [vmem:[%s1073 + $0x68] sm:$0xff]
        %v1088 = vld [vmem:[%s1073 + $0x70] sm:$0xff]
        %v1089 = vld [vmem:[%s1073 + $0x78] sm:$0xff]
        %v1090 = vld [vmem:[%s1073 + $0x80] sm:$0xff]
        %v1091 = vld [vmem:[%s1073 + $0x88] sm:$0xff]
        %v1092 = vld [vmem:[%s1073 + $0x90] sm:$0xff]
        %v1093 = vld [vmem:[%s1073 + $0x98] sm:$0xff]
        %v1094 = vld [vmem:[%s1073 + $0xa0] sm:$0xff]
        %v1095 = vld [vmem:[%s1073 + $0xa8] sm:$0xff]
        %v1096 = vld [vmem:[%s1073 + $0xb0] sm:$0xff]
        %v1097 = vld [vmem:[%s1073 + $0xb8] sm:$0xff]
        %v1098 = vld [vmem:[%s1073 + $0xc0] sm:$0xff]
        %v1099 = vld [vmem:[%s1073 + $0xc8] sm:$0xff]
        %v1100 = vld [vmem:[%s1073 + $0xd0] sm:$0xff]
        %v1101 = vld [vmem:[%s1073 + $0xd8] sm:$0xff]
        %v1102 = vld [vmem:[%s1073 + $0xe0] sm:$0xff]
        %v1103 = vld [vmem:[%s1073 + $0xe8] sm:$0xff]
        %v1104 = vld [vmem:[%s1073 + $0xf0] sm:$0xff]
        %v1105 = vld [vmem:[%s1073 + $0xf8] sm:$0xff]
        %v1106 = vld [vmem:[%s1073 + $0x100] sm:$0xff]
        %v1107 = vld [vmem:[%s1073 + $0x108] sm:$0xff]
        %v1108 = vld [vmem:[%s1073 + $0x110] sm:$0xff]
        %v1109 = vld [vmem:[%s1073 + $0x118] sm:$0xff]
        %v1110 = vld [vmem:[%s1073 + $0x120] sm:$0xff]
        %v1111 = vld [vmem:[%s1073 + $0x128] sm:$0xff]
        %v1112 = vld [vmem:[%s1073 + $0x130] sm:$0xff]
        %v1113 = vld [vmem:[%s1073 + $0x138] sm:$0xff]
        %v1114 = vld [vmem:[%s1073 + $0x140] sm:$0xff]
        %v1115 = vld [vmem:[%s1073 + $0x148] sm:$0xff]
        %v1116 = vld [vmem:[%s1073 + $0x150] sm:$0xff]
        %v1117 = vld [vmem:[%s1073 + $0x158] sm:$0xff]
        %v1118 = vld [vmem:[%s1073 + $0x160] sm:$0xff]
        %v1119 = vld [vmem:[%s1073 + $0x168] sm:$0xff]
        %v1120 = vld [vmem:[%s1073 + $0x170] sm:$0xff]
        %v1121 = vld [vmem:[%s1073 + $0x178] sm:$0xff]
        %v1122 = vld [vmem:[%s1073 + $0x180] sm:$0xff]
        %v1123 = vld [vmem:[%s1073 + $0x188] sm:$0xff]
        %v1124 = vld [vmem:[%s1073 + $0x190] sm:$0xff]
        %v1125 = vld [vmem:[%s1073 + $0x198] sm:$0xff]
        %v1126 = vld [vmem:[%s1073 + $0x1a0] sm:$0xff]
        %v1127 = vld [vmem:[%s1073 + $0x1a8] sm:$0xff]
        %v1128 = vld [vmem:[%s1073 + $0x1b0] sm:$0xff]
        %v1129 = vld [vmem:[%s1073 + $0x1b8] sm:$0xff]
        %v1130 = vld [vmem:[%s1073 + $0x1c0] sm:$0xff]
        %v1131 = vld [vmem:[%s1073 + $0x1c8] sm:$0xff]
        %v1132 = vld [vmem:[%s1073 + $0x1d0] sm:$0xff]
        %v1133 = vld [vmem:[%s1073 + $0x1d8] sm:$0xff]
        %v1134 = vld [vmem:[%s1073 + $0x1e0] sm:$0xff]
        %v1135 = vld [vmem:[%s1073 + $0x1e8] sm:$0xff]
        %v1136 = vld [vmem:[%s1073 + $0x1f0] sm:$0xff]
        %v1137 = vld [vmem:[%s1073 + $0x1f8] sm:$0xff]
        %v1138 = vld [vmem:[%s1073 + $0x200] sm:$0xff]
        %v1139 = vld [vmem:[%s1073 + $0x208] sm:$0xff]
        %v1140 = vld [vmem:[%s1073 + $0x210] sm:$0xff]
        %v1141 = vld [vmem:[%s1073 + $0x218] sm:$0xff]
        %v1142 = vld [vmem:[%s1073 + $0x220] sm:$0xff]
        %v1143 = vld [vmem:[%s1073 + $0x228] sm:$0xff]
        %v1144 = vld [vmem:[%s1073 + $0x230] sm:$0xff]
        %v1145 = vld [vmem:[%s1073 + $0x238] sm:$0xff]
        %v1146 = vld [vmem:[%s1073 + $0x240] sm:$0xff]
        %v1147 = vld [vmem:[%s1073 + $0x248] sm:$0xff]
        %v1148 = vld [vmem:[%s1073 + $0x250] sm:$0xff]
        %v1149 = vld [vmem:[%s1073 + $0x258] sm:$0xff]
        %v1150 = vld [vmem:[%s1073 + $0x260] sm:$0xff]
        %v1151 = vld [vmem:[%s1073 + $0x268] sm:$0xff]
        %v1152 = vld [vmem:[%s1073 + $0x270] sm:$0xff]
        %v1153 = vld [vmem:[%s1073 + $0x278] sm:$0xff]
        %v1154 = vld [vmem:[%s1073 + $0x280] sm:$0xff]
        %v1155 = vld [vmem:[%s1073 + $0x288] sm:$0xff]
        %v1156 = vld [vmem:[%s1073 + $0x290] sm:$0xff]
        %v1157 = vld [vmem:[%s1073 + $0x298] sm:$0xff]
        %v1158 = vld [vmem:[%s1073 + $0x2a0] sm:$0xff]
        %v1159 = vld [vmem:[%s1073 + $0x2a8] sm:$0xff]
        %v1160 = vld [vmem:[%s1073 + $0x2b0] sm:$0xff]
        %v1161 = vld [vmem:[%s1073 + $0x2b8] sm:$0xff]
        %v1162 = vld [vmem:[%s1073 + $0x2c0] sm:$0xff]
        %v1163 = vld [vmem:[%s1073 + $0x2c8] sm:$0xff]
        %v1164 = vld [vmem:[%s1073 + $0x2d0] sm:$0xff]
        %v1165 = vld [vmem:[%s1073 + $0x2d8] sm:$0xff]
        %v1166 = vld [vmem:[%s1073 + $0x2e0] sm:$0xff]
        %v1167 = vld [vmem:[%s1073 + $0x2e8] sm:$0xff]
        %v1168 = vld [vmem:[%s1073 + $0x2f0] sm:$0xff]
        %v1169 = vld [vmem:[%s1073 + $0x2f8] sm:$0xff]
        %v1170 = vld [vmem:[%s1073 + $0x300] sm:$0xff]
        %v1171 = vld [vmem:[%s1073 + $0x308] sm:$0xff]
        %v1172 = vld [vmem:[%s1073 + $0x310] sm:$0xff]
        %v1173 = vld [vmem:[%s1073 + $0x318] sm:$0xff]
        %v1174 = vld [vmem:[%s1073 + $0x320] sm:$0xff]
        %v1175 = vld [vmem:[%s1073 + $0x328] sm:$0xff]
        %v1176 = vld [vmem:[%s1073 + $0x330] sm:$0xff]
        %v1177 = vld [vmem:[%s1073 + $0x338] sm:$0xff]
        %v1178 = vld [vmem:[%s1073 + $0x340] sm:$0xff]
        %v1179 = vld [vmem:[%s1073 + $0x348] sm:$0xff]
        %v1180 = vld [vmem:[%s1073 + $0x350] sm:$0xff]
        %v1181 = vld [vmem:[%s1073 + $0x358] sm:$0xff]
        %v1182 = vld [vmem:[%s1073 + $0x360] sm:$0xff]
        %v1183 = vld [vmem:[%s1073 + $0x368] sm:$0xff]
        %v1184 = vld [vmem:[%s1073 + $0x370] sm:$0xff]
        %v1185 = vld [vmem:[%s1073 + $0x378] sm:$0xff]
        %v1186 = vld [vmem:[%s1073 + $0x380] sm:$0xff]
        %v1187 = vld [vmem:[%s1073 + $0x388] sm:$0xff]
        %v1188 = vld [vmem:[%s1073 + $0x390] sm:$0xff]
        %v1189 = vld [vmem:[%s1073 + $0x398] sm:$0xff]
        %v1190 = vld [vmem:[%s1073 + $0x3a0] sm:$0xff]
        %v1191 = vld [vmem:[%s1073 + $0x3a8] sm:$0xff]
        %v1192 = vld [vmem:[%s1073 + $0x3b0] sm:$0xff]
        %v1193 = vld [vmem:[%s1073 + $0x3b8] sm:$0xff]
        %v1194 = vld [vmem:[%s1073 + $0x3c0] sm:$0xff]
        %v1195 = vld [vmem:[%s1073 + $0x3c8] sm:$0xff]
        %v1196 = vld [vmem:[%s1073 + $0x3d0] sm:$0xff]
        %v1197 = vld [vmem:[%s1073 + $0x3d8] sm:$0xff]
        %v1198 = vld [vmem:[%s1073 + $0x3e0] sm:$0xff]
        %v1199 = vld [vmem:[%s1073 + $0x3e8] sm:$0xff]
        %v1200 = vld [vmem:[%s1073 + $0x3f0] sm:$0xff]
        %v1201 = vld [vmem:[%s1073 + $0x3f8] sm:$0xff]
        %v1202 = vld [vmem:[%s1073 + $0x400] sm:$0xff]
        %v1203 = vld [vmem:[%s1073 + $0x408] sm:$0xff]
        %v1204 = vld [vmem:[%s1073 + $0x410] sm:$0xff]
        %v1205 = vld [vmem:[%s1073 + $0x418] sm:$0xff]
        %v1206 = vld [vmem:[%s1073 + $0x420] sm:$0xff]
        %v1207 = vld [vmem:[%s1073 + $0x428] sm:$0xff]
        %v1208 = vld [vmem:[%s1073 + $0x430] sm:$0xff]
        %v1209 = vld [vmem:[%s1073 + $0x438] sm:$0xff]
        %v1210 = vld [vmem:[%s1073 + $0x440] sm:$0xff]
        %v1211 = vld [vmem:[%s1073 + $0x448] sm:$0xff]
        %v1212 = vld [vmem:[%s1073 + $0x450] sm:$0xff]
        %v1213 = vld [vmem:[%s1073 + $0x458] sm:$0xff]
        %v1214 = vld [vmem:[%s1073 + $0x460] sm:$0xff]
        %v1215 = vld [vmem:[%s1073 + $0x468] sm:$0xff]
        %v1216 = vld [vmem:[%s1073 + $0x470] sm:$0xff]
        %v1217 = vld [vmem:[%s1073 + $0x478] sm:$0xff]
        %v1221 = vrot.slane %v1070, 1
        %v1222 = vrot.slane %v1071, 1
        %v1223 = vrot.slane %v1072, 1
        %v1226 = vsel %vm495, %v1223, 0
        %1228 = vmatprep.subr.mxu0 %v1075
        %1229 = vmatpush1.msra.mxu0 %v1074
        %1230 = vmatprep.subr.mxu0 %v1079
        %1231 = vmatpush1.msra.mxu0 %v1078
        %1232 = vmatprep.subr.mxu0 %v1083
        %1233 = vmatpush1.msra.mxu0 %v1082
        %1234 = vmatprep.subr.mxu0 %v1087
        %1235 = vmatpush1.msra.mxu0 %v1086
        %1236 = vmatprep.subr.mxu0 %v1091
        %1237 = vmatpush1.msra.mxu0 %v1090
        %1238 = vmatprep.subr.mxu0 %v1095
        %1239 = vmatpush1.msra.mxu0 %v1094
        %1240 = vmatprep.subr.mxu0 %v1099
        %1241 = vmatpush1.msra.mxu0 %v1098
        %1242 = vmatprep.subr.mxu0 %v1103
        %1243 = vmatpush1.msra.mxu0 %v1102
        %1244 = vmatprep.subr.mxu0 %v1107
        %1245 = vmatpush1.msra.mxu0 %v1106
        %1246 = vmatprep.subr.mxu0 %v1111
        %1247 = vmatpush1.msra.mxu0 %v1110
        %1248 = vmatprep.subr.mxu0 %v1115
        %1249 = vmatpush1.msra.mxu0 %v1114
        %1250 = vmatprep.subr.mxu0 %v1119
        %1251 = vmatpush1.msra.mxu0 %v1118
        %1252 = vmatprep.subr.mxu0 %v1123
        %1253 = vmatpush1.msra.mxu0 %v1122
        %1254 = vmatprep.subr.mxu0 %v1127
        %1255 = vmatpush1.msra.mxu0 %v1126
        %1256 = vmatprep.subr.mxu0 %v1131
        %1257 = vmatpush1.msra.mxu0 %v1130
        %1258 = vmatprep.subr.mxu0 %v1135
        %1259 = vmatpush1.msra.mxu0 %v1134
        %1260 = vmatprep.subr.mxu0 %v1139
        %1261 = vmatpush1.msra.mxu0 %v1138
        %1262 = vmatprep.subr.mxu0 %v1143
        %1263 = vmatpush1.msra.mxu0 %v1142
        %1264 = vmatprep.subr.mxu0 %v1147
        %1265 = vmatpush1.msra.mxu0 %v1146
        %1266 = vmatprep.subr.mxu0 %v1151
        %1267 = vmatpush1.msra.mxu0 %v1150
        %1268 = vmatprep.subr.mxu0 %v1155
        %1269 = vmatpush1.msra.mxu0 %v1154
        %1270 = vmatprep.subr.mxu0 %v1159
        %1271 = vmatpush1.msra.mxu0 %v1158
        %1272 = vmatprep.subr.mxu0 %v1163
        %1273 = vmatpush1.msra.mxu0 %v1162
        %1274 = vmatprep.subr.mxu0 %v1167
        %1275 = vmatpush1.msra.mxu0 %v1166
        %1276 = vmatprep.subr.mxu0 %v1171
        %1277 = vmatpush1.msra.mxu0 %v1170
        %1278 = vmatprep.subr.mxu0 %v1175
        %1279 = vmatpush1.msra.mxu0 %v1174
        %1280 = vmatprep.subr.mxu0 %v1179
        %1281 = vmatpush1.msra.mxu0 %v1178
        %1282 = vmatprep.subr.mxu0 %v1183
        %1283 = vmatpush1.msra.mxu0 %v1182
        %1284 = vmatprep.subr.mxu0 %v1187
        %1285 = vmatpush1.msra.mxu0 %v1186
        %1286 = vmatprep.subr.mxu0 %v1191
        %1287 = vmatpush1.msra.mxu0 %v1190
        %1288 = vmatprep.subr.mxu0 %v1195
        %1289 = vmatpush1.msra.mxu0 %v1194
        %1290 = vmatprep.subr.mxu0 %v1199
        %1291 = vmatpush1.msra.mxu0 %v1198
        %1292 = vmatprep.mubr.f32.mxu0 %v1222
        %1293 = vmatmul.mubr.f32.gmra.mrb[0].mxu0 %v1221
        %v1294 = vpop.f32.mrb[0].mxu0
        %v1295 = vadd.f32 0.0, %v1294
        %v1296 = vpop.f32.mrb[0].mxu0
        %v1297 = vadd.f32 0.0, %v1296
        %1298 = vdwg.mxu0
        %1299 = vmatprep.subr.mxu0 %v1203
        %1300 = vmatpush1.msra.mxu0 %v1202
        %1301 = vmatprep.subr.mxu0 %v1207
        %1302 = vmatpush1.msra.mxu0 %v1206
        %1303 = vmatprep.subr.mxu0 %v1211
        %1304 = vmatpush1.msra.mxu0 %v1210
        %1305 = vmatprep.subr.mxu0 %v1215
        %1306 = vmatpush1.msra.mxu0 %v1214
        %1307 = vmatprep.subr.mxu0 0.0
        %1308 = vmatpush1.msra.mxu0 0.0
        %1309 = vmatprep.subr.mxu0 0.0
        %1310 = vmatpush1.msra.mxu0 0.0
        %1311 = vmatprep.subr.mxu0 0.0
        %1312 = vmatpush1.msra.mxu0 0.0
        %1313 = vmatprep.subr.mxu0 0.0
        %1314 = vmatpush1.msra.mxu0 0.0
        %1315 = vmatprep.subr.mxu0 0.0
        %1316 = vmatpush1.msra.mxu0 0.0
        %1317 = vmatprep.subr.mxu0 0.0
        %1318 = vmatpush1.msra.mxu0 0.0
        %1319 = vmatprep.subr.mxu0 0.0
        %1320 = vmatpush1.msra.mxu0 0.0
        %1321 = vmatprep.subr.mxu0 0.0
        %1322 = vmatpush1.msra.mxu0 0.0
        %1323 = vmatprep.subr.mxu0 0.0
        %1324 = vmatpush1.msra.mxu0 0.0
        %1325 = vmatprep.subr.mxu0 0.0
        %1326 = vmatpush1.msra.mxu0 0.0
        %1327 = vmatprep.subr.mxu0 0.0
        %1328 = vmatpush1.msra.mxu0 0.0
        %1329 = vmatprep.subr.mxu0 0.0
        %1330 = vmatpush1.msra.mxu0 0.0
        %1331 = vmatprep.subr.mxu0 0.0
        %1332 = vmatpush1.msra.mxu0 0.0
        %1333 = vmatprep.subr.mxu0 0.0
        %1334 = vmatpush1.msra.mxu0 0.0
        %1335 = vmatprep.subr.mxu0 0.0
        %1336 = vmatpush1.msra.mxu0 0.0
        %1337 = vmatprep.subr.mxu0 0.0
        %1338 = vmatpush1.msra.mxu0 0.0
        %1339 = vmatprep.subr.mxu0 0.0
        %1340 = vmatpush1.msra.mxu0 0.0
        %1341 = vmatprep.subr.mxu0 0.0
        %1342 = vmatpush1.msra.mxu0 0.0
        %1343 = vmatprep.subr.mxu0 0.0
        %1344 = vmatpush1.msra.mxu0 0.0
        %1345 = vmatprep.subr.mxu0 0.0
        %1346 = vmatpush1.msra.mxu0 0.0
        %1347 = vmatprep.subr.mxu0 0.0
        %1348 = vmatpush1.msra.mxu0 0.0
        %1349 = vmatprep.subr.mxu0 0.0
        %1350 = vmatpush1.msra.mxu0 0.0
        %1351 = vmatprep.subr.mxu0 0.0
        %1352 = vmatpush1.msra.mxu0 0.0
        %1353 = vmatprep.subr.mxu0 0.0
        %1354 = vmatpush1.msra.mxu0 0.0
        %1355 = vmatprep.subr.mxu0 0.0
        %1356 = vmatpush1.msra.mxu0 0.0
        %1357 = vmatprep.subr.mxu0 0.0
        %1358 = vmatpush1.msra.mxu0 0.0
        %1359 = vmatprep.subr.mxu0 0.0
        %1360 = vmatpush1.msra.mxu0 0.0
        %1361 = vmatprep.subr.mxu0 0.0
        %1362 = vmatpush1.msra.mxu0 0.0
        %1363 = vmatprep.mubr.f32.mxu0 0.0
        %1364 = vmatmul.mubr.f32.gmra.mrb[0].mxu0 %v1226
        %v1365 = vpop.f32.mrb[0].mxu0
        %v1366 = vadd.f32 %v1295, %v1365
        %v1367 = vpop.f32.mrb[0].mxu0
        %v1368 = vadd.f32 %v1297, %v1367
        %1369 = vdwg.mxu0
        %1370 = vmatprep.subr.mxu0 %v1077
        %1371 = vmatpush1.msra.mxu0 %v1076
        %1372 = vmatprep.subr.mxu0 %v1081
        %1373 = vmatpush1.msra.mxu0 %v1080
        %1374 = vmatprep.subr.mxu0 %v1085
        %1375 = vmatpush1.msra.mxu0 %v1084
        %1376 = vmatprep.subr.mxu0 %v1089
        %1377 = vmatpush1.msra.mxu0 %v1088
        %1378 = vmatprep.subr.mxu0 %v1093
        %1379 = vmatpush1.msra.mxu0 %v1092
        %1380 = vmatprep.subr.mxu0 %v1097
        %1381 = vmatpush1.msra.mxu0 %v1096
        %1382 = vmatprep.subr.mxu0 %v1101
        %1383 = vmatpush1.msra.mxu0 %v1100
        %1384 = vmatprep.subr.mxu0 %v1105
        %1385 = vmatpush1.msra.mxu0 %v1104
        %1386 = vmatprep.subr.mxu0 %v1109
        %1387 = vmatpush1.msra.mxu0 %v1108
        %1388 = vmatprep.subr.mxu0 %v1113
        %1389 = vmatpush1.msra.mxu0 %v1112
        %1390 = vmatprep.subr.mxu0 %v1117
        %1391 = vmatpush1.msra.mxu0 %v1116
        %1392 = vmatprep.subr.mxu0 %v1121
        %1393 = vmatpush1.msra.mxu0 %v1120
        %1394 = vmatprep.subr.mxu0 %v1125
        %1395 = vmatpush1.msra.mxu0 %v1124
        %1396 = vmatprep.subr.mxu0 %v1129
        %1397 = vmatpush1.msra.mxu0 %v1128
        %1398 = vmatprep.subr.mxu0 %v1133
        %1399 = vmatpush1.msra.mxu0 %v1132
        %1400 = vmatprep.subr.mxu0 %v1137
        %1401 = vmatpush1.msra.mxu0 %v1136
        %1402 = vmatprep.subr.mxu0 %v1141
        %1403 = vmatpush1.msra.mxu0 %v1140
        %1404 = vmatprep.subr.mxu0 %v1145
        %1405 = vmatpush1.msra.mxu0 %v1144
        %1406 = vmatprep.subr.mxu0 %v1149
        %1407 = vmatpush1.msra.mxu0 %v1148
        %1408 = vmatprep.subr.mxu0 %v1153
        %1409 = vmatpush1.msra.mxu0 %v1152
        %1410 = vmatprep.subr.mxu0 %v1157
        %1411 = vmatpush1.msra.mxu0 %v1156
        %1412 = vmatprep.subr.mxu0 %v1161
        %1413 = vmatpush1.msra.mxu0 %v1160
        %1414 = vmatprep.subr.mxu0 %v1165
        %1415 = vmatpush1.msra.mxu0 %v1164
        %1416 = vmatprep.subr.mxu0 %v1169
        %1417 = vmatpush1.msra.mxu0 %v1168
        %1418 = vmatprep.subr.mxu0 %v1173
        %1419 = vmatpush1.msra.mxu0 %v1172
        %1420 = vmatprep.subr.mxu0 %v1177
        %1421 = vmatpush1.msra.mxu0 %v1176
        %1422 = vmatprep.subr.mxu0 %v1181
        %1423 = vmatpush1.msra.mxu0 %v1180
        %1424 = vmatprep.subr.mxu0 %v1185
        %1425 = vmatpush1.msra.mxu0 %v1184
        %1426 = vmatprep.subr.mxu0 %v1189
        %1427 = vmatpush1.msra.mxu0 %v1188
        %1428 = vmatprep.subr.mxu0 %v1193
        %1429 = vmatpush1.msra.mxu0 %v1192
        %1430 = vmatprep.subr.mxu0 %v1197
        %1431 = vmatpush1.msra.mxu0 %v1196
        %1432 = vmatprep.subr.mxu0 %v1201
        %1433 = vmatpush1.msra.mxu0 %v1200
        %1434 = vmatprep.mubr.f32.mxu0 %v1222
        %1435 = vmatmul.mubr.f32.gmra.mrb[0].mxu0 %v1221
        %v1436 = vpop.f32.mrb[0].mxu0
        %v1437 = vadd.f32 0.0, %v1436
        %v1438 = vpop.f32.mrb[0].mxu0
        %v1439 = vadd.f32 0.0, %v1438
        %1440 = vdwg.mxu0
        %1441 = vmatprep.subr.mxu0 %v1205
        %1442 = vmatpush1.msra.mxu0 %v1204
        %1443 = vmatprep.subr.mxu0 %v1209
        %1444 = vmatpush1.msra.mxu0 %v1208
        %1445 = vmatprep.subr.mxu0 %v1213
        %1446 = vmatpush1.msra.mxu0 %v1212
        %1447 = vmatprep.subr.mxu0 %v1217
        %1448 = vmatpush1.msra.mxu0 %v1216
        %1449 = vmatprep.subr.mxu0 0.0
        %1450 = vmatpush1.msra.mxu0 0.0
        %1451 = vmatprep.subr.mxu0 0.0
        %1452 = vmatpush1.msra.mxu0 0.0
        %1453 = vmatprep.subr.mxu0 0.0
        %1454 = vmatpush1.msra.mxu0 0.0
        %1455 = vmatprep.subr.mxu0 0.0
        %1456 = vmatpush1.msra.mxu0 0.0
        %1457 = vmatprep.subr.mxu0 0.0
        %1458 = vmatpush1.msra.mxu0 0.0
        %1459 = vmatprep.subr.mxu0 0.0
        %1460 = vmatpush1.msra.mxu0 0.0
        %1461 = vmatprep.subr.mxu0 0.0
        %1462 = vmatpush1.msra.mxu0 0.0
        %1463 = vmatprep.subr.mxu0 0.0
        %1464 = vmatpush1.msra.mxu0 0.0
        %1465 = vmatprep.subr.mxu0 0.0
        %1466 = vmatpush1.msra.mxu0 0.0
        %1467 = vmatprep.subr.mxu0 0.0
        %1468 = vmatpush1.msra.mxu0 0.0
        %1469 = vmatprep.subr.mxu0 0.0
        %1470 = vmatpush1.msra.mxu0 0.0
        %1471 = vmatprep.subr.mxu0 0.0
        %1472 = vmatpush1.msra.mxu0 0.0
        %1473 = vmatprep.subr.mxu0 0.0
        %1474 = vmatpush1.msra.mxu0 0.0
        %1475 = vmatprep.subr.mxu0 0.0
        %1476 = vmatpush1.msra.mxu0 0.0
        %1477 = vmatprep.subr.mxu0 0.0
        %1478 = vmatpush1.msra.mxu0 0.0
        %1479 = vmatprep.subr.mxu0 0.0
        %1480 = vmatpush1.msra.mxu0 0.0
        %1481 = vmatprep.subr.mxu0 0.0
        %1482 = vmatpush1.msra.mxu0 0.0
        %1483 = vmatprep.subr.mxu0 0.0
        %1484 = vmatpush1.msra.mxu0 0.0
        %1485 = vmatprep.subr.mxu0 0.0
        %1486 = vmatpush1.msra.mxu0 0.0
        %1487 = vmatprep.subr.mxu0 0.0
        %1488 = vmatpush1.msra.mxu0 0.0
        %1489 = vmatprep.subr.mxu0 0.0
        %1490 = vmatpush1.msra.mxu0 0.0
        %1491 = vmatprep.subr.mxu0 0.0
        %1492 = vmatpush1.msra.mxu0 0.0
        %1493 = vmatprep.subr.mxu0 0.0
        %1494 = vmatpush1.msra.mxu0 0.0
        %1495 = vmatprep.subr.mxu0 0.0
        %1496 = vmatpush1.msra.mxu0 0.0
        %1497 = vmatprep.subr.mxu0 0.0
        %1498 = vmatpush1.msra.mxu0 0.0
        %1499 = vmatprep.subr.mxu0 0.0
        %1500 = vmatpush1.msra.mxu0 0.0
        %1501 = vmatprep.subr.mxu0 0.0
        %1502 = vmatpush1.msra.mxu0 0.0
        %1503 = vmatprep.subr.mxu0 0.0
        %1504 = vmatpush1.msra.mxu0 0.0
        %1505 = vmatprep.mubr.f32.mxu0 0.0
        %1506 = vmatmul.mubr.f32.gmra.mrb[0].mxu0 %v1226
        %v1507 = vpop.f32.mrb[0].mxu0
        %v1508 = vadd.f32 %v1437, %v1507
        %v1509 = vpop.f32.mrb[0].mxu0
        %v1510 = vadd.f32 %v1439, %v1509
        %1511 = vdwg.mxu0
        %v1512 = vadd.f32 %v924, %v1366
        %v1513 = vadd.f32 %v926, %v1368
        %v1514 = vadd.f32 %v1066, %v1508
        %v1515 = vadd.f32 %v1068, %v1510
        %v1516 = vld [vmem:[%s346] sm:$0xfe]
        %v1517 = vld [vmem:[%s346 + $0x8] sm:$0xfe]
        %v1518 = vld [vmem:[%s346 + $0x10] sm:$0xfe]
        %s1519 = scalar_lea.vmem [#allocation2], 3456
        %v1520 = vld [vmem:[%s1519] sm:$0xff]
        %v1521 = vld [vmem:[%s1519 + $0x8] sm:$0xff]
        %v1522 = vld [vmem:[%s1519 + $0x10] sm:$0xff]
        %v1523 = vld [vmem:[%s1519 + $0x18] sm:$0xff]
        %v1524 = vld [vmem:[%s1519 + $0x20] sm:$0xff]
        %v1525 = vld [vmem:[%s1519 + $0x28] sm:$0xff]
        %v1526 = vld [vmem:[%s1519 + $0x30] sm:$0xff]
        %v1527 = vld [vmem:[%s1519 + $0x38] sm:$0xff]
        %v1528 = vld [vmem:[%s1519 + $0x40] sm:$0xff]
        %v1529 = vld [vmem:[%s1519 + $0x48] sm:$0xff]
        %v1530 = vld [vmem:[%s1519 + $0x50] sm:$0xff]
        %v1531 = vld [vmem:[%s1519 + $0x58] sm:$0xff]
        %v1532 = vld [vmem:[%s1519 + $0x60] sm:$0xff]
        %v1533 = vld [vmem:[%s1519 + $0x68] sm:$0xff]
        %v1534 = vld [vmem:[%s1519 + $0x70] sm:$0xff]
        %v1535 = vld [vmem:[%s1519 + $0x78] sm:$0xff]
        %v1536 = vld [vmem:[%s1519 + $0x80] sm:$0xff]
        %v1537 = vld [vmem:[%s1519 + $0x88] sm:$0xff]
        %v1538 = vld [vmem:[%s1519 + $0x90] sm:$0xff]
        %v1539 = vld [vmem:[%s1519 + $0x98] sm:$0xff]
        %v1540 = vld [vmem:[%s1519 + $0xa0] sm:$0xff]
        %v1541 = vld [vmem:[%s1519 + $0xa8] sm:$0xff]
        %v1542 = vld [vmem:[%s1519 + $0xb0] sm:$0xff]
        %v1543 = vld [vmem:[%s1519 + $0xb8] sm:$0xff]
        %v1544 = vld [vmem:[%s1519 + $0xc0] sm:$0xff]
        %v1545 = vld [vmem:[%s1519 + $0xc8] sm:$0xff]
        %v1546 = vld [vmem:[%s1519 + $0xd0] sm:$0xff]
        %v1547 = vld [vmem:[%s1519 + $0xd8] sm:$0xff]
        %v1548 = vld [vmem:[%s1519 + $0xe0] sm:$0xff]
        %v1549 = vld [vmem:[%s1519 + $0xe8] sm:$0xff]
        %v1550 = vld [vmem:[%s1519 + $0xf0] sm:$0xff]
        %v1551 = vld [vmem:[%s1519 + $0xf8] sm:$0xff]
        %v1552 = vld [vmem:[%s1519 + $0x100] sm:$0xff]
        %v1553 = vld [vmem:[%s1519 + $0x108] sm:$0xff]
        %v1554 = vld [vmem:[%s1519 + $0x110] sm:$0xff]
        %v1555 = vld [vmem:[%s1519 + $0x118] sm:$0xff]
        %v1556 = vld [vmem:[%s1519 + $0x120] sm:$0xff]
        %v1557 = vld [vmem:[%s1519 + $0x128] sm:$0xff]
        %v1558 = vld [vmem:[%s1519 + $0x130] sm:$0xff]
        %v1559 = vld [vmem:[%s1519 + $0x138] sm:$0xff]
        %v1560 = vld [vmem:[%s1519 + $0x140] sm:$0xff]
        %v1561 = vld [vmem:[%s1519 + $0x148] sm:$0xff]
        %v1562 = vld [vmem:[%s1519 + $0x150] sm:$0xff]
        %v1563 = vld [vmem:[%s1519 + $0x158] sm:$0xff]
        %v1564 = vld [vmem:[%s1519 + $0x160] sm:$0xff]
        %v1565 = vld [vmem:[%s1519 + $0x168] sm:$0xff]
        %v1566 = vld [vmem:[%s1519 + $0x170] sm:$0xff]
        %v1567 = vld [vmem:[%s1519 + $0x178] sm:$0xff]
        %v1568 = vld [vmem:[%s1519 + $0x180] sm:$0xff]
        %v1569 = vld [vmem:[%s1519 + $0x188] sm:$0xff]
        %v1570 = vld [vmem:[%s1519 + $0x190] sm:$0xff]
        %v1571 = vld [vmem:[%s1519 + $0x198] sm:$0xff]
        %v1572 = vld [vmem:[%s1519 + $0x1a0] sm:$0xff]
        %v1573 = vld [vmem:[%s1519 + $0x1a8] sm:$0xff]
        %v1574 = vld [vmem:[%s1519 + $0x1b0] sm:$0xff]
        %v1575 = vld [vmem:[%s1519 + $0x1b8] sm:$0xff]
        %v1576 = vld [vmem:[%s1519 + $0x1c0] sm:$0xff]
        %v1577 = vld [vmem:[%s1519 + $0x1c8] sm:$0xff]
        %v1578 = vld [vmem:[%s1519 + $0x1d0] sm:$0xff]
        %v1579 = vld [vmem:[%s1519 + $0x1d8] sm:$0xff]
        %v1580 = vld [vmem:[%s1519 + $0x1e0] sm:$0xff]
        %v1581 = vld [vmem:[%s1519 + $0x1e8] sm:$0xff]
        %v1582 = vld [vmem:[%s1519 + $0x1f0] sm:$0xff]
        %v1583 = vld [vmem:[%s1519 + $0x1f8] sm:$0xff]
        %v1584 = vld [vmem:[%s1519 + $0x200] sm:$0xff]
        %v1585 = vld [vmem:[%s1519 + $0x208] sm:$0xff]
        %v1586 = vld [vmem:[%s1519 + $0x210] sm:$0xff]
        %v1587 = vld [vmem:[%s1519 + $0x218] sm:$0xff]
        %v1588 = vld [vmem:[%s1519 + $0x220] sm:$0xff]
        %v1589 = vld [vmem:[%s1519 + $0x228] sm:$0xff]
        %v1590 = vld [vmem:[%s1519 + $0x230] sm:$0xff]
        %v1591 = vld [vmem:[%s1519 + $0x238] sm:$0xff]
        %v1592 = vld [vmem:[%s1519 + $0x240] sm:$0xff]
        %v1593 = vld [vmem:[%s1519 + $0x248] sm:$0xff]
        %v1594 = vld [vmem:[%s1519 + $0x250] sm:$0xff]
        %v1595 = vld [vmem:[%s1519 + $0x258] sm:$0xff]
        %v1596 = vld [vmem:[%s1519 + $0x260] sm:$0xff]
        %v1597 = vld [vmem:[%s1519 + $0x268] sm:$0xff]
        %v1598 = vld [vmem:[%s1519 + $0x270] sm:$0xff]
        %v1599 = vld [vmem:[%s1519 + $0x278] sm:$0xff]
        %v1600 = vld [vmem:[%s1519 + $0x280] sm:$0xff]
        %v1601 = vld [vmem:[%s1519 + $0x288] sm:$0xff]
        %v1602 = vld [vmem:[%s1519 + $0x290] sm:$0xff]
        %v1603 = vld [vmem:[%s1519 + $0x298] sm:$0xff]
        %v1604 = vld [vmem:[%s1519 + $0x2a0] sm:$0xff]
        %v1605 = vld [vmem:[%s1519 + $0x2a8] sm:$0xff]
        %v1606 = vld [vmem:[%s1519 + $0x2b0] sm:$0xff]
        %v1607 = vld [vmem:[%s1519 + $0x2b8] sm:$0xff]
        %v1608 = vld [vmem:[%s1519 + $0x2c0] sm:$0xff]
        %v1609 = vld [vmem:[%s1519 + $0x2c8] sm:$0xff]
        %v1610 = vld [vmem:[%s1519 + $0x2d0] sm:$0xff]
        %v1611 = vld [vmem:[%s1519 + $0x2d8] sm:$0xff]
        %v1612 = vld [vmem:[%s1519 + $0x2e0] sm:$0xff]
        %v1613 = vld [vmem:[%s1519 + $0x2e8] sm:$0xff]
        %v1614 = vld [vmem:[%s1519 + $0x2f0] sm:$0xff]
        %v1615 = vld [vmem:[%s1519 + $0x2f8] sm:$0xff]
        %v1616 = vld [vmem:[%s1519 + $0x300] sm:$0xff]
        %v1617 = vld [vmem:[%s1519 + $0x308] sm:$0xff]
        %v1618 = vld [vmem:[%s1519 + $0x310] sm:$0xff]
        %v1619 = vld [vmem:[%s1519 + $0x318] sm:$0xff]
        %v1620 = vld [vmem:[%s1519 + $0x320] sm:$0xff]
        %v1621 = vld [vmem:[%s1519 + $0x328] sm:$0xff]
        %v1622 = vld [vmem:[%s1519 + $0x330] sm:$0xff]
        %v1623 = vld [vmem:[%s1519 + $0x338] sm:$0xff]
        %v1624 = vld [vmem:[%s1519 + $0x340] sm:$0xff]
        %v1625 = vld [vmem:[%s1519 + $0x348] sm:$0xff]
        %v1626 = vld [vmem:[%s1519 + $0x350] sm:$0xff]
        %v1627 = vld [vmem:[%s1519 + $0x358] sm:$0xff]
        %v1628 = vld [vmem:[%s1519 + $0x360] sm:$0xff]
        %v1629 = vld [vmem:[%s1519 + $0x368] sm:$0xff]
        %v1630 = vld [vmem:[%s1519 + $0x370] sm:$0xff]
        %v1631 = vld [vmem:[%s1519 + $0x378] sm:$0xff]
        %v1632 = vld [vmem:[%s1519 + $0x380] sm:$0xff]
        %v1633 = vld [vmem:[%s1519 + $0x388] sm:$0xff]
        %v1634 = vld [vmem:[%s1519 + $0x390] sm:$0xff]
        %v1635 = vld [vmem:[%s1519 + $0x398] sm:$0xff]
        %v1636 = vld [vmem:[%s1519 + $0x3a0] sm:$0xff]
        %v1637 = vld [vmem:[%s1519 + $0x3a8] sm:$0xff]
        %v1638 = vld [vmem:[%s1519 + $0x3b0] sm:$0xff]
        %v1639 = vld [vmem:[%s1519 + $0x3b8] sm:$0xff]
        %v1640 = vld [vmem:[%s1519 + $0x3c0] sm:$0xff]
        %v1641 = vld [vmem:[%s1519 + $0x3c8] sm:$0xff]
        %v1642 = vld [vmem:[%s1519 + $0x3d0] sm:$0xff]
        %v1643 = vld [vmem:[%s1519 + $0x3d8] sm:$0xff]
        %v1644 = vld [vmem:[%s1519 + $0x3e0] sm:$0xff]
        %v1645 = vld [vmem:[%s1519 + $0x3e8] sm:$0xff]
        %v1646 = vld [vmem:[%s1519 + $0x3f0] sm:$0xff]
        %v1647 = vld [vmem:[%s1519 + $0x3f8] sm:$0xff]
        %v1648 = vld [vmem:[%s1519 + $0x400] sm:$0xff]
        %v1649 = vld [vmem:[%s1519 + $0x408] sm:$0xff]
        %v1650 = vld [vmem:[%s1519 + $0x410] sm:$0xff]
        %v1651 = vld [vmem:[%s1519 + $0x418] sm:$0xff]
        %v1652 = vld [vmem:[%s1519 + $0x420] sm:$0xff]
        %v1653 = vld [vmem:[%s1519 + $0x428] sm:$0xff]
        %v1654 = vld [vmem:[%s1519 + $0x430] sm:$0xff]
        %v1655 = vld [vmem:[%s1519 + $0x438] sm:$0xff]
        %v1656 = vld [vmem:[%s1519 + $0x440] sm:$0xff]
        %v1657 = vld [vmem:[%s1519 + $0x448] sm:$0xff]
        %v1658 = vld [vmem:[%s1519 + $0x450] sm:$0xff]
        %v1659 = vld [vmem:[%s1519 + $0x458] sm:$0xff]
        %v1660 = vld [vmem:[%s1519 + $0x460] sm:$0xff]
        %v1661 = vld [vmem:[%s1519 + $0x468] sm:$0xff]
        %v1662 = vld [vmem:[%s1519 + $0x470] sm:$0xff]
        %v1663 = vld [vmem:[%s1519 + $0x478] sm:$0xff]
        %v1667 = vrot.slane %v1516, 1
        %v1668 = vrot.slane %v1517, 1
        %v1669 = vrot.slane %v1518, 1
        %v1672 = vsel %vm495, %v1669, 0
        %1674 = vmatprep.subr.mxu0 %v1521
        %1675 = vmatpush1.msra.mxu0 %v1520
        %1676 = vmatprep.subr.mxu0 %v1525
        %1677 = vmatpush1.msra.mxu0 %v1524
        %1678 = vmatprep.subr.mxu0 %v1529
        %1679 = vmatpush1.msra.mxu0 %v1528
        %1680 = vmatprep.subr.mxu0 %v1533
        %1681 = vmatpush1.msra.mxu0 %v1532
        %1682 = vmatprep.subr.mxu0 %v1537
        %1683 = vmatpush1.msra.mxu0 %v1536
        %1684 = vmatprep.subr.mxu0 %v1541
        %1685 = vmatpush1.msra.mxu0 %v1540
        %1686 = vmatprep.subr.mxu0 %v1545
        %1687 = vmatpush1.msra.mxu0 %v1544
        %1688 = vmatprep.subr.mxu0 %v1549
        %1689 = vmatpush1.msra.mxu0 %v1548
        %1690 = vmatprep.subr.mxu0 %v1553
        %1691 = vmatpush1.msra.mxu0 %v1552
        %1692 = vmatprep.subr.mxu0 %v1557
        %1693 = vmatpush1.msra.mxu0 %v1556
        %1694 = vmatprep.subr.mxu0 %v1561
        %1695 = vmatpush1.msra.mxu0 %v1560
        %1696 = vmatprep.subr.mxu0 %v1565
        %1697 = vmatpush1.msra.mxu0 %v1564
        %1698 = vmatprep.subr.mxu0 %v1569
        %1699 = vmatpush1.msra.mxu0 %v1568
        %1700 = vmatprep.subr.mxu0 %v1573
        %1701 = vmatpush1.msra.mxu0 %v1572
        %1702 = vmatprep.subr.mxu0 %v1577
        %1703 = vmatpush1.msra.mxu0 %v1576
        %1704 = vmatprep.subr.mxu0 %v1581
        %1705 = vmatpush1.msra.mxu0 %v1580
        %1706 = vmatprep.subr.mxu0 %v1585
        %1707 = vmatpush1.msra.mxu0 %v1584
        %1708 = vmatprep.subr.mxu0 %v1589
        %1709 = vmatpush1.msra.mxu0 %v1588
        %1710 = vmatprep.subr.mxu0 %v1593
        %1711 = vmatpush1.msra.mxu0 %v1592
        %1712 = vmatprep.subr.mxu0 %v1597
        %1713 = vmatpush1.msra.mxu0 %v1596
        %1714 = vmatprep.subr.mxu0 %v1601
        %1715 = vmatpush1.msra.mxu0 %v1600
        %1716 = vmatprep.subr.mxu0 %v1605
        %1717 = vmatpush1.msra.mxu0 %v1604
        %1718 = vmatprep.subr.mxu0 %v1609
        %1719 = vmatpush1.msra.mxu0 %v1608
        %1720 = vmatprep.subr.mxu0 %v1613
        %1721 = vmatpush1.msra.mxu0 %v1612
        %1722 = vmatprep.subr.mxu0 %v1617
        %1723 = vmatpush1.msra.mxu0 %v1616
        %1724 = vmatprep.subr.mxu0 %v1621
        %1725 = vmatpush1.msra.mxu0 %v1620
        %1726 = vmatprep.subr.mxu0 %v1625
        %1727 = vmatpush1.msra.mxu0 %v1624
        %1728 = vmatprep.subr.mxu0 %v1629
        %1729 = vmatpush1.msra.mxu0 %v1628
        %1730 = vmatprep.subr.mxu0 %v1633
        %1731 = vmatpush1.msra.mxu0 %v1632
        %1732 = vmatprep.subr.mxu0 %v1637
        %1733 = vmatpush1.msra.mxu0 %v1636
        %1734 = vmatprep.subr.mxu0 %v1641
        %1735 = vmatpush1.msra.mxu0 %v1640
        %1736 = vmatprep.subr.mxu0 %v1645
        %1737 = vmatpush1.msra.mxu0 %v1644
        %1738 = vmatprep.mubr.f32.mxu0 %v1668
        %1739 = vmatmul.mubr.f32.gmra.mrb[0].mxu0 %v1667
        %v1740 = vpop.f32.mrb[0].mxu0
        %v1741 = vadd.f32 0.0, %v1740
        %v1742 = vpop.f32.mrb[0].mxu0
        %v1743 = vadd.f32 0.0, %v1742
        %1744 = vdwg.mxu0
        %1745 = vmatprep.subr.mxu0 %v1649
        %1746 = vmatpush1.msra.mxu0 %v1648
        %1747 = vmatprep.subr.mxu0 %v1653
        %1748 = vmatpush1.msra.mxu0 %v1652
        %1749 = vmatprep.subr.mxu0 %v1657
        %1750 = vmatpush1.msra.mxu0 %v1656
        %1751 = vmatprep.subr.mxu0 %v1661
        %1752 = vmatpush1.msra.mxu0 %v1660
        %1753 = vmatprep.subr.mxu0 0.0
        %1754 = vmatpush1.msra.mxu0 0.0
        %1755 = vmatprep.subr.mxu0 0.0
        %1756 = vmatpush1.msra.mxu0 0.0
        %1757 = vmatprep.subr.mxu0 0.0
        %1758 = vmatpush1.msra.mxu0 0.0
        %1759 = vmatprep.subr.mxu0 0.0
        %1760 = vmatpush1.msra.mxu0 0.0
        %1761 = vmatprep.subr.mxu0 0.0
        %1762 = vmatpush1.msra.mxu0 0.0
        %1763 = vmatprep.subr.mxu0 0.0
        %1764 = vmatpush1.msra.mxu0 0.0
        %1765 = vmatprep.subr.mxu0 0.0
        %1766 = vmatpush1.msra.mxu0 0.0
        %1767 = vmatprep.subr.mxu0 0.0
        %1768 = vmatpush1.msra.mxu0 0.0
        %1769 = vmatprep.subr.mxu0 0.0
        %1770 = vmatpush1.msra.mxu0 0.0
        %1771 = vmatprep.subr.mxu0 0.0
        %1772 = vmatpush1.msra.mxu0 0.0
        %1773 = vmatprep.subr.mxu0 0.0
        %1774 = vmatpush1.msra.mxu0 0.0
        %1775 = vmatprep.subr.mxu0 0.0
        %1776 = vmatpush1.msra.mxu0 0.0
        %1777 = vmatprep.subr.mxu0 0.0
        %1778 = vmatpush1.msra.mxu0 0.0
        %1779 = vmatprep.subr.mxu0 0.0
        %1780 = vmatpush1.msra.mxu0 0.0
        %1781 = vmatprep.subr.mxu0 0.0
        %1782 = vmatpush1.msra.mxu0 0.0
        %1783 = vmatprep.subr.mxu0 0.0
        %1784 = vmatpush1.msra.mxu0 0.0
        %1785 = vmatprep.subr.mxu0 0.0
        %1786 = vmatpush1.msra.mxu0 0.0
        %1787 = vmatprep.subr.mxu0 0.0
        %1788 = vmatpush1.msra.mxu0 0.0
        %1789 = vmatprep.subr.mxu0 0.0
        %1790 = vmatpush1.msra.mxu0 0.0
        %1791 = vmatprep.subr.mxu0 0.0
        %1792 = vmatpush1.msra.mxu0 0.0
        %1793 = vmatprep.subr.mxu0 0.0
        %1794 = vmatpush1.msra.mxu0 0.0
        %1795 = vmatprep.subr.mxu0 0.0
        %1796 = vmatpush1.msra.mxu0 0.0
        %1797 = vmatprep.subr.mxu0 0.0
        %1798 = vmatpush1.msra.mxu0 0.0
        %1799 = vmatprep.subr.mxu0 0.0
        %1800 = vmatpush1.msra.mxu0 0.0
        %1801 = vmatprep.subr.mxu0 0.0
        %1802 = vmatpush1.msra.mxu0 0.0
        %1803 = vmatprep.subr.mxu0 0.0
        %1804 = vmatpush1.msra.mxu0 0.0
        %1805 = vmatprep.subr.mxu0 0.0
        %1806 = vmatpush1.msra.mxu0 0.0
        %1807 = vmatprep.subr.mxu0 0.0
        %1808 = vmatpush1.msra.mxu0 0.0
        %1809 = vmatprep.mubr.f32.mxu0 0.0
        %1810 = vmatmul.mubr.f32.gmra.mrb[0].mxu0 %v1672
        %v1811 = vpop.f32.mrb[0].mxu0
        %v1812 = vadd.f32 %v1741, %v1811
        %v1813 = vpop.f32.mrb[0].mxu0
        %v1814 = vadd.f32 %v1743, %v1813
        %1815 = vdwg.mxu0
        %1816 = vmatprep.subr.mxu0 %v1523
        %1817 = vmatpush1.msra.mxu0 %v1522
        %1818 = vmatprep.subr.mxu0 %v1527
        %1819 = vmatpush1.msra.mxu0 %v1526
        %1820 = vmatprep.subr.mxu0 %v1531
        %1821 = vmatpush1.msra.mxu0 %v1530
        %1822 = vmatprep.subr.mxu0 %v1535
        %1823 = vmatpush1.msra.mxu0 %v1534
        %1824 = vmatprep.subr.mxu0 %v1539
        %1825 = vmatpush1.msra.mxu0 %v1538
        %1826 = vmatprep.subr.mxu0 %v1543
        %1827 = vmatpush1.msra.mxu0 %v1542
        %1828 = vmatprep.subr.mxu0 %v1547
        %1829 = vmatpush1.msra.mxu0 %v1546
        %1830 = vmatprep.subr.mxu0 %v1551
        %1831 = vmatpush1.msra.mxu0 %v1550
        %1832 = vmatprep.subr.mxu0 %v1555
        %1833 = vmatpush1.msra.mxu0 %v1554
        %1834 = vmatprep.subr.mxu0 %v1559
        %1835 = vmatpush1.msra.mxu0 %v1558
        %1836 = vmatprep.subr.mxu0 %v1563
        %1837 = vmatpush1.msra.mxu0 %v1562
        %1838 = vmatprep.subr.mxu0 %v1567
        %1839 = vmatpush1.msra.mxu0 %v1566
        %1840 = vmatprep.subr.mxu0 %v1571
        %1841 = vmatpush1.msra.mxu0 %v1570
        %1842 = vmatprep.subr.mxu0 %v1575
        %1843 = vmatpush1.msra.mxu0 %v1574
        %1844 = vmatprep.subr.mxu0 %v1579
        %1845 = vmatpush1.msra.mxu0 %v1578
        %1846 = vmatprep.subr.mxu0 %v1583
        %1847 = vmatpush1.msra.mxu0 %v1582
        %1848 = vmatprep.subr.mxu0 %v1587
        %1849 = vmatpush1.msra.mxu0 %v1586
        %1850 = vmatprep.subr.mxu0 %v1591
        %1851 = vmatpush1.msra.mxu0 %v1590
        %1852 = vmatprep.subr.mxu0 %v1595
        %1853 = vmatpush1.msra.mxu0 %v1594
        %1854 = vmatprep.subr.mxu0 %v1599
        %1855 = vmatpush1.msra.mxu0 %v1598
        %1856 = vmatprep.subr.mxu0 %v1603
        %1857 = vmatpush1.msra.mxu0 %v1602
        %1858 = vmatprep.subr.mxu0 %v1607
        %1859 = vmatpush1.msra.mxu0 %v1606
        %1860 = vmatprep.subr.mxu0 %v1611
        %1861 = vmatpush1.msra.mxu0 %v1610
        %1862 = vmatprep.subr.mxu0 %v1615
        %1863 = vmatpush1.msra.mxu0 %v1614
        %1864 = vmatprep.subr.mxu0 %v1619
        %1865 = vmatpush1.msra.mxu0 %v1618
        %1866 = vmatprep.subr.mxu0 %v1623
        %1867 = vmatpush1.msra.mxu0 %v1622
        %1868 = vmatprep.subr.mxu0 %v1627
        %1869 = vmatpush1.msra.mxu0 %v1626
        %1870 = vmatprep.subr.mxu0 %v1631
        %1871 = vmatpush1.msra.mxu0 %v1630
        %1872 = vmatprep.subr.mxu0 %v1635
        %1873 = vmatpush1.msra.mxu0 %v1634
        %1874 = vmatprep.subr.mxu0 %v1639
        %1875 = vmatpush1.msra.mxu0 %v1638
        %1876 = vmatprep.subr.mxu0 %v1643
        %1877 = vmatpush1.msra.mxu0 %v1642
        %1878 = vmatprep.subr.mxu0 %v1647
        %1879 = vmatpush1.msra.mxu0 %v1646
        %1880 = vmatprep.mubr.f32.mxu0 %v1668
        %1881 = vmatmul.mubr.f32.gmra.mrb[0].mxu0 %v1667
        %v1882 = vpop.f32.mrb[0].mxu0
        %v1883 = vadd.f32 0.0, %v1882
        %v1884 = vpop.f32.mrb[0].mxu0
        %v1885 = vadd.f32 0.0, %v1884
        %1886 = vdwg.mxu0
        %1887 = vmatprep.subr.mxu0 %v1651
        %1888 = vmatpush1.msra.mxu0 %v1650
        %1889 = vmatprep.subr.mxu0 %v1655
        %1890 = vmatpush1.msra.mxu0 %v1654
        %1891 = vmatprep.subr.mxu0 %v1659
        %1892 = vmatpush1.msra.mxu0 %v1658
        %1893 = vmatprep.subr.mxu0 %v1663
        %1894 = vmatpush1.msra.mxu0 %v1662
        %1895 = vmatprep.subr.mxu0 0.0
        %1896 = vmatpush1.msra.mxu0 0.0
        %1897 = vmatprep.subr.mxu0 0.0
        %1898 = vmatpush1.msra.mxu0 0.0
        %1899 = vmatprep.subr.mxu0 0.0
        %1900 = vmatpush1.msra.mxu0 0.0
        %1901 = vmatprep.subr.mxu0 0.0
        %1902 = vmatpush1.msra.mxu0 0.0
        %1903 = vmatprep.subr.mxu0 0.0
        %1904 = vmatpush1.msra.mxu0 0.0
        %1905 = vmatprep.subr.mxu0 0.0
        %1906 = vmatpush1.msra.mxu0 0.0
        %1907 = vmatprep.subr.mxu0 0.0
        %1908 = vmatpush1.msra.mxu0 0.0
        %1909 = vmatprep.subr.mxu0 0.0
        %1910 = vmatpush1.msra.mxu0 0.0
        %1911 = vmatprep.subr.mxu0 0.0
        %1912 = vmatpush1.msra.mxu0 0.0
        %1913 = vmatprep.subr.mxu0 0.0
        %1914 = vmatpush1.msra.mxu0 0.0
        %1915 = vmatprep.subr.mxu0 0.0
        %1916 = vmatpush1.msra.mxu0 0.0
        %1917 = vmatprep.subr.mxu0 0.0
        %1918 = vmatpush1.msra.mxu0 0.0
        %1919 = vmatprep.subr.mxu0 0.0
        %1920 = vmatpush1.msra.mxu0 0.0
        %1921 = vmatprep.subr.mxu0 0.0
        %1922 = vmatpush1.msra.mxu0 0.0
        %1923 = vmatprep.subr.mxu0 0.0
        %1924 = vmatpush1.msra.mxu0 0.0
        %1925 = vmatprep.subr.mxu0 0.0
        %1926 = vmatpush1.msra.mxu0 0.0
        %1927 = vmatprep.subr.mxu0 0.0
        %1928 = vmatpush1.msra.mxu0 0.0
        %1929 = vmatprep.subr.mxu0 0.0
        %1930 = vmatpush1.msra.mxu0 0.0
        %1931 = vmatprep.subr.mxu0 0.0
        %1932 = vmatpush1.msra.mxu0 0.0
        %1933 = vmatprep.subr.mxu0 0.0
        %1934 = vmatpush1.msra.mxu0 0.0
        %1935 = vmatprep.subr.mxu0 0.0
        %1936 = vmatpush1.msra.mxu0 0.0
        %1937 = vmatprep.subr.mxu0 0.0
        %1938 = vmatpush1.msra.mxu0 0.0
        %1939 = vmatprep.subr.mxu0 0.0
        %1940 = vmatpush1.msra.mxu0 0.0
        %1941 = vmatprep.subr.mxu0 0.0
        %1942 = vmatpush1.msra.mxu0 0.0
        %1943 = vmatprep.subr.mxu0 0.0
        %1944 = vmatpush1.msra.mxu0 0.0
        %1945 = vmatprep.subr.mxu0 0.0
        %1946 = vmatpush1.msra.mxu0 0.0
        %1947 = vmatprep.subr.mxu0 0.0
        %1948 = vmatpush1.msra.mxu0 0.0
        %1949 = vmatprep.subr.mxu0 0.0
        %1950 = vmatpush1.msra.mxu0 0.0
        %1951 = vmatprep.mubr.f32.mxu0 0.0
        %1952 = vmatmul.mubr.f32.gmra.mrb[0].mxu0 %v1672
        %v1953 = vpop.f32.mrb[0].mxu0
        %v1954 = vadd.f32 %v1883, %v1953
        %v1955 = vpop.f32.mrb[0].mxu0
        %v1956 = vadd.f32 %v1885, %v1955
        %1957 = vdwg.mxu0
        %v1958 = vadd.f32 %v1512, %v1812
        %v1959 = vadd.f32 %v1513, %v1814
        %v1960 = vadd.f32 %v1514, %v1954
        %v1961 = vadd.f32 %v1515, %v1956
        %v1962 = vld [vmem:[%s193] sm:$0xfc]
        %v1963 = vld [vmem:[%s193 + $0x8] sm:$0xfc]
        %v1964 = vld [vmem:[%s193 + $0x10] sm:$0xfc]
        %v1965 = vld [vmem:[%s193 + $0x18] sm:$0x1]
        %v1966 = vld [vmem:[%s193 + $0x20] sm:$0x1]
        %v1967 = vld [vmem:[%s193 + $0x28] sm:$0x1]
        %s1968 = scalar_lea.vmem [#allocation2], 4608
        %v1969 = vld [vmem:[%s1968] sm:$0xff]
        %v1970 = vld [vmem:[%s1968 + $0x8] sm:$0xff]
        %v1971 = vld [vmem:[%s1968 + $0x10] sm:$0xff]
        %v1972 = vld [vmem:[%s1968 + $0x18] sm:$0xff]
        %v1973 = vld [vmem:[%s1968 + $0x20] sm:$0xff]
        %v1974 = vld [vmem:[%s1968 + $0x28] sm:$0xff]
        %v1975 = vld [vmem:[%s1968 + $0x30] sm:$0xff]
        %v1976 = vld [vmem:[%s1968 + $0x38] sm:$0xff]
        %v1977 = vld [vmem:[%s1968 + $0x40] sm:$0xff]
        %v1978 = vld [vmem:[%s1968 + $0x48] sm:$0xff]
        %v1979 = vld [vmem:[%s1968 + $0x50] sm:$0xff]
        %v1980 = vld [vmem:[%s1968 + $0x58] sm:$0xff]
        %v1981 = vld [vmem:[%s1968 + $0x60] sm:$0xff]
        %v1982 = vld [vmem:[%s1968 + $0x68] sm:$0xff]
        %v1983 = vld [vmem:[%s1968 + $0x70] sm:$0xff]
        %v1984 = vld [vmem:[%s1968 + $0x78] sm:$0xff]
        %v1985 = vld [vmem:[%s1968 + $0x80] sm:$0xff]
        %v1986 = vld [vmem:[%s1968 + $0x88] sm:$0xff]
        %v1987 = vld [vmem:[%s1968 + $0x90] sm:$0xff]
        %v1988 = vld [vmem:[%s1968 + $0x98] sm:$0xff]
        %v1989 = vld [vmem:[%s1968 + $0xa0] sm:$0xff]
        %v1990 = vld [vmem:[%s1968 + $0xa8] sm:$0xff]
        %v1991 = vld [vmem:[%s1968 + $0xb0] sm:$0xff]
        %v1992 = vld [vmem:[%s1968 + $0xb8] sm:$0xff]
        %v1993 = vld [vmem:[%s1968 + $0xc0] sm:$0xff]
        %v1994 = vld [vmem:[%s1968 + $0xc8] sm:$0xff]
        %v1995 = vld [vmem:[%s1968 + $0xd0] sm:$0xff]
        %v1996 = vld [vmem:[%s1968 + $0xd8] sm:$0xff]
        %v1997 = vld [vmem:[%s1968 + $0xe0] sm:$0xff]
        %v1998 = vld [vmem:[%s1968 + $0xe8] sm:$0xff]
        %v1999 = vld [vmem:[%s1968 + $0xf0] sm:$0xff]
        %v2000 = vld [vmem:[%s1968 + $0xf8] sm:$0xff]
        %v2001 = vld [vmem:[%s1968 + $0x100] sm:$0xff]
        %v2002 = vld [vmem:[%s1968 + $0x108] sm:$0xff]
        %v2003 = vld [vmem:[%s1968 + $0x110] sm:$0xff]
        %v2004 = vld [vmem:[%s1968 + $0x118] sm:$0xff]
        %v2005 = vld [vmem:[%s1968 + $0x120] sm:$0xff]
        %v2006 = vld [vmem:[%s1968 + $0x128] sm:$0xff]
        %v2007 = vld [vmem:[%s1968 + $0x130] sm:$0xff]
        %v2008 = vld [vmem:[%s1968 + $0x138] sm:$0xff]
        %v2009 = vld [vmem:[%s1968 + $0x140] sm:$0xff]
        %v2010 = vld [vmem:[%s1968 + $0x148] sm:$0xff]
        %v2011 = vld [vmem:[%s1968 + $0x150] sm:$0xff]
        %v2012 = vld [vmem:[%s1968 + $0x158] sm:$0xff]
        %v2013 = vld [vmem:[%s1968 + $0x160] sm:$0xff]
        %v2014 = vld [vmem:[%s1968 + $0x168] sm:$0xff]
        %v2015 = vld [vmem:[%s1968 + $0x170] sm:$0xff]
        %v2016 = vld [vmem:[%s1968 + $0x178] sm:$0xff]
        %v2017 = vld [vmem:[%s1968 + $0x180] sm:$0xff]
        %v2018 = vld [vmem:[%s1968 + $0x188] sm:$0xff]
        %v2019 = vld [vmem:[%s1968 + $0x190] sm:$0xff]
        %v2020 = vld [vmem:[%s1968 + $0x198] sm:$0xff]
        %v2021 = vld [vmem:[%s1968 + $0x1a0] sm:$0xff]
        %v2022 = vld [vmem:[%s1968 + $0x1a8] sm:$0xff]
        %v2023 = vld [vmem:[%s1968 + $0x1b0] sm:$0xff]
        %v2024 = vld [vmem:[%s1968 + $0x1b8] sm:$0xff]
        %v2025 = vld [vmem:[%s1968 + $0x1c0] sm:$0xff]
        %v2026 = vld [vmem:[%s1968 + $0x1c8] sm:$0xff]
        %v2027 = vld [vmem:[%s1968 + $0x1d0] sm:$0xff]
        %v2028 = vld [vmem:[%s1968 + $0x1d8] sm:$0xff]
        %v2029 = vld [vmem:[%s1968 + $0x1e0] sm:$0xff]
        %v2030 = vld [vmem:[%s1968 + $0x1e8] sm:$0xff]
        %v2031 = vld [vmem:[%s1968 + $0x1f0] sm:$0xff]
        %v2032 = vld [vmem:[%s1968 + $0x1f8] sm:$0xff]
        %v2033 = vld [vmem:[%s1968 + $0x200] sm:$0xff]
        %v2034 = vld [vmem:[%s1968 + $0x208] sm:$0xff]
        %v2035 = vld [vmem:[%s1968 + $0x210] sm:$0xff]
        %v2036 = vld [vmem:[%s1968 + $0x218] sm:$0xff]
        %v2037 = vld [vmem:[%s1968 + $0x220] sm:$0xff]
        %v2038 = vld [vmem:[%s1968 + $0x228] sm:$0xff]
        %v2039 = vld [vmem:[%s1968 + $0x230] sm:$0xff]
        %v2040 = vld [vmem:[%s1968 + $0x238] sm:$0xff]
        %v2041 = vld [vmem:[%s1968 + $0x240] sm:$0xff]
        %v2042 = vld [vmem:[%s1968 + $0x248] sm:$0xff]
        %v2043 = vld [vmem:[%s1968 + $0x250] sm:$0xff]
        %v2044 = vld [vmem:[%s1968 + $0x258] sm:$0xff]
        %v2045 = vld [vmem:[%s1968 + $0x260] sm:$0xff]
        %v2046 = vld [vmem:[%s1968 + $0x268] sm:$0xff]
        %v2047 = vld [vmem:[%s1968 + $0x270] sm:$0xff]
        %v2048 = vld [vmem:[%s1968 + $0x278] sm:$0xff]
        %v2049 = vld [vmem:[%s1968 + $0x280] sm:$0xff]
        %v2050 = vld [vmem:[%s1968 + $0x288] sm:$0xff]
        %v2051 = vld [vmem:[%s1968 + $0x290] sm:$0xff]
        %v2052 = vld [vmem:[%s1968 + $0x298] sm:$0xff]
        %v2053 = vld [vmem:[%s1968 + $0x2a0] sm:$0xff]
        %v2054 = vld [vmem:[%s1968 + $0x2a8] sm:$0xff]
        %v2055 = vld [vmem:[%s1968 + $0x2b0] sm:$0xff]
        %v2056 = vld [vmem:[%s1968 + $0x2b8] sm:$0xff]
        %v2057 = vld [vmem:[%s1968 + $0x2c0] sm:$0xff]
        %v2058 = vld [vmem:[%s1968 + $0x2c8] sm:$0xff]
        %v2059 = vld [vmem:[%s1968 + $0x2d0] sm:$0xff]
        %v2060 = vld [vmem:[%s1968 + $0x2d8] sm:$0xff]
        %v2061 = vld [vmem:[%s1968 + $0x2e0] sm:$0xff]
        %v2062 = vld [vmem:[%s1968 + $0x2e8] sm:$0xff]
        %v2063 = vld [vmem:[%s1968 + $0x2f0] sm:$0xff]
        %v2064 = vld [vmem:[%s1968 + $0x2f8] sm:$0xff]
        %v2065 = vld [vmem:[%s1968 + $0x300] sm:$0xff]
        %v2066 = vld [vmem:[%s1968 + $0x308] sm:$0xff]
        %v2067 = vld [vmem:[%s1968 + $0x310] sm:$0xff]
        %v2068 = vld [vmem:[%s1968 + $0x318] sm:$0xff]
        %v2069 = vld [vmem:[%s1968 + $0x320] sm:$0xff]
        %v2070 = vld [vmem:[%s1968 + $0x328] sm:$0xff]
        %v2071 = vld [vmem:[%s1968 + $0x330] sm:$0xff]
        %v2072 = vld [vmem:[%s1968 + $0x338] sm:$0xff]
        %v2073 = vld [vmem:[%s1968 + $0x340] sm:$0xff]
        %v2074 = vld [vmem:[%s1968 + $0x348] sm:$0xff]
        %v2075 = vld [vmem:[%s1968 + $0x350] sm:$0xff]
        %v2076 = vld [vmem:[%s1968 + $0x358] sm:$0xff]
        %v2077 = vld [vmem:[%s1968 + $0x360] sm:$0xff]
        %v2078 = vld [vmem:[%s1968 + $0x368] sm:$0xff]
        %v2079 = vld [vmem:[%s1968 + $0x370] sm:$0xff]
        %v2080 = vld [vmem:[%s1968 + $0x378] sm:$0xff]
        %v2081 = vld [vmem:[%s1968 + $0x380] sm:$0xff]
        %v2082 = vld [vmem:[%s1968 + $0x388] sm:$0xff]
        %v2083 = vld [vmem:[%s1968 + $0x390] sm:$0xff]
        %v2084 = vld [vmem:[%s1968 + $0x398] sm:$0xff]
        %v2085 = vld [vmem:[%s1968 + $0x3a0] sm:$0xff]
        %v2086 = vld [vmem:[%s1968 + $0x3a8] sm:$0xff]
        %v2087 = vld [vmem:[%s1968 + $0x3b0] sm:$0xff]
        %v2088 = vld [vmem:[%s1968 + $0x3b8] sm:$0xff]
        %v2089 = vld [vmem:[%s1968 + $0x3c0] sm:$0xff]
        %v2090 = vld [vmem:[%s1968 + $0x3c8] sm:$0xff]
        %v2091 = vld [vmem:[%s1968 + $0x3d0] sm:$0xff]
        %v2092 = vld [vmem:[%s1968 + $0x3d8] sm:$0xff]
        %v2093 = vld [vmem:[%s1968 + $0x3e0] sm:$0xff]
        %v2094 = vld [vmem:[%s1968 + $0x3e8] sm:$0xff]
        %v2095 = vld [vmem:[%s1968 + $0x3f0] sm:$0xff]
        %v2096 = vld [vmem:[%s1968 + $0x3f8] sm:$0xff]
        %v2097 = vld [vmem:[%s1968 + $0x400] sm:$0xff]
        %v2098 = vld [vmem:[%s1968 + $0x408] sm:$0xff]
        %v2099 = vld [vmem:[%s1968 + $0x410] sm:$0xff]
        %v2100 = vld [vmem:[%s1968 + $0x418] sm:$0xff]
        %v2101 = vld [vmem:[%s1968 + $0x420] sm:$0xff]
        %v2102 = vld [vmem:[%s1968 + $0x428] sm:$0xff]
        %v2103 = vld [vmem:[%s1968 + $0x430] sm:$0xff]
        %v2104 = vld [vmem:[%s1968 + $0x438] sm:$0xff]
        %v2105 = vld [vmem:[%s1968 + $0x440] sm:$0xff]
        %v2106 = vld [vmem:[%s1968 + $0x448] sm:$0xff]
        %v2107 = vld [vmem:[%s1968 + $0x450] sm:$0xff]
        %v2108 = vld [vmem:[%s1968 + $0x458] sm:$0xff]
        %v2109 = vld [vmem:[%s1968 + $0x460] sm:$0xff]
        %v2110 = vld [vmem:[%s1968 + $0x468] sm:$0xff]
        %v2111 = vld [vmem:[%s1968 + $0x470] sm:$0xff]
        %v2112 = vld [vmem:[%s1968 + $0x478] sm:$0xff]
        %vm2119 = vcmask 1045504
        %v2120 = vrot.slane %v1962, 2
        %v2121 = vrot.slane %v1965, 2
        %v2122 = vsel %vm2119, %v2120, %v2121
        %v2123 = vrot.slane %v1963, 2
        %v2124 = vrot.slane %v1966, 2
        %v2125 = vsel %vm2119, %v2123, %v2124
        %v2126 = vrot.slane %v1964, 2
        %v2127 = vrot.slane %v1967, 2
        %v2128 = vsel %vm2119, %v2126, %v2127
        %v2131 = vsel %vm495, %v2128, 0
        %2133 = vmatprep.subr.mxu0 %v1970
        %2134 = vmatpush1.msra.mxu0 %v1969
        %2135 = vmatprep.subr.mxu0 %v1974
        %2136 = vmatpush1.msra.mxu0 %v1973
        %2137 = vmatprep.subr.mxu0 %v1978
        %2138 = vmatpush1.msra.mxu0 %v1977
        %2139 = vmatprep.subr.mxu0 %v1982
        %2140 = vmatpush1.msra.mxu0 %v1981
        %2141 = vmatprep.subr.mxu0 %v1986
        %2142 = vmatpush1.msra.mxu0 %v1985
        %2143 = vmatprep.subr.mxu0 %v1990
        %2144 = vmatpush1.msra.mxu0 %v1989
        %2145 = vmatprep.subr.mxu0 %v1994
        %2146 = vmatpush1.msra.mxu0 %v1993
        %2147 = vmatprep.subr.mxu0 %v1998
        %2148 = vmatpush1.msra.mxu0 %v1997
        %2149 = vmatprep.subr.mxu0 %v2002
        %2150 = vmatpush1.msra.mxu0 %v2001
        %2151 = vmatprep.subr.mxu0 %v2006
        %2152 = vmatpush1.msra.mxu0 %v2005
        %2153 = vmatprep.subr.mxu0 %v2010
        %2154 = vmatpush1.msra.mxu0 %v2009
        %2155 = vmatprep.subr.mxu0 %v2014
        %2156 = vmatpush1.msra.mxu0 %v2013
        %2157 = vmatprep.subr.mxu0 %v2018
        %2158 = vmatpush1.msra.mxu0 %v2017
        %2159 = vmatprep.subr.mxu0 %v2022
        %2160 = vmatpush1.msra.mxu0 %v2021
        %2161 = vmatprep.subr.mxu0 %v2026
        %2162 = vmatpush1.msra.mxu0 %v2025
        %2163 = vmatprep.subr.mxu0 %v2030
        %2164 = vmatpush1.msra.mxu0 %v2029
        %2165 = vmatprep.subr.mxu0 %v2034
        %2166 = vmatpush1.msra.mxu0 %v2033
        %2167 = vmatprep.subr.mxu0 %v2038
        %2168 = vmatpush1.msra.mxu0 %v2037
        %2169 = vmatprep.subr.mxu0 %v2042
        %2170 = vmatpush1.msra.mxu0 %v2041
        %2171 = vmatprep.subr.mxu0 %v2046
        %2172 = vmatpush1.msra.mxu0 %v2045
        %2173 = vmatprep.subr.mxu0 %v2050
        %2174 = vmatpush1.msra.mxu0 %v2049
        %2175 = vmatprep.subr.mxu0 %v2054
        %2176 = vmatpush1.msra.mxu0 %v2053
        %2177 = vmatprep.subr.mxu0 %v2058
        %2178 = vmatpush1.msra.mxu0 %v2057
        %2179 = vmatprep.subr.mxu0 %v2062
        %2180 = vmatpush1.msra.mxu0 %v2061
        %2181 = vmatprep.subr.mxu0 %v2066
        %2182 = vmatpush1.msra.mxu0 %v2065
        %2183 = vmatprep.subr.mxu0 %v2070
        %2184 = vmatpush1.msra.mxu0 %v2069
        %2185 = vmatprep.subr.mxu0 %v2074
        %2186 = vmatpush1.msra.mxu0 %v2073
        %2187 = vmatprep.subr.mxu0 %v2078
        %2188 = vmatpush1.msra.mxu0 %v2077
        %2189 = vmatprep.subr.mxu0 %v2082
        %2190 = vmatpush1.msra.mxu0 %v2081
        %2191 = vmatprep.subr.mxu0 %v2086
        %2192 = vmatpush1.msra.mxu0 %v2085
        %2193 = vmatprep.subr.mxu0 %v2090
        %2194 = vmatpush1.msra.mxu0 %v2089
        %2195 = vmatprep.subr.mxu0 %v2094
        %2196 = vmatpush1.msra.mxu0 %v2093
        %2197 = vmatprep.mubr.f32.mxu0 %v2125
        %2198 = vmatmul.mubr.f32.gmra.mrb[0].mxu0 %v2122
        %v2199 = vpop.f32.mrb[0].mxu0
        %v2200 = vadd.f32 0.0, %v2199
        %v2201 = vpop.f32.mrb[0].mxu0
        %v2202 = vadd.f32 0.0, %v2201
        %2203 = vdwg.mxu0
        %2204 = vmatprep.subr.mxu0 %v2098
        %2205 = vmatpush1.msra.mxu0 %v2097
        %2206 = vmatprep.subr.mxu0 %v2102
        %2207 = vmatpush1.msra.mxu0 %v2101
        %2208 = vmatprep.subr.mxu0 %v2106
        %2209 = vmatpush1.msra.mxu0 %v2105
        %2210 = vmatprep.subr.mxu0 %v2110
        %2211 = vmatpush1.msra.mxu0 %v2109
        %2212 = vmatprep.subr.mxu0 0.0
        %2213 = vmatpush1.msra.mxu0 0.0
        %2214 = vmatprep.subr.mxu0 0.0
        %2215 = vmatpush1.msra.mxu0 0.0
        %2216 = vmatprep.subr.mxu0 0.0
        %2217 = vmatpush1.msra.mxu0 0.0
        %2218 = vmatprep.subr.mxu0 0.0
        %2219 = vmatpush1.msra.mxu0 0.0
        %2220 = vmatprep.subr.mxu0 0.0
        %2221 = vmatpush1.msra.mxu0 0.0
        %2222 = vmatprep.subr.mxu0 0.0
        %2223 = vmatpush1.msra.mxu0 0.0
        %2224 = vmatprep.subr.mxu0 0.0
        %2225 = vmatpush1.msra.mxu0 0.0
        %2226 = vmatprep.subr.mxu0 0.0
        %2227 = vmatpush1.msra.mxu0 0.0
        %2228 = vmatprep.subr.mxu0 0.0
        %2229 = vmatpush1.msra.mxu0 0.0
        %2230 = vmatprep.subr.mxu0 0.0
        %2231 = vmatpush1.msra.mxu0 0.0
        %2232 = vmatprep.subr.mxu0 0.0
        %2233 = vmatpush1.msra.mxu0 0.0
        %2234 = vmatprep.subr.mxu0 0.0
        %2235 = vmatpush1.msra.mxu0 0.0
        %2236 = vmatprep.subr.mxu0 0.0
        %2237 = vmatpush1.msra.mxu0 0.0
        %2238 = vmatprep.subr.mxu0 0.0
        %2239 = vmatpush1.msra.mxu0 0.0
        %2240 = vmatprep.subr.mxu0 0.0
        %2241 = vmatpush1.msra.mxu0 0.0
        %2242 = vmatprep.subr.mxu0 0.0
        %2243 = vmatpush1.msra.mxu0 0.0
        %2244 = vmatprep.subr.mxu0 0.0
        %2245 = vmatpush1.msra.mxu0 0.0
        %2246 = vmatprep.subr.mxu0 0.0
        %2247 = vmatpush1.msra.mxu0 0.0
        %2248 = vmatprep.subr.mxu0 0.0
        %2249 = vmatpush1.msra.mxu0 0.0
        %2250 = vmatprep.subr.mxu0 0.0
        %2251 = vmatpush1.msra.mxu0 0.0
        %2252 = vmatprep.subr.mxu0 0.0
        %2253 = vmatpush1.msra.mxu0 0.0
        %2254 = vmatprep.subr.mxu0 0.0
        %2255 = vmatpush1.msra.mxu0 0.0
        %2256 = vmatprep.subr.mxu0 0.0
        %2257 = vmatpush1.msra.mxu0 0.0
        %2258 = vmatprep.subr.mxu0 0.0
        %2259 = vmatpush1.msra.mxu0 0.0
        %2260 = vmatprep.subr.mxu0 0.0
        %2261 = vmatpush1.msra.mxu0 0.0
        %2262 = vmatprep.subr.mxu0 0.0
        %2263 = vmatpush1.msra.mxu0 0.0
        %2264 = vmatprep.subr.mxu0 0.0
        %2265 = vmatpush1.msra.mxu0 0.0
        %2266 = vmatprep.subr.mxu0 0.0
        %2267 = vmatpush1.msra.mxu0 0.0
        %2268 = vmatprep.mubr.f32.mxu0 0.0
        %2269 = vmatmul.mubr.f32.gmra.mrb[0].mxu0 %v2131
        %v2270 = vpop.f32.mrb[0].mxu0
        %v2271 = vadd.f32 %v2200, %v2270
        %v2272 = vpop.f32.mrb[0].mxu0
        %v2273 = vadd.f32 %v2202, %v2272
        %2274 = vdwg.mxu0
        %2275 = vmatprep.subr.mxu0 %v1972
        %2276 = vmatpush1.msra.mxu0 %v1971
        %2277 = vmatprep.subr.mxu0 %v1976
        %2278 = vmatpush1.msra.mxu0 %v1975
        %2279 = vmatprep.subr.mxu0 %v1980
        %2280 = vmatpush1.msra.mxu0 %v1979
        %2281 = vmatprep.subr.mxu0 %v1984
        %2282 = vmatpush1.msra.mxu0 %v1983
        %2283 = vmatprep.subr.mxu0 %v1988
        %2284 = vmatpush1.msra.mxu0 %v1987
        %2285 = vmatprep.subr.mxu0 %v1992
        %2286 = vmatpush1.msra.mxu0 %v1991
        %2287 = vmatprep.subr.mxu0 %v1996
        %2288 = vmatpush1.msra.mxu0 %v1995
        %2289 = vmatprep.subr.mxu0 %v2000
        %2290 = vmatpush1.msra.mxu0 %v1999
        %2291 = vmatprep.subr.mxu0 %v2004
        %2292 = vmatpush1.msra.mxu0 %v2003
        %2293 = vmatprep.subr.mxu0 %v2008
        %2294 = vmatpush1.msra.mxu0 %v2007
        %2295 = vmatprep.subr.mxu0 %v2012
        %2296 = vmatpush1.msra.mxu0 %v2011
        %2297 = vmatprep.subr.mxu0 %v2016
        %2298 = vmatpush1.msra.mxu0 %v2015
        %2299 = vmatprep.subr.mxu0 %v2020
        %2300 = vmatpush1.msra.mxu0 %v2019
        %2301 = vmatprep.subr.mxu0 %v2024
        %2302 = vmatpush1.msra.mxu0 %v2023
        %2303 = vmatprep.subr.mxu0 %v2028
        %2304 = vmatpush1.msra.mxu0 %v2027
        %2305 = vmatprep.subr.mxu0 %v2032
        %2306 = vmatpush1.msra.mxu0 %v2031
        %2307 = vmatprep.subr.mxu0 %v2036
        %2308 = vmatpush1.msra.mxu0 %v2035
        %2309 = vmatprep.subr.mxu0 %v2040
        %2310 = vmatpush1.msra.mxu0 %v2039
        %2311 = vmatprep.subr.mxu0 %v2044
        %2312 = vmatpush1.msra.mxu0 %v2043
        %2313 = vmatprep.subr.mxu0 %v2048
        %2314 = vmatpush1.msra.mxu0 %v2047
        %2315 = vmatprep.subr.mxu0 %v2052
        %2316 = vmatpush1.msra.mxu0 %v2051
        %2317 = vmatprep.subr.mxu0 %v2056
        %2318 = vmatpush1.msra.mxu0 %v2055
        %2319 = vmatprep.subr.mxu0 %v2060
        %2320 = vmatpush1.msra.mxu0 %v2059
        %2321 = vmatprep.subr.mxu0 %v2064
        %2322 = vmatpush1.msra.mxu0 %v2063
        %2323 = vmatprep.subr.mxu0 %v2068
        %2324 = vmatpush1.msra.mxu0 %v2067
        %2325 = vmatprep.subr.mxu0 %v2072
        %2326 = vmatpush1.msra.mxu0 %v2071
        %2327 = vmatprep.subr.mxu0 %v2076
        %2328 = vmatpush1.msra.mxu0 %v2075
        %2329 = vmatprep.subr.mxu0 %v2080
        %2330 = vmatpush1.msra.mxu0 %v2079
        %2331 = vmatprep.subr.mxu0 %v2084
        %2332 = vmatpush1.msra.mxu0 %v2083
        %2333 = vmatprep.subr.mxu0 %v2088
        %2334 = vmatpush1.msra.mxu0 %v2087
        %2335 = vmatprep.subr.mxu0 %v2092
        %2336 = vmatpush1.msra.mxu0 %v2091
        %2337 = vmatprep.subr.mxu0 %v2096
        %2338 = vmatpush1.msra.mxu0 %v2095
        %2339 = vmatprep.mubr.f32.mxu0 %v2125
        %2340 = vmatmul.mubr.f32.gmra.mrb[0].mxu0 %v2122
        %v2341 = vpop.f32.mrb[0].mxu0
        %v2342 = vadd.f32 0.0, %v2341
        %v2343 = vpop.f32.mrb[0].mxu0
        %v2344 = vadd.f32 0.0, %v2343
        %2345 = vdwg.mxu0
        %2346 = vmatprep.subr.mxu0 %v2100
        %2347 = vmatpush1.msra.mxu0 %v2099
        %2348 = vmatprep.subr.mxu0 %v2104
        %2349 = vmatpush1.msra.mxu0 %v2103
        %2350 = vmatprep.subr.mxu0 %v2108
        %2351 = vmatpush1.msra.mxu0 %v2107
        %2352 = vmatprep.subr.mxu0 %v2112
        %2353 = vmatpush1.msra.mxu0 %v2111
        %2354 = vmatprep.subr.mxu0 0.0
        %2355 = vmatpush1.msra.mxu0 0.0
        %2356 = vmatprep.subr.mxu0 0.0
        %2357 = vmatpush1.msra.mxu0 0.0
        %2358 = vmatprep.subr.mxu0 0.0
        %2359 = vmatpush1.msra.mxu0 0.0
        %2360 = vmatprep.subr.mxu0 0.0
        %2361 = vmatpush1.msra.mxu0 0.0
        %2362 = vmatprep.subr.mxu0 0.0
        %2363 = vmatpush1.msra.mxu0 0.0
        %2364 = vmatprep.subr.mxu0 0.0
        %2365 = vmatpush1.msra.mxu0 0.0
        %2366 = vmatprep.subr.mxu0 0.0
        %2367 = vmatpush1.msra.mxu0 0.0
        %2368 = vmatprep.subr.mxu0 0.0
        %2369 = vmatpush1.msra.mxu0 0.0
        %2370 = vmatprep.subr.mxu0 0.0
        %2371 = vmatpush1.msra.mxu0 0.0
        %2372 = vmatprep.subr.mxu0 0.0
        %2373 = vmatpush1.msra.mxu0 0.0
        %2374 = vmatprep.subr.mxu0 0.0
        %2375 = vmatpush1.msra.mxu0 0.0
        %2376 = vmatprep.subr.mxu0 0.0
        %2377 = vmatpush1.msra.mxu0 0.0
        %2378 = vmatprep.subr.mxu0 0.0
        %2379 = vmatpush1.msra.mxu0 0.0
        %2380 = vmatprep.subr.mxu0 0.0
        %2381 = vmatpush1.msra.mxu0 0.0
        %2382 = vmatprep.subr.mxu0 0.0
        %2383 = vmatpush1.msra.mxu0 0.0
        %2384 = vmatprep.subr.mxu0 0.0
        %2385 = vmatpush1.msra.mxu0 0.0
        %2386 = vmatprep.subr.mxu0 0.0
        %2387 = vmatpush1.msra.mxu0 0.0
        %2388 = vmatprep.subr.mxu0 0.0
        %2389 = vmatpush1.msra.mxu0 0.0
        %2390 = vmatprep.subr.mxu0 0.0
        %2391 = vmatpush1.msra.mxu0 0.0
        %2392 = vmatprep.subr.mxu0 0.0
        %2393 = vmatpush1.msra.mxu0 0.0
        %2394 = vmatprep.subr.mxu0 0.0
        %2395 = vmatpush1.msra.mxu0 0.0
        %2396 = vmatprep.subr.mxu0 0.0
        %2397 = vmatpush1.msra.mxu0 0.0
        %2398 = vmatprep.subr.mxu0 0.0
        %2399 = vmatpush1.msra.mxu0 0.0
        %2400 = vmatprep.subr.mxu0 0.0
        %2401 = vmatpush1.msra.mxu0 0.0
        %2402 = vmatprep.subr.mxu0 0.0
        %2403 = vmatpush1.msra.mxu0 0.0
        %2404 = vmatprep.subr.mxu0 0.0
        %2405 = vmatpush1.msra.mxu0 0.0
        %2406 = vmatprep.subr.mxu0 0.0
        %2407 = vmatpush1.msra.mxu0 0.0
        %2408 = vmatprep.subr.mxu0 0.0
        %2409 = vmatpush1.msra.mxu0 0.0
        %2410 = vmatprep.mubr.f32.mxu0 0.0
        %2411 = vmatmul.mubr.f32.gmra.mrb[0].mxu0 %v2131
        %v2412 = vpop.f32.mrb[0].mxu0
        %v2413 = vadd.f32 %v2342, %v2412
        %v2414 = vpop.f32.mrb[0].mxu0
        %v2415 = vadd.f32 %v2344, %v2414
        %2416 = vdwg.mxu0
        %v2417 = vadd.f32 %v1958, %v2271
        %v2418 = vadd.f32 %v1959, %v2273
        %v2419 = vadd.f32 %v1960, %v2413
        %v2420 = vadd.f32 %v1961, %v2415
        %2421 = vmatprep.subr.mxu0 %v352
        %2422 = vmatpush1.msra.mxu0 %v351
        %2423 = vmatprep.subr.mxu0 %v356
        %2424 = vmatpush1.msra.mxu0 %v355
        %2425 = vmatprep.subr.mxu0 %v360
        %2426 = vmatpush1.msra.mxu0 %v359
        %2427 = vmatprep.subr.mxu0 %v364
        %2428 = vmatpush1.msra.mxu0 %v363
        %2429 = vmatprep.subr.mxu0 %v368
        %2430 = vmatpush1.msra.mxu0 %v367
        %2431 = vmatprep.subr.mxu0 %v372
        %2432 = vmatpush1.msra.mxu0 %v371
        %2433 = vmatprep.subr.mxu0 %v376
        %2434 = vmatpush1.msra.mxu0 %v375
        %2435 = vmatprep.subr.mxu0 %v380
        %2436 = vmatpush1.msra.mxu0 %v379
        %2437 = vmatprep.subr.mxu0 %v384
        %2438 = vmatpush1.msra.mxu0 %v383
        %2439 = vmatprep.subr.mxu0 %v388
        %2440 = vmatpush1.msra.mxu0 %v387
        %2441 = vmatprep.subr.mxu0 %v392
        %2442 = vmatpush1.msra.mxu0 %v391
        %2443 = vmatprep.subr.mxu0 %v396
        %2444 = vmatpush1.msra.mxu0 %v395
        %2445 = vmatprep.subr.mxu0 %v400
        %2446 = vmatpush1.msra.mxu0 %v399
        %2447 = vmatprep.subr.mxu0 %v404
        %2448 = vmatpush1.msra.mxu0 %v403
        %2449 = vmatprep.subr.mxu0 %v408
        %2450 = vmatpush1.msra.mxu0 %v407
        %2451 = vmatprep.subr.mxu0 %v412
        %2452 = vmatpush1.msra.mxu0 %v411
        %2453 = vmatprep.subr.mxu0 %v416
        %2454 = vmatpush1.msra.mxu0 %v415
        %2455 = vmatprep.subr.mxu0 %v420
        %2456 = vmatpush1.msra.mxu0 %v419
        %2457 = vmatprep.subr.mxu0 %v424
        %2458 = vmatpush1.msra.mxu0 %v423
        %2459 = vmatprep.subr.mxu0 %v428
        %2460 = vmatpush1.msra.mxu0 %v427
        %2461 = vmatprep.subr.mxu0 %v432
        %2462 = vmatpush1.msra.mxu0 %v431
        %2463 = vmatprep.subr.mxu0 %v436
        %2464 = vmatpush1.msra.mxu0 %v435
        %2465 = vmatprep.subr.mxu0 %v440
        %2466 = vmatpush1.msra.mxu0 %v439
        %2467 = vmatprep.subr.mxu0 %v444
        %2468 = vmatpush1.msra.mxu0 %v443
        %2469 = vmatprep.subr.mxu0 %v448
        %2470 = vmatpush1.msra.mxu0 %v447
        %2471 = vmatprep.subr.mxu0 %v452
        %2472 = vmatpush1.msra.mxu0 %v451
        %2473 = vmatprep.subr.mxu0 %v456
        %2474 = vmatpush1.msra.mxu0 %v455
        %2475 = vmatprep.subr.mxu0 %v460
        %2476 = vmatpush1.msra.mxu0 %v459
        %2477 = vmatprep.subr.mxu0 %v464
        %2478 = vmatpush1.msra.mxu0 %v463
        %2479 = vmatprep.subr.mxu0 %v468
        %2480 = vmatpush1.msra.mxu0 %v467
        %2481 = vmatprep.subr.mxu0 %v472
        %2482 = vmatpush1.msra.mxu0 %v471
        %2483 = vmatprep.subr.mxu0 %v476
        %2484 = vmatpush1.msra.mxu0 %v475
        %2485 = vmatprep.mubr.f32.mxu0 %v1222
        %2486 = vmatmul.mubr.f32.gmra.mrb[0].mxu0 %v1221
        %v2487 = vpop.f32.mrb[0].mxu0
        %v2488 = vadd.f32 0.0, %v2487
        %v2489 = vpop.f32.mrb[0].mxu0
        %v2490 = vadd.f32 0.0, %v2489
        %2491 = vdwg.mxu0
        %2492 = vmatprep.subr.mxu0 %v480
        %2493 = vmatpush1.msra.mxu0 %v479
        %2494 = vmatprep.subr.mxu0 %v484
        %2495 = vmatpush1.msra.mxu0 %v483
        %2496 = vmatprep.subr.mxu0 %v488
        %2497 = vmatpush1.msra.mxu0 %v487
        %2498 = vmatprep.subr.mxu0 %v492
        %2499 = vmatpush1.msra.mxu0 %v491
        %2500 = vmatprep.subr.mxu0 0.0
        %2501 = vmatpush1.msra.mxu0 0.0
        %2502 = vmatprep.subr.mxu0 0.0
        %2503 = vmatpush1.msra.mxu0 0.0
        %2504 = vmatprep.subr.mxu0 0.0
        %2505 = vmatpush1.msra.mxu0 0.0
        %2506 = vmatprep.subr.mxu0 0.0
        %2507 = vmatpush1.msra.mxu0 0.0
        %2508 = vmatprep.subr.mxu0 0.0
        %2509 = vmatpush1.msra.mxu0 0.0
        %2510 = vmatprep.subr.mxu0 0.0
        %2511 = vmatpush1.msra.mxu0 0.0
        %2512 = vmatprep.subr.mxu0 0.0
        %2513 = vmatpush1.msra.mxu0 0.0
        %2514 = vmatprep.subr.mxu0 0.0
        %2515 = vmatpush1.msra.mxu0 0.0
        %2516 = vmatprep.subr.mxu0 0.0
        %2517 = vmatpush1.msra.mxu0 0.0
        %2518 = vmatprep.subr.mxu0 0.0
        %2519 = vmatpush1.msra.mxu0 0.0
        %2520 = vmatprep.subr.mxu0 0.0
        %2521 = vmatpush1.msra.mxu0 0.0
        %2522 = vmatprep.subr.mxu0 0.0
        %2523 = vmatpush1.msra.mxu0 0.0
        %2524 = vmatprep.subr.mxu0 0.0
        %2525 = vmatpush1.msra.mxu0 0.0
        %2526 = vmatprep.subr.mxu0 0.0
        %2527 = vmatpush1.msra.mxu0 0.0
        %2528 = vmatprep.subr.mxu0 0.0
        %2529 = vmatpush1.msra.mxu0 0.0
        %2530 = vmatprep.subr.mxu0 0.0
        %2531 = vmatpush1.msra.mxu0 0.0
        %2532 = vmatprep.subr.mxu0 0.0
        %2533 = vmatpush1.msra.mxu0 0.0
        %2534 = vmatprep.subr.mxu0 0.0
        %2535 = vmatpush1.msra.mxu0 0.0
        %2536 = vmatprep.subr.mxu0 0.0
        %2537 = vmatpush1.msra.mxu0 0.0
        %2538 = vmatprep.subr.mxu0 0.0
        %2539 = vmatpush1.msra.mxu0 0.0
        %2540 = vmatprep.subr.mxu0 0.0
        %2541 = vmatpush1.msra.mxu0 0.0
        %2542 = vmatprep.subr.mxu0 0.0
        %2543 = vmatpush1.msra.mxu0 0.0
        %2544 = vmatprep.subr.mxu0 0.0
        %2545 = vmatpush1.msra.mxu0 0.0
        %2546 = vmatprep.subr.mxu0 0.0
        %2547 = vmatpush1.msra.mxu0 0.0
        %2548 = vmatprep.subr.mxu0 0.0
        %2549 = vmatpush1.msra.mxu0 0.0
        %2550 = vmatprep.subr.mxu0 0.0
        %2551 = vmatpush1.msra.mxu0 0.0
        %2552 = vmatprep.subr.mxu0 0.0
        %2553 = vmatpush1.msra.mxu0 0.0
        %2554 = vmatprep.subr.mxu0 0.0
        %2555 = vmatpush1.msra.mxu0 0.0
        %2556 = vmatprep.mubr.f32.mxu0 0.0
        %2557 = vmatmul.mubr.f32.gmra.mrb[0].mxu0 %v1226
        %v2558 = vpop.f32.mrb[0].mxu0
        %v2559 = vadd.f32 %v2488, %v2558
        %v2560 = vpop.f32.mrb[0].mxu0
        %v2561 = vadd.f32 %v2490, %v2560
        %2562 = vdwg.mxu0
        %2563 = vmatprep.subr.mxu0 %v354
        %2564 = vmatpush1.msra.mxu0 %v353
        %2565 = vmatprep.subr.mxu0 %v358
        %2566 = vmatpush1.msra.mxu0 %v357
        %2567 = vmatprep.subr.mxu0 %v362
        %2568 = vmatpush1.msra.mxu0 %v361
        %2569 = vmatprep.subr.mxu0 %v366
        %2570 = vmatpush1.msra.mxu0 %v365
        %2571 = vmatprep.subr.mxu0 %v370
        %2572 = vmatpush1.msra.mxu0 %v369
        %2573 = vmatprep.subr.mxu0 %v374
        %2574 = vmatpush1.msra.mxu0 %v373
        %2575 = vmatprep.subr.mxu0 %v378
        %2576 = vmatpush1.msra.mxu0 %v377
        %2577 = vmatprep.subr.mxu0 %v382
        %2578 = vmatpush1.msra.mxu0 %v381
        %2579 = vmatprep.subr.mxu0 %v386
        %2580 = vmatpush1.msra.mxu0 %v385
        %2581 = vmatprep.subr.mxu0 %v390
        %2582 = vmatpush1.msra.mxu0 %v389
        %2583 = vmatprep.subr.mxu0 %v394
        %2584 = vmatpush1.msra.mxu0 %v393
        %2585 = vmatprep.subr.mxu0 %v398
        %2586 = vmatpush1.msra.mxu0 %v397
        %2587 = vmatprep.subr.mxu0 %v402
        %2588 = vmatpush1.msra.mxu0 %v401
        %2589 = vmatprep.subr.mxu0 %v406
        %2590 = vmatpush1.msra.mxu0 %v405
        %2591 = vmatprep.subr.mxu0 %v410
        %2592 = vmatpush1.msra.mxu0 %v409
        %2593 = vmatprep.subr.mxu0 %v414
        %2594 = vmatpush1.msra.mxu0 %v413
        %2595 = vmatprep.subr.mxu0 %v418
        %2596 = vmatpush1.msra.mxu0 %v417
        %2597 = vmatprep.subr.mxu0 %v422
        %2598 = vmatpush1.msra.mxu0 %v421
        %2599 = vmatprep.subr.mxu0 %v426
        %2600 = vmatpush1.msra.mxu0 %v425
        %2601 = vmatprep.subr.mxu0 %v430
        %2602 = vmatpush1.msra.mxu0 %v429
        %2603 = vmatprep.subr.mxu0 %v434
        %2604 = vmatpush1.msra.mxu0 %v433
        %2605 = vmatprep.subr.mxu0 %v438
        %2606 = vmatpush1.msra.mxu0 %v437
        %2607 = vmatprep.subr.mxu0 %v442
        %2608 = vmatpush1.msra.mxu0 %v441
        %2609 = vmatprep.subr.mxu0 %v446
        %2610 = vmatpush1.msra.mxu0 %v445
        %2611 = vmatprep.subr.mxu0 %v450
        %2612 = vmatpush1.msra.mxu0 %v449
        %2613 = vmatprep.subr.mxu0 %v454
        %2614 = vmatpush1.msra.mxu0 %v453
        %2615 = vmatprep.subr.mxu0 %v458
        %2616 = vmatpush1.msra.mxu0 %v457
        %2617 = vmatprep.subr.mxu0 %v462
        %2618 = vmatpush1.msra.mxu0 %v461
        %2619 = vmatprep.subr.mxu0 %v466
        %2620 = vmatpush1.msra.mxu0 %v465
        %2621 = vmatprep.subr.mxu0 %v470
        %2622 = vmatpush1.msra.mxu0 %v469
        %2623 = vmatprep.subr.mxu0 %v474
        %2624 = vmatpush1.msra.mxu0 %v473
        %2625 = vmatprep.subr.mxu0 %v478
        %2626 = vmatpush1.msra.mxu0 %v477
        %2627 = vmatprep.mubr.f32.mxu0 %v1222
        %2628 = vmatmul.mubr.f32.gmra.mrb[0].mxu0 %v1221
        %v2629 = vpop.f32.mrb[0].mxu0
        %v2630 = vadd.f32 0.0, %v2629
        %v2631 = vpop.f32.mrb[0].mxu0
        %v2632 = vadd.f32 0.0, %v2631
        %2633 = vdwg.mxu0
        %2634 = vmatprep.subr.mxu0 %v482
        %2635 = vmatpush1.msra.mxu0 %v481
        %2636 = vmatprep.subr.mxu0 %v486
        %2637 = vmatpush1.msra.mxu0 %v485
        %2638 = vmatprep.subr.mxu0 %v490
        %2639 = vmatpush1.msra.mxu0 %v489
        %2640 = vmatprep.subr.mxu0 %v494
        %2641 = vmatpush1.msra.mxu0 %v493
        %2642 = vmatprep.subr.mxu0 0.0
        %2643 = vmatpush1.msra.mxu0 0.0
        %2644 = vmatprep.subr.mxu0 0.0
        %2645 = vmatpush1.msra.mxu0 0.0
        %2646 = vmatprep.subr.mxu0 0.0
        %2647 = vmatpush1.msra.mxu0 0.0
        %2648 = vmatprep.subr.mxu0 0.0
        %2649 = vmatpush1.msra.mxu0 0.0
        %2650 = vmatprep.subr.mxu0 0.0
        %2651 = vmatpush1.msra.mxu0 0.0
        %2652 = vmatprep.subr.mxu0 0.0
        %2653 = vmatpush1.msra.mxu0 0.0
        %2654 = vmatprep.subr.mxu0 0.0
        %2655 = vmatpush1.msra.mxu0 0.0
        %2656 = vmatprep.subr.mxu0 0.0
        %2657 = vmatpush1.msra.mxu0 0.0
        %2658 = vmatprep.subr.mxu0 0.0
        %2659 = vmatpush1.msra.mxu0 0.0
        %2660 = vmatprep.subr.mxu0 0.0
        %2661 = vmatpush1.msra.mxu0 0.0
        %2662 = vmatprep.subr.mxu0 0.0
        %2663 = vmatpush1.msra.mxu0 0.0
        %2664 = vmatprep.subr.mxu0 0.0
        %2665 = vmatpush1.msra.mxu0 0.0
        %2666 = vmatprep.subr.mxu0 0.0
        %2667 = vmatpush1.msra.mxu0 0.0
        %2668 = vmatprep.subr.mxu0 0.0
        %2669 = vmatpush1.msra.mxu0 0.0
        %2670 = vmatprep.subr.mxu0 0.0
        %2671 = vmatpush1.msra.mxu0 0.0
        %2672 = vmatprep.subr.mxu0 0.0
        %2673 = vmatpush1.msra.mxu0 0.0
        %2674 = vmatprep.subr.mxu0 0.0
        %2675 = vmatpush1.msra.mxu0 0.0
        %2676 = vmatprep.subr.mxu0 0.0
        %2677 = vmatpush1.msra.mxu0 0.0
        %2678 = vmatprep.subr.mxu0 0.0
        %2679 = vmatpush1.msra.mxu0 0.0
        %2680 = vmatprep.subr.mxu0 0.0
        %2681 = vmatpush1.msra.mxu0 0.0
        %2682 = vmatprep.subr.mxu0 0.0
        %2683 = vmatpush1.msra.mxu0 0.0
        %2684 = vmatprep.subr.mxu0 0.0
        %2685 = vmatpush1.msra.mxu0 0.0
        %2686 = vmatprep.subr.mxu0 0.0
        %2687 = vmatpush1.msra.mxu0 0.0
        %2688 = vmatprep.subr.mxu0 0.0
        %2689 = vmatpush1.msra.mxu0 0.0
        %2690 = vmatprep.subr.mxu0 0.0
        %2691 = vmatpush1.msra.mxu0 0.0
        %2692 = vmatprep.subr.mxu0 0.0
        %2693 = vmatpush1.msra.mxu0 0.0
        %2694 = vmatprep.subr.mxu0 0.0
        %2695 = vmatpush1.msra.mxu0 0.0
        %2696 = vmatprep.subr.mxu0 0.0
        %2697 = vmatpush1.msra.mxu0 0.0
        %2698 = vmatprep.mubr.f32.mxu0 0.0
        %2699 = vmatmul.mubr.f32.gmra.mrb[0].mxu0 %v1226
        %v2700 = vpop.f32.mrb[0].mxu0
        %v2701 = vadd.f32 %v2630, %v2700
        %v2702 = vpop.f32.mrb[0].mxu0
        %v2703 = vadd.f32 %v2632, %v2702
        %2704 = vdwg.mxu0
        %2705 = vmatprep.subr.mxu0 %v203
        %2706 = vmatpush1.msra.mxu0 %v202
        %2707 = vmatprep.subr.mxu0 %v207
        %2708 = vmatpush1.msra.mxu0 %v206
        %2709 = vmatprep.subr.mxu0 %v211
        %2710 = vmatpush1.msra.mxu0 %v210
        %2711 = vmatprep.subr.mxu0 %v215
        %2712 = vmatpush1.msra.mxu0 %v214
        %2713 = vmatprep.subr.mxu0 %v219
        %2714 = vmatpush1.msra.mxu0 %v218
        %2715 = vmatprep.subr.mxu0 %v223
        %2716 = vmatpush1.msra.mxu0 %v222
        %2717 = vmatprep.subr.mxu0 %v227
        %2718 = vmatpush1.msra.mxu0 %v226
        %2719 = vmatprep.subr.mxu0 %v231
        %2720 = vmatpush1.msra.mxu0 %v230
        %2721 = vmatprep.subr.mxu0 %v235
        %2722 = vmatpush1.msra.mxu0 %v234
        %2723 = vmatprep.subr.mxu0 %v239
        %2724 = vmatpush1.msra.mxu0 %v238
        %2725 = vmatprep.subr.mxu0 %v243
        %2726 = vmatpush1.msra.mxu0 %v242
        %2727 = vmatprep.subr.mxu0 %v247
        %2728 = vmatpush1.msra.mxu0 %v246
        %2729 = vmatprep.subr.mxu0 %v251
        %2730 = vmatpush1.msra.mxu0 %v250
        %2731 = vmatprep.subr.mxu0 %v255
        %2732 = vmatpush1.msra.mxu0 %v254
        %2733 = vmatprep.subr.mxu0 %v259
        %2734 = vmatpush1.msra.mxu0 %v258
        %2735 = vmatprep.subr.mxu0 %v263
        %2736 = vmatpush1.msra.mxu0 %v262
        %2737 = vmatprep.subr.mxu0 %v267
        %2738 = vmatpush1.msra.mxu0 %v266
        %2739 = vmatprep.subr.mxu0 %v271
        %2740 = vmatpush1.msra.mxu0 %v270
        %2741 = vmatprep.subr.mxu0 %v275
        %2742 = vmatpush1.msra.mxu0 %v274
        %2743 = vmatprep.subr.mxu0 %v279
        %2744 = vmatpush1.msra.mxu0 %v278
        %2745 = vmatprep.subr.mxu0 %v283
        %2746 = vmatpush1.msra.mxu0 %v282
        %2747 = vmatprep.subr.mxu0 %v287
        %2748 = vmatpush1.msra.mxu0 %v286
        %2749 = vmatprep.subr.mxu0 %v291
        %2750 = vmatpush1.msra.mxu0 %v290
        %2751 = vmatprep.subr.mxu0 %v295
        %2752 = vmatpush1.msra.mxu0 %v294
        %2753 = vmatprep.subr.mxu0 %v299
        %2754 = vmatpush1.msra.mxu0 %v298
        %2755 = vmatprep.subr.mxu0 %v303
        %2756 = vmatpush1.msra.mxu0 %v302
        %2757 = vmatprep.subr.mxu0 %v307
        %2758 = vmatpush1.msra.mxu0 %v306
        %2759 = vmatprep.subr.mxu0 %v311
        %2760 = vmatpush1.msra.mxu0 %v310
        %2761 = vmatprep.subr.mxu0 %v315
        %2762 = vmatpush1.msra.mxu0 %v314
        %2763 = vmatprep.subr.mxu0 %v319
        %2764 = vmatpush1.msra.mxu0 %v318
        %2765 = vmatprep.subr.mxu0 %v323
        %2766 = vmatpush1.msra.mxu0 %v322
        %2767 = vmatprep.subr.mxu0 %v327
        %2768 = vmatpush1.msra.mxu0 %v326
        %2769 = vmatprep.mubr.f32.mxu0 %v348
        %2770 = vmatmul.mubr.f32.gmra.mrb[0].mxu0 %v347
        %v2771 = vpop.f32.mrb[0].mxu0
        %v2772 = vadd.f32 %v2559, %v2771
        %v2773 = vpop.f32.mrb[0].mxu0
        %v2774 = vadd.f32 %v2561, %v2773
        %2775 = vdwg.mxu0
        %2776 = vmatprep.subr.mxu0 %v331
        %2777 = vmatpush1.msra.mxu0 %v330
        %2778 = vmatprep.subr.mxu0 %v335
        %2779 = vmatpush1.msra.mxu0 %v334
        %2780 = vmatprep.subr.mxu0 %v339
        %2781 = vmatpush1.msra.mxu0 %v338
        %2782 = vmatprep.subr.mxu0 %v343
        %2783 = vmatpush1.msra.mxu0 %v342
        %2784 = vmatprep.subr.mxu0 0.0
        %2785 = vmatpush1.msra.mxu0 0.0
        %2786 = vmatprep.subr.mxu0 0.0
        %2787 = vmatpush1.msra.mxu0 0.0
        %2788 = vmatprep.subr.mxu0 0.0
        %2789 = vmatpush1.msra.mxu0 0.0
        %2790 = vmatprep.subr.mxu0 0.0
        %2791 = vmatpush1.msra.mxu0 0.0
        %2792 = vmatprep.subr.mxu0 0.0
        %2793 = vmatpush1.msra.mxu0 0.0
        %2794 = vmatprep.subr.mxu0 0.0
        %2795 = vmatpush1.msra.mxu0 0.0
        %2796 = vmatprep.subr.mxu0 0.0
        %2797 = vmatpush1.msra.mxu0 0.0
        %2798 = vmatprep.subr.mxu0 0.0
        %2799 = vmatpush1.msra.mxu0 0.0
        %2800 = vmatprep.subr.mxu0 0.0
        %2801 = vmatpush1.msra.mxu0 0.0
        %2802 = vmatprep.subr.mxu0 0.0
        %2803 = vmatpush1.msra.mxu0 0.0
        %2804 = vmatprep.subr.mxu0 0.0
        %2805 = vmatpush1.msra.mxu0 0.0
        %2806 = vmatprep.subr.mxu0 0.0
        %2807 = vmatpush1.msra.mxu0 0.0
        %2808 = vmatprep.subr.mxu0 0.0
        %2809 = vmatpush1.msra.mxu0 0.0
        %2810 = vmatprep.subr.mxu0 0.0
        %2811 = vmatpush1.msra.mxu0 0.0
        %2812 = vmatprep.subr.mxu0 0.0
        %2813 = vmatpush1.msra.mxu0 0.0
        %2814 = vmatprep.subr.mxu0 0.0
        %2815 = vmatpush1.msra.mxu0 0.0
        %2816 = vmatprep.subr.mxu0 0.0
        %2817 = vmatpush1.msra.mxu0 0.0
        %2818 = vmatprep.subr.mxu0 0.0
        %2819 = vmatpush1.msra.mxu0 0.0
        %2820 = vmatprep.subr.mxu0 0.0
        %2821 = vmatpush1.msra.mxu0 0.0
        %2822 = vmatprep.subr.mxu0 0.0
        %2823 = vmatpush1.msra.mxu0 0.0
        %2824 = vmatprep.subr.mxu0 0.0
        %2825 = vmatpush1.msra.mxu0 0.0
        %2826 = vmatprep.subr.mxu0 0.0
        %2827 = vmatpush1.msra.mxu0 0.0
        %2828 = vmatprep.subr.mxu0 0.0
        %2829 = vmatpush1.msra.mxu0 0.0
        %2830 = vmatprep.subr.mxu0 0.0
        %2831 = vmatpush1.msra.mxu0 0.0
        %2832 = vmatprep.subr.mxu0 0.0
        %2833 = vmatpush1.msra.mxu0 0.0
        %2834 = vmatprep.subr.mxu0 0.0
        %2835 = vmatpush1.msra.mxu0 0.0
        %2836 = vmatprep.subr.mxu0 0.0
        %2837 = vmatpush1.msra.mxu0 0.0
        %2838 = vmatprep.subr.mxu0 0.0
        %2839 = vmatpush1.msra.mxu0 0.0
        %2840 = vmatprep.mubr.f32.mxu0 0.0
        %2841 = vmatmul.mubr.f32.gmra.mrb[0].mxu0 %v497
        %v2842 = vpop.f32.mrb[0].mxu0
        %v2843 = vadd.f32 %v2772, %v2842
        %v2844 = vpop.f32.mrb[0].mxu0
        %v2845 = vadd.f32 %v2774, %v2844
        %2846 = vdwg.mxu0
        %2847 = vmatprep.subr.mxu0 %v205
        %2848 = vmatpush1.msra.mxu0 %v204
        %2849 = vmatprep.subr.mxu0 %v209
        %2850 = vmatpush1.msra.mxu0 %v208
        %2851 = vmatprep.subr.mxu0 %v213
        %2852 = vmatpush1.msra.mxu0 %v212
        %2853 = vmatprep.subr.mxu0 %v217
        %2854 = vmatpush1.msra.mxu0 %v216
        %2855 = vmatprep.subr.mxu0 %v221
        %2856 = vmatpush1.msra.mxu0 %v220
        %2857 = vmatprep.subr.mxu0 %v225
        %2858 = vmatpush1.msra.mxu0 %v224
        %2859 = vmatprep.subr.mxu0 %v229
        %2860 = vmatpush1.msra.mxu0 %v228
        %2861 = vmatprep.subr.mxu0 %v233
        %2862 = vmatpush1.msra.mxu0 %v232
        %2863 = vmatprep.subr.mxu0 %v237
        %2864 = vmatpush1.msra.mxu0 %v236
        %2865 = vmatprep.subr.mxu0 %v241
        %2866 = vmatpush1.msra.mxu0 %v240
        %2867 = vmatprep.subr.mxu0 %v245
        %2868 = vmatpush1.msra.mxu0 %v244
        %2869 = vmatprep.subr.mxu0 %v249
        %2870 = vmatpush1.msra.mxu0 %v248
        %2871 = vmatprep.subr.mxu0 %v253
        %2872 = vmatpush1.msra.mxu0 %v252
        %2873 = vmatprep.subr.mxu0 %v257
        %2874 = vmatpush1.msra.mxu0 %v256
        %2875 = vmatprep.subr.mxu0 %v261
        %2876 = vmatpush1.msra.mxu0 %v260
        %2877 = vmatprep.subr.mxu0 %v265
        %2878 = vmatpush1.msra.mxu0 %v264
        %2879 = vmatprep.subr.mxu0 %v269
        %2880 = vmatpush1.msra.mxu0 %v268
        %2881 = vmatprep.subr.mxu0 %v273
        %2882 = vmatpush1.msra.mxu0 %v272
        %2883 = vmatprep.subr.mxu0 %v277
        %2884 = vmatpush1.msra.mxu0 %v276
        %2885 = vmatprep.subr.mxu0 %v281
        %2886 = vmatpush1.msra.mxu0 %v280
        %2887 = vmatprep.subr.mxu0 %v285
        %2888 = vmatpush1.msra.mxu0 %v284
        %2889 = vmatprep.subr.mxu0 %v289
        %2890 = vmatpush1.msra.mxu0 %v288
        %2891 = vmatprep.subr.mxu0 %v293
        %2892 = vmatpush1.msra.mxu0 %v292
        %2893 = vmatprep.subr.mxu0 %v297
        %2894 = vmatpush1.msra.mxu0 %v296
        %2895 = vmatprep.subr.mxu0 %v301
        %2896 = vmatpush1.msra.mxu0 %v300
        %2897 = vmatprep.subr.mxu0 %v305
        %2898 = vmatpush1.msra.mxu0 %v304
        %2899 = vmatprep.subr.mxu0 %v309
        %2900 = vmatpush1.msra.mxu0 %v308
        %2901 = vmatprep.subr.mxu0 %v313
        %2902 = vmatpush1.msra.mxu0 %v312
        %2903 = vmatprep.subr.mxu0 %v317
        %2904 = vmatpush1.msra.mxu0 %v316
        %2905 = vmatprep.subr.mxu0 %v321
        %2906 = vmatpush1.msra.mxu0 %v320
        %2907 = vmatprep.subr.mxu0 %v325
        %2908 = vmatpush1.msra.mxu0 %v324
        %2909 = vmatprep.subr.mxu0 %v329
        %2910 = vmatpush1.msra.mxu0 %v328
        %2911 = vmatprep.mubr.f32.mxu0 %v348
        %2912 = vmatmul.mubr.f32.gmra.mrb[0].mxu0 %v347
        %v2913 = vpop.f32.mrb[0].mxu0
        %v2914 = vadd.f32 %v2701, %v2913
        %v2915 = vpop.f32.mrb[0].mxu0
        %v2916 = vadd.f32 %v2703, %v2915
        %2917 = vdwg.mxu0
        %2918 = vmatprep.subr.mxu0 %v333
        %2919 = vmatpush1.msra.mxu0 %v332
        %2920 = vmatprep.subr.mxu0 %v337
        %2921 = vmatpush1.msra.mxu0 %v336
        %2922 = vmatprep.subr.mxu0 %v341
        %2923 = vmatpush1.msra.mxu0 %v340
        %2924 = vmatprep.subr.mxu0 %v345
        %2925 = vmatpush1.msra.mxu0 %v344
        %2926 = vmatprep.subr.mxu0 0.0
        %2927 = vmatpush1.msra.mxu0 0.0
        %2928 = vmatprep.subr.mxu0 0.0
        %2929 = vmatpush1.msra.mxu0 0.0
        %2930 = vmatprep.subr.mxu0 0.0
        %2931 = vmatpush1.msra.mxu0 0.0
        %2932 = vmatprep.subr.mxu0 0.0
        %2933 = vmatpush1.msra.mxu0 0.0
        %2934 = vmatprep.subr.mxu0 0.0
        %2935 = vmatpush1.msra.mxu0 0.0
        %2936 = vmatprep.subr.mxu0 0.0
        %2937 = vmatpush1.msra.mxu0 0.0
        %2938 = vmatprep.subr.mxu0 0.0
        %2939 = vmatpush1.msra.mxu0 0.0
        %2940 = vmatprep.subr.mxu0 0.0
        %2941 = vmatpush1.msra.mxu0 0.0
        %2942 = vmatprep.subr.mxu0 0.0
        %2943 = vmatpush1.msra.mxu0 0.0
        %2944 = vmatprep.subr.mxu0 0.0
        %2945 = vmatpush1.msra.mxu0 0.0
        %2946 = vmatprep.subr.mxu0 0.0
        %2947 = vmatpush1.msra.mxu0 0.0
        %2948 = vmatprep.subr.mxu0 0.0
        %2949 = vmatpush1.msra.mxu0 0.0
        %2950 = vmatprep.subr.mxu0 0.0
        %2951 = vmatpush1.msra.mxu0 0.0
        %2952 = vmatprep.subr.mxu0 0.0
        %2953 = vmatpush1.msra.mxu0 0.0
        %2954 = vmatprep.subr.mxu0 0.0
        %2955 = vmatpush1.msra.mxu0 0.0
        %2956 = vmatprep.subr.mxu0 0.0
        %2957 = vmatpush1.msra.mxu0 0.0
        %2958 = vmatprep.subr.mxu0 0.0
        %2959 = vmatpush1.msra.mxu0 0.0
        %2960 = vmatprep.subr.mxu0 0.0
        %2961 = vmatpush1.msra.mxu0 0.0
        %2962 = vmatprep.subr.mxu0 0.0
        %2963 = vmatpush1.msra.mxu0 0.0
        %2964 = vmatprep.subr.mxu0 0.0
        %2965 = vmatpush1.msra.mxu0 0.0
        %2966 = vmatprep.subr.mxu0 0.0
        %2967 = vmatpush1.msra.mxu0 0.0
        %2968 = vmatprep.subr.mxu0 0.0
        %2969 = vmatpush1.msra.mxu0 0.0
        %2970 = vmatprep.subr.mxu0 0.0
        %2971 = vmatpush1.msra.mxu0 0.0
        %2972 = vmatprep.subr.mxu0 0.0
        %2973 = vmatpush1.msra.mxu0 0.0
        %2974 = vmatprep.subr.mxu0 0.0
        %2975 = vmatpush1.msra.mxu0 0.0
        %2976 = vmatprep.subr.mxu0 0.0
        %2977 = vmatpush1.msra.mxu0 0.0
        %2978 = vmatprep.subr.mxu0 0.0
        %2979 = vmatpush1.msra.mxu0 0.0
        %2980 = vmatprep.subr.mxu0 0.0
        %2981 = vmatpush1.msra.mxu0 0.0
        %2982 = vmatprep.mubr.f32.mxu0 0.0
        %2983 = vmatmul.mubr.f32.gmra.mrb[0].mxu0 %v497
        %v2984 = vpop.f32.mrb[0].mxu0
        %v2985 = vadd.f32 %v2914, %v2984
        %v2986 = vpop.f32.mrb[0].mxu0
        %v2987 = vadd.f32 %v2916, %v2986
        %2988 = vdwg.mxu0
        %2989 = vmatprep.subr.mxu0 %v1075
        %2990 = vmatpush1.msra.mxu0 %v1074
        %2991 = vmatprep.subr.mxu0 %v1079
        %2992 = vmatpush1.msra.mxu0 %v1078
        %2993 = vmatprep.subr.mxu0 %v1083
        %2994 = vmatpush1.msra.mxu0 %v1082
        %2995 = vmatprep.subr.mxu0 %v1087
        %2996 = vmatpush1.msra.mxu0 %v1086
        %2997 = vmatprep.subr.mxu0 %v1091
        %2998 = vmatpush1.msra.mxu0 %v1090
        %2999 = vmatprep.subr.mxu0 %v1095
        %3000 = vmatpush1.msra.mxu0 %v1094
        %3001 = vmatprep.subr.mxu0 %v1099
        %3002 = vmatpush1.msra.mxu0 %v1098
        %3003 = vmatprep.subr.mxu0 %v1103
        %3004 = vmatpush1.msra.mxu0 %v1102
        %3005 = vmatprep.subr.mxu0 %v1107
        %3006 = vmatpush1.msra.mxu0 %v1106
        %3007 = vmatprep.subr.mxu0 %v1111
        %3008 = vmatpush1.msra.mxu0 %v1110
        %3009 = vmatprep.subr.mxu0 %v1115
        %3010 = vmatpush1.msra.mxu0 %v1114
        %3011 = vmatprep.subr.mxu0 %v1119
        %3012 = vmatpush1.msra.mxu0 %v1118
        %3013 = vmatprep.subr.mxu0 %v1123
        %3014 = vmatpush1.msra.mxu0 %v1122
        %3015 = vmatprep.subr.mxu0 %v1127
        %3016 = vmatpush1.msra.mxu0 %v1126
        %3017 = vmatprep.subr.mxu0 %v1131
        %3018 = vmatpush1.msra.mxu0 %v1130
        %3019 = vmatprep.subr.mxu0 %v1135
        %3020 = vmatpush1.msra.mxu0 %v1134
        %3021 = vmatprep.subr.mxu0 %v1139
        %3022 = vmatpush1.msra.mxu0 %v1138
        %3023 = vmatprep.subr.mxu0 %v1143
        %3024 = vmatpush1.msra.mxu0 %v1142
        %3025 = vmatprep.subr.mxu0 %v1147
        %3026 = vmatpush1.msra.mxu0 %v1146
        %3027 = vmatprep.subr.mxu0 %v1151
        %3028 = vmatpush1.msra.mxu0 %v1150
        %3029 = vmatprep.subr.mxu0 %v1155
        %3030 = vmatpush1.msra.mxu0 %v1154
        %3031 = vmatprep.subr.mxu0 %v1159
        %3032 = vmatpush1.msra.mxu0 %v1158
        %3033 = vmatprep.subr.mxu0 %v1163
        %3034 = vmatpush1.msra.mxu0 %v1162
        %3035 = vmatprep.subr.mxu0 %v1167
        %3036 = vmatpush1.msra.mxu0 %v1166
        %3037 = vmatprep.subr.mxu0 %v1171
        %3038 = vmatpush1.msra.mxu0 %v1170
        %3039 = vmatprep.subr.mxu0 %v1175
        %3040 = vmatpush1.msra.mxu0 %v1174
        %3041 = vmatprep.subr.mxu0 %v1179
        %3042 = vmatpush1.msra.mxu0 %v1178
        %3043 = vmatprep.subr.mxu0 %v1183
        %3044 = vmatpush1.msra.mxu0 %v1182
        %3045 = vmatprep.subr.mxu0 %v1187
        %3046 = vmatpush1.msra.mxu0 %v1186
        %3047 = vmatprep.subr.mxu0 %v1191
        %3048 = vmatpush1.msra.mxu0 %v1190
        %3049 = vmatprep.subr.mxu0 %v1195
        %3050 = vmatpush1.msra.mxu0 %v1194
        %3051 = vmatprep.subr.mxu0 %v1199
        %3052 = vmatpush1.msra.mxu0 %v1198
        %3053 = vmatprep.mubr.f32.mxu0 %v1668
        %3054 = vmatmul.mubr.f32.gmra.mrb[0].mxu0 %v1667
        %v3055 = vpop.f32.mrb[0].mxu0
        %v3056 = vadd.f32 0.0, %v3055
        %v3057 = vpop.f32.mrb[0].mxu0
        %v3058 = vadd.f32 0.0, %v3057
        %3059 = vdwg.mxu0
        %3060 = vmatprep.subr.mxu0 %v1203
        %3061 = vmatpush1.msra.mxu0 %v1202
        %3062 = vmatprep.subr.mxu0 %v1207
        %3063 = vmatpush1.msra.mxu0 %v1206
        %3064 = vmatprep.subr.mxu0 %v1211
        %3065 = vmatpush1.msra.mxu0 %v1210
        %3066 = vmatprep.subr.mxu0 %v1215
        %3067 = vmatpush1.msra.mxu0 %v1214
        %3068 = vmatprep.subr.mxu0 0.0
        %3069 = vmatpush1.msra.mxu0 0.0
        %3070 = vmatprep.subr.mxu0 0.0
        %3071 = vmatpush1.msra.mxu0 0.0
        %3072 = vmatprep.subr.mxu0 0.0
        %3073 = vmatpush1.msra.mxu0 0.0
        %3074 = vmatprep.subr.mxu0 0.0
        %3075 = vmatpush1.msra.mxu0 0.0
        %3076 = vmatprep.subr.mxu0 0.0
        %3077 = vmatpush1.msra.mxu0 0.0
        %3078 = vmatprep.subr.mxu0 0.0
        %3079 = vmatpush1.msra.mxu0 0.0
        %3080 = vmatprep.subr.mxu0 0.0
        %3081 = vmatpush1.msra.mxu0 0.0
        %3082 = vmatprep.subr.mxu0 0.0
        %3083 = vmatpush1.msra.mxu0 0.0
        %3084 = vmatprep.subr.mxu0 0.0
        %3085 = vmatpush1.msra.mxu0 0.0
        %3086 = vmatprep.subr.mxu0 0.0
        %3087 = vmatpush1.msra.mxu0 0.0
        %3088 = vmatprep.subr.mxu0 0.0
        %3089 = vmatpush1.msra.mxu0 0.0
        %3090 = vmatprep.subr.mxu0 0.0
        %3091 = vmatpush1.msra.mxu0 0.0
        %3092 = vmatprep.subr.mxu0 0.0
        %3093 = vmatpush1.msra.mxu0 0.0
        %3094 = vmatprep.subr.mxu0 0.0
        %3095 = vmatpush1.msra.mxu0 0.0
        %3096 = vmatprep.subr.mxu0 0.0
        %3097 = vmatpush1.msra.mxu0 0.0
        %3098 = vmatprep.subr.mxu0 0.0
        %3099 = vmatpush1.msra.mxu0 0.0
        %3100 = vmatprep.subr.mxu0 0.0
        %3101 = vmatpush1.msra.mxu0 0.0
        %3102 = vmatprep.subr.mxu0 0.0
        %3103 = vmatpush1.msra.mxu0 0.0
        %3104 = vmatprep.subr.mxu0 0.0
        %3105 = vmatpush1.msra.mxu0 0.0
        %3106 = vmatprep.subr.mxu0 0.0
        %3107 = vmatpush1.msra.mxu0 0.0
        %3108 = vmatprep.subr.mxu0 0.0
        %3109 = vmatpush1.msra.mxu0 0.0
        %3110 = vmatprep.subr.mxu0 0.0
        %3111 = vmatpush1.msra.mxu0 0.0
        %3112 = vmatprep.subr.mxu0 0.0
        %3113 = vmatpush1.msra.mxu0 0.0
        %3114 = vmatprep.subr.mxu0 0.0
        %3115 = vmatpush1.msra.mxu0 0.0
        %3116 = vmatprep.subr.mxu0 0.0
        %3117 = vmatpush1.msra.mxu0 0.0
        %3118 = vmatprep.subr.mxu0 0.0
        %3119 = vmatpush1.msra.mxu0 0.0
        %3120 = vmatprep.subr.mxu0 0.0
        %3121 = vmatpush1.msra.mxu0 0.0
        %3122 = vmatprep.subr.mxu0 0.0
        %3123 = vmatpush1.msra.mxu0 0.0
        %3124 = vmatprep.mubr.f32.mxu0 0.0
        %3125 = vmatmul.mubr.f32.gmra.mrb[0].mxu0 %v1672
        %v3126 = vpop.f32.mrb[0].mxu0
        %v3127 = vadd.f32 %v3056, %v3126
        %v3128 = vpop.f32.mrb[0].mxu0
        %v3129 = vadd.f32 %v3058, %v3128
        %3130 = vdwg.mxu0
        %3131 = vmatprep.subr.mxu0 %v1077
        %3132 = vmatpush1.msra.mxu0 %v1076
        %3133 = vmatprep.subr.mxu0 %v1081
        %3134 = vmatpush1.msra.mxu0 %v1080
        %3135 = vmatprep.subr.mxu0 %v1085
        %3136 = vmatpush1.msra.mxu0 %v1084
        %3137 = vmatprep.subr.mxu0 %v1089
        %3138 = vmatpush1.msra.mxu0 %v1088
        %3139 = vmatprep.subr.mxu0 %v1093
        %3140 = vmatpush1.msra.mxu0 %v1092
        %3141 = vmatprep.subr.mxu0 %v1097
        %3142 = vmatpush1.msra.mxu0 %v1096
        %3143 = vmatprep.subr.mxu0 %v1101
        %3144 = vmatpush1.msra.mxu0 %v1100
        %3145 = vmatprep.subr.mxu0 %v1105
        %3146 = vmatpush1.msra.mxu0 %v1104
        %3147 = vmatprep.subr.mxu0 %v1109
        %3148 = vmatpush1.msra.mxu0 %v1108
        %3149 = vmatprep.subr.mxu0 %v1113
        %3150 = vmatpush1.msra.mxu0 %v1112
        %3151 = vmatprep.subr.mxu0 %v1117
        %3152 = vmatpush1.msra.mxu0 %v1116
        %3153 = vmatprep.subr.mxu0 %v1121
        %3154 = vmatpush1.msra.mxu0 %v1120
        %3155 = vmatprep.subr.mxu0 %v1125
        %3156 = vmatpush1.msra.mxu0 %v1124
        %3157 = vmatprep.subr.mxu0 %v1129
        %3158 = vmatpush1.msra.mxu0 %v1128
        %3159 = vmatprep.subr.mxu0 %v1133
        %3160 = vmatpush1.msra.mxu0 %v1132
        %3161 = vmatprep.subr.mxu0 %v1137
        %3162 = vmatpush1.msra.mxu0 %v1136
        %3163 = vmatprep.subr.mxu0 %v1141
        %3164 = vmatpush1.msra.mxu0 %v1140
        %3165 = vmatprep.subr.mxu0 %v1145
        %3166 = vmatpush1.msra.mxu0 %v1144
        %3167 = vmatprep.subr.mxu0 %v1149
        %3168 = vmatpush1.msra.mxu0 %v1148
        %3169 = vmatprep.subr.mxu0 %v1153
        %3170 = vmatpush1.msra.mxu0 %v1152
        %3171 = vmatprep.subr.mxu0 %v1157
        %3172 = vmatpush1.msra.mxu0 %v1156
        %3173 = vmatprep.subr.mxu0 %v1161
        %3174 = vmatpush1.msra.mxu0 %v1160
        %3175 = vmatprep.subr.mxu0 %v1165
        %3176 = vmatpush1.msra.mxu0 %v1164
        %3177 = vmatprep.subr.mxu0 %v1169
        %3178 = vmatpush1.msra.mxu0 %v1168
        %3179 = vmatprep.subr.mxu0 %v1173
        %3180 = vmatpush1.msra.mxu0 %v1172
        %3181 = vmatprep.subr.mxu0 %v1177
        %3182 = vmatpush1.msra.mxu0 %v1176
        %3183 = vmatprep.subr.mxu0 %v1181
        %3184 = vmatpush1.msra.mxu0 %v1180
        %3185 = vmatprep.subr.mxu0 %v1185
        %3186 = vmatpush1.msra.mxu0 %v1184
        %3187 = vmatprep.subr.mxu0 %v1189
        %3188 = vmatpush1.msra.mxu0 %v1188
        %3189 = vmatprep.subr.mxu0 %v1193
        %3190 = vmatpush1.msra.mxu0 %v1192
        %3191 = vmatprep.subr.mxu0 %v1197
        %3192 = vmatpush1.msra.mxu0 %v1196
        %3193 = vmatprep.subr.mxu0 %v1201
        %3194 = vmatpush1.msra.mxu0 %v1200
        %3195 = vmatprep.mubr.f32.mxu0 %v1668
        %3196 = vmatmul.mubr.f32.gmra.mrb[0].mxu0 %v1667
        %v3197 = vpop.f32.mrb[0].mxu0
        %v3198 = vadd.f32 0.0, %v3197
        %v3199 = vpop.f32.mrb[0].mxu0
        %v3200 = vadd.f32 0.0, %v3199
        %3201 = vdwg.mxu0
        %3202 = vmatprep.subr.mxu0 %v1205
        %3203 = vmatpush1.msra.mxu0 %v1204
        %3204 = vmatprep.subr.mxu0 %v1209
        %3205 = vmatpush1.msra.mxu0 %v1208
        %3206 = vmatprep.subr.mxu0 %v1213
        %3207 = vmatpush1.msra.mxu0 %v1212
        %3208 = vmatprep.subr.mxu0 %v1217
        %3209 = vmatpush1.msra.mxu0 %v1216
        %3210 = vmatprep.subr.mxu0 0.0
        %3211 = vmatpush1.msra.mxu0 0.0
        %3212 = vmatprep.subr.mxu0 0.0
        %3213 = vmatpush1.msra.mxu0 0.0
        %3214 = vmatprep.subr.mxu0 0.0
        %3215 = vmatpush1.msra.mxu0 0.0
        %3216 = vmatprep.subr.mxu0 0.0
        %3217 = vmatpush1.msra.mxu0 0.0
        %3218 = vmatprep.subr.mxu0 0.0
        %3219 = vmatpush1.msra.mxu0 0.0
        %3220 = vmatprep.subr.mxu0 0.0
        %3221 = vmatpush1.msra.mxu0 0.0
        %3222 = vmatprep.subr.mxu0 0.0
        %3223 = vmatpush1.msra.mxu0 0.0
        %3224 = vmatprep.subr.mxu0 0.0
        %3225 = vmatpush1.msra.mxu0 0.0
        %3226 = vmatprep.subr.mxu0 0.0
        %3227 = vmatpush1.msra.mxu0 0.0
        %3228 = vmatprep.subr.mxu0 0.0
        %3229 = vmatpush1.msra.mxu0 0.0
        %3230 = vmatprep.subr.mxu0 0.0
        %3231 = vmatpush1.msra.mxu0 0.0
        %3232 = vmatprep.subr.mxu0 0.0
        %3233 = vmatpush1.msra.mxu0 0.0
        %3234 = vmatprep.subr.mxu0 0.0
        %3235 = vmatpush1.msra.mxu0 0.0
        %3236 = vmatprep.subr.mxu0 0.0
        %3237 = vmatpush1.msra.mxu0 0.0
        %3238 = vmatprep.subr.mxu0 0.0
        %3239 = vmatpush1.msra.mxu0 0.0
        %3240 = vmatprep.subr.mxu0 0.0
        %3241 = vmatpush1.msra.mxu0 0.0
        %3242 = vmatprep.subr.mxu0 0.0
        %3243 = vmatpush1.msra.mxu0 0.0
        %3244 = vmatprep.subr.mxu0 0.0
        %3245 = vmatpush1.msra.mxu0 0.0
        %3246 = vmatprep.subr.mxu0 0.0
        %3247 = vmatpush1.msra.mxu0 0.0
        %3248 = vmatprep.subr.mxu0 0.0
        %3249 = vmatpush1.msra.mxu0 0.0
        %3250 = vmatprep.subr.mxu0 0.0
        %3251 = vmatpush1.msra.mxu0 0.0
        %3252 = vmatprep.subr.mxu0 0.0
        %3253 = vmatpush1.msra.mxu0 0.0
        %3254 = vmatprep.subr.mxu0 0.0
        %3255 = vmatpush1.msra.mxu0 0.0
        %3256 = vmatprep.subr.mxu0 0.0
        %3257 = vmatpush1.msra.mxu0 0.0
        %3258 = vmatprep.subr.mxu0 0.0
        %3259 = vmatpush1.msra.mxu0 0.0
        %3260 = vmatprep.subr.mxu0 0.0
        %3261 = vmatpush1.msra.mxu0 0.0
        %3262 = vmatprep.subr.mxu0 0.0
        %3263 = vmatpush1.msra.mxu0 0.0
        %3264 = vmatprep.subr.mxu0 0.0
        %3265 = vmatpush1.msra.mxu0 0.0
        %3266 = vmatprep.mubr.f32.mxu0 0.0
        %3267 = vmatmul.mubr.f32.gmra.mrb[0].mxu0 %v1672
        %v3268 = vpop.f32.mrb[0].mxu0
        %v3269 = vadd.f32 %v3198, %v3268
        %v3270 = vpop.f32.mrb[0].mxu0
        %v3271 = vadd.f32 %v3200, %v3270
        %3272 = vdwg.mxu0
        %v3273 = vadd.f32 %v2843, %v3127
        %v3274 = vadd.f32 %v2845, %v3129
        %v3275 = vadd.f32 %v2985, %v3269
        %v3276 = vadd.f32 %v2987, %v3271
        %3277 = vmatprep.subr.mxu0 %v1521
        %3278 = vmatpush1.msra.mxu0 %v1520
        %3279 = vmatprep.subr.mxu0 %v1525
        %3280 = vmatpush1.msra.mxu0 %v1524
        %3281 = vmatprep.subr.mxu0 %v1529
        %3282 = vmatpush1.msra.mxu0 %v1528
        %3283 = vmatprep.subr.mxu0 %v1533
        %3284 = vmatpush1.msra.mxu0 %v1532
        %3285 = vmatprep.subr.mxu0 %v1537
        %3286 = vmatpush1.msra.mxu0 %v1536
        %3287 = vmatprep.subr.mxu0 %v1541
        %3288 = vmatpush1.msra.mxu0 %v1540
        %3289 = vmatprep.subr.mxu0 %v1545
        %3290 = vmatpush1.msra.mxu0 %v1544
        %3291 = vmatprep.subr.mxu0 %v1549
        %3292 = vmatpush1.msra.mxu0 %v1548
        %3293 = vmatprep.subr.mxu0 %v1553
        %3294 = vmatpush1.msra.mxu0 %v1552
        %3295 = vmatprep.subr.mxu0 %v1557
        %3296 = vmatpush1.msra.mxu0 %v1556
        %3297 = vmatprep.subr.mxu0 %v1561
        %3298 = vmatpush1.msra.mxu0 %v1560
        %3299 = vmatprep.subr.mxu0 %v1565
        %3300 = vmatpush1.msra.mxu0 %v1564
        %3301 = vmatprep.subr.mxu0 %v1569
        %3302 = vmatpush1.msra.mxu0 %v1568
        %3303 = vmatprep.subr.mxu0 %v1573
        %3304 = vmatpush1.msra.mxu0 %v1572
        %3305 = vmatprep.subr.mxu0 %v1577
        %3306 = vmatpush1.msra.mxu0 %v1576
        %3307 = vmatprep.subr.mxu0 %v1581
        %3308 = vmatpush1.msra.mxu0 %v1580
        %3309 = vmatprep.subr.mxu0 %v1585
        %3310 = vmatpush1.msra.mxu0 %v1584
        %3311 = vmatprep.subr.mxu0 %v1589
        %3312 = vmatpush1.msra.mxu0 %v1588
        %3313 = vmatprep.subr.mxu0 %v1593
        %3314 = vmatpush1.msra.mxu0 %v1592
        %3315 = vmatprep.subr.mxu0 %v1597
        %3316 = vmatpush1.msra.mxu0 %v1596
        %3317 = vmatprep.subr.mxu0 %v1601
        %3318 = vmatpush1.msra.mxu0 %v1600
        %3319 = vmatprep.subr.mxu0 %v1605
        %3320 = vmatpush1.msra.mxu0 %v1604
        %3321 = vmatprep.subr.mxu0 %v1609
        %3322 = vmatpush1.msra.mxu0 %v1608
        %3323 = vmatprep.subr.mxu0 %v1613
        %3324 = vmatpush1.msra.mxu0 %v1612
        %3325 = vmatprep.subr.mxu0 %v1617
        %3326 = vmatpush1.msra.mxu0 %v1616
        %3327 = vmatprep.subr.mxu0 %v1621
        %3328 = vmatpush1.msra.mxu0 %v1620
        %3329 = vmatprep.subr.mxu0 %v1625
        %3330 = vmatpush1.msra.mxu0 %v1624
        %3331 = vmatprep.subr.mxu0 %v1629
        %3332 = vmatpush1.msra.mxu0 %v1628
        %3333 = vmatprep.subr.mxu0 %v1633
        %3334 = vmatpush1.msra.mxu0 %v1632
        %3335 = vmatprep.subr.mxu0 %v1637
        %3336 = vmatpush1.msra.mxu0 %v1636
        %3337 = vmatprep.subr.mxu0 %v1641
        %3338 = vmatpush1.msra.mxu0 %v1640
        %3339 = vmatprep.subr.mxu0 %v1645
        %3340 = vmatpush1.msra.mxu0 %v1644
        %3341 = vmatprep.mubr.f32.mxu0 %v2125
        %3342 = vmatmul.mubr.f32.gmra.mrb[0].mxu0 %v2122
        %v3343 = vpop.f32.mrb[0].mxu0
        %v3344 = vadd.f32 0.0, %v3343
        %v3345 = vpop.f32.mrb[0].mxu0
        %v3346 = vadd.f32 0.0, %v3345
        %3347 = vdwg.mxu0
        %3348 = vmatprep.subr.mxu0 %v1649
        %3349 = vmatpush1.msra.mxu0 %v1648
        %3350 = vmatprep.subr.mxu0 %v1653
        %3351 = vmatpush1.msra.mxu0 %v1652
        %3352 = vmatprep.subr.mxu0 %v1657
        %3353 = vmatpush1.msra.mxu0 %v1656
        %3354 = vmatprep.subr.mxu0 %v1661
        %3355 = vmatpush1.msra.mxu0 %v1660
        %3356 = vmatprep.subr.mxu0 0.0
        %3357 = vmatpush1.msra.mxu0 0.0
        %3358 = vmatprep.subr.mxu0 0.0
        %3359 = vmatpush1.msra.mxu0 0.0
        %3360 = vmatprep.subr.mxu0 0.0
        %3361 = vmatpush1.msra.mxu0 0.0
        %3362 = vmatprep.subr.mxu0 0.0
        %3363 = vmatpush1.msra.mxu0 0.0
        %3364 = vmatprep.subr.mxu0 0.0
        %3365 = vmatpush1.msra.mxu0 0.0
        %3366 = vmatprep.subr.mxu0 0.0
        %3367 = vmatpush1.msra.mxu0 0.0
        %3368 = vmatprep.subr.mxu0 0.0
        %3369 = vmatpush1.msra.mxu0 0.0
        %3370 = vmatprep.subr.mxu0 0.0
        %3371 = vmatpush1.msra.mxu0 0.0
        %3372 = vmatprep.subr.mxu0 0.0
        %3373 = vmatpush1.msra.mxu0 0.0
        %3374 = vmatprep.subr.mxu0 0.0
        %3375 = vmatpush1.msra.mxu0 0.0
        %3376 = vmatprep.subr.mxu0 0.0
        %3377 = vmatpush1.msra.mxu0 0.0
        %3378 = vmatprep.subr.mxu0 0.0
        %3379 = vmatpush1.msra.mxu0 0.0
        %3380 = vmatprep.subr.mxu0 0.0
        %3381 = vmatpush1.msra.mxu0 0.0
        %3382 = vmatprep.subr.mxu0 0.0
        %3383 = vmatpush1.msra.mxu0 0.0
        %3384 = vmatprep.subr.mxu0 0.0
        %3385 = vmatpush1.msra.mxu0 0.0
        %3386 = vmatprep.subr.mxu0 0.0
        %3387 = vmatpush1.msra.mxu0 0.0
        %3388 = vmatprep.subr.mxu0 0.0
        %3389 = vmatpush1.msra.mxu0 0.0
        %3390 = vmatprep.subr.mxu0 0.0
        %3391 = vmatpush1.msra.mxu0 0.0
        %3392 = vmatprep.subr.mxu0 0.0
        %3393 = vmatpush1.msra.mxu0 0.0
        %3394 = vmatprep.subr.mxu0 0.0
        %3395 = vmatpush1.msra.mxu0 0.0
        %3396 = vmatprep.subr.mxu0 0.0
        %3397 = vmatpush1.msra.mxu0 0.0
        %3398 = vmatprep.subr.mxu0 0.0
        %3399 = vmatpush1.msra.mxu0 0.0
        %3400 = vmatprep.subr.mxu0 0.0
        %3401 = vmatpush1.msra.mxu0 0.0
        %3402 = vmatprep.subr.mxu0 0.0
        %3403 = vmatpush1.msra.mxu0 0.0
        %3404 = vmatprep.subr.mxu0 0.0
        %3405 = vmatpush1.msra.mxu0 0.0
        %3406 = vmatprep.subr.mxu0 0.0
        %3407 = vmatpush1.msra.mxu0 0.0
        %3408 = vmatprep.subr.mxu0 0.0
        %3409 = vmatpush1.msra.mxu0 0.0
        %3410 = vmatprep.subr.mxu0 0.0
        %3411 = vmatpush1.msra.mxu0 0.0
        %3412 = vmatprep.mubr.f32.mxu0 0.0
        %3413 = vmatmul.mubr.f32.gmra.mrb[0].mxu0 %v2131
        %v3414 = vpop.f32.mrb[0].mxu0
        %v3415 = vadd.f32 %v3344, %v3414
        %v3416 = vpop.f32.mrb[0].mxu0
        %v3417 = vadd.f32 %v3346, %v3416
        %3418 = vdwg.mxu0
        %3419 = vmatprep.subr.mxu0 %v1523
        %3420 = vmatpush1.msra.mxu0 %v1522
        %3421 = vmatprep.subr.mxu0 %v1527
        %3422 = vmatpush1.msra.mxu0 %v1526
        %3423 = vmatprep.subr.mxu0 %v1531
        %3424 = vmatpush1.msra.mxu0 %v1530
        %3425 = vmatprep.subr.mxu0 %v1535
        %3426 = vmatpush1.msra.mxu0 %v1534
        %3427 = vmatprep.subr.mxu0 %v1539
        %3428 = vmatpush1.msra.mxu0 %v1538
        %3429 = vmatprep.subr.mxu0 %v1543
        %3430 = vmatpush1.msra.mxu0 %v1542
        %3431 = vmatprep.subr.mxu0 %v1547
        %3432 = vmatpush1.msra.mxu0 %v1546
        %3433 = vmatprep.subr.mxu0 %v1551
        %3434 = vmatpush1.msra.mxu0 %v1550
        %3435 = vmatprep.subr.mxu0 %v1555
        %3436 = vmatpush1.msra.mxu0 %v1554
        %3437 = vmatprep.subr.mxu0 %v1559
        %3438 = vmatpush1.msra.mxu0 %v1558
        %3439 = vmatprep.subr.mxu0 %v1563
        %3440 = vmatpush1.msra.mxu0 %v1562
        %3441 = vmatprep.subr.mxu0 %v1567
        %3442 = vmatpush1.msra.mxu0 %v1566
        %3443 = vmatprep.subr.mxu0 %v1571
        %3444 = vmatpush1.msra.mxu0 %v1570
        %3445 = vmatprep.subr.mxu0 %v1575
        %3446 = vmatpush1.msra.mxu0 %v1574
        %3447 = vmatprep.subr.mxu0 %v1579
        %3448 = vmatpush1.msra.mxu0 %v1578
        %3449 = vmatprep.subr.mxu0 %v1583
        %3450 = vmatpush1.msra.mxu0 %v1582
        %3451 = vmatprep.subr.mxu0 %v1587
        %3452 = vmatpush1.msra.mxu0 %v1586
        %3453 = vmatprep.subr.mxu0 %v1591
        %3454 = vmatpush1.msra.mxu0 %v1590
        %3455 = vmatprep.subr.mxu0 %v1595
        %3456 = vmatpush1.msra.mxu0 %v1594
        %3457 = vmatprep.subr.mxu0 %v1599
        %3458 = vmatpush1.msra.mxu0 %v1598
        %3459 = vmatprep.subr.mxu0 %v1603
        %3460 = vmatpush1.msra.mxu0 %v1602
        %3461 = vmatprep.subr.mxu0 %v1607
        %3462 = vmatpush1.msra.mxu0 %v1606
        %3463 = vmatprep.subr.mxu0 %v1611
        %3464 = vmatpush1.msra.mxu0 %v1610
        %3465 = vmatprep.subr.mxu0 %v1615
        %3466 = vmatpush1.msra.mxu0 %v1614
        %3467 = vmatprep.subr.mxu0 %v1619
        %3468 = vmatpush1.msra.mxu0 %v1618
        %3469 = vmatprep.subr.mxu0 %v1623
        %3470 = vmatpush1.msra.mxu0 %v1622
        %3471 = vmatprep.subr.mxu0 %v1627
        %3472 = vmatpush1.msra.mxu0 %v1626
        %3473 = vmatprep.subr.mxu0 %v1631
        %3474 = vmatpush1.msra.mxu0 %v1630
        %3475 = vmatprep.subr.mxu0 %v1635
        %3476 = vmatpush1.msra.mxu0 %v1634
        %3477 = vmatprep.subr.mxu0 %v1639
        %3478 = vmatpush1.msra.mxu0 %v1638
        %3479 = vmatprep.subr.mxu0 %v1643
        %3480 = vmatpush1.msra.mxu0 %v1642
        %3481 = vmatprep.subr.mxu0 %v1647
        %3482 = vmatpush1.msra.mxu0 %v1646
        %3483 = vmatprep.mubr.f32.mxu0 %v2125
        %3484 = vmatmul.mubr.f32.gmra.mrb[0].mxu0 %v2122
        %v3485 = vpop.f32.mrb[0].mxu0
        %v3486 = vadd.f32 0.0, %v3485
        %v3487 = vpop.f32.mrb[0].mxu0
        %v3488 = vadd.f32 0.0, %v3487
        %3489 = vdwg.mxu0
        %3490 = vmatprep.subr.mxu0 %v1651
        %3491 = vmatpush1.msra.mxu0 %v1650
        %3492 = vmatprep.subr.mxu0 %v1655
        %3493 = vmatpush1.msra.mxu0 %v1654
        %3494 = vmatprep.subr.mxu0 %v1659
        %3495 = vmatpush1.msra.mxu0 %v1658
        %3496 = vmatprep.subr.mxu0 %v1663
        %3497 = vmatpush1.msra.mxu0 %v1662
        %3498 = vmatprep.subr.mxu0 0.0
        %3499 = vmatpush1.msra.mxu0 0.0
        %3500 = vmatprep.subr.mxu0 0.0
        %3501 = vmatpush1.msra.mxu0 0.0
        %3502 = vmatprep.subr.mxu0 0.0
        %3503 = vmatpush1.msra.mxu0 0.0
        %3504 = vmatprep.subr.mxu0 0.0
        %3505 = vmatpush1.msra.mxu0 0.0
        %3506 = vmatprep.subr.mxu0 0.0
        %3507 = vmatpush1.msra.mxu0 0.0
        %3508 = vmatprep.subr.mxu0 0.0
        %3509 = vmatpush1.msra.mxu0 0.0
        %3510 = vmatprep.subr.mxu0 0.0
        %3511 = vmatpush1.msra.mxu0 0.0
        %3512 = vmatprep.subr.mxu0 0.0
        %3513 = vmatpush1.msra.mxu0 0.0
        %3514 = vmatprep.subr.mxu0 0.0
        %3515 = vmatpush1.msra.mxu0 0.0
        %3516 = vmatprep.subr.mxu0 0.0
        %3517 = vmatpush1.msra.mxu0 0.0
        %3518 = vmatprep.subr.mxu0 0.0
        %3519 = vmatpush1.msra.mxu0 0.0
        %3520 = vmatprep.subr.mxu0 0.0
        %3521 = vmatpush1.msra.mxu0 0.0
        %3522 = vmatprep.subr.mxu0 0.0
        %3523 = vmatpush1.msra.mxu0 0.0
        %3524 = vmatprep.subr.mxu0 0.0
        %3525 = vmatpush1.msra.mxu0 0.0
        %3526 = vmatprep.subr.mxu0 0.0
        %3527 = vmatpush1.msra.mxu0 0.0
        %3528 = vmatprep.subr.mxu0 0.0
        %3529 = vmatpush1.msra.mxu0 0.0
        %3530 = vmatprep.subr.mxu0 0.0
        %3531 = vmatpush1.msra.mxu0 0.0
        %3532 = vmatprep.subr.mxu0 0.0
        %3533 = vmatpush1.msra.mxu0 0.0
        %3534 = vmatprep.subr.mxu0 0.0
        %3535 = vmatpush1.msra.mxu0 0.0
        %3536 = vmatprep.subr.mxu0 0.0
        %3537 = vmatpush1.msra.mxu0 0.0
        %3538 = vmatprep.subr.mxu0 0.0
        %3539 = vmatpush1.msra.mxu0 0.0
        %3540 = vmatprep.subr.mxu0 0.0
        %3541 = vmatpush1.msra.mxu0 0.0
        %3542 = vmatprep.subr.mxu0 0.0
        %3543 = vmatpush1.msra.mxu0 0.0
        %3544 = vmatprep.subr.mxu0 0.0
        %3545 = vmatpush1.msra.mxu0 0.0
        %3546 = vmatprep.subr.mxu0 0.0
        %3547 = vmatpush1.msra.mxu0 0.0
        %3548 = vmatprep.subr.mxu0 0.0
        %3549 = vmatpush1.msra.mxu0 0.0
        %3550 = vmatprep.subr.mxu0 0.0
        %3551 = vmatpush1.msra.mxu0 0.0
        %3552 = vmatprep.subr.mxu0 0.0
        %3553 = vmatpush1.msra.mxu0 0.0
        %3554 = vmatprep.mubr.f32.mxu0 0.0
        %3555 = vmatmul.mubr.f32.gmra.mrb[0].mxu0 %v2131
        %v3556 = vpop.f32.mrb[0].mxu0
        %v3557 = vadd.f32 %v3486, %v3556
        %v3558 = vpop.f32.mrb[0].mxu0
        %v3559 = vadd.f32 %v3488, %v3558
        %3560 = vdwg.mxu0
        %v3561 = vadd.f32 %v3273, %v3415
        %v3562 = vadd.f32 %v3274, %v3417
        %v3563 = vadd.f32 %v3275, %v3557
        %v3564 = vadd.f32 %v3276, %v3559
        %v3565 = vld [vmem:[%s346] sm:$0xfc]
        %v3566 = vld [vmem:[%s346 + $0x8] sm:$0xfc]
        %v3567 = vld [vmem:[%s346 + $0x10] sm:$0xfc]
        %v3568 = vld [vmem:[%s346 + $0x18] sm:$0x1]
        %v3569 = vld [vmem:[%s346 + $0x20] sm:$0x1]
        %v3570 = vld [vmem:[%s346 + $0x28] sm:$0x1]
        %v3577 = vrot.slane %v3565, 2
        %v3578 = vrot.slane %v3568, 2
        %v3579 = vsel %vm2119, %v3577, %v3578
        %v3580 = vrot.slane %v3566, 2
        %v3581 = vrot.slane %v3569, 2
        %v3582 = vsel %vm2119, %v3580, %v3581
        %v3583 = vrot.slane %v3567, 2
        %v3584 = vrot.slane %v3570, 2
        %v3585 = vsel %vm2119, %v3583, %v3584
        %v3588 = vsel %vm495, %v3585, 0
        %3590 = vmatprep.subr.mxu0 %v1970
        %3591 = vmatpush1.msra.mxu0 %v1969
        %3592 = vmatprep.subr.mxu0 %v1974
        %3593 = vmatpush1.msra.mxu0 %v1973
        %3594 = vmatprep.subr.mxu0 %v1978
        %3595 = vmatpush1.msra.mxu0 %v1977
        %3596 = vmatprep.subr.mxu0 %v1982
        %3597 = vmatpush1.msra.mxu0 %v1981
        %3598 = vmatprep.subr.mxu0 %v1986
        %3599 = vmatpush1.msra.mxu0 %v1985
        %3600 = vmatprep.subr.mxu0 %v1990
        %3601 = vmatpush1.msra.mxu0 %v1989
        %3602 = vmatprep.subr.mxu0 %v1994
        %3603 = vmatpush1.msra.mxu0 %v1993
        %3604 = vmatprep.subr.mxu0 %v1998
        %3605 = vmatpush1.msra.mxu0 %v1997
        %3606 = vmatprep.subr.mxu0 %v2002
        %3607 = vmatpush1.msra.mxu0 %v2001
        %3608 = vmatprep.subr.mxu0 %v2006
        %3609 = vmatpush1.msra.mxu0 %v2005
        %3610 = vmatprep.subr.mxu0 %v2010
        %3611 = vmatpush1.msra.mxu0 %v2009
        %3612 = vmatprep.subr.mxu0 %v2014
        %3613 = vmatpush1.msra.mxu0 %v2013
        %3614 = vmatprep.subr.mxu0 %v2018
        %3615 = vmatpush1.msra.mxu0 %v2017
        %3616 = vmatprep.subr.mxu0 %v2022
        %3617 = vmatpush1.msra.mxu0 %v2021
        %3618 = vmatprep.subr.mxu0 %v2026
        %3619 = vmatpush1.msra.mxu0 %v2025
        %3620 = vmatprep.subr.mxu0 %v2030
        %3621 = vmatpush1.msra.mxu0 %v2029
        %3622 = vmatprep.subr.mxu0 %v2034
        %3623 = vmatpush1.msra.mxu0 %v2033
        %3624 = vmatprep.subr.mxu0 %v2038
        %3625 = vmatpush1.msra.mxu0 %v2037
        %3626 = vmatprep.subr.mxu0 %v2042
        %3627 = vmatpush1.msra.mxu0 %v2041
        %3628 = vmatprep.subr.mxu0 %v2046
        %3629 = vmatpush1.msra.mxu0 %v2045
        %3630 = vmatprep.subr.mxu0 %v2050
        %3631 = vmatpush1.msra.mxu0 %v2049
        %3632 = vmatprep.subr.mxu0 %v2054
        %3633 = vmatpush1.msra.mxu0 %v2053
        %3634 = vmatprep.subr.mxu0 %v2058
        %3635 = vmatpush1.msra.mxu0 %v2057
        %3636 = vmatprep.subr.mxu0 %v2062
        %3637 = vmatpush1.msra.mxu0 %v2061
        %3638 = vmatprep.subr.mxu0 %v2066
        %3639 = vmatpush1.msra.mxu0 %v2065
        %3640 = vmatprep.subr.mxu0 %v2070
        %3641 = vmatpush1.msra.mxu0 %v2069
        %3642 = vmatprep.subr.mxu0 %v2074
        %3643 = vmatpush1.msra.mxu0 %v2073
        %3644 = vmatprep.subr.mxu0 %v2078
        %3645 = vmatpush1.msra.mxu0 %v2077
        %3646 = vmatprep.subr.mxu0 %v2082
        %3647 = vmatpush1.msra.mxu0 %v2081
        %3648 = vmatprep.subr.mxu0 %v2086
        %3649 = vmatpush1.msra.mxu0 %v2085
        %3650 = vmatprep.subr.mxu0 %v2090
        %3651 = vmatpush1.msra.mxu0 %v2089
        %3652 = vmatprep.subr.mxu0 %v2094
        %3653 = vmatpush1.msra.mxu0 %v2093
        %3654 = vmatprep.mubr.f32.mxu0 %v3582
        %3655 = vmatmul.mubr.f32.gmra.mrb[0].mxu0 %v3579
        %v3656 = vpop.f32.mrb[0].mxu0
        %v3657 = vadd.f32 0.0, %v3656
        %v3658 = vpop.f32.mrb[0].mxu0
        %v3659 = vadd.f32 0.0, %v3658
        %3660 = vdwg.mxu0
        %3661 = vmatprep.subr.mxu0 %v2098
        %3662 = vmatpush1.msra.mxu0 %v2097
        %3663 = vmatprep.subr.mxu0 %v2102
        %3664 = vmatpush1.msra.mxu0 %v2101
        %3665 = vmatprep.subr.mxu0 %v2106
        %3666 = vmatpush1.msra.mxu0 %v2105
        %3667 = vmatprep.subr.mxu0 %v2110
        %3668 = vmatpush1.msra.mxu0 %v2109
        %3669 = vmatprep.subr.mxu0 0.0
        %3670 = vmatpush1.msra.mxu0 0.0
        %3671 = vmatprep.subr.mxu0 0.0
        %3672 = vmatpush1.msra.mxu0 0.0
        %3673 = vmatprep.subr.mxu0 0.0
        %3674 = vmatpush1.msra.mxu0 0.0
        %3675 = vmatprep.subr.mxu0 0.0
        %3676 = vmatpush1.msra.mxu0 0.0
        %3677 = vmatprep.subr.mxu0 0.0
        %3678 = vmatpush1.msra.mxu0 0.0
        %3679 = vmatprep.subr.mxu0 0.0
        %3680 = vmatpush1.msra.mxu0 0.0
        %3681 = vmatprep.subr.mxu0 0.0
        %3682 = vmatpush1.msra.mxu0 0.0
        %3683 = vmatprep.subr.mxu0 0.0
        %3684 = vmatpush1.msra.mxu0 0.0
        %3685 = vmatprep.subr.mxu0 0.0
        %3686 = vmatpush1.msra.mxu0 0.0
        %3687 = vmatprep.subr.mxu0 0.0
        %3688 = vmatpush1.msra.mxu0 0.0
        %3689 = vmatprep.subr.mxu0 0.0
        %3690 = vmatpush1.msra.mxu0 0.0
        %3691 = vmatprep.subr.mxu0 0.0
        %3692 = vmatpush1.msra.mxu0 0.0
        %3693 = vmatprep.subr.mxu0 0.0
        %3694 = vmatpush1.msra.mxu0 0.0
        %3695 = vmatprep.subr.mxu0 0.0
        %3696 = vmatpush1.msra.mxu0 0.0
        %3697 = vmatprep.subr.mxu0 0.0
        %3698 = vmatpush1.msra.mxu0 0.0
        %3699 = vmatprep.subr.mxu0 0.0
        %3700 = vmatpush1.msra.mxu0 0.0
        %3701 = vmatprep.subr.mxu0 0.0
        %3702 = vmatpush1.msra.mxu0 0.0
        %3703 = vmatprep.subr.mxu0 0.0
        %3704 = vmatpush1.msra.mxu0 0.0
        %3705 = vmatprep.subr.mxu0 0.0
        %3706 = vmatpush1.msra.mxu0 0.0
        %3707 = vmatprep.subr.mxu0 0.0
        %3708 = vmatpush1.msra.mxu0 0.0
        %3709 = vmatprep.subr.mxu0 0.0
        %3710 = vmatpush1.msra.mxu0 0.0
        %3711 = vmatprep.subr.mxu0 0.0
        %3712 = vmatpush1.msra.mxu0 0.0
        %3713 = vmatprep.subr.mxu0 0.0
        %3714 = vmatpush1.msra.mxu0 0.0
        %3715 = vmatprep.subr.mxu0 0.0
        %3716 = vmatpush1.msra.mxu0 0.0
        %3717 = vmatprep.subr.mxu0 0.0
        %3718 = vmatpush1.msra.mxu0 0.0
        %3719 = vmatprep.subr.mxu0 0.0
        %3720 = vmatpush1.msra.mxu0 0.0
        %3721 = vmatprep.subr.mxu0 0.0
        %3722 = vmatpush1.msra.mxu0 0.0
        %3723 = vmatprep.subr.mxu0 0.0
        %3724 = vmatpush1.msra.mxu0 0.0
        %3725 = vmatprep.mubr.f32.mxu0 0.0
        %3726 = vmatmul.mubr.f32.gmra.mrb[0].mxu0 %v3588
        %v3727 = vpop.f32.mrb[0].mxu0
        %v3728 = vadd.f32 %v3657, %v3727
        %v3729 = vpop.f32.mrb[0].mxu0
        %v3730 = vadd.f32 %v3659, %v3729
        %3731 = vdwg.mxu0
        %3732 = vmatprep.subr.mxu0 %v1972
        %3733 = vmatpush1.msra.mxu0 %v1971
        %3734 = vmatprep.subr.mxu0 %v1976
        %3735 = vmatpush1.msra.mxu0 %v1975
        %3736 = vmatprep.subr.mxu0 %v1980
        %3737 = vmatpush1.msra.mxu0 %v1979
        %3738 = vmatprep.subr.mxu0 %v1984
        %3739 = vmatpush1.msra.mxu0 %v1983
        %3740 = vmatprep.subr.mxu0 %v1988
        %3741 = vmatpush1.msra.mxu0 %v1987
        %3742 = vmatprep.subr.mxu0 %v1992
        %3743 = vmatpush1.msra.mxu0 %v1991
        %3744 = vmatprep.subr.mxu0 %v1996
        %3745 = vmatpush1.msra.mxu0 %v1995
        %3746 = vmatprep.subr.mxu0 %v2000
        %3747 = vmatpush1.msra.mxu0 %v1999
        %3748 = vmatprep.subr.mxu0 %v2004
        %3749 = vmatpush1.msra.mxu0 %v2003
        %3750 = vmatprep.subr.mxu0 %v2008
        %3751 = vmatpush1.msra.mxu0 %v2007
        %3752 = vmatprep.subr.mxu0 %v2012
        %3753 = vmatpush1.msra.mxu0 %v2011
        %3754 = vmatprep.subr.mxu0 %v2016
        %3755 = vmatpush1.msra.mxu0 %v2015
        %3756 = vmatprep.subr.mxu0 %v2020
        %3757 = vmatpush1.msra.mxu0 %v2019
        %3758 = vmatprep.subr.mxu0 %v2024
        %3759 = vmatpush1.msra.mxu0 %v2023
        %3760 = vmatprep.subr.mxu0 %v2028
        %3761 = vmatpush1.msra.mxu0 %v2027
        %3762 = vmatprep.subr.mxu0 %v2032
        %3763 = vmatpush1.msra.mxu0 %v2031
        %3764 = vmatprep.subr.mxu0 %v2036
        %3765 = vmatpush1.msra.mxu0 %v2035
        %3766 = vmatprep.subr.mxu0 %v2040
        %3767 = vmatpush1.msra.mxu0 %v2039
        %3768 = vmatprep.subr.mxu0 %v2044
        %3769 = vmatpush1.msra.mxu0 %v2043
        %3770 = vmatprep.subr.mxu0 %v2048
        %3771 = vmatpush1.msra.mxu0 %v2047
        %3772 = vmatprep.subr.mxu0 %v2052
        %3773 = vmatpush1.msra.mxu0 %v2051
        %3774 = vmatprep.subr.mxu0 %v2056
        %3775 = vmatpush1.msra.mxu0 %v2055
        %3776 = vmatprep.subr.mxu0 %v2060
        %3777 = vmatpush1.msra.mxu0 %v2059
        %3778 = vmatprep.subr.mxu0 %v2064
        %3779 = vmatpush1.msra.mxu0 %v2063
        %3780 = vmatprep.subr.mxu0 %v2068
        %3781 = vmatpush1.msra.mxu0 %v2067
        %3782 = vmatprep.subr.mxu0 %v2072
        %3783 = vmatpush1.msra.mxu0 %v2071
        %3784 = vmatprep.subr.mxu0 %v2076
        %3785 = vmatpush1.msra.mxu0 %v2075
        %3786 = vmatprep.subr.mxu0 %v2080
        %3787 = vmatpush1.msra.mxu0 %v2079
        %3788 = vmatprep.subr.mxu0 %v2084
        %3789 = vmatpush1.msra.mxu0 %v2083
        %3790 = vmatprep.subr.mxu0 %v2088
        %3791 = vmatpush1.msra.mxu0 %v2087
        %3792 = vmatprep.subr.mxu0 %v2092
        %3793 = vmatpush1.msra.mxu0 %v2091
        %3794 = vmatprep.subr.mxu0 %v2096
        %3795 = vmatpush1.msra.mxu0 %v2095
        %3796 = vmatprep.mubr.f32.mxu0 %v3582
        %3797 = vmatmul.mubr.f32.gmra.mrb[0].mxu0 %v3579
        %v3798 = vpop.f32.mrb[0].mxu0
        %v3799 = vadd.f32 0.0, %v3798
        %v3800 = vpop.f32.mrb[0].mxu0
        %v3801 = vadd.f32 0.0, %v3800
        %3802 = vdwg.mxu0
        %3803 = vmatprep.subr.mxu0 %v2100
        %3804 = vmatpush1.msra.mxu0 %v2099
        %3805 = vmatprep.subr.mxu0 %v2104
        %3806 = vmatpush1.msra.mxu0 %v2103
        %3807 = vmatprep.subr.mxu0 %v2108
        %3808 = vmatpush1.msra.mxu0 %v2107
        %3809 = vmatprep.subr.mxu0 %v2112
        %3810 = vmatpush1.msra.mxu0 %v2111
        %3811 = vmatprep.subr.mxu0 0.0
        %3812 = vmatpush1.msra.mxu0 0.0
        %3813 = vmatprep.subr.mxu0 0.0
        %3814 = vmatpush1.msra.mxu0 0.0
        %3815 = vmatprep.subr.mxu0 0.0
        %3816 = vmatpush1.msra.mxu0 0.0
        %3817 = vmatprep.subr.mxu0 0.0
        %3818 = vmatpush1.msra.mxu0 0.0
        %3819 = vmatprep.subr.mxu0 0.0
        %3820 = vmatpush1.msra.mxu0 0.0
        %3821 = vmatprep.subr.mxu0 0.0
        %3822 = vmatpush1.msra.mxu0 0.0
        %3823 = vmatprep.subr.mxu0 0.0
        %3824 = vmatpush1.msra.mxu0 0.0
        %3825 = vmatprep.subr.mxu0 0.0
        %3826 = vmatpush1.msra.mxu0 0.0
        %3827 = vmatprep.subr.mxu0 0.0
        %3828 = vmatpush1.msra.mxu0 0.0
        %3829 = vmatprep.subr.mxu0 0.0
        %3830 = vmatpush1.msra.mxu0 0.0
        %3831 = vmatprep.subr.mxu0 0.0
        %3832 = vmatpush1.msra.mxu0 0.0
        %3833 = vmatprep.subr.mxu0 0.0
        %3834 = vmatpush1.msra.mxu0 0.0
        %3835 = vmatprep.subr.mxu0 0.0
        %3836 = vmatpush1.msra.mxu0 0.0
        %3837 = vmatprep.subr.mxu0 0.0
        %3838 = vmatpush1.msra.mxu0 0.0
        %3839 = vmatprep.subr.mxu0 0.0
        %3840 = vmatpush1.msra.mxu0 0.0
        %3841 = vmatprep.subr.mxu0 0.0
        %3842 = vmatpush1.msra.mxu0 0.0
        %3843 = vmatprep.subr.mxu0 0.0
        %3844 = vmatpush1.msra.mxu0 0.0
        %3845 = vmatprep.subr.mxu0 0.0
        %3846 = vmatpush1.msra.mxu0 0.0
        %3847 = vmatprep.subr.mxu0 0.0
        %3848 = vmatpush1.msra.mxu0 0.0
        %3849 = vmatprep.subr.mxu0 0.0
        %3850 = vmatpush1.msra.mxu0 0.0
        %3851 = vmatprep.subr.mxu0 0.0
        %3852 = vmatpush1.msra.mxu0 0.0
        %3853 = vmatprep.subr.mxu0 0.0
        %3854 = vmatpush1.msra.mxu0 0.0
        %3855 = vmatprep.subr.mxu0 0.0
        %3856 = vmatpush1.msra.mxu0 0.0
        %3857 = vmatprep.subr.mxu0 0.0
        %3858 = vmatpush1.msra.mxu0 0.0
        %3859 = vmatprep.subr.mxu0 0.0
        %3860 = vmatpush1.msra.mxu0 0.0
        %3861 = vmatprep.subr.mxu0 0.0
        %3862 = vmatpush1.msra.mxu0 0.0
        %3863 = vmatprep.subr.mxu0 0.0
        %3864 = vmatpush1.msra.mxu0 0.0
        %3865 = vmatprep.subr.mxu0 0.0
        %3866 = vmatpush1.msra.mxu0 0.0
        %3867 = vmatprep.mubr.f32.mxu0 0.0
        %3868 = vmatmul.mubr.f32.gmra.mrb[0].mxu0 %v3588
        %v3869 = vpop.f32.mrb[0].mxu0
        %v3870 = vadd.f32 %v3799, %v3869
        %v3871 = vpop.f32.mrb[0].mxu0
        %v3872 = vadd.f32 %v3801, %v3871
        %3873 = vdwg.mxu0
        %v3874 = vadd.f32 %v3561, %v3728
        %v3875 = vadd.f32 %v3562, %v3730
        %v3876 = vadd.f32 %v3563, %v3870
        %v3877 = vadd.f32 %v3564, %v3872
        %v3878 = vmax.f32 %v2417, %v3874
        %v3879 = vmax.f32 %v2418, %v3875
        %v3880 = vmax.f32 %v2419, %v3876
        %v3881 = vmax.f32 %v2420, %v3877
        %3885 = vrot.lane.b32.xlu0 %v3879, 32
        %v3886 = vpop.permute.xlu0 %3885
        %3887 = vrot.lane.b32.xlu0 %v3880, 32
        %v3888 = vpop.permute.xlu0 %3887
        %3889 = vrot.lane.b32.xlu0 %v3881, 32
        %v3890 = vpop.permute.xlu0 %3889
        %v3891 = vsel %vm495, %v3886, %v3888
        %v3892 = vsel %vm495, %v3888, %v3890
        %v3895 = vmax.f32 %v3878, %v3891
        %v3896 = vmax.f32 %v3879, %v3892
        %v3897 = vld [vmem:[#allocation4] sm:$0x3]
        %v3899 = vlaneseq
        %v3900 = vshrl.u32 %v3899, 7
        %v3901 = vsub.s32 0, %v3900
        %v3902 = vrot.slane %v3897, %v3901
        %v3903 = vlaneseq
        %v3904 = vshrl.u32 %v3903, 7
        %v3905 = vsub.s32 1, %v3904
        %v3906 = vrot.slane %v3897, %v3905
        %v3909 = vadd.f32 %v3895, %v3902
        %v3910 = vadd.f32 %v3896, %v3906
        %v3911 = vmax.f32 %v3909, 0.0
        %v3912 = vmax.f32 %v3910, 0.0
        %3913 = vst [vmem:[%s198] sm:$0x7f] %v3911
        %vm3914 = vcmask 784384
        %3915 = vst.msk [vmem:[%s198 + $0x8] sm:$0x7f] %vm3914, %v3912
        %p3916 = scmp.lt.s32.totalorder %s16, 1
        %s3917 = scalar_select %p3916, %s16, 1
        %s3918 = smul.addr %s3917, 2
        %s3919 = smul.addr %s3918, 8
        %s3920 = scalar_lea.vmem %s3, %s3919
        // Predicated region
        $region41: #{convnet_forward.4} parent=31 // pred_check
          %p3921 = pneg %p102
        $region42: #{convnet_forward.4} parent=31 // pred_check_branch
          %3923 = sbr.rel (%p3921) target = $region44
        $region43: #{convnet_forward.4} parent=31 // pred_region
          _
        $region44: #{convnet_forward.4} parent=31 // pred_fallthru
          _
      $region32: #{convnet_forward.4} parent=5 // pred_fallthru
        _
      %p3924 = scmp.le.s32.totalorder 2, %s11
      // Predicated region
      $region45: #{convnet_forward.4} parent=5 // pred_check
        %p3925 = pneg %p3924
      $region46: #{convnet_forward.4} parent=5 // pred_check_branch
        %3927 = sbr.rel (%p3925) target = $region48
      $region47: #{convnet_forward.4} parent=5 // pred_region
        %s3928 = ssub.s32 %s11, 2
        // Predicated region
        $region49: #{convnet_forward.4} parent=47 // pred_check
          %p3929 = pneg %p108
        $region50: #{convnet_forward.4} parent=47 // pred_check_branch
          %3931 = sbr.rel (%p3929) target = $region52
        $region51: #{convnet_forward.4} parent=47 // pred_region
          %p3932 = scmp.lt.s32.totalorder %s17, 1
          %s3933 = scalar_select %p3932, %s17, 1
          %s3934 = smul.addr %s3933, 2
          %s3935 = smul.addr %s3934, 8
          %s3936 = scalar_lea.vmem %s3, %s3935
        $region52: #{convnet_forward.4} parent=47 // pred_fallthru
          _
      $region48: #{convnet_forward.4} parent=5 // pred_fallthru
        _
    $region6: #{convnet_forward.4} parent=1 // loop_footer
      %s15 = sadd.s32 1, %s11
    $region7: #{convnet_forward.4} parent=1 // loop_footer_branch
      %10 = sbr.rel target = $region3
    $region8: #{convnet_forward.4} parent=1 // loop_exit
      _
    %3937 = vsyncpa [#allocation3], 1
    %s3938 = scalar_lea.sflag [#allocation3], 1
    %3939 = vsyncpa %s3938, 1
    %3940 = vsyncpa [#allocation5], 1

</llo_original>
